<compile_context>
chip_gen: v6e
topology: v6e:2x2x1
jax: 0.10.0
libtpu: 0.0.40
codegen_flags: <defaults>
</compile_context>

<pallas_src>
import jax
import jax.numpy as jnp
from jax.experimental import pallas as pl
from jax.experimental.pallas import tpu as pltpu

# ---------------- model hyper-params ----------------------------------------
KEYS_SIZE = 16
GAME_STATE_DIM = 16
IN_DIM = KEYS_SIZE + GAME_STATE_DIM          # 32
D_DIM = 512                                  # as in the reference module
H1 = 4 * D_DIM                               # 2048
H2 = 2 * D_DIM                               # 1024
H3 = D_DIM                                   # 512
BN_EPS = 1e-5
NEG_SLOPE = 0.2

MAX_TILE_B = 512                             # batch tile (rows per grid step)
MIN_SPLIT_B = 256                            # force >=2 blocks (v7x megacore) above this


def _leaky_relu(x):
    return jnp.where(x > 0, x, NEG_SLOPE * x)


# ---------------- kernel ------------------------------------------------------
def discriminator_kernel(
    xy_ref,                      # [TB, IN_DIM] bf16  (x || y pre-concatenated)
    w1_ref, b1_ref,              # [IN_DIM, H1] bf16, [1, H1] f32
    w2_ref, b2_ref,              # [H1, H2] bf16 (BN folded), [1, H2] f32
    w3_ref, b3_ref,              # [H2, H3] bf16 (BN folded), [1, H3] f32
    w4_ref, b4_ref,              # [1, H3] f32, [1, 1] f32
    o_ref,                       # [1, TB] f32 (lane-dense output row)
):
    xy = xy_ref[...]

    # ---- block 1: Linear(32 -> 2048) -> LeakyReLU (single K=32 matmul) -------
    h1 = jnp.dot(xy, w1_ref[...], preferred_element_type=jnp.float32) + b1_ref[...]
    h1 = _leaky_relu(h1)

    # ---- block 2: Linear (BN pre-folded) -> LeakyReLU -------------------------
    h2 = jnp.dot(h1.astype(jnp.bfloat16), w2_ref[...],
                 preferred_element_type=jnp.float32) + b2_ref[...]
    h2 = _leaky_relu(h2)

    # ---- block 3: Linear (BN pre-folded) -> LeakyReLU -------------------------
    h3 = jnp.dot(h2.astype(jnp.bfloat16), w3_ref[...],
                 preferred_element_type=jnp.float32) + b3_ref[...]
    h3 = _leaky_relu(h3)

    # ---- final Linear(d_dim, 1): w4 . h3^T (NT contraction) -> [1, TB] --------
    # Produces the output directly lane-dense (unmasked full-lane stores).
    out_row = jax.lax.dot_general(
        w4_ref[...], h3,
        dimension_numbers=(((1,), (1,)), ((), ())),
        preferred_element_type=jnp.float32)
    o_ref[...] = (out_row + b4_ref[...]).astype(o_ref.dtype)


# ---------------- wrapper -----------------------------------------------------
def _round_up(n, m):
    return ((n + m - 1) // m) * m


def _fold_bn(w, b, g, be, rm, rv):
    """Fold eval-mode BatchNorm1d into the preceding Linear (per output column)."""
    s = g * jax.lax.rsqrt(rv + BN_EPS)          # [1, H]
    return w * s, (b - rm) * s + be             # [Fin, H], [1, H]


def prepare_kernel_params(p):
    """Fold BN, cast matmul weights to bf16, reshape the final vector weight."""
    w2f, b2f = _fold_bn(p["w2"], p["b2"], p["g2"], p["be2"], p["rm2"], p["rv2"])
    w3f, b3f = _fold_bn(p["w3"], p["b3"], p["g3"], p["be3"], p["rm3"], p["rv3"])
    return dict(
        w1=p["w1"].astype(jnp.bfloat16),                      # [32, H1]
        b1=p["b1"].astype(jnp.float32),
        w2=w2f.astype(jnp.bfloat16), b2=b2f.astype(jnp.float32),
        w3=w3f.astype(jnp.bfloat16), b3=b3f.astype(jnp.float32),
        w4=p["w4"].reshape(1, H3).astype(jnp.float32),        # [1, 512]
        b4=p["b4"].reshape(1, 1).astype(jnp.float32),
    )


@jax.jit
def discriminator_forward(x, y, kparams):
    """x: [B, KEYS_SIZE], y: [B, GAME_STATE_DIM] -> [B, 1] (f32)."""
    B = x.shape[0]

    # Balanced tiling: minimize padding, and once B >= 256 use >= 2 blocks so the
    # "parallel" batch axis spans both TensorCores on v7x.
    n_blocks = pl.cdiv(B, MAX_TILE_B)
    if B >= MIN_SPLIT_B:
        n_blocks = max(n_blocks, 2)
    tile_b = _round_up(pl.cdiv(B, n_blocks), 8)
    b_pad = n_blocks * tile_b

    # Concatenate once in the wrapper and hand the kernel bf16 directly.
    xy = jnp.concatenate([x, y], axis=1).astype(jnp.bfloat16)
    if b_pad != B:
        xy = jnp.pad(xy, ((0, b_pad - B), (0, 0)))

    kp = kparams
    weight_inputs = (kp["w1"], kp["b1"], kp["w2"], kp["b2"],
                     kp["w3"], kp["b3"], kp["w4"], kp["b4"])

    def batch_map(i):   # tiled over the batch axis
        return (i, 0)

    def const_map(i):   # weights / biases stay VMEM-resident
        return (0, 0)

    in_specs = [pl.BlockSpec((tile_b, IN_DIM), batch_map)] + [
        pl.BlockSpec(a.shape, const_map) for a in weight_inputs
    ]

    out = pl.pallas_call(
        discriminator_kernel,
        out_shape=jax.ShapeDtypeStruct((n_blocks, 1, tile_b), jnp.float32),
        grid_spec=pltpu.PrefetchScalarGridSpec(
            num_scalar_prefetch=0,
            grid=(n_blocks,),
            in_specs=in_specs,
            # Lane-dense output: each grid step writes one (1, tile_b) row.
            out_specs=pl.BlockSpec((None, 1, tile_b), lambda i: (i, 0, 0)),
        ),
        compiler_params=pltpu.CompilerParams(
            dimension_semantics=("parallel",),
            vmem_limit_bytes=48 << 20,   # > v5e default 16 MiB, < v7x 64 MiB physical
        ),
    )(xy, *weight_inputs)

    return out.reshape(b_pad, 1)[:B]


# ---------------- params & reference -----------------------------------------
def init_params(key):
    """PyTorch-default-like init plus non-trivial BN running stats."""
    def linear(key, fan_in, fan_out):
        kw, kb = jax.random.split(key)
        bound = 1.0 / jnp.sqrt(fan_in)
        w = jax.random.uniform(kw, (fan_in, fan_out), jnp.float32, -bound, bound)
        b = jax.random.uniform(kb, (1, fan_out), jnp.float32, -bound, bound)
        return w, b

    k1, k2, k3, k4, kbn = jax.random.split(key, 5)
    w1, b1 = linear(k1, IN_DIM, H1)
    w2, b2 = linear(k2, H1, H2)
    w3, b3 = linear(k3, H2, H3)
    w4, b4 = linear(k4, H3, 1)

    kg2, kb2, km2, kv2, kg3, kb3, km3, kv3 = jax.random.split(kbn, 8)
    return dict(
        w1=w1, b1=b1,
        w2=w2, b2=b2,
        g2=jax.random.uniform(kg2, (1, H2), jnp.float32, 0.5, 1.5),
        be2=0.1 * jax.random.normal(kb2, (1, H2), jnp.float32),
        rm2=0.1 * jax.random.normal(km2, (1, H2), jnp.float32),
        rv2=jax.random.uniform(kv2, (1, H2), jnp.float32, 0.5, 1.5),
        w3=w3, b3=b3,
        g3=jax.random.uniform(kg3, (1, H3), jnp.float32, 0.5, 1.5),
        be3=0.1 * jax.random.normal(kb3, (1, H3), jnp.float32),
        rm3=0.1 * jax.random.normal(km3, (1, H3), jnp.float32),
        rv3=jax.random.uniform(kv3, (1, H3), jnp.float32, 0.5, 1.5),
        w4=w4, b4=b4,
    )


def reference_forward(x, y, kp):
    """Pure-JAX reference using the same folded / bf16-quantized parameters."""
    xy = jnp.concatenate([x, y], axis=1).astype(jnp.bfloat16)
    h = jnp.dot(xy, kp["w1"], preferred_element_type=jnp.float32) + kp["b1"]
    h = _leaky_relu(h)
    h = jnp.dot(h.astype(jnp.bfloat16), kp["w2"],
                preferred_element_type=jnp.float32) + kp["b2"]
    h = _leaky_relu(h)
    h = jnp.dot(h.astype(jnp.bfloat16), kp["w3"],
                preferred_element_type=jnp.float32) + kp["b3"]
    h = _leaky_relu(h)
    return h @ kp["w4"].T + kp["b4"]


if __name__ == "__main__":
    B = 8
    key = jax.random.PRNGKey(0)
    kx, ky, kp = jax.random.split(key, 3)
    x = jax.random.normal(kx, (B, KEYS_SIZE), jnp.float32)
    y = jax.random.normal(ky, (B, GAME_STATE_DIM), jnp.float32)

    params = init_params(kp)
    kernel_params = prepare_kernel_params(params)

    out = discriminator_forward(x, y, kernel_params)
    out = jax.block_until_ready(out)

    ref = reference_forward(x, y, kernel_params)
    assert out.shape == (B, 1), out.shape
    assert jnp.allclose(out, ref, atol=1e-2, rtol=1e-2), (
        f"max abs diff {jnp.max(jnp.abs(out - ref))}"
    )
    print("KERNEL_OK")
</pallas_src>

<mosaic_0001>
module attributes {stable_mosaic.version = 11 : i64} {
  func.func @discriminator_kernel(%arg0: i32, %arg1: memref<8x32xbf16, #tpu.memory_space<vmem>>, %arg2: memref<32x2048xbf16, #tpu.memory_space<vmem>>, %arg3: memref<1x2048xf32, #tpu.memory_space<vmem>>, %arg4: memref<2048x1024xbf16, #tpu.memory_space<vmem>>, %arg5: memref<1x1024xf32, #tpu.memory_space<vmem>>, %arg6: memref<1024x512xbf16, #tpu.memory_space<vmem>>, %arg7: memref<1x512xf32, #tpu.memory_space<vmem>>, %arg8: memref<1x512xf32, #tpu.memory_space<vmem>>, %arg9: memref<1x1xf32, #tpu.memory_space<vmem>>, %arg10: memref<1x1x8xf32, #tpu.memory_space<vmem>>) attributes {dimension_semantics = [#tpu.dimension_semantics<parallel>], iteration_bounds = array<i64: 1>, scalar_prefetch = 0 : i64, scratch_operands = 0 : i64, tpu.core_type = #tpu.core_type<tc>, window_params = [{transform_indices = @transform_0, window_bounds = array<i64: 8, 32>}, {pipeline_mode = #tpu.pipeline_mode<synchronous>, transform_indices = @transform_1, window_bounds = array<i64: 32, 2048>}, {pipeline_mode = #tpu.pipeline_mode<synchronous>, transform_indices = @transform_2, window_bounds = array<i64: 1, 2048>}, {pipeline_mode = #tpu.pipeline_mode<synchronous>, transform_indices = @transform_3, window_bounds = array<i64: 2048, 1024>}, {pipeline_mode = #tpu.pipeline_mode<synchronous>, transform_indices = @transform_4, window_bounds = array<i64: 1, 1024>}, {pipeline_mode = #tpu.pipeline_mode<synchronous>, transform_indices = @transform_5, window_bounds = array<i64: 1024, 512>}, {pipeline_mode = #tpu.pipeline_mode<synchronous>, transform_indices = @transform_6, window_bounds = array<i64: 1, 512>}, {pipeline_mode = #tpu.pipeline_mode<synchronous>, transform_indices = @transform_7, window_bounds = array<i64: 1, 512>}, {pipeline_mode = #tpu.pipeline_mode<synchronous>, transform_indices = @transform_8, window_bounds = array<i64: 1, 1>}, {transform_indices = @transform_9, window_bounds = array<i64: 1, 1, 8>}]} {
    %c0 = arith.constant 0 : index
    %c0_0 = arith.constant 0 : index
    %0 = vector.load %arg1[%c0, %c0_0] : memref<8x32xbf16, #tpu.memory_space<vmem>>, vector<8x32xbf16>
    %c0_1 = arith.constant 0 : index
    %c0_2 = arith.constant 0 : index
    %1 = vector.load %arg2[%c0_1, %c0_2] : memref<32x2048xbf16, #tpu.memory_space<vmem>>, vector<32x2048xbf16>
    %cst = arith.constant dense<0.000000e+00> : vector<8x2048xf32>
    %2 = tpu.matmul %0, %1, %cst {dimension_numbers = #tpu.dot_dimension_numbers<[1], [0], [0], [1], [0, 0, 1, 1], [], []>} : vector<8x32xbf16>, vector<32x2048xbf16>, vector<8x2048xf32> -> vector<8x2048xf32>
    %c0_3 = arith.constant 0 : index
    %c0_4 = arith.constant 0 : index
    %3 = vector.load %arg3[%c0_3, %c0_4] : memref<1x2048xf32, #tpu.memory_space<vmem>>, vector<1x2048xf32>
    %4 = vector.broadcast %3 : vector<1x2048xf32> to vector<8x2048xf32>
    %5 = arith.addf %2, %4 : vector<8x2048xf32>
    %cst_5 = arith.constant 0.000000e+00 : f32
    %6 = vector.broadcast %cst_5 : f32 to vector<8x2048xf32>
    %7 = arith.cmpf ogt, %5, %6 : vector<8x2048xf32>
    %cst_6 = arith.constant 2.000000e-01 : f32
    %8 = vector.broadcast %cst_6 : f32 to vector<8x2048xf32>
    %9 = arith.mulf %8, %5 : vector<8x2048xf32>
    %10 = arith.select %7, %5, %9 : vector<8x2048xi1>, vector<8x2048xf32>
    %11 = arith.truncf %10 : vector<8x2048xf32> to vector<8x2048xbf16>
    %c0_7 = arith.constant 0 : index
    %c0_8 = arith.constant 0 : index
    %12 = vector.load %arg4[%c0_7, %c0_8] : memref<2048x1024xbf16, #tpu.memory_space<vmem>>, vector<2048x1024xbf16>
    %cst_9 = arith.constant dense<0.000000e+00> : vector<8x1024xf32>
    %13 = tpu.matmul %11, %12, %cst_9 {dimension_numbers = #tpu.dot_dimension_numbers<[1], [0], [0], [1], [0, 0, 1, 1], [], []>} : vector<8x2048xbf16>, vector<2048x1024xbf16>, vector<8x1024xf32> -> vector<8x1024xf32>
    %c0_10 = arith.constant 0 : index
    %c0_11 = arith.constant 0 : index
    %14 = vector.load %arg5[%c0_10, %c0_11] : memref<1x1024xf32, #tpu.memory_space<vmem>>, vector<1x1024xf32>
    %15 = vector.broadcast %14 : vector<1x1024xf32> to vector<8x1024xf32>
    %16 = arith.addf %13, %15 : vector<8x1024xf32>
    %cst_12 = arith.constant 0.000000e+00 : f32
    %17 = vector.broadcast %cst_12 : f32 to vector<8x1024xf32>
    %18 = arith.cmpf ogt, %16, %17 : vector<8x1024xf32>
    %cst_13 = arith.constant 2.000000e-01 : f32
    %19 = vector.broadcast %cst_13 : f32 to vector<8x1024xf32>
    %20 = arith.mulf %19, %16 : vector<8x1024xf32>
    %21 = arith.select %18, %16, %20 : vector<8x1024xi1>, vector<8x1024xf32>
    %22 = arith.truncf %21 : vector<8x1024xf32> to vector<8x1024xbf16>
    %c0_14 = arith.constant 0 : index
    %c0_15 = arith.constant 0 : index
    %23 = vector.load %arg6[%c0_14, %c0_15] : memref<1024x512xbf16, #tpu.memory_space<vmem>>, vector<1024x512xbf16>
    %cst_16 = arith.constant dense<0.000000e+00> : vector<8x512xf32>
    %24 = tpu.matmul %22, %23, %cst_16 {dimension_numbers = #tpu.dot_dimension_numbers<[1], [0], [0], [1], [0, 0, 1, 1], [], []>} : vector<8x1024xbf16>, vector<1024x512xbf16>, vector<8x512xf32> -> vector<8x512xf32>
    %c0_17 = arith.constant 0 : index
    %c0_18 = arith.constant 0 : index
    %25 = vector.load %arg7[%c0_17, %c0_18] : memref<1x512xf32, #tpu.memory_space<vmem>>, vector<1x512xf32>
    %26 = vector.broadcast %25 : vector<1x512xf32> to vector<8x512xf32>
    %27 = arith.addf %24, %26 : vector<8x512xf32>
    %cst_19 = arith.constant 0.000000e+00 : f32
    %28 = vector.broadcast %cst_19 : f32 to vector<8x512xf32>
    %29 = arith.cmpf ogt, %27, %28 : vector<8x512xf32>
    %cst_20 = arith.constant 2.000000e-01 : f32
    %30 = vector.broadcast %cst_20 : f32 to vector<8x512xf32>
    %31 = arith.mulf %30, %27 : vector<8x512xf32>
    %32 = arith.select %29, %27, %31 : vector<8x512xi1>, vector<8x512xf32>
    %c0_21 = arith.constant 0 : index
    %c0_22 = arith.constant 0 : index
    %33 = vector.load %arg8[%c0_21, %c0_22] : memref<1x512xf32, #tpu.memory_space<vmem>>, vector<1x512xf32>
    %cst_23 = arith.constant dense<0.000000e+00> : vector<1x8xf32>
    %34 = tpu.matmul %33, %32, %cst_23 {dimension_numbers = #tpu.dot_dimension_numbers<[1], [1], [0], [0], [0, 0, 1, 0], [], []>} : vector<1x512xf32>, vector<8x512xf32>, vector<1x8xf32> -> vector<1x8xf32>
    %c0_24 = arith.constant 0 : index
    %c0_25 = arith.constant 0 : index
    %35 = vector.load %arg9[%c0_24, %c0_25] : memref<1x1xf32, #tpu.memory_space<vmem>>, vector<1x1xf32>
    %36 = vector.broadcast %35 : vector<1x1xf32> to vector<1x8xf32>
    %37 = arith.addf %34, %36 : vector<1x8xf32>
    %c0_26 = arith.constant 0 : index
    %c0_27 = arith.constant 0 : index
    %c0_28 = arith.constant 0 : index
    %38 = vector.load %arg10[%c0_26, %c0_27, %c0_28] : memref<1x1x8xf32, #tpu.memory_space<vmem>>, vector<1x1x8xf32>
    %39 = vector.shape_cast %38 : vector<1x1x8xf32> to vector<1x8xf32>
    %40 = vector.shape_cast %37 : vector<1x8xf32> to vector<1x1x8xf32>
    tpu.vector_store %arg10[%c0_26, %c0_27, %c0_28], %40 {strides = array<i32>} : memref<1x1x8xf32, #tpu.memory_space<vmem>>, vector<1x1x8xf32>,
    return
  }
  func.func @transform_0(%arg0: i32) -> (i32, i32) {
    %c0_i32 = arith.constant 0 : i32
    %c0_i32_0 = arith.constant 0 : i32
    return %arg0, %c0_i32 : i32, i32
  }
  func.func @transform_1(%arg0: i32) -> (i32, i32) {
    %c0_i32 = arith.constant 0 : i32
    %c0_i32_0 = arith.constant 0 : i32
    %c0_i32_1 = arith.constant 0 : i32
    return %c0_i32, %c0_i32_0 : i32, i32
  }
  func.func @transform_2(%arg0: i32) -> (i32, i32) {
    %c0_i32 = arith.constant 0 : i32
    %c0_i32_0 = arith.constant 0 : i32
    %c0_i32_1 = arith.constant 0 : i32
    return %c0_i32, %c0_i32_0 : i32, i32
  }
  func.func @transform_3(%arg0: i32) -> (i32, i32) {
    %c0_i32 = arith.constant 0 : i32
    %c0_i32_0 = arith.constant 0 : i32
    %c0_i32_1 = arith.constant 0 : i32
    return %c0_i32, %c0_i32_0 : i32, i32
  }
  func.func @transform_4(%arg0: i32) -> (i32, i32) {
    %c0_i32 = arith.constant 0 : i32
    %c0_i32_0 = arith.constant 0 : i32
    %c0_i32_1 = arith.constant 0 : i32
    return %c0_i32, %c0_i32_0 : i32, i32
  }
  func.func @transform_5(%arg0: i32) -> (i32, i32) {
    %c0_i32 = arith.constant 0 : i32
    %c0_i32_0 = arith.constant 0 : i32
    %c0_i32_1 = arith.constant 0 : i32
    return %c0_i32, %c0_i32_0 : i32, i32
  }
  func.func @transform_6(%arg0: i32) -> (i32, i32) {
    %c0_i32 = arith.constant 0 : i32
    %c0_i32_0 = arith.constant 0 : i32
    %c0_i32_1 = arith.constant 0 : i32
    return %c0_i32, %c0_i32_0 : i32, i32
  }
  func.func @transform_7(%arg0: i32) -> (i32, i32) {
    %c0_i32 = arith.constant 0 : i32
    %c0_i32_0 = arith.constant 0 : i32
    %c0_i32_1 = arith.constant 0 : i32
    return %c0_i32, %c0_i32_0 : i32, i32
  }
  func.func @transform_8(%arg0: i32) -> (i32, i32) {
    %c0_i32 = arith.constant 0 : i32
    %c0_i32_0 = arith.constant 0 : i32
    %c0_i32_1 = arith.constant 0 : i32
    return %c0_i32, %c0_i32_0 : i32, i32
  }
  func.func @transform_9(%arg0: i32) -> (i32, i32, i32) {
    %c0_i32 = arith.constant 0 : i32
    %c0_i32_0 = arith.constant 0 : i32
    %c0_i32_1 = arith.constant 0 : i32
    return %arg0, %c0_i32, %c0_i32_0 : i32, i32, i32
  }
}

</mosaic_0001>

<llo_original>
// kernel: discriminator_forward.1
$region0: #{discriminator_forward.1}
  #allocation0 [shape = 'u32[]', space=smem, size = 0x4, offset = 0x4, fixed_abs, tag = 'smem constant byte address 0x4 - core index']
  #allocation1 [shape = 'u32[144,128]{1,0:T(1,128)}', space=vmem, size = 0x12000, scoped, tag = 'internal scratch']
  #allocation2 [shape = 'f32[1,1]{1,0:T(1,128)S(1)}', space=vmem, size = 0x200, scoped, tag = 'scoped memory for discriminator_forward.1']
  %s0 = inlined_call_operand.vmem [shape: bf16[8,32], index: 0, kind: input, shape index: {}]
  %s1 = inlined_call_operand.hbm [shape: bf16[32,2048], index: 1, kind: input, shape index: {}]
  %s2 = inlined_call_operand.hbm [shape: f32[1,2048], index: 2, kind: input, shape index: {}]
  %s3 = inlined_call_operand.hbm [shape: bf16[2048,1024], index: 3, kind: input, shape index: {}]
  %s4 = inlined_call_operand.hbm [shape: f32[1,1024], index: 4, kind: input, shape index: {}]
  %s5 = inlined_call_operand.hbm [shape: bf16[1024,512], index: 5, kind: input, shape index: {}]
  %s6 = inlined_call_operand.hbm [shape: f32[1,512], index: 6, kind: input, shape index: {}]
  %s7 = inlined_call_operand.hbm [shape: f32[1,512], index: 7, kind: input, shape index: {}]
  %s8 = inlined_call_operand.<no memory space> [shape: f32[1,1], index: 8, kind: input, shape index: {}]
  %s9 = inlined_call_operand.hbm [shape: f32[1,1,8], index: 9, kind: output, shape index: {}]
  %s10 = sld [smem:[#allocation0]]
  $region74: #{discriminator_forward.1} parent=0
    _
  %s12 = ssub.s32 1, %s10
  %s13 = scalar_select 0, %s12, %s10
  %v14 = vstv %s8
  %15 = vst [vmem:[#allocation2] sm:$0x1] %v14
  $region1: #{discriminator_forward.1} parent=0
    #allocation3 [shape = 'u8[131072]{0}', space=vmem, size = 0x20000, scoped, tag = 'input window, operand 1, single buffered']
    #allocation4 [shape = 's32[1]{0}', space=sflag, size = 0x4, scoped, tag = 'scoped memory for discriminator_forward.1']
    #allocation5 [shape = 's32[1]{0}', space=sflag, size = 0x4, scoped, tag = 'scoped memory for discriminator_forward.1']
    #allocation6 [shape = 'u8[8192]{0}', space=vmem, size = 0x2000, scoped, tag = 'input window, operand 2, single buffered']
    #allocation7 [shape = 's32[1]{0}', space=sflag, size = 0x4, scoped, tag = 'scoped memory for discriminator_forward.1']
    #allocation8 [shape = 'u8[4194304]{0}', space=vmem, size = 0x400000, scoped, tag = 'input window, operand 3, single buffered']
    #allocation9 [shape = 'u8[4096]{0}', space=vmem, size = 0x1000, scoped, tag = 'input window, operand 4, single buffered']
    #allocation10 [shape = 's32[1]{0}', space=sflag, size = 0x4, scoped, tag = 'scoped memory for discriminator_forward.1']
    #allocation11 [shape = 'u8[1048576]{0}', space=vmem, size = 0x100000, scoped, tag = 'input window, operand 5, single buffered']
    #allocation12 [shape = 'u8[2048]{0}', space=vmem, size = 0x800, scoped, tag = 'input window, operand 6, single buffered']
    #allocation13 [shape = 's32[1]{0}', space=sflag, size = 0x4, scoped, tag = 'scoped memory for discriminator_forward.1']
    #allocation14 [shape = 'u8[2048]{0}', space=vmem, size = 0x800, scoped, tag = 'input window, operand 7, single buffered']
    #allocation15 [shape = 'u8[512]{0}', space=vmem, size = 0x400, scoped, tag = 'output window, operand 0, single buffered']
    %16 = vsyncpa [#allocation4], 0
    %17 = vsyncpa [#allocation7], 0
    %18 = vsyncpa [#allocation10], 0
    %19 = vsyncpa [#allocation13], 0
    %20 = vsyncpa [#allocation5], 0
    // Predicated region
    $region2: #{discriminator_forward.1} parent=1 // pred_check
      _
    $region3: #{discriminator_forward.1} parent=1 // pred_check_branch
      %22 = sbr.rel (0) target = $region5
    $region4: #{discriminator_forward.1} parent=1 // pred_region
      _
    $region5: #{discriminator_forward.1} parent=1 // pred_fallthru
      _
    // Predicated region
    $region6: #{discriminator_forward.1} parent=1 // pred_check
      _
    $region7: #{discriminator_forward.1} parent=1 // pred_check_branch
      %24 = sbr.rel (0) target = $region9
    $region8: #{discriminator_forward.1} parent=1 // pred_region
      %s26 = ssub.s32 4096, 4096
      %27 = vsyncadd [#allocation4], %s26
      %s28 = sshll.u32 [#allocation3], 4
      %s29 = int_to_ptr.vmem [resolvable:$true] %s28
      %34 = dma.hbm_to_vmem [thread:$0]  %s1, 4096, %s29, [#allocation4], 1024, 1024, 64
    $region9: #{discriminator_forward.1} parent=1 // pred_fallthru
      _
    // Predicated region
    $region10: #{discriminator_forward.1} parent=1 // pred_check
      _
    $region11: #{discriminator_forward.1} parent=1 // pred_check_branch
      %36 = sbr.rel (0) target = $region13
    $region12: #{discriminator_forward.1} parent=1 // pred_region
      %s38 = ssub.s32 256, 256
      %39 = vsyncadd [#allocation7], %s38
      %s41 = sshll.u32 [#allocation6], 4
      %s42 = int_to_ptr.vmem [resolvable:$true] %s41
      %44 = dma.hbm_to_vmem [thread:$0]  %s2, 256, %s42, [#allocation7]
    $region13: #{discriminator_forward.1} parent=1 // pred_fallthru
      _
    // Predicated region
    $region14: #{discriminator_forward.1} parent=1 // pred_check
      _
    $region15: #{discriminator_forward.1} parent=1 // pred_check_branch
      %46 = sbr.rel (0) target = $region17
    $region16: #{discriminator_forward.1} parent=1 // pred_region
      %s48 = ssub.s32 131072, 131072
      %49 = vsyncadd [#allocation7], %s48
      %s50 = sshll.u32 [#allocation8], 4
      %s51 = int_to_ptr.vmem [resolvable:$true] %s50
      %56 = dma.hbm_to_vmem [thread:$0]  %s3, 131072, %s51, [#allocation7], 512, 512, 32
    $region17: #{discriminator_forward.1} parent=1 // pred_fallthru
      _
    // Predicated region
    $region18: #{discriminator_forward.1} parent=1 // pred_check
      _
    $region19: #{discriminator_forward.1} parent=1 // pred_check_branch
      %58 = sbr.rel (0) target = $region21
    $region20: #{discriminator_forward.1} parent=1 // pred_region
      %s60 = ssub.s32 128, 128
      %61 = vsyncadd [#allocation10], %s60
      %s63 = sshll.u32 [#allocation9], 4
      %s64 = int_to_ptr.vmem [resolvable:$true] %s63
      %66 = dma.hbm_to_vmem [thread:$0]  %s4, 128, %s64, [#allocation10]
    $region21: #{discriminator_forward.1} parent=1 // pred_fallthru
      _
    // Predicated region
    $region22: #{discriminator_forward.1} parent=1 // pred_check
      _
    $region23: #{discriminator_forward.1} parent=1 // pred_check_branch
      %68 = sbr.rel (0) target = $region25
    $region24: #{discriminator_forward.1} parent=1 // pred_region
      %s70 = ssub.s32 32768, 32768
      %71 = vsyncadd [#allocation10], %s70
      %s72 = sshll.u32 [#allocation11], 4
      %s73 = int_to_ptr.vmem [resolvable:$true] %s72
      %78 = dma.hbm_to_vmem [thread:$0]  %s5, 32768, %s73, [#allocation10], 256, 256, 16
    $region25: #{discriminator_forward.1} parent=1 // pred_fallthru
      _
    // Predicated region
    $region26: #{discriminator_forward.1} parent=1 // pred_check
      _
    $region27: #{discriminator_forward.1} parent=1 // pred_check_branch
      %80 = sbr.rel (0) target = $region29
    $region28: #{discriminator_forward.1} parent=1 // pred_region
      %s82 = ssub.s32 64, 64
      %83 = vsyncadd [#allocation13], %s82
      %s85 = sshll.u32 [#allocation12], 4
      %s86 = int_to_ptr.vmem [resolvable:$true] %s85
      %88 = dma.hbm_to_vmem [thread:$0]  %s6, 64, %s86, [#allocation13]
    $region29: #{discriminator_forward.1} parent=1 // pred_fallthru
      _
    // Predicated region
    $region30: #{discriminator_forward.1} parent=1 // pred_check
      _
    $region31: #{discriminator_forward.1} parent=1 // pred_check_branch
      %90 = sbr.rel (0) target = $region33
    $region32: #{discriminator_forward.1} parent=1 // pred_region
      %s92 = ssub.s32 64, 64
      %93 = vsyncadd [#allocation13], %s92
      %s95 = sshll.u32 [#allocation14], 4
      %s96 = int_to_ptr.vmem [resolvable:$true] %s95
      %98 = dma.hbm_to_vmem [thread:$0]  %s7, 64, %s96, [#allocation13]
    $region33: #{discriminator_forward.1} parent=1 // pred_fallthru
      _
    // Predicated region
    $region34: #{discriminator_forward.1} parent=1 // pred_check
      _
    $region35: #{discriminator_forward.1} parent=1 // pred_check_branch
      %100 = sbr.rel (0) target = $region37
    $region36: #{discriminator_forward.1} parent=1 // pred_region
      _
    $region37: #{discriminator_forward.1} parent=1 // pred_fallthru
      _
    // Predicated region
    $region38: #{discriminator_forward.1} parent=1 // pred_check
      _
    $region39: #{discriminator_forward.1} parent=1 // pred_check_branch
      %102 = sbr.rel (0) target = $region41
    $region40: #{discriminator_forward.1} parent=1 // pred_region
      %103 = dma.done [#allocation4], 4096
    $region41: #{discriminator_forward.1} parent=1 // pred_fallthru
      _
    // Predicated region
    $region42: #{discriminator_forward.1} parent=1 // pred_check
      _
    $region43: #{discriminator_forward.1} parent=1 // pred_check_branch
      %105 = sbr.rel (0) target = $region45
    $region44: #{discriminator_forward.1} parent=1 // pred_region
      %106 = dma.done [#allocation7], 256
    $region45: #{discriminator_forward.1} parent=1 // pred_fallthru
      _
    // Predicated region
    $region46: #{discriminator_forward.1} parent=1 // pred_check
      _
    $region47: #{discriminator_forward.1} parent=1 // pred_check_branch
      %108 = sbr.rel (0) target = $region49
    $region48: #{discriminator_forward.1} parent=1 // pred_region
      %109 = dma.done [#allocation7], 131072
    $region49: #{discriminator_forward.1} parent=1 // pred_fallthru
      _
    // Predicated region
    $region50: #{discriminator_forward.1} parent=1 // pred_check
      _
    $region51: #{discriminator_forward.1} parent=1 // pred_check_branch
      %111 = sbr.rel (0) target = $region53
    $region52: #{discriminator_forward.1} parent=1 // pred_region
      %112 = dma.done [#allocation10], 128
    $region53: #{discriminator_forward.1} parent=1 // pred_fallthru
      _
    // Predicated region
    $region54: #{discriminator_forward.1} parent=1 // pred_check
      _
    $region55: #{discriminator_forward.1} parent=1 // pred_check_branch
      %114 = sbr.rel (0) target = $region57
    $region56: #{discriminator_forward.1} parent=1 // pred_region
      %115 = dma.done [#allocation10], 32768
    $region57: #{discriminator_forward.1} parent=1 // pred_fallthru
      _
    // Predicated region
    $region58: #{discriminator_forward.1} parent=1 // pred_check
      _
    $region59: #{discriminator_forward.1} parent=1 // pred_check_branch
      %117 = sbr.rel (0) target = $region61
    $region60: #{discriminator_forward.1} parent=1 // pred_region
      %118 = dma.done [#allocation13], 64
    $region61: #{discriminator_forward.1} parent=1 // pred_fallthru
      _
    // Predicated region
    $region62: #{discriminator_forward.1} parent=1 // pred_check
      _
    $region63: #{discriminator_forward.1} parent=1 // pred_check_branch
      %120 = sbr.rel (0) target = $region65
    $region64: #{discriminator_forward.1} parent=1 // pred_region
      %121 = dma.done [#allocation13], 64
    $region65: #{discriminator_forward.1} parent=1 // pred_fallthru
      _
    %v123 = vld [vmem:[%s0] sm:$0xf]
    %v124 = vld [vmem:[#allocation3] sm:$0xff]
    %v125 = vld [vmem:[#allocation3 + $0x8] sm:$0xff]
    %v126 = vld [vmem:[#allocation3 + $0x10] sm:$0xff]
    %v127 = vld [vmem:[#allocation3 + $0x18] sm:$0xff]
    %v128 = vld [vmem:[#allocation3 + $0x20] sm:$0xff]
    %v129 = vld [vmem:[#allocation3 + $0x28] sm:$0xff]
    %v130 = vld [vmem:[#allocation3 + $0x30] sm:$0xff]
    %v131 = vld [vmem:[#allocation3 + $0x38] sm:$0xff]
    %v132 = vld [vmem:[#allocation3 + $0x40] sm:$0xff]
    %v133 = vld [vmem:[#allocation3 + $0x48] sm:$0xff]
    %v134 = vld [vmem:[#allocation3 + $0x50] sm:$0xff]
    %v135 = vld [vmem:[#allocation3 + $0x58] sm:$0xff]
    %v136 = vld [vmem:[#allocation3 + $0x60] sm:$0xff]
    %v137 = vld [vmem:[#allocation3 + $0x68] sm:$0xff]
    %v138 = vld [vmem:[#allocation3 + $0x70] sm:$0xff]
    %v139 = vld [vmem:[#allocation3 + $0x78] sm:$0xff]
    %v140 = vld [vmem:[#allocation3 + $0x80] sm:$0xff]
    %v141 = vld [vmem:[#allocation3 + $0x88] sm:$0xff]
    %v142 = vld [vmem:[#allocation3 + $0x90] sm:$0xff]
    %v143 = vld [vmem:[#allocation3 + $0x98] sm:$0xff]
    %v144 = vld [vmem:[#allocation3 + $0xa0] sm:$0xff]
    %v145 = vld [vmem:[#allocation3 + $0xa8] sm:$0xff]
    %v146 = vld [vmem:[#allocation3 + $0xb0] sm:$0xff]
    %v147 = vld [vmem:[#allocation3 + $0xb8] sm:$0xff]
    %v148 = vld [vmem:[#allocation3 + $0xc0] sm:$0xff]
    %v149 = vld [vmem:[#allocation3 + $0xc8] sm:$0xff]
    %v150 = vld [vmem:[#allocation3 + $0xd0] sm:$0xff]
    %v151 = vld [vmem:[#allocation3 + $0xd8] sm:$0xff]
    %v152 = vld [vmem:[#allocation3 + $0xe0] sm:$0xff]
    %v153 = vld [vmem:[#allocation3 + $0xe8] sm:$0xff]
    %v154 = vld [vmem:[#allocation3 + $0xf0] sm:$0xff]
    %v155 = vld [vmem:[#allocation3 + $0xf8] sm:$0xff]
    %v156 = vld [vmem:[#allocation6] sm:$0xff]
    %v157 = vld [vmem:[#allocation6 + $0x8] sm:$0xff]
    %v160 = vlaneseq
    %v161 = vshrl.u32 %v160, 7
    %v162 = vsub.s32 0, %v161
    %v163 = vrot.slane %v156, %v162
    %v164 = vlaneseq
    %v165 = vshrl.u32 %v164, 7
    %v166 = vsub.s32 1, %v165
    %v167 = vrot.slane %v156, %v166
    %v168 = vlaneseq
    %v169 = vshrl.u32 %v168, 7
    %v170 = vsub.s32 2, %v169
    %v171 = vrot.slane %v156, %v170
    %v172 = vlaneseq
    %v173 = vshrl.u32 %v172, 7
    %v174 = vsub.s32 3, %v173
    %v175 = vrot.slane %v156, %v174
    %v176 = vlaneseq
    %v177 = vshrl.u32 %v176, 7
    %v178 = vsub.s32 4, %v177
    %v179 = vrot.slane %v156, %v178
    %v180 = vlaneseq
    %v181 = vshrl.u32 %v180, 7
    %v182 = vsub.s32 5, %v181
    %v183 = vrot.slane %v156, %v182
    %v184 = vlaneseq
    %v185 = vshrl.u32 %v184, 7
    %v186 = vsub.s32 6, %v185
    %v187 = vrot.slane %v156, %v186
    %v188 = vlaneseq
    %v189 = vshrl.u32 %v188, 7
    %v190 = vsub.s32 7, %v189
    %v191 = vrot.slane %v156, %v190
    %v192 = vlaneseq
    %v193 = vshrl.u32 %v192, 7
    %v194 = vsub.s32 0, %v193
    %v195 = vrot.slane %v157, %v194
    %v196 = vlaneseq
    %v197 = vshrl.u32 %v196, 7
    %v198 = vsub.s32 1, %v197
    %v199 = vrot.slane %v157, %v198
    %v200 = vlaneseq
    %v201 = vshrl.u32 %v200, 7
    %v202 = vsub.s32 2, %v201
    %v203 = vrot.slane %v157, %v202
    %v204 = vlaneseq
    %v205 = vshrl.u32 %v204, 7
    %v206 = vsub.s32 3, %v205
    %v207 = vrot.slane %v157, %v206
    %v208 = vlaneseq
    %v209 = vshrl.u32 %v208, 7
    %v210 = vsub.s32 4, %v209
    %v211 = vrot.slane %v157, %v210
    %v212 = vlaneseq
    %v213 = vshrl.u32 %v212, 7
    %v214 = vsub.s32 5, %v213
    %v215 = vrot.slane %v157, %v214
    %v216 = vlaneseq
    %v217 = vshrl.u32 %v216, 7
    %v218 = vsub.s32 6, %v217
    %v219 = vrot.slane %v157, %v218
    %v220 = vlaneseq
    %v221 = vshrl.u32 %v220, 7
    %v222 = vsub.s32 7, %v221
    %v223 = vrot.slane %v157, %v222
    %v272 = vunpack.c.l.b16 %v124
    %v273 = vunpack.c.h.b16 %v124
    %v274 = vunpack.c.l.b16 %v125
    %v275 = vunpack.c.h.b16 %v125
    %v276 = vunpack.c.l.b16 %v126
    %v277 = vunpack.c.h.b16 %v126
    %v278 = vunpack.c.l.b16 %v127
    %v279 = vunpack.c.h.b16 %v127
    %v280 = vunpack.c.l.b16 %v128
    %v281 = vunpack.c.h.b16 %v128
    %v282 = vunpack.c.l.b16 %v129
    %v283 = vunpack.c.h.b16 %v129
    %v284 = vunpack.c.l.b16 %v130
    %v285 = vunpack.c.h.b16 %v130
    %v286 = vunpack.c.l.b16 %v131
    %v287 = vunpack.c.h.b16 %v131
    %v288 = vunpack.c.l.b16 %v132
    %v289 = vunpack.c.h.b16 %v132
    %v290 = vunpack.c.l.b16 %v133
    %v291 = vunpack.c.h.b16 %v133
    %v292 = vunpack.c.l.b16 %v134
    %v293 = vunpack.c.h.b16 %v134
    %v294 = vunpack.c.l.b16 %v135
    %v295 = vunpack.c.h.b16 %v135
    %v296 = vunpack.c.l.b16 %v136
    %v297 = vunpack.c.h.b16 %v136
    %v298 = vunpack.c.l.b16 %v137
    %v299 = vunpack.c.h.b16 %v137
    %v300 = vunpack.c.l.b16 %v138
    %v301 = vunpack.c.h.b16 %v138
    %v302 = vunpack.c.l.b16 %v139
    %v303 = vunpack.c.h.b16 %v139
    %v304 = vunpack.c.l.b16 %v140
    %v305 = vunpack.c.h.b16 %v140
    %v306 = vunpack.c.l.b16 %v141
    %v307 = vunpack.c.h.b16 %v141
    %v308 = vunpack.c.l.b16 %v142
    %v309 = vunpack.c.h.b16 %v142
    %v310 = vunpack.c.l.b16 %v143
    %v311 = vunpack.c.h.b16 %v143
    %v312 = vunpack.c.l.b16 %v144
    %v313 = vunpack.c.h.b16 %v144
    %v314 = vunpack.c.l.b16 %v145
    %v315 = vunpack.c.h.b16 %v145
    %v316 = vunpack.c.l.b16 %v146
    %v317 = vunpack.c.h.b16 %v146
    %v318 = vunpack.c.l.b16 %v147
    %v319 = vunpack.c.h.b16 %v147
    %v320 = vunpack.c.l.b16 %v148
    %v321 = vunpack.c.h.b16 %v148
    %v322 = vunpack.c.l.b16 %v149
    %v323 = vunpack.c.h.b16 %v149
    %v324 = vunpack.c.l.b16 %v150
    %v325 = vunpack.c.h.b16 %v150
    %v326 = vunpack.c.l.b16 %v151
    %v327 = vunpack.c.h.b16 %v151
    %v328 = vunpack.c.l.b16 %v152
    %v329 = vunpack.c.h.b16 %v152
    %v330 = vunpack.c.l.b16 %v153
    %v331 = vunpack.c.h.b16 %v153
    %v332 = vunpack.c.l.b16 %v154
    %v333 = vunpack.c.h.b16 %v154
    %v334 = vunpack.c.l.b16 %v155
    %v335 = vunpack.c.h.b16 %v155
    %v336 = vpack.c.b16 %v288, %v272
    %v337 = vpack.c.b16 %v289, %v273
    %v338 = vpack.c.b16 %v290, %v274
    %v339 = vpack.c.b16 %v291, %v275
    %v340 = vpack.c.b16 %v292, %v276
    %v341 = vpack.c.b16 %v293, %v277
    %v342 = vpack.c.b16 %v294, %v278
    %v343 = vpack.c.b16 %v295, %v279
    %v344 = vpack.c.b16 %v296, %v280
    %v345 = vpack.c.b16 %v297, %v281
    %v346 = vpack.c.b16 %v298, %v282
    %v347 = vpack.c.b16 %v299, %v283
    %v348 = vpack.c.b16 %v300, %v284
    %v349 = vpack.c.b16 %v301, %v285
    %v350 = vpack.c.b16 %v302, %v286
    %v351 = vpack.c.b16 %v303, %v287
    %v352 = vpack.c.b16 %v320, %v304
    %v353 = vpack.c.b16 %v321, %v305
    %v354 = vpack.c.b16 %v322, %v306
    %v355 = vpack.c.b16 %v323, %v307
    %v356 = vpack.c.b16 %v324, %v308
    %v357 = vpack.c.b16 %v325, %v309
    %v358 = vpack.c.b16 %v326, %v310
    %v359 = vpack.c.b16 %v327, %v311
    %v360 = vpack.c.b16 %v328, %v312
    %v361 = vpack.c.b16 %v329, %v313
    %v362 = vpack.c.b16 %v330, %v314
    %v363 = vpack.c.b16 %v331, %v315
    %v364 = vpack.c.b16 %v332, %v316
    %v365 = vpack.c.b16 %v333, %v317
    %v366 = vpack.c.b16 %v334, %v318
    %v367 = vpack.c.b16 %v335, %v319
    %vm400 = vcmask 261120
    %v402 = vsel %vm400, %v123, 0
    %404 = vmatprep.subr.bf16.mxu0 0
    %405 = vmatpush1.bf16.msra.mxu0 0
    %406 = vmatprep.subr.bf16.mxu0 0
    %407 = vmatpush1.bf16.msra.mxu0 0
    %408 = vmatprep.subr.bf16.mxu0 0
    %409 = vmatpush1.bf16.msra.mxu0 0
    %410 = vmatprep.subr.bf16.mxu0 0
    %411 = vmatpush1.bf16.msra.mxu0 0
    %412 = vmatprep.subr.bf16.mxu0 0
    %413 = vmatpush1.bf16.msra.mxu0 0
    %414 = vmatprep.subr.bf16.mxu0 0
    %415 = vmatpush1.bf16.msra.mxu0 0
    %416 = vmatprep.subr.bf16.mxu0 %v353
    %417 = vmatpush1.bf16.msra.mxu0 %v352
    %418 = vmatprep.subr.bf16.mxu0 %v337
    %419 = vmatpush1.bf16.msra.mxu0 %v336
    %420 = vmatprep.subr.bf16.mxu0 0
    %421 = vmatpush2.bf16.msra.mxu0 0
    %422 = vmatprep.subr.bf16.mxu0 0
    %423 = vmatpush2.bf16.msra.mxu0 0
    %424 = vmatprep.subr.bf16.mxu0 0
    %425 = vmatpush2.bf16.msra.mxu0 0
    %426 = vmatprep.subr.bf16.mxu0 0
    %427 = vmatpush2.bf16.msra.mxu0 0
    %428 = vmatprep.subr.bf16.mxu0 0
    %429 = vmatpush2.bf16.msra.mxu0 0
    %430 = vmatprep.subr.bf16.mxu0 0
    %431 = vmatpush2.bf16.msra.mxu0 0
    %432 = vmatprep.subr.bf16.mxu0 0
    %433 = vmatpush2.bf16.msra.mxu0 0
    %434 = vmatprep.subr.bf16.mxu0 0
    %435 = vmatpush2.bf16.msra.mxu0 0
    %436 = vmatprep.mubr.bf16.mxu0 0
    %437 = vmatmul.mubr.bf16.gmra.mxu0 %v402
    %v438 = vpop.f32.mrf.mxu0
    %v439 = vadd.f32 %v163, %v438
    %v440 = vpop.f32.mrf.mxu0
    %v441 = vadd.f32 %v167, %v440
    %v442 = vpop.f32.mrf.mxu0
    %v443 = vpop.f32.mrf.mxu0
    %444 = vdwg.mxu0
    %445 = vmatprep.subr.bf16.mxu0 0
    %446 = vmatpush1.bf16.msra.mxu0 0
    %447 = vmatprep.subr.bf16.mxu0 0
    %448 = vmatpush1.bf16.msra.mxu0 0
    %449 = vmatprep.subr.bf16.mxu0 0
    %450 = vmatpush1.bf16.msra.mxu0 0
    %451 = vmatprep.subr.bf16.mxu0 0
    %452 = vmatpush1.bf16.msra.mxu0 0
    %453 = vmatprep.subr.bf16.mxu0 0
    %454 = vmatpush1.bf16.msra.mxu0 0
    %455 = vmatprep.subr.bf16.mxu0 0
    %456 = vmatpush1.bf16.msra.mxu0 0
    %457 = vmatprep.subr.bf16.mxu0 %v355
    %458 = vmatpush1.bf16.msra.mxu0 %v354
    %459 = vmatprep.subr.bf16.mxu0 %v339
    %460 = vmatpush1.bf16.msra.mxu0 %v338
    %461 = vmatprep.subr.bf16.mxu0 0
    %462 = vmatpush2.bf16.msra.mxu0 0
    %463 = vmatprep.subr.bf16.mxu0 0
    %464 = vmatpush2.bf16.msra.mxu0 0
    %465 = vmatprep.subr.bf16.mxu0 0
    %466 = vmatpush2.bf16.msra.mxu0 0
    %467 = vmatprep.subr.bf16.mxu0 0
    %468 = vmatpush2.bf16.msra.mxu0 0
    %469 = vmatprep.subr.bf16.mxu0 0
    %470 = vmatpush2.bf16.msra.mxu0 0
    %471 = vmatprep.subr.bf16.mxu0 0
    %472 = vmatpush2.bf16.msra.mxu0 0
    %473 = vmatprep.subr.bf16.mxu0 0
    %474 = vmatpush2.bf16.msra.mxu0 0
    %475 = vmatprep.subr.bf16.mxu0 0
    %476 = vmatpush2.bf16.msra.mxu0 0
    %477 = vmatprep.mubr.bf16.mxu0 0
    %478 = vmatmul.mubr.bf16.gmra.mxu0 %v402
    %v479 = vpop.f32.mrf.mxu0
    %v480 = vadd.f32 %v171, %v479
    %v481 = vpop.f32.mrf.mxu0
    %v482 = vadd.f32 %v175, %v481
    %v483 = vpop.f32.mrf.mxu0
    %v484 = vpop.f32.mrf.mxu0
    %485 = vdwg.mxu0
    %486 = vmatprep.subr.bf16.mxu0 0
    %487 = vmatpush1.bf16.msra.mxu0 0
    %488 = vmatprep.subr.bf16.mxu0 0
    %489 = vmatpush1.bf16.msra.mxu0 0
    %490 = vmatprep.subr.bf16.mxu0 0
    %491 = vmatpush1.bf16.msra.mxu0 0
    %492 = vmatprep.subr.bf16.mxu0 0
    %493 = vmatpush1.bf16.msra.mxu0 0
    %494 = vmatprep.subr.bf16.mxu0 0
    %495 = vmatpush1.bf16.msra.mxu0 0
    %496 = vmatprep.subr.bf16.mxu0 0
    %497 = vmatpush1.bf16.msra.mxu0 0
    %498 = vmatprep.subr.bf16.mxu0 %v357
    %499 = vmatpush1.bf16.msra.mxu0 %v356
    %500 = vmatprep.subr.bf16.mxu0 %v341
    %501 = vmatpush1.bf16.msra.mxu0 %v340
    %502 = vmatprep.subr.bf16.mxu0 0
    %503 = vmatpush2.bf16.msra.mxu0 0
    %504 = vmatprep.subr.bf16.mxu0 0
    %505 = vmatpush2.bf16.msra.mxu0 0
    %506 = vmatprep.subr.bf16.mxu0 0
    %507 = vmatpush2.bf16.msra.mxu0 0
    %508 = vmatprep.subr.bf16.mxu0 0
    %509 = vmatpush2.bf16.msra.mxu0 0
    %510 = vmatprep.subr.bf16.mxu0 0
    %511 = vmatpush2.bf16.msra.mxu0 0
    %512 = vmatprep.subr.bf16.mxu0 0
    %513 = vmatpush2.bf16.msra.mxu0 0
    %514 = vmatprep.subr.bf16.mxu0 0
    %515 = vmatpush2.bf16.msra.mxu0 0
    %516 = vmatprep.subr.bf16.mxu0 0
    %517 = vmatpush2.bf16.msra.mxu0 0
    %518 = vmatprep.mubr.bf16.mxu0 0
    %519 = vmatmul.mubr.bf16.gmra.mxu0 %v402
    %v520 = vpop.f32.mrf.mxu0
    %v521 = vadd.f32 %v179, %v520
    %v522 = vpop.f32.mrf.mxu0
    %v523 = vadd.f32 %v183, %v522
    %v524 = vpop.f32.mrf.mxu0
    %v525 = vpop.f32.mrf.mxu0
    %526 = vdwg.mxu0
    %527 = vmatprep.subr.bf16.mxu0 0
    %528 = vmatpush1.bf16.msra.mxu0 0
    %529 = vmatprep.subr.bf16.mxu0 0
    %530 = vmatpush1.bf16.msra.mxu0 0
    %531 = vmatprep.subr.bf16.mxu0 0
    %532 = vmatpush1.bf16.msra.mxu0 0
    %533 = vmatprep.subr.bf16.mxu0 0
    %534 = vmatpush1.bf16.msra.mxu0 0
    %535 = vmatprep.subr.bf16.mxu0 0
    %536 = vmatpush1.bf16.msra.mxu0 0
    %537 = vmatprep.subr.bf16.mxu0 0
    %538 = vmatpush1.bf16.msra.mxu0 0
    %539 = vmatprep.subr.bf16.mxu0 %v359
    %540 = vmatpush1.bf16.msra.mxu0 %v358
    %541 = vmatprep.subr.bf16.mxu0 %v343
    %542 = vmatpush1.bf16.msra.mxu0 %v342
    %543 = vmatprep.subr.bf16.mxu0 0
    %544 = vmatpush2.bf16.msra.mxu0 0
    %545 = vmatprep.subr.bf16.mxu0 0
    %546 = vmatpush2.bf16.msra.mxu0 0
    %547 = vmatprep.subr.bf16.mxu0 0
    %548 = vmatpush2.bf16.msra.mxu0 0
    %549 = vmatprep.subr.bf16.mxu0 0
    %550 = vmatpush2.bf16.msra.mxu0 0
    %551 = vmatprep.subr.bf16.mxu0 0
    %552 = vmatpush2.bf16.msra.mxu0 0
    %553 = vmatprep.subr.bf16.mxu0 0
    %554 = vmatpush2.bf16.msra.mxu0 0
    %555 = vmatprep.subr.bf16.mxu0 0
    %556 = vmatpush2.bf16.msra.mxu0 0
    %557 = vmatprep.subr.bf16.mxu0 0
    %558 = vmatpush2.bf16.msra.mxu0 0
    %559 = vmatprep.mubr.bf16.mxu0 0
    %560 = vmatmul.mubr.bf16.gmra.mxu0 %v402
    %v561 = vpop.f32.mrf.mxu0
    %v562 = vadd.f32 %v187, %v561
    %v563 = vpop.f32.mrf.mxu0
    %v564 = vadd.f32 %v191, %v563
    %v565 = vpop.f32.mrf.mxu0
    %v566 = vpop.f32.mrf.mxu0
    %567 = vdwg.mxu0
    %568 = vmatprep.subr.bf16.mxu0 0
    %569 = vmatpush1.bf16.msra.mxu0 0
    %570 = vmatprep.subr.bf16.mxu0 0
    %571 = vmatpush1.bf16.msra.mxu0 0
    %572 = vmatprep.subr.bf16.mxu0 0
    %573 = vmatpush1.bf16.msra.mxu0 0
    %574 = vmatprep.subr.bf16.mxu0 0
    %575 = vmatpush1.bf16.msra.mxu0 0
    %576 = vmatprep.subr.bf16.mxu0 0
    %577 = vmatpush1.bf16.msra.mxu0 0
    %578 = vmatprep.subr.bf16.mxu0 0
    %579 = vmatpush1.bf16.msra.mxu0 0
    %580 = vmatprep.subr.bf16.mxu0 %v361
    %581 = vmatpush1.bf16.msra.mxu0 %v360
    %582 = vmatprep.subr.bf16.mxu0 %v345
    %583 = vmatpush1.bf16.msra.mxu0 %v344
    %584 = vmatprep.subr.bf16.mxu0 0
    %585 = vmatpush2.bf16.msra.mxu0 0
    %586 = vmatprep.subr.bf16.mxu0 0
    %587 = vmatpush2.bf16.msra.mxu0 0
    %588 = vmatprep.subr.bf16.mxu0 0
    %589 = vmatpush2.bf16.msra.mxu0 0
    %590 = vmatprep.subr.bf16.mxu0 0
    %591 = vmatpush2.bf16.msra.mxu0 0
    %592 = vmatprep.subr.bf16.mxu0 0
    %593 = vmatpush2.bf16.msra.mxu0 0
    %594 = vmatprep.subr.bf16.mxu0 0
    %595 = vmatpush2.bf16.msra.mxu0 0
    %596 = vmatprep.subr.bf16.mxu0 0
    %597 = vmatpush2.bf16.msra.mxu0 0
    %598 = vmatprep.subr.bf16.mxu0 0
    %599 = vmatpush2.bf16.msra.mxu0 0
    %600 = vmatprep.mubr.bf16.mxu0 0
    %601 = vmatmul.mubr.bf16.gmra.mxu0 %v402
    %v602 = vpop.f32.mrf.mxu0
    %v603 = vadd.f32 %v195, %v602
    %v604 = vpop.f32.mrf.mxu0
    %v605 = vadd.f32 %v199, %v604
    %v606 = vpop.f32.mrf.mxu0
    %v607 = vpop.f32.mrf.mxu0
    %608 = vdwg.mxu0
    %609 = vmatprep.subr.bf16.mxu0 0
    %610 = vmatpush1.bf16.msra.mxu0 0
    %611 = vmatprep.subr.bf16.mxu0 0
    %612 = vmatpush1.bf16.msra.mxu0 0
    %613 = vmatprep.subr.bf16.mxu0 0
    %614 = vmatpush1.bf16.msra.mxu0 0
    %615 = vmatprep.subr.bf16.mxu0 0
    %616 = vmatpush1.bf16.msra.mxu0 0
    %617 = vmatprep.subr.bf16.mxu0 0
    %618 = vmatpush1.bf16.msra.mxu0 0
    %619 = vmatprep.subr.bf16.mxu0 0
    %620 = vmatpush1.bf16.msra.mxu0 0
    %621 = vmatprep.subr.bf16.mxu0 %v363
    %622 = vmatpush1.bf16.msra.mxu0 %v362
    %623 = vmatprep.subr.bf16.mxu0 %v347
    %624 = vmatpush1.bf16.msra.mxu0 %v346
    %625 = vmatprep.subr.bf16.mxu0 0
    %626 = vmatpush2.bf16.msra.mxu0 0
    %627 = vmatprep.subr.bf16.mxu0 0
    %628 = vmatpush2.bf16.msra.mxu0 0
    %629 = vmatprep.subr.bf16.mxu0 0
    %630 = vmatpush2.bf16.msra.mxu0 0
    %631 = vmatprep.subr.bf16.mxu0 0
    %632 = vmatpush2.bf16.msra.mxu0 0
    %633 = vmatprep.subr.bf16.mxu0 0
    %634 = vmatpush2.bf16.msra.mxu0 0
    %635 = vmatprep.subr.bf16.mxu0 0
    %636 = vmatpush2.bf16.msra.mxu0 0
    %637 = vmatprep.subr.bf16.mxu0 0
    %638 = vmatpush2.bf16.msra.mxu0 0
    %639 = vmatprep.subr.bf16.mxu0 0
    %640 = vmatpush2.bf16.msra.mxu0 0
    %641 = vmatprep.mubr.bf16.mxu0 0
    %642 = vmatmul.mubr.bf16.gmra.mxu0 %v402
    %v643 = vpop.f32.mrf.mxu0
    %v644 = vadd.f32 %v203, %v643
    %v645 = vpop.f32.mrf.mxu0
    %v646 = vadd.f32 %v207, %v645
    %v647 = vpop.f32.mrf.mxu0
    %v648 = vpop.f32.mrf.mxu0
    %649 = vdwg.mxu0
    %650 = vmatprep.subr.bf16.mxu0 0
    %651 = vmatpush1.bf16.msra.mxu0 0
    %652 = vmatprep.subr.bf16.mxu0 0
    %653 = vmatpush1.bf16.msra.mxu0 0
    %654 = vmatprep.subr.bf16.mxu0 0
    %655 = vmatpush1.bf16.msra.mxu0 0
    %656 = vmatprep.subr.bf16.mxu0 0
    %657 = vmatpush1.bf16.msra.mxu0 0
    %658 = vmatprep.subr.bf16.mxu0 0
    %659 = vmatpush1.bf16.msra.mxu0 0
    %660 = vmatprep.subr.bf16.mxu0 0
    %661 = vmatpush1.bf16.msra.mxu0 0
    %662 = vmatprep.subr.bf16.mxu0 %v365
    %663 = vmatpush1.bf16.msra.mxu0 %v364
    %664 = vmatprep.subr.bf16.mxu0 %v349
    %665 = vmatpush1.bf16.msra.mxu0 %v348
    %666 = vmatprep.subr.bf16.mxu0 0
    %667 = vmatpush2.bf16.msra.mxu0 0
    %668 = vmatprep.subr.bf16.mxu0 0
    %669 = vmatpush2.bf16.msra.mxu0 0
    %670 = vmatprep.subr.bf16.mxu0 0
    %671 = vmatpush2.bf16.msra.mxu0 0
    %672 = vmatprep.subr.bf16.mxu0 0
    %673 = vmatpush2.bf16.msra.mxu0 0
    %674 = vmatprep.subr.bf16.mxu0 0
    %675 = vmatpush2.bf16.msra.mxu0 0
    %676 = vmatprep.subr.bf16.mxu0 0
    %677 = vmatpush2.bf16.msra.mxu0 0
    %678 = vmatprep.subr.bf16.mxu0 0
    %679 = vmatpush2.bf16.msra.mxu0 0
    %680 = vmatprep.subr.bf16.mxu0 0
    %681 = vmatpush2.bf16.msra.mxu0 0
    %682 = vmatprep.mubr.bf16.mxu0 0
    %683 = vmatmul.mubr.bf16.gmra.mxu0 %v402
    %v684 = vpop.f32.mrf.mxu0
    %v685 = vadd.f32 %v211, %v684
    %v686 = vpop.f32.mrf.mxu0
    %v687 = vadd.f32 %v215, %v686
    %v688 = vpop.f32.mrf.mxu0
    %v689 = vpop.f32.mrf.mxu0
    %690 = vdwg.mxu0
    %691 = vmatprep.subr.bf16.mxu0 0
    %692 = vmatpush1.bf16.msra.mxu0 0
    %693 = vmatprep.subr.bf16.mxu0 0
    %694 = vmatpush1.bf16.msra.mxu0 0
    %695 = vmatprep.subr.bf16.mxu0 0
    %696 = vmatpush1.bf16.msra.mxu0 0
    %697 = vmatprep.subr.bf16.mxu0 0
    %698 = vmatpush1.bf16.msra.mxu0 0
    %699 = vmatprep.subr.bf16.mxu0 0
    %700 = vmatpush1.bf16.msra.mxu0 0
    %701 = vmatprep.subr.bf16.mxu0 0
    %702 = vmatpush1.bf16.msra.mxu0 0
    %703 = vmatprep.subr.bf16.mxu0 %v367
    %704 = vmatpush1.bf16.msra.mxu0 %v366
    %705 = vmatprep.subr.bf16.mxu0 %v351
    %706 = vmatpush1.bf16.msra.mxu0 %v350
    %707 = vmatprep.subr.bf16.mxu0 0
    %708 = vmatpush2.bf16.msra.mxu0 0
    %709 = vmatprep.subr.bf16.mxu0 0
    %710 = vmatpush2.bf16.msra.mxu0 0
    %711 = vmatprep.subr.bf16.mxu0 0
    %712 = vmatpush2.bf16.msra.mxu0 0
    %713 = vmatprep.subr.bf16.mxu0 0
    %714 = vmatpush2.bf16.msra.mxu0 0
    %715 = vmatprep.subr.bf16.mxu0 0
    %716 = vmatpush2.bf16.msra.mxu0 0
    %717 = vmatprep.subr.bf16.mxu0 0
    %718 = vmatpush2.bf16.msra.mxu0 0
    %719 = vmatprep.subr.bf16.mxu0 0
    %720 = vmatpush2.bf16.msra.mxu0 0
    %721 = vmatprep.subr.bf16.mxu0 0
    %722 = vmatpush2.bf16.msra.mxu0 0
    %723 = vmatprep.mubr.bf16.mxu0 0
    %724 = vmatmul.mubr.bf16.gmra.mxu0 %v402
    %v725 = vpop.f32.mrf.mxu0
    %v726 = vadd.f32 %v219, %v725
    %v727 = vpop.f32.mrf.mxu0
    %v728 = vadd.f32 %v223, %v727
    %v729 = vpop.f32.mrf.mxu0
    %v730 = vpop.f32.mrf.mxu0
    %731 = vdwg.mxu0
    %vm732 = vcmp.gt.f32.partialorder %v439, 0.0
    %vm733 = vcmp.gt.f32.partialorder %v441, 0.0
    %vm734 = vcmp.gt.f32.partialorder %v480, 0.0
    %vm735 = vcmp.gt.f32.partialorder %v482, 0.0
    %vm736 = vcmp.gt.f32.partialorder %v521, 0.0
    %vm737 = vcmp.gt.f32.partialorder %v523, 0.0
    %vm738 = vcmp.gt.f32.partialorder %v562, 0.0
    %vm739 = vcmp.gt.f32.partialorder %v564, 0.0
    %vm740 = vcmp.gt.f32.partialorder %v603, 0.0
    %vm741 = vcmp.gt.f32.partialorder %v605, 0.0
    %vm742 = vcmp.gt.f32.partialorder %v644, 0.0
    %vm743 = vcmp.gt.f32.partialorder %v646, 0.0
    %vm744 = vcmp.gt.f32.partialorder %v685, 0.0
    %vm745 = vcmp.gt.f32.partialorder %v687, 0.0
    %vm746 = vcmp.gt.f32.partialorder %v726, 0.0
    %vm747 = vcmp.gt.f32.partialorder %v728, 0.0
    %v748 = vmul.f32 %v439, 0.2
    %v749 = vmul.f32 %v441, 0.2
    %v750 = vmul.f32 %v480, 0.2
    %v751 = vmul.f32 %v482, 0.2
    %v752 = vmul.f32 %v521, 0.2
    %v753 = vmul.f32 %v523, 0.2
    %v754 = vmul.f32 %v562, 0.2
    %v755 = vmul.f32 %v564, 0.2
    %v756 = vmul.f32 %v603, 0.2
    %v757 = vmul.f32 %v605, 0.2
    %v758 = vmul.f32 %v644, 0.2
    %v759 = vmul.f32 %v646, 0.2
    %v760 = vmul.f32 %v685, 0.2
    %v761 = vmul.f32 %v687, 0.2
    %v762 = vmul.f32 %v726, 0.2
    %v763 = vmul.f32 %v728, 0.2
    %v764 = vsel %vm732, %v439, %v748
    %v765 = vsel %vm733, %v441, %v749
    %v766 = vsel %vm734, %v480, %v750
    %v767 = vsel %vm735, %v482, %v751
    %v768 = vsel %vm736, %v521, %v752
    %v769 = vsel %vm737, %v523, %v753
    %v770 = vsel %vm738, %v562, %v754
    %v771 = vsel %vm739, %v564, %v755
    %v772 = vsel %vm740, %v603, %v756
    %v773 = vsel %vm741, %v605, %v757
    %v774 = vsel %vm742, %v644, %v758
    %v775 = vsel %vm743, %v646, %v759
    %v776 = vsel %vm744, %v685, %v760
    %v777 = vsel %vm745, %v687, %v761
    %v778 = vsel %vm746, %v726, %v762
    %v779 = vsel %vm747, %v728, %v763
    %v780 = vpack.c.bf16 %v764, %v764
    %v781 = vpack.c.bf16 %v765, %v765
    %v782 = vpack.c.bf16 %v766, %v766
    %v783 = vpack.c.bf16 %v767, %v767
    %v784 = vpack.c.bf16 %v768, %v768
    %v785 = vpack.c.bf16 %v769, %v769
    %v786 = vpack.c.bf16 %v770, %v770
    %v787 = vpack.c.bf16 %v771, %v771
    %v788 = vpack.c.bf16 %v772, %v772
    %v789 = vpack.c.bf16 %v773, %v773
    %v790 = vpack.c.bf16 %v774, %v774
    %v791 = vpack.c.bf16 %v775, %v775
    %v792 = vpack.c.bf16 %v776, %v776
    %v793 = vpack.c.bf16 %v777, %v777
    %v794 = vpack.c.bf16 %v778, %v778
    %v795 = vpack.c.bf16 %v779, %v779
    %v796 = vld [vmem:[#allocation8] sm:$0xff]
    %v797 = vld [vmem:[#allocation8 + $0x8] sm:$0xff]
    %v798 = vld [vmem:[#allocation8 + $0x10] sm:$0xff]
    %v799 = vld [vmem:[#allocation8 + $0x18] sm:$0xff]
    %v800 = vld [vmem:[#allocation8 + $0x20] sm:$0xff]
    %v801 = vld [vmem:[#allocation8 + $0x28] sm:$0xff]
    %v802 = vld [vmem:[#allocation8 + $0x30] sm:$0xff]
    %v803 = vld [vmem:[#allocation8 + $0x38] sm:$0xff]
    %v804 = vld [vmem:[#allocation8 + $0x40] sm:$0xff]
    %v805 = vld [vmem:[#allocation8 + $0x48] sm:$0xff]
    %v806 = vld [vmem:[#allocation8 + $0x50] sm:$0xff]
    %v807 = vld [vmem:[#allocation8 + $0x58] sm:$0xff]
    %v808 = vld [vmem:[#allocation8 + $0x60] sm:$0xff]
    %v809 = vld [vmem:[#allocation8 + $0x68] sm:$0xff]
    %v810 = vld [vmem:[#allocation8 + $0x70] sm:$0xff]
    %v811 = vld [vmem:[#allocation8 + $0x78] sm:$0xff]
    %v812 = vld [vmem:[#allocation8 + $0x80] sm:$0xff]
    %v813 = vld [vmem:[#allocation8 + $0x88] sm:$0xff]
    %v814 = vld [vmem:[#allocation8 + $0x90] sm:$0xff]
    %v815 = vld [vmem:[#allocation8 + $0x98] sm:$0xff]
    %v816 = vld [vmem:[#allocation8 + $0xa0] sm:$0xff]
    %v817 = vld [vmem:[#allocation8 + $0xa8] sm:$0xff]
    %v818 = vld [vmem:[#allocation8 + $0xb0] sm:$0xff]
    %v819 = vld [vmem:[#allocation8 + $0xb8] sm:$0xff]
    %v820 = vld [vmem:[#allocation8 + $0xc0] sm:$0xff]
    %v821 = vld [vmem:[#allocation8 + $0xc8] sm:$0xff]
    %v822 = vld [vmem:[#allocation8 + $0xd0] sm:$0xff]
    %v823 = vld [vmem:[#allocation8 + $0xd8] sm:$0xff]
    %v824 = vld [vmem:[#allocation8 + $0xe0] sm:$0xff]
    %v825 = vld [vmem:[#allocation8 + $0xe8] sm:$0xff]
    %v826 = vld [vmem:[#allocation8 + $0xf0] sm:$0xff]
    %v827 = vld [vmem:[#allocation8 + $0xf8] sm:$0xff]
    %v828 = vld [vmem:[#allocation8 + $0x100] sm:$0xff]
    %v829 = vld [vmem:[#allocation8 + $0x108] sm:$0xff]
    %v830 = vld [vmem:[#allocation8 + $0x110] sm:$0xff]
    %v831 = vld [vmem:[#allocation8 + $0x118] sm:$0xff]
    %v832 = vld [vmem:[#allocation8 + $0x120] sm:$0xff]
    %v833 = vld [vmem:[#allocation8 + $0x128] sm:$0xff]
    %v834 = vld [vmem:[#allocation8 + $0x130] sm:$0xff]
    %v835 = vld [vmem:[#allocation8 + $0x138] sm:$0xff]
    %v836 = vld [vmem:[#allocation8 + $0x140] sm:$0xff]
    %v837 = vld [vmem:[#allocation8 + $0x148] sm:$0xff]
    %v838 = vld [vmem:[#allocation8 + $0x150] sm:$0xff]
    %v839 = vld [vmem:[#allocation8 + $0x158] sm:$0xff]
    %v840 = vld [vmem:[#allocation8 + $0x160] sm:$0xff]
    %v841 = vld [vmem:[#allocation8 + $0x168] sm:$0xff]
    %v842 = vld [vmem:[#allocation8 + $0x170] sm:$0xff]
    %v843 = vld [vmem:[#allocation8 + $0x178] sm:$0xff]
    %v844 = vld [vmem:[#allocation8 + $0x180] sm:$0xff]
    %v845 = vld [vmem:[#allocation8 + $0x188] sm:$0xff]
    %v846 = vld [vmem:[#allocation8 + $0x190] sm:$0xff]
    %v847 = vld [vmem:[#allocation8 + $0x198] sm:$0xff]
    %v848 = vld [vmem:[#allocation8 + $0x1a0] sm:$0xff]
    %v849 = vld [vmem:[#allocation8 + $0x1a8] sm:$0xff]
    %v850 = vld [vmem:[#allocation8 + $0x1b0] sm:$0xff]
    %v851 = vld [vmem:[#allocation8 + $0x1b8] sm:$0xff]
    %v852 = vld [vmem:[#allocation8 + $0x1c0] sm:$0xff]
    %v853 = vld [vmem:[#allocation8 + $0x1c8] sm:$0xff]
    %v854 = vld [vmem:[#allocation8 + $0x1d0] sm:$0xff]
    %v855 = vld [vmem:[#allocation8 + $0x1d8] sm:$0xff]
    %v856 = vld [vmem:[#allocation8 + $0x1e0] sm:$0xff]
    %v857 = vld [vmem:[#allocation8 + $0x1e8] sm:$0xff]
    %v858 = vld [vmem:[#allocation8 + $0x1f0] sm:$0xff]
    %v859 = vld [vmem:[#allocation8 + $0x1f8] sm:$0xff]
    %v860 = vld [vmem:[#allocation8 + $0x200] sm:$0xff]
    %v861 = vld [vmem:[#allocation8 + $0x208] sm:$0xff]
    %v862 = vld [vmem:[#allocation8 + $0x210] sm:$0xff]
    %v863 = vld [vmem:[#allocation8 + $0x218] sm:$0xff]
    %v864 = vld [vmem:[#allocation8 + $0x220] sm:$0xff]
    %v865 = vld [vmem:[#allocation8 + $0x228] sm:$0xff]
    %v866 = vld [vmem:[#allocation8 + $0x230] sm:$0xff]
    %v867 = vld [vmem:[#allocation8 + $0x238] sm:$0xff]
    %v868 = vld [vmem:[#allocation8 + $0x240] sm:$0xff]
    %v869 = vld [vmem:[#allocation8 + $0x248] sm:$0xff]
    %v870 = vld [vmem:[#allocation8 + $0x250] sm:$0xff]
    %v871 = vld [vmem:[#allocation8 + $0x258] sm:$0xff]
    %v872 = vld [vmem:[#allocation8 + $0x260] sm:$0xff]
    %v873 = vld [vmem:[#allocation8 + $0x268] sm:$0xff]
    %v874 = vld [vmem:[#allocation8 + $0x270] sm:$0xff]
    %v875 = vld [vmem:[#allocation8 + $0x278] sm:$0xff]
    %v876 = vld [vmem:[#allocation8 + $0x280] sm:$0xff]
    %v877 = vld [vmem:[#allocation8 + $0x288] sm:$0xff]
    %v878 = vld [vmem:[#allocation8 + $0x290] sm:$0xff]
    %v879 = vld [vmem:[#allocation8 + $0x298] sm:$0xff]
    %v880 = vld [vmem:[#allocation8 + $0x2a0] sm:$0xff]
    %v881 = vld [vmem:[#allocation8 + $0x2a8] sm:$0xff]
    %v882 = vld [vmem:[#allocation8 + $0x2b0] sm:$0xff]
    %v883 = vld [vmem:[#allocation8 + $0x2b8] sm:$0xff]
    %v884 = vld [vmem:[#allocation8 + $0x2c0] sm:$0xff]
    %v885 = vld [vmem:[#allocation8 + $0x2c8] sm:$0xff]
    %v886 = vld [vmem:[#allocation8 + $0x2d0] sm:$0xff]
    %v887 = vld [vmem:[#allocation8 + $0x2d8] sm:$0xff]
    %v888 = vld [vmem:[#allocation8 + $0x2e0] sm:$0xff]
    %v889 = vld [vmem:[#allocation8 + $0x2e8] sm:$0xff]
    %v890 = vld [vmem:[#allocation8 + $0x2f0] sm:$0xff]
    %v891 = vld [vmem:[#allocation8 + $0x2f8] sm:$0xff]
    %v892 = vld [vmem:[#allocation8 + $0x300] sm:$0xff]
    %v893 = vld [vmem:[#allocation8 + $0x308] sm:$0xff]
    %v894 = vld [vmem:[#allocation8 + $0x310] sm:$0xff]
    %v895 = vld [vmem:[#allocation8 + $0x318] sm:$0xff]
    %v896 = vld [vmem:[#allocation8 + $0x320] sm:$0xff]
    %v897 = vld [vmem:[#allocation8 + $0x328] sm:$0xff]
    %v898 = vld [vmem:[#allocation8 + $0x330] sm:$0xff]
    %v899 = vld [vmem:[#allocation8 + $0x338] sm:$0xff]
    %v900 = vld [vmem:[#allocation8 + $0x340] sm:$0xff]
    %v901 = vld [vmem:[#allocation8 + $0x348] sm:$0xff]
    %v902 = vld [vmem:[#allocation8 + $0x350] sm:$0xff]
    %v903 = vld [vmem:[#allocation8 + $0x358] sm:$0xff]
    %v904 = vld [vmem:[#allocation8 + $0x360] sm:$0xff]
    %v905 = vld [vmem:[#allocation8 + $0x368] sm:$0xff]
    %v906 = vld [vmem:[#allocation8 + $0x370] sm:$0xff]
    %v907 = vld [vmem:[#allocation8 + $0x378] sm:$0xff]
    %v908 = vld [vmem:[#allocation8 + $0x380] sm:$0xff]
    %v909 = vld [vmem:[#allocation8 + $0x388] sm:$0xff]
    %v910 = vld [vmem:[#allocation8 + $0x390] sm:$0xff]
    %v911 = vld [vmem:[#allocation8 + $0x398] sm:$0xff]
    %v912 = vld [vmem:[#allocation8 + $0x3a0] sm:$0xff]
    %v913 = vld [vmem:[#allocation8 + $0x3a8] sm:$0xff]
    %v914 = vld [vmem:[#allocation8 + $0x3b0] sm:$0xff]
    %v915 = vld [vmem:[#allocation8 + $0x3b8] sm:$0xff]
    %v916 = vld [vmem:[#allocation8 + $0x3c0] sm:$0xff]
    %v917 = vld [vmem:[#allocation8 + $0x3c8] sm:$0xff]
    %v918 = vld [vmem:[#allocation8 + $0x3d0] sm:$0xff]
    %v919 = vld [vmem:[#allocation8 + $0x3d8] sm:$0xff]
    %v920 = vld [vmem:[#allocation8 + $0x3e0] sm:$0xff]
    %v921 = vld [vmem:[#allocation8 + $0x3e8] sm:$0xff]
    %v922 = vld [vmem:[#allocation8 + $0x3f0] sm:$0xff]
    %v923 = vld [vmem:[#allocation8 + $0x3f8] sm:$0xff]
    %v924 = vld [vmem:[#allocation8 + $0x400] sm:$0xff]
    %v925 = vld [vmem:[#allocation8 + $0x408] sm:$0xff]
    %v926 = vld [vmem:[#allocation8 + $0x410] sm:$0xff]
    %v927 = vld [vmem:[#allocation8 + $0x418] sm:$0xff]
    %v928 = vld [vmem:[#allocation8 + $0x420] sm:$0xff]
    %v929 = vld [vmem:[#allocation8 + $0x428] sm:$0xff]
    %v930 = vld [vmem:[#allocation8 + $0x430] sm:$0xff]
    %v931 = vld [vmem:[#allocation8 + $0x438] sm:$0xff]
    %v932 = vld [vmem:[#allocation8 + $0x440] sm:$0xff]
    %v933 = vld [vmem:[#allocation8 + $0x448] sm:$0xff]
    %v934 = vld [vmem:[#allocation8 + $0x450] sm:$0xff]
    %v935 = vld [vmem:[#allocation8 + $0x458] sm:$0xff]
    %v936 = vld [vmem:[#allocation8 + $0x460] sm:$0xff]
    %v937 = vld [vmem:[#allocation8 + $0x468] sm:$0xff]
    %v938 = vld [vmem:[#allocation8 + $0x470] sm:$0xff]
    %v939 = vld [vmem:[#allocation8 + $0x478] sm:$0xff]
    %v940 = vld [vmem:[#allocation8 + $0x480] sm:$0xff]
    %v941 = vld [vmem:[#allocation8 + $0x488] sm:$0xff]
    %v942 = vld [vmem:[#allocation8 + $0x490] sm:$0xff]
    %v943 = vld [vmem:[#allocation8 + $0x498] sm:$0xff]
    %v944 = vld [vmem:[#allocation8 + $0x4a0] sm:$0xff]
    %v945 = vld [vmem:[#allocation8 + $0x4a8] sm:$0xff]
    %v946 = vld [vmem:[#allocation8 + $0x4b0] sm:$0xff]
    %v947 = vld [vmem:[#allocation8 + $0x4b8] sm:$0xff]
    %v948 = vld [vmem:[#allocation8 + $0x4c0] sm:$0xff]
    %v949 = vld [vmem:[#allocation8 + $0x4c8] sm:$0xff]
    %v950 = vld [vmem:[#allocation8 + $0x4d0] sm:$0xff]
    %v951 = vld [vmem:[#allocation8 + $0x4d8] sm:$0xff]
    %v952 = vld [vmem:[#allocation8 + $0x4e0] sm:$0xff]
    %v953 = vld [vmem:[#allocation8 + $0x4e8] sm:$0xff]
    %v954 = vld [vmem:[#allocation8 + $0x4f0] sm:$0xff]
    %v955 = vld [vmem:[#allocation8 + $0x4f8] sm:$0xff]
    %v956 = vld [vmem:[#allocation8 + $0x500] sm:$0xff]
    %v957 = vld [vmem:[#allocation8 + $0x508] sm:$0xff]
    %v958 = vld [vmem:[#allocation8 + $0x510] sm:$0xff]
    %v959 = vld [vmem:[#allocation8 + $0x518] sm:$0xff]
    %v960 = vld [vmem:[#allocation8 + $0x520] sm:$0xff]
    %v961 = vld [vmem:[#allocation8 + $0x528] sm:$0xff]
    %v962 = vld [vmem:[#allocation8 + $0x530] sm:$0xff]
    %v963 = vld [vmem:[#allocation8 + $0x538] sm:$0xff]
    %v964 = vld [vmem:[#allocation8 + $0x540] sm:$0xff]
    %v965 = vld [vmem:[#allocation8 + $0x548] sm:$0xff]
    %v966 = vld [vmem:[#allocation8 + $0x550] sm:$0xff]
    %v967 = vld [vmem:[#allocation8 + $0x558] sm:$0xff]
    %v968 = vld [vmem:[#allocation8 + $0x560] sm:$0xff]
    %v969 = vld [vmem:[#allocation8 + $0x568] sm:$0xff]
    %v970 = vld [vmem:[#allocation8 + $0x570] sm:$0xff]
    %v971 = vld [vmem:[#allocation8 + $0x578] sm:$0xff]
    %v972 = vld [vmem:[#allocation8 + $0x580] sm:$0xff]
    %v973 = vld [vmem:[#allocation8 + $0x588] sm:$0xff]
    %v974 = vld [vmem:[#allocation8 + $0x590] sm:$0xff]
    %v975 = vld [vmem:[#allocation8 + $0x598] sm:$0xff]
    %v976 = vld [vmem:[#allocation8 + $0x5a0] sm:$0xff]
    %v977 = vld [vmem:[#allocation8 + $0x5a8] sm:$0xff]
    %v978 = vld [vmem:[#allocation8 + $0x5b0] sm:$0xff]
    %v979 = vld [vmem:[#allocation8 + $0x5b8] sm:$0xff]
    %v980 = vld [vmem:[#allocation8 + $0x5c0] sm:$0xff]
    %v981 = vld [vmem:[#allocation8 + $0x5c8] sm:$0xff]
    %v982 = vld [vmem:[#allocation8 + $0x5d0] sm:$0xff]
    %v983 = vld [vmem:[#allocation8 + $0x5d8] sm:$0xff]
    %v984 = vld [vmem:[#allocation8 + $0x5e0] sm:$0xff]
    %v985 = vld [vmem:[#allocation8 + $0x5e8] sm:$0xff]
    %v986 = vld [vmem:[#allocation8 + $0x5f0] sm:$0xff]
    %v987 = vld [vmem:[#allocation8 + $0x5f8] sm:$0xff]
    %v988 = vld [vmem:[#allocation8 + $0x600] sm:$0xff]
    %v989 = vld [vmem:[#allocation8 + $0x608] sm:$0xff]
    %v990 = vld [vmem:[#allocation8 + $0x610] sm:$0xff]
    %v991 = vld [vmem:[#allocation8 + $0x618] sm:$0xff]
    %v992 = vld [vmem:[#allocation8 + $0x620] sm:$0xff]
    %v993 = vld [vmem:[#allocation8 + $0x628] sm:$0xff]
    %v994 = vld [vmem:[#allocation8 + $0x630] sm:$0xff]
    %v995 = vld [vmem:[#allocation8 + $0x638] sm:$0xff]
    %v996 = vld [vmem:[#allocation8 + $0x640] sm:$0xff]
    %v997 = vld [vmem:[#allocation8 + $0x648] sm:$0xff]
    %v998 = vld [vmem:[#allocation8 + $0x650] sm:$0xff]
    %v999 = vld [vmem:[#allocation8 + $0x658] sm:$0xff]
    %v1000 = vld [vmem:[#allocation8 + $0x660] sm:$0xff]
    %v1001 = vld [vmem:[#allocation8 + $0x668] sm:$0xff]
    %v1002 = vld [vmem:[#allocation8 + $0x670] sm:$0xff]
    %v1003 = vld [vmem:[#allocation8 + $0x678] sm:$0xff]
    %v1004 = vld [vmem:[#allocation8 + $0x680] sm:$0xff]
    %v1005 = vld [vmem:[#allocation8 + $0x688] sm:$0xff]
    %v1006 = vld [vmem:[#allocation8 + $0x690] sm:$0xff]
    %v1007 = vld [vmem:[#allocation8 + $0x698] sm:$0xff]
    %v1008 = vld [vmem:[#allocation8 + $0x6a0] sm:$0xff]
    %v1009 = vld [vmem:[#allocation8 + $0x6a8] sm:$0xff]
    %v1010 = vld [vmem:[#allocation8 + $0x6b0] sm:$0xff]
    %v1011 = vld [vmem:[#allocation8 + $0x6b8] sm:$0xff]
    %v1012 = vld [vmem:[#allocation8 + $0x6c0] sm:$0xff]
    %v1013 = vld [vmem:[#allocation8 + $0x6c8] sm:$0xff]
    %v1014 = vld [vmem:[#allocation8 + $0x6d0] sm:$0xff]
    %v1015 = vld [vmem:[#allocation8 + $0x6d8] sm:$0xff]
    %v1016 = vld [vmem:[#allocation8 + $0x6e0] sm:$0xff]
    %v1017 = vld [vmem:[#allocation8 + $0x6e8] sm:$0xff]
    %v1018 = vld [vmem:[#allocation8 + $0x6f0] sm:$0xff]
    %v1019 = vld [vmem:[#allocation8 + $0x6f8] sm:$0xff]
    %v1020 = vld [vmem:[#allocation8 + $0x700] sm:$0xff]
    %v1021 = vld [vmem:[#allocation8 + $0x708] sm:$0xff]
    %v1022 = vld [vmem:[#allocation8 + $0x710] sm:$0xff]
    %v1023 = vld [vmem:[#allocation8 + $0x718] sm:$0xff]
    %v1024 = vld [vmem:[#allocation8 + $0x720] sm:$0xff]
    %v1025 = vld [vmem:[#allocation8 + $0x728] sm:$0xff]
    %v1026 = vld [vmem:[#allocation8 + $0x730] sm:$0xff]
    %v1027 = vld [vmem:[#allocation8 + $0x738] sm:$0xff]
    %v1028 = vld [vmem:[#allocation8 + $0x740] sm:$0xff]
    %v1029 = vld [vmem:[#allocation8 + $0x748] sm:$0xff]
    %v1030 = vld [vmem:[#allocation8 + $0x750] sm:$0xff]
    %v1031 = vld [vmem:[#allocation8 + $0x758] sm:$0xff]
    %v1032 = vld [vmem:[#allocation8 + $0x760] sm:$0xff]
    %v1033 = vld [vmem:[#allocation8 + $0x768] sm:$0xff]
    %v1034 = vld [vmem:[#allocation8 + $0x770] sm:$0xff]
    %v1035 = vld [vmem:[#allocation8 + $0x778] sm:$0xff]
    %v1036 = vld [vmem:[#allocation8 + $0x780] sm:$0xff]
    %v1037 = vld [vmem:[#allocation8 + $0x788] sm:$0xff]
    %v1038 = vld [vmem:[#allocation8 + $0x790] sm:$0xff]
    %v1039 = vld [vmem:[#allocation8 + $0x798] sm:$0xff]
    %v1040 = vld [vmem:[#allocation8 + $0x7a0] sm:$0xff]
    %v1041 = vld [vmem:[#allocation8 + $0x7a8] sm:$0xff]
    %v1042 = vld [vmem:[#allocation8 + $0x7b0] sm:$0xff]
    %v1043 = vld [vmem:[#allocation8 + $0x7b8] sm:$0xff]
    %v1044 = vld [vmem:[#allocation8 + $0x7c0] sm:$0xff]
    %v1045 = vld [vmem:[#allocation8 + $0x7c8] sm:$0xff]
    %v1046 = vld [vmem:[#allocation8 + $0x7d0] sm:$0xff]
    %v1047 = vld [vmem:[#allocation8 + $0x7d8] sm:$0xff]
    %v1048 = vld [vmem:[#allocation8 + $0x7e0] sm:$0xff]
    %v1049 = vld [vmem:[#allocation8 + $0x7e8] sm:$0xff]
    %v1050 = vld [vmem:[#allocation8 + $0x7f0] sm:$0xff]
    %v1051 = vld [vmem:[#allocation8 + $0x7f8] sm:$0xff]
    %v1052 = vld [vmem:[#allocation8 + $0x800] sm:$0xff]
    %v1053 = vld [vmem:[#allocation8 + $0x808] sm:$0xff]
    %v1054 = vld [vmem:[#allocation8 + $0x810] sm:$0xff]
    %v1055 = vld [vmem:[#allocation8 + $0x818] sm:$0xff]
    %v1056 = vld [vmem:[#allocation8 + $0x820] sm:$0xff]
    %v1057 = vld [vmem:[#allocation8 + $0x828] sm:$0xff]
    %v1058 = vld [vmem:[#allocation8 + $0x830] sm:$0xff]
    %v1059 = vld [vmem:[#allocation8 + $0x838] sm:$0xff]
    %v1060 = vld [vmem:[#allocation8 + $0x840] sm:$0xff]
    %v1061 = vld [vmem:[#allocation8 + $0x848] sm:$0xff]
    %v1062 = vld [vmem:[#allocation8 + $0x850] sm:$0xff]
    %v1063 = vld [vmem:[#allocation8 + $0x858] sm:$0xff]
    %v1064 = vld [vmem:[#allocation8 + $0x860] sm:$0xff]
    %v1065 = vld [vmem:[#allocation8 + $0x868] sm:$0xff]
    %v1066 = vld [vmem:[#allocation8 + $0x870] sm:$0xff]
    %v1067 = vld [vmem:[#allocation8 + $0x878] sm:$0xff]
    %v1068 = vld [vmem:[#allocation8 + $0x880] sm:$0xff]
    %v1069 = vld [vmem:[#allocation8 + $0x888] sm:$0xff]
    %v1070 = vld [vmem:[#allocation8 + $0x890] sm:$0xff]
    %v1071 = vld [vmem:[#allocation8 + $0x898] sm:$0xff]
    %v1072 = vld [vmem:[#allocation8 + $0x8a0] sm:$0xff]
    %v1073 = vld [vmem:[#allocation8 + $0x8a8] sm:$0xff]
    %v1074 = vld [vmem:[#allocation8 + $0x8b0] sm:$0xff]
    %v1075 = vld [vmem:[#allocation8 + $0x8b8] sm:$0xff]
    %v1076 = vld [vmem:[#allocation8 + $0x8c0] sm:$0xff]
    %v1077 = vld [vmem:[#allocation8 + $0x8c8] sm:$0xff]
    %v1078 = vld [vmem:[#allocation8 + $0x8d0] sm:$0xff]
    %v1079 = vld [vmem:[#allocation8 + $0x8d8] sm:$0xff]
    %v1080 = vld [vmem:[#allocation8 + $0x8e0] sm:$0xff]
    %v1081 = vld [vmem:[#allocation8 + $0x8e8] sm:$0xff]
    %v1082 = vld [vmem:[#allocation8 + $0x8f0] sm:$0xff]
    %v1083 = vld [vmem:[#allocation8 + $0x8f8] sm:$0xff]
    %v1084 = vld [vmem:[#allocation8 + $0x900] sm:$0xff]
    %v1085 = vld [vmem:[#allocation8 + $0x908] sm:$0xff]
    %v1086 = vld [vmem:[#allocation8 + $0x910] sm:$0xff]
    %v1087 = vld [vmem:[#allocation8 + $0x918] sm:$0xff]
    %v1088 = vld [vmem:[#allocation8 + $0x920] sm:$0xff]
    %v1089 = vld [vmem:[#allocation8 + $0x928] sm:$0xff]
    %v1090 = vld [vmem:[#allocation8 + $0x930] sm:$0xff]
    %v1091 = vld [vmem:[#allocation8 + $0x938] sm:$0xff]
    %v1092 = vld [vmem:[#allocation8 + $0x940] sm:$0xff]
    %v1093 = vld [vmem:[#allocation8 + $0x948] sm:$0xff]
    %v1094 = vld [vmem:[#allocation8 + $0x950] sm:$0xff]
    %v1095 = vld [vmem:[#allocation8 + $0x958] sm:$0xff]
    %v1096 = vld [vmem:[#allocation8 + $0x960] sm:$0xff]
    %v1097 = vld [vmem:[#allocation8 + $0x968] sm:$0xff]
    %v1098 = vld [vmem:[#allocation8 + $0x970] sm:$0xff]
    %v1099 = vld [vmem:[#allocation8 + $0x978] sm:$0xff]
    %v1100 = vld [vmem:[#allocation8 + $0x980] sm:$0xff]
    %v1101 = vld [vmem:[#allocation8 + $0x988] sm:$0xff]
    %v1102 = vld [vmem:[#allocation8 + $0x990] sm:$0xff]
    %v1103 = vld [vmem:[#allocation8 + $0x998] sm:$0xff]
    %v1104 = vld [vmem:[#allocation8 + $0x9a0] sm:$0xff]
    %v1105 = vld [vmem:[#allocation8 + $0x9a8] sm:$0xff]
    %v1106 = vld [vmem:[#allocation8 + $0x9b0] sm:$0xff]
    %v1107 = vld [vmem:[#allocation8 + $0x9b8] sm:$0xff]
    %v1108 = vld [vmem:[#allocation8 + $0x9c0] sm:$0xff]
    %v1109 = vld [vmem:[#allocation8 + $0x9c8] sm:$0xff]
    %v1110 = vld [vmem:[#allocation8 + $0x9d0] sm:$0xff]
    %v1111 = vld [vmem:[#allocation8 + $0x9d8] sm:$0xff]
    %v1112 = vld [vmem:[#allocation8 + $0x9e0] sm:$0xff]
    %v1113 = vld [vmem:[#allocation8 + $0x9e8] sm:$0xff]
    %v1114 = vld [vmem:[#allocation8 + $0x9f0] sm:$0xff]
    %v1115 = vld [vmem:[#allocation8 + $0x9f8] sm:$0xff]
    %v1116 = vld [vmem:[#allocation8 + $0xa00] sm:$0xff]
    %v1117 = vld [vmem:[#allocation8 + $0xa08] sm:$0xff]
    %v1118 = vld [vmem:[#allocation8 + $0xa10] sm:$0xff]
    %v1119 = vld [vmem:[#allocation8 + $0xa18] sm:$0xff]
    %v1120 = vld [vmem:[#allocation8 + $0xa20] sm:$0xff]
    %v1121 = vld [vmem:[#allocation8 + $0xa28] sm:$0xff]
    %v1122 = vld [vmem:[#allocation8 + $0xa30] sm:$0xff]
    %v1123 = vld [vmem:[#allocation8 + $0xa38] sm:$0xff]
    %v1124 = vld [vmem:[#allocation8 + $0xa40] sm:$0xff]
    %v1125 = vld [vmem:[#allocation8 + $0xa48] sm:$0xff]
    %v1126 = vld [vmem:[#allocation8 + $0xa50] sm:$0xff]
    %v1127 = vld [vmem:[#allocation8 + $0xa58] sm:$0xff]
    %v1128 = vld [vmem:[#allocation8 + $0xa60] sm:$0xff]
    %v1129 = vld [vmem:[#allocation8 + $0xa68] sm:$0xff]
    %v1130 = vld [vmem:[#allocation8 + $0xa70] sm:$0xff]
    %v1131 = vld [vmem:[#allocation8 + $0xa78] sm:$0xff]
    %v1132 = vld [vmem:[#allocation8 + $0xa80] sm:$0xff]
    %v1133 = vld [vmem:[#allocation8 + $0xa88] sm:$0xff]
    %v1134 = vld [vmem:[#allocation8 + $0xa90] sm:$0xff]
    %v1135 = vld [vmem:[#allocation8 + $0xa98] sm:$0xff]
    %v1136 = vld [vmem:[#allocation8 + $0xaa0] sm:$0xff]
    %v1137 = vld [vmem:[#allocation8 + $0xaa8] sm:$0xff]
    %v1138 = vld [vmem:[#allocation8 + $0xab0] sm:$0xff]
    %v1139 = vld [vmem:[#allocation8 + $0xab8] sm:$0xff]
    %v1140 = vld [vmem:[#allocation8 + $0xac0] sm:$0xff]
    %v1141 = vld [vmem:[#allocation8 + $0xac8] sm:$0xff]
    %v1142 = vld [vmem:[#allocation8 + $0xad0] sm:$0xff]
    %v1143 = vld [vmem:[#allocation8 + $0xad8] sm:$0xff]
    %v1144 = vld [vmem:[#allocation8 + $0xae0] sm:$0xff]
    %v1145 = vld [vmem:[#allocation8 + $0xae8] sm:$0xff]
    %v1146 = vld [vmem:[#allocation8 + $0xaf0] sm:$0xff]
    %v1147 = vld [vmem:[#allocation8 + $0xaf8] sm:$0xff]
    %v1148 = vld [vmem:[#allocation8 + $0xb00] sm:$0xff]
    %v1149 = vld [vmem:[#allocation8 + $0xb08] sm:$0xff]
    %v1150 = vld [vmem:[#allocation8 + $0xb10] sm:$0xff]
    %v1151 = vld [vmem:[#allocation8 + $0xb18] sm:$0xff]
    %v1152 = vld [vmem:[#allocation8 + $0xb20] sm:$0xff]
    %v1153 = vld [vmem:[#allocation8 + $0xb28] sm:$0xff]
    %v1154 = vld [vmem:[#allocation8 + $0xb30] sm:$0xff]
    %v1155 = vld [vmem:[#allocation8 + $0xb38] sm:$0xff]
    %v1156 = vld [vmem:[#allocation8 + $0xb40] sm:$0xff]
    %v1157 = vld [vmem:[#allocation8 + $0xb48] sm:$0xff]
    %v1158 = vld [vmem:[#allocation8 + $0xb50] sm:$0xff]
    %v1159 = vld [vmem:[#allocation8 + $0xb58] sm:$0xff]
    %v1160 = vld [vmem:[#allocation8 + $0xb60] sm:$0xff]
    %v1161 = vld [vmem:[#allocation8 + $0xb68] sm:$0xff]
    %v1162 = vld [vmem:[#allocation8 + $0xb70] sm:$0xff]
    %v1163 = vld [vmem:[#allocation8 + $0xb78] sm:$0xff]
    %v1164 = vld [vmem:[#allocation8 + $0xb80] sm:$0xff]
    %v1165 = vld [vmem:[#allocation8 + $0xb88] sm:$0xff]
    %v1166 = vld [vmem:[#allocation8 + $0xb90] sm:$0xff]
    %v1167 = vld [vmem:[#allocation8 + $0xb98] sm:$0xff]
    %v1168 = vld [vmem:[#allocation8 + $0xba0] sm:$0xff]
    %v1169 = vld [vmem:[#allocation8 + $0xba8] sm:$0xff]
    %v1170 = vld [vmem:[#allocation8 + $0xbb0] sm:$0xff]
    %v1171 = vld [vmem:[#allocation8 + $0xbb8] sm:$0xff]
    %v1172 = vld [vmem:[#allocation8 + $0xbc0] sm:$0xff]
    %v1173 = vld [vmem:[#allocation8 + $0xbc8] sm:$0xff]
    %v1174 = vld [vmem:[#allocation8 + $0xbd0] sm:$0xff]
    %v1175 = vld [vmem:[#allocation8 + $0xbd8] sm:$0xff]
    %v1176 = vld [vmem:[#allocation8 + $0xbe0] sm:$0xff]
    %v1177 = vld [vmem:[#allocation8 + $0xbe8] sm:$0xff]
    %v1178 = vld [vmem:[#allocation8 + $0xbf0] sm:$0xff]
    %v1179 = vld [vmem:[#allocation8 + $0xbf8] sm:$0xff]
    %v1180 = vld [vmem:[#allocation8 + $0xc00] sm:$0xff]
    %v1181 = vld [vmem:[#allocation8 + $0xc08] sm:$0xff]
    %v1182 = vld [vmem:[#allocation8 + $0xc10] sm:$0xff]
    %v1183 = vld [vmem:[#allocation8 + $0xc18] sm:$0xff]
    %v1184 = vld [vmem:[#allocation8 + $0xc20] sm:$0xff]
    %v1185 = vld [vmem:[#allocation8 + $0xc28] sm:$0xff]
    %v1186 = vld [vmem:[#allocation8 + $0xc30] sm:$0xff]
    %v1187 = vld [vmem:[#allocation8 + $0xc38] sm:$0xff]
    %v1188 = vld [vmem:[#allocation8 + $0xc40] sm:$0xff]
    %v1189 = vld [vmem:[#allocation8 + $0xc48] sm:$0xff]
    %v1190 = vld [vmem:[#allocation8 + $0xc50] sm:$0xff]
    %v1191 = vld [vmem:[#allocation8 + $0xc58] sm:$0xff]
    %v1192 = vld [vmem:[#allocation8 + $0xc60] sm:$0xff]
    %v1193 = vld [vmem:[#allocation8 + $0xc68] sm:$0xff]
    %v1194 = vld [vmem:[#allocation8 + $0xc70] sm:$0xff]
    %v1195 = vld [vmem:[#allocation8 + $0xc78] sm:$0xff]
    %v1196 = vld [vmem:[#allocation8 + $0xc80] sm:$0xff]
    %v1197 = vld [vmem:[#allocation8 + $0xc88] sm:$0xff]
    %v1198 = vld [vmem:[#allocation8 + $0xc90] sm:$0xff]
    %v1199 = vld [vmem:[#allocation8 + $0xc98] sm:$0xff]
    %v1200 = vld [vmem:[#allocation8 + $0xca0] sm:$0xff]
    %v1201 = vld [vmem:[#allocation8 + $0xca8] sm:$0xff]
    %v1202 = vld [vmem:[#allocation8 + $0xcb0] sm:$0xff]
    %v1203 = vld [vmem:[#allocation8 + $0xcb8] sm:$0xff]
    %v1204 = vld [vmem:[#allocation8 + $0xcc0] sm:$0xff]
    %v1205 = vld [vmem:[#allocation8 + $0xcc8] sm:$0xff]
    %v1206 = vld [vmem:[#allocation8 + $0xcd0] sm:$0xff]
    %v1207 = vld [vmem:[#allocation8 + $0xcd8] sm:$0xff]
    %v1208 = vld [vmem:[#allocation8 + $0xce0] sm:$0xff]
    %v1209 = vld [vmem:[#allocation8 + $0xce8] sm:$0xff]
    %v1210 = vld [vmem:[#allocation8 + $0xcf0] sm:$0xff]
    %v1211 = vld [vmem:[#allocation8 + $0xcf8] sm:$0xff]
    %v1212 = vld [vmem:[#allocation8 + $0xd00] sm:$0xff]
    %v1213 = vld [vmem:[#allocation8 + $0xd08] sm:$0xff]
    %v1214 = vld [vmem:[#allocation8 + $0xd10] sm:$0xff]
    %v1215 = vld [vmem:[#allocation8 + $0xd18] sm:$0xff]
    %v1216 = vld [vmem:[#allocation8 + $0xd20] sm:$0xff]
    %v1217 = vld [vmem:[#allocation8 + $0xd28] sm:$0xff]
    %v1218 = vld [vmem:[#allocation8 + $0xd30] sm:$0xff]
    %v1219 = vld [vmem:[#allocation8 + $0xd38] sm:$0xff]
    %v1220 = vld [vmem:[#allocation8 + $0xd40] sm:$0xff]
    %v1221 = vld [vmem:[#allocation8 + $0xd48] sm:$0xff]
    %v1222 = vld [vmem:[#allocation8 + $0xd50] sm:$0xff]
    %v1223 = vld [vmem:[#allocation8 + $0xd58] sm:$0xff]
    %v1224 = vld [vmem:[#allocation8 + $0xd60] sm:$0xff]
    %v1225 = vld [vmem:[#allocation8 + $0xd68] sm:$0xff]
    %v1226 = vld [vmem:[#allocation8 + $0xd70] sm:$0xff]
    %v1227 = vld [vmem:[#allocation8 + $0xd78] sm:$0xff]
    %v1228 = vld [vmem:[#allocation8 + $0xd80] sm:$0xff]
    %v1229 = vld [vmem:[#allocation8 + $0xd88] sm:$0xff]
    %v1230 = vld [vmem:[#allocation8 + $0xd90] sm:$0xff]
    %v1231 = vld [vmem:[#allocation8 + $0xd98] sm:$0xff]
    %v1232 = vld [vmem:[#allocation8 + $0xda0] sm:$0xff]
    %v1233 = vld [vmem:[#allocation8 + $0xda8] sm:$0xff]
    %v1234 = vld [vmem:[#allocation8 + $0xdb0] sm:$0xff]
    %v1235 = vld [vmem:[#allocation8 + $0xdb8] sm:$0xff]
    %v1236 = vld [vmem:[#allocation8 + $0xdc0] sm:$0xff]
    %v1237 = vld [vmem:[#allocation8 + $0xdc8] sm:$0xff]
    %v1238 = vld [vmem:[#allocation8 + $0xdd0] sm:$0xff]
    %v1239 = vld [vmem:[#allocation8 + $0xdd8] sm:$0xff]
    %v1240 = vld [vmem:[#allocation8 + $0xde0] sm:$0xff]
    %v1241 = vld [vmem:[#allocation8 + $0xde8] sm:$0xff]
    %v1242 = vld [vmem:[#allocation8 + $0xdf0] sm:$0xff]
    %v1243 = vld [vmem:[#allocation8 + $0xdf8] sm:$0xff]
    %v1244 = vld [vmem:[#allocation8 + $0xe00] sm:$0xff]
    %v1245 = vld [vmem:[#allocation8 + $0xe08] sm:$0xff]
    %v1246 = vld [vmem:[#allocation8 + $0xe10] sm:$0xff]
    %v1247 = vld [vmem:[#allocation8 + $0xe18] sm:$0xff]
    %v1248 = vld [vmem:[#allocation8 + $0xe20] sm:$0xff]
    %v1249 = vld [vmem:[#allocation8 + $0xe28] sm:$0xff]
    %v1250 = vld [vmem:[#allocation8 + $0xe30] sm:$0xff]
    %v1251 = vld [vmem:[#allocation8 + $0xe38] sm:$0xff]
    %v1252 = vld [vmem:[#allocation8 + $0xe40] sm:$0xff]
    %v1253 = vld [vmem:[#allocation8 + $0xe48] sm:$0xff]
    %v1254 = vld [vmem:[#allocation8 + $0xe50] sm:$0xff]
    %v1255 = vld [vmem:[#allocation8 + $0xe58] sm:$0xff]
    %v1256 = vld [vmem:[#allocation8 + $0xe60] sm:$0xff]
    %v1257 = vld [vmem:[#allocation8 + $0xe68] sm:$0xff]
    %v1258 = vld [vmem:[#allocation8 + $0xe70] sm:$0xff]
    %v1259 = vld [vmem:[#allocation8 + $0xe78] sm:$0xff]
    %v1260 = vld [vmem:[#allocation8 + $0xe80] sm:$0xff]
    %v1261 = vld [vmem:[#allocation8 + $0xe88] sm:$0xff]
    %v1262 = vld [vmem:[#allocation8 + $0xe90] sm:$0xff]
    %v1263 = vld [vmem:[#allocation8 + $0xe98] sm:$0xff]
    %v1264 = vld [vmem:[#allocation8 + $0xea0] sm:$0xff]
    %v1265 = vld [vmem:[#allocation8 + $0xea8] sm:$0xff]
    %v1266 = vld [vmem:[#allocation8 + $0xeb0] sm:$0xff]
    %v1267 = vld [vmem:[#allocation8 + $0xeb8] sm:$0xff]
    %v1268 = vld [vmem:[#allocation8 + $0xec0] sm:$0xff]
    %v1269 = vld [vmem:[#allocation8 + $0xec8] sm:$0xff]
    %v1270 = vld [vmem:[#allocation8 + $0xed0] sm:$0xff]
    %v1271 = vld [vmem:[#allocation8 + $0xed8] sm:$0xff]
    %v1272 = vld [vmem:[#allocation8 + $0xee0] sm:$0xff]
    %v1273 = vld [vmem:[#allocation8 + $0xee8] sm:$0xff]
    %v1274 = vld [vmem:[#allocation8 + $0xef0] sm:$0xff]
    %v1275 = vld [vmem:[#allocation8 + $0xef8] sm:$0xff]
    %v1276 = vld [vmem:[#allocation8 + $0xf00] sm:$0xff]
    %v1277 = vld [vmem:[#allocation8 + $0xf08] sm:$0xff]
    %v1278 = vld [vmem:[#allocation8 + $0xf10] sm:$0xff]
    %v1279 = vld [vmem:[#allocation8 + $0xf18] sm:$0xff]
    %v1280 = vld [vmem:[#allocation8 + $0xf20] sm:$0xff]
    %v1281 = vld [vmem:[#allocation8 + $0xf28] sm:$0xff]
    %v1282 = vld [vmem:[#allocation8 + $0xf30] sm:$0xff]
    %v1283 = vld [vmem:[#allocation8 + $0xf38] sm:$0xff]
    %v1284 = vld [vmem:[#allocation8 + $0xf40] sm:$0xff]
    %v1285 = vld [vmem:[#allocation8 + $0xf48] sm:$0xff]
    %v1286 = vld [vmem:[#allocation8 + $0xf50] sm:$0xff]
    %v1287 = vld [vmem:[#allocation8 + $0xf58] sm:$0xff]
    %v1288 = vld [vmem:[#allocation8 + $0xf60] sm:$0xff]
    %v1289 = vld [vmem:[#allocation8 + $0xf68] sm:$0xff]
    %v1290 = vld [vmem:[#allocation8 + $0xf70] sm:$0xff]
    %v1291 = vld [vmem:[#allocation8 + $0xf78] sm:$0xff]
    %v1292 = vld [vmem:[#allocation8 + $0xf80] sm:$0xff]
    %v1293 = vld [vmem:[#allocation8 + $0xf88] sm:$0xff]
    %v1294 = vld [vmem:[#allocation8 + $0xf90] sm:$0xff]
    %v1295 = vld [vmem:[#allocation8 + $0xf98] sm:$0xff]
    %v1296 = vld [vmem:[#allocation8 + $0xfa0] sm:$0xff]
    %v1297 = vld [vmem:[#allocation8 + $0xfa8] sm:$0xff]
    %v1298 = vld [vmem:[#allocation8 + $0xfb0] sm:$0xff]
    %v1299 = vld [vmem:[#allocation8 + $0xfb8] sm:$0xff]
    %v1300 = vld [vmem:[#allocation8 + $0xfc0] sm:$0xff]
    %v1301 = vld [vmem:[#allocation8 + $0xfc8] sm:$0xff]
    %v1302 = vld [vmem:[#allocation8 + $0xfd0] sm:$0xff]
    %v1303 = vld [vmem:[#allocation8 + $0xfd8] sm:$0xff]
    %v1304 = vld [vmem:[#allocation8 + $0xfe0] sm:$0xff]
    %v1305 = vld [vmem:[#allocation8 + $0xfe8] sm:$0xff]
    %v1306 = vld [vmem:[#allocation8 + $0xff0] sm:$0xff]
    %v1307 = vld [vmem:[#allocation8 + $0xff8] sm:$0xff]
    %v1308 = vld [vmem:[#allocation8 + $0x1000] sm:$0xff]
    %v1309 = vld [vmem:[#allocation8 + $0x1008] sm:$0xff]
    %v1310 = vld [vmem:[#allocation8 + $0x1010] sm:$0xff]
    %v1311 = vld [vmem:[#allocation8 + $0x1018] sm:$0xff]
    %v1312 = vld [vmem:[#allocation8 + $0x1020] sm:$0xff]
    %v1313 = vld [vmem:[#allocation8 + $0x1028] sm:$0xff]
    %v1314 = vld [vmem:[#allocation8 + $0x1030] sm:$0xff]
    %v1315 = vld [vmem:[#allocation8 + $0x1038] sm:$0xff]
    %v1316 = vld [vmem:[#allocation8 + $0x1040] sm:$0xff]
    %v1317 = vld [vmem:[#allocation8 + $0x1048] sm:$0xff]
    %v1318 = vld [vmem:[#allocation8 + $0x1050] sm:$0xff]
    %v1319 = vld [vmem:[#allocation8 + $0x1058] sm:$0xff]
    %v1320 = vld [vmem:[#allocation8 + $0x1060] sm:$0xff]
    %v1321 = vld [vmem:[#allocation8 + $0x1068] sm:$0xff]
    %v1322 = vld [vmem:[#allocation8 + $0x1070] sm:$0xff]
    %v1323 = vld [vmem:[#allocation8 + $0x1078] sm:$0xff]
    %v1324 = vld [vmem:[#allocation8 + $0x1080] sm:$0xff]
    %v1325 = vld [vmem:[#allocation8 + $0x1088] sm:$0xff]
    %v1326 = vld [vmem:[#allocation8 + $0x1090] sm:$0xff]
    %v1327 = vld [vmem:[#allocation8 + $0x1098] sm:$0xff]
    %v1328 = vld [vmem:[#allocation8 + $0x10a0] sm:$0xff]
    %v1329 = vld [vmem:[#allocation8 + $0x10a8] sm:$0xff]
    %v1330 = vld [vmem:[#allocation8 + $0x10b0] sm:$0xff]
    %v1331 = vld [vmem:[#allocation8 + $0x10b8] sm:$0xff]
    %v1332 = vld [vmem:[#allocation8 + $0x10c0] sm:$0xff]
    %v1333 = vld [vmem:[#allocation8 + $0x10c8] sm:$0xff]
    %v1334 = vld [vmem:[#allocation8 + $0x10d0] sm:$0xff]
    %v1335 = vld [vmem:[#allocation8 + $0x10d8] sm:$0xff]
    %v1336 = vld [vmem:[#allocation8 + $0x10e0] sm:$0xff]
    %v1337 = vld [vmem:[#allocation8 + $0x10e8] sm:$0xff]
    %v1338 = vld [vmem:[#allocation8 + $0x10f0] sm:$0xff]
    %v1339 = vld [vmem:[#allocation8 + $0x10f8] sm:$0xff]
    %v1340 = vld [vmem:[#allocation8 + $0x1100] sm:$0xff]
    %v1341 = vld [vmem:[#allocation8 + $0x1108] sm:$0xff]
    %v1342 = vld [vmem:[#allocation8 + $0x1110] sm:$0xff]
    %v1343 = vld [vmem:[#allocation8 + $0x1118] sm:$0xff]
    %v1344 = vld [vmem:[#allocation8 + $0x1120] sm:$0xff]
    %v1345 = vld [vmem:[#allocation8 + $0x1128] sm:$0xff]
    %v1346 = vld [vmem:[#allocation8 + $0x1130] sm:$0xff]
    %v1347 = vld [vmem:[#allocation8 + $0x1138] sm:$0xff]
    %v1348 = vld [vmem:[#allocation8 + $0x1140] sm:$0xff]
    %v1349 = vld [vmem:[#allocation8 + $0x1148] sm:$0xff]
    %v1350 = vld [vmem:[#allocation8 + $0x1150] sm:$0xff]
    %v1351 = vld [vmem:[#allocation8 + $0x1158] sm:$0xff]
    %v1352 = vld [vmem:[#allocation8 + $0x1160] sm:$0xff]
    %v1353 = vld [vmem:[#allocation8 + $0x1168] sm:$0xff]
    %v1354 = vld [vmem:[#allocation8 + $0x1170] sm:$0xff]
    %v1355 = vld [vmem:[#allocation8 + $0x1178] sm:$0xff]
    %v1356 = vld [vmem:[#allocation8 + $0x1180] sm:$0xff]
    %v1357 = vld [vmem:[#allocation8 + $0x1188] sm:$0xff]
    %v1358 = vld [vmem:[#allocation8 + $0x1190] sm:$0xff]
    %v1359 = vld [vmem:[#allocation8 + $0x1198] sm:$0xff]
    %v1360 = vld [vmem:[#allocation8 + $0x11a0] sm:$0xff]
    %v1361 = vld [vmem:[#allocation8 + $0x11a8] sm:$0xff]
    %v1362 = vld [vmem:[#allocation8 + $0x11b0] sm:$0xff]
    %v1363 = vld [vmem:[#allocation8 + $0x11b8] sm:$0xff]
    %v1364 = vld [vmem:[#allocation8 + $0x11c0] sm:$0xff]
    %v1365 = vld [vmem:[#allocation8 + $0x11c8] sm:$0xff]
    %v1366 = vld [vmem:[#allocation8 + $0x11d0] sm:$0xff]
    %v1367 = vld [vmem:[#allocation8 + $0x11d8] sm:$0xff]
    %v1368 = vld [vmem:[#allocation8 + $0x11e0] sm:$0xff]
    %v1369 = vld [vmem:[#allocation8 + $0x11e8] sm:$0xff]
    %v1370 = vld [vmem:[#allocation8 + $0x11f0] sm:$0xff]
    %v1371 = vld [vmem:[#allocation8 + $0x11f8] sm:$0xff]
    %v1372 = vld [vmem:[#allocation8 + $0x1200] sm:$0xff]
    %v1373 = vld [vmem:[#allocation8 + $0x1208] sm:$0xff]
    %v1374 = vld [vmem:[#allocation8 + $0x1210] sm:$0xff]
    %v1375 = vld [vmem:[#allocation8 + $0x1218] sm:$0xff]
    %v1376 = vld [vmem:[#allocation8 + $0x1220] sm:$0xff]
    %v1377 = vld [vmem:[#allocation8 + $0x1228] sm:$0xff]
    %v1378 = vld [vmem:[#allocation8 + $0x1230] sm:$0xff]
    %v1379 = vld [vmem:[#allocation8 + $0x1238] sm:$0xff]
    %v1380 = vld [vmem:[#allocation8 + $0x1240] sm:$0xff]
    %v1381 = vld [vmem:[#allocation8 + $0x1248] sm:$0xff]
    %v1382 = vld [vmem:[#allocation8 + $0x1250] sm:$0xff]
    %v1383 = vld [vmem:[#allocation8 + $0x1258] sm:$0xff]
    %v1384 = vld [vmem:[#allocation8 + $0x1260] sm:$0xff]
    %v1385 = vld [vmem:[#allocation8 + $0x1268] sm:$0xff]
    %v1386 = vld [vmem:[#allocation8 + $0x1270] sm:$0xff]
    %v1387 = vld [vmem:[#allocation8 + $0x1278] sm:$0xff]
    %v1388 = vld [vmem:[#allocation8 + $0x1280] sm:$0xff]
    %v1389 = vld [vmem:[#allocation8 + $0x1288] sm:$0xff]
    %v1390 = vld [vmem:[#allocation8 + $0x1290] sm:$0xff]
    %v1391 = vld [vmem:[#allocation8 + $0x1298] sm:$0xff]
    %v1392 = vld [vmem:[#allocation8 + $0x12a0] sm:$0xff]
    %v1393 = vld [vmem:[#allocation8 + $0x12a8] sm:$0xff]
    %v1394 = vld [vmem:[#allocation8 + $0x12b0] sm:$0xff]
    %v1395 = vld [vmem:[#allocation8 + $0x12b8] sm:$0xff]
    %v1396 = vld [vmem:[#allocation8 + $0x12c0] sm:$0xff]
    %v1397 = vld [vmem:[#allocation8 + $0x12c8] sm:$0xff]
    %v1398 = vld [vmem:[#allocation8 + $0x12d0] sm:$0xff]
    %v1399 = vld [vmem:[#allocation8 + $0x12d8] sm:$0xff]
    %v1400 = vld [vmem:[#allocation8 + $0x12e0] sm:$0xff]
    %v1401 = vld [vmem:[#allocation8 + $0x12e8] sm:$0xff]
    %v1402 = vld [vmem:[#allocation8 + $0x12f0] sm:$0xff]
    %v1403 = vld [vmem:[#allocation8 + $0x12f8] sm:$0xff]
    %v1404 = vld [vmem:[#allocation8 + $0x1300] sm:$0xff]
    %v1405 = vld [vmem:[#allocation8 + $0x1308] sm:$0xff]
    %v1406 = vld [vmem:[#allocation8 + $0x1310] sm:$0xff]
    %v1407 = vld [vmem:[#allocation8 + $0x1318] sm:$0xff]
    %v1408 = vld [vmem:[#allocation8 + $0x1320] sm:$0xff]
    %v1409 = vld [vmem:[#allocation8 + $0x1328] sm:$0xff]
    %v1410 = vld [vmem:[#allocation8 + $0x1330] sm:$0xff]
    %v1411 = vld [vmem:[#allocation8 + $0x1338] sm:$0xff]
    %v1412 = vld [vmem:[#allocation8 + $0x1340] sm:$0xff]
    %v1413 = vld [vmem:[#allocation8 + $0x1348] sm:$0xff]
    %v1414 = vld [vmem:[#allocation8 + $0x1350] sm:$0xff]
    %v1415 = vld [vmem:[#allocation8 + $0x1358] sm:$0xff]
    %v1416 = vld [vmem:[#allocation8 + $0x1360] sm:$0xff]
    %v1417 = vld [vmem:[#allocation8 + $0x1368] sm:$0xff]
    %v1418 = vld [vmem:[#allocation8 + $0x1370] sm:$0xff]
    %v1419 = vld [vmem:[#allocation8 + $0x1378] sm:$0xff]
    %v1420 = vld [vmem:[#allocation8 + $0x1380] sm:$0xff]
    %v1421 = vld [vmem:[#allocation8 + $0x1388] sm:$0xff]
    %v1422 = vld [vmem:[#allocation8 + $0x1390] sm:$0xff]
    %v1423 = vld [vmem:[#allocation8 + $0x1398] sm:$0xff]
    %v1424 = vld [vmem:[#allocation8 + $0x13a0] sm:$0xff]
    %v1425 = vld [vmem:[#allocation8 + $0x13a8] sm:$0xff]
    %v1426 = vld [vmem:[#allocation8 + $0x13b0] sm:$0xff]
    %v1427 = vld [vmem:[#allocation8 + $0x13b8] sm:$0xff]
    %v1428 = vld [vmem:[#allocation8 + $0x13c0] sm:$0xff]
    %v1429 = vld [vmem:[#allocation8 + $0x13c8] sm:$0xff]
    %v1430 = vld [vmem:[#allocation8 + $0x13d0] sm:$0xff]
    %v1431 = vld [vmem:[#allocation8 + $0x13d8] sm:$0xff]
    %v1432 = vld [vmem:[#allocation8 + $0x13e0] sm:$0xff]
    %v1433 = vld [vmem:[#allocation8 + $0x13e8] sm:$0xff]
    %v1434 = vld [vmem:[#allocation8 + $0x13f0] sm:$0xff]
    %v1435 = vld [vmem:[#allocation8 + $0x13f8] sm:$0xff]
    %v1436 = vld [vmem:[#allocation8 + $0x1400] sm:$0xff]
    %v1437 = vld [vmem:[#allocation8 + $0x1408] sm:$0xff]
    %v1438 = vld [vmem:[#allocation8 + $0x1410] sm:$0xff]
    %v1439 = vld [vmem:[#allocation8 + $0x1418] sm:$0xff]
    %v1440 = vld [vmem:[#allocation8 + $0x1420] sm:$0xff]
    %v1441 = vld [vmem:[#allocation8 + $0x1428] sm:$0xff]
    %v1442 = vld [vmem:[#allocation8 + $0x1430] sm:$0xff]
    %v1443 = vld [vmem:[#allocation8 + $0x1438] sm:$0xff]
    %v1444 = vld [vmem:[#allocation8 + $0x1440] sm:$0xff]
    %v1445 = vld [vmem:[#allocation8 + $0x1448] sm:$0xff]
    %v1446 = vld [vmem:[#allocation8 + $0x1450] sm:$0xff]
    %v1447 = vld [vmem:[#allocation8 + $0x1458] sm:$0xff]
    %v1448 = vld [vmem:[#allocation8 + $0x1460] sm:$0xff]
    %v1449 = vld [vmem:[#allocation8 + $0x1468] sm:$0xff]
    %v1450 = vld [vmem:[#allocation8 + $0x1470] sm:$0xff]
    %v1451 = vld [vmem:[#allocation8 + $0x1478] sm:$0xff]
    %v1452 = vld [vmem:[#allocation8 + $0x1480] sm:$0xff]
    %v1453 = vld [vmem:[#allocation8 + $0x1488] sm:$0xff]
    %v1454 = vld [vmem:[#allocation8 + $0x1490] sm:$0xff]
    %v1455 = vld [vmem:[#allocation8 + $0x1498] sm:$0xff]
    %v1456 = vld [vmem:[#allocation8 + $0x14a0] sm:$0xff]
    %v1457 = vld [vmem:[#allocation8 + $0x14a8] sm:$0xff]
    %v1458 = vld [vmem:[#allocation8 + $0x14b0] sm:$0xff]
    %v1459 = vld [vmem:[#allocation8 + $0x14b8] sm:$0xff]
    %v1460 = vld [vmem:[#allocation8 + $0x14c0] sm:$0xff]
    %v1461 = vld [vmem:[#allocation8 + $0x14c8] sm:$0xff]
    %v1462 = vld [vmem:[#allocation8 + $0x14d0] sm:$0xff]
    %v1463 = vld [vmem:[#allocation8 + $0x14d8] sm:$0xff]
    %v1464 = vld [vmem:[#allocation8 + $0x14e0] sm:$0xff]
    %v1465 = vld [vmem:[#allocation8 + $0x14e8] sm:$0xff]
    %v1466 = vld [vmem:[#allocation8 + $0x14f0] sm:$0xff]
    %v1467 = vld [vmem:[#allocation8 + $0x14f8] sm:$0xff]
    %v1468 = vld [vmem:[#allocation8 + $0x1500] sm:$0xff]
    %v1469 = vld [vmem:[#allocation8 + $0x1508] sm:$0xff]
    %v1470 = vld [vmem:[#allocation8 + $0x1510] sm:$0xff]
    %v1471 = vld [vmem:[#allocation8 + $0x1518] sm:$0xff]
    %v1472 = vld [vmem:[#allocation8 + $0x1520] sm:$0xff]
    %v1473 = vld [vmem:[#allocation8 + $0x1528] sm:$0xff]
    %v1474 = vld [vmem:[#allocation8 + $0x1530] sm:$0xff]
    %v1475 = vld [vmem:[#allocation8 + $0x1538] sm:$0xff]
    %v1476 = vld [vmem:[#allocation8 + $0x1540] sm:$0xff]
    %v1477 = vld [vmem:[#allocation8 + $0x1548] sm:$0xff]
    %v1478 = vld [vmem:[#allocation8 + $0x1550] sm:$0xff]
    %v1479 = vld [vmem:[#allocation8 + $0x1558] sm:$0xff]
    %v1480 = vld [vmem:[#allocation8 + $0x1560] sm:$0xff]
    %v1481 = vld [vmem:[#allocation8 + $0x1568] sm:$0xff]
    %v1482 = vld [vmem:[#allocation8 + $0x1570] sm:$0xff]
    %v1483 = vld [vmem:[#allocation8 + $0x1578] sm:$0xff]
    %v1484 = vld [vmem:[#allocation8 + $0x1580] sm:$0xff]
    %v1485 = vld [vmem:[#allocation8 + $0x1588] sm:$0xff]
    %v1486 = vld [vmem:[#allocation8 + $0x1590] sm:$0xff]
    %v1487 = vld [vmem:[#allocation8 + $0x1598] sm:$0xff]
    %v1488 = vld [vmem:[#allocation8 + $0x15a0] sm:$0xff]
    %v1489 = vld [vmem:[#allocation8 + $0x15a8] sm:$0xff]
    %v1490 = vld [vmem:[#allocation8 + $0x15b0] sm:$0xff]
    %v1491 = vld [vmem:[#allocation8 + $0x15b8] sm:$0xff]
    %v1492 = vld [vmem:[#allocation8 + $0x15c0] sm:$0xff]
    %v1493 = vld [vmem:[#allocation8 + $0x15c8] sm:$0xff]
    %v1494 = vld [vmem:[#allocation8 + $0x15d0] sm:$0xff]
    %v1495 = vld [vmem:[#allocation8 + $0x15d8] sm:$0xff]
    %v1496 = vld [vmem:[#allocation8 + $0x15e0] sm:$0xff]
    %v1497 = vld [vmem:[#allocation8 + $0x15e8] sm:$0xff]
    %v1498 = vld [vmem:[#allocation8 + $0x15f0] sm:$0xff]
    %v1499 = vld [vmem:[#allocation8 + $0x15f8] sm:$0xff]
    %v1500 = vld [vmem:[#allocation8 + $0x1600] sm:$0xff]
    %v1501 = vld [vmem:[#allocation8 + $0x1608] sm:$0xff]
    %v1502 = vld [vmem:[#allocation8 + $0x1610] sm:$0xff]
    %v1503 = vld [vmem:[#allocation8 + $0x1618] sm:$0xff]
    %v1504 = vld [vmem:[#allocation8 + $0x1620] sm:$0xff]
    %v1505 = vld [vmem:[#allocation8 + $0x1628] sm:$0xff]
    %v1506 = vld [vmem:[#allocation8 + $0x1630] sm:$0xff]
    %v1507 = vld [vmem:[#allocation8 + $0x1638] sm:$0xff]
    %v1508 = vld [vmem:[#allocation8 + $0x1640] sm:$0xff]
    %v1509 = vld [vmem:[#allocation8 + $0x1648] sm:$0xff]
    %v1510 = vld [vmem:[#allocation8 + $0x1650] sm:$0xff]
    %v1511 = vld [vmem:[#allocation8 + $0x1658] sm:$0xff]
    %v1512 = vld [vmem:[#allocation8 + $0x1660] sm:$0xff]
    %v1513 = vld [vmem:[#allocation8 + $0x1668] sm:$0xff]
    %v1514 = vld [vmem:[#allocation8 + $0x1670] sm:$0xff]
    %v1515 = vld [vmem:[#allocation8 + $0x1678] sm:$0xff]
    %v1516 = vld [vmem:[#allocation8 + $0x1680] sm:$0xff]
    %v1517 = vld [vmem:[#allocation8 + $0x1688] sm:$0xff]
    %v1518 = vld [vmem:[#allocation8 + $0x1690] sm:$0xff]
    %v1519 = vld [vmem:[#allocation8 + $0x1698] sm:$0xff]
    %v1520 = vld [vmem:[#allocation8 + $0x16a0] sm:$0xff]
    %v1521 = vld [vmem:[#allocation8 + $0x16a8] sm:$0xff]
    %v1522 = vld [vmem:[#allocation8 + $0x16b0] sm:$0xff]
    %v1523 = vld [vmem:[#allocation8 + $0x16b8] sm:$0xff]
    %v1524 = vld [vmem:[#allocation8 + $0x16c0] sm:$0xff]
    %v1525 = vld [vmem:[#allocation8 + $0x16c8] sm:$0xff]
    %v1526 = vld [vmem:[#allocation8 + $0x16d0] sm:$0xff]
    %v1527 = vld [vmem:[#allocation8 + $0x16d8] sm:$0xff]
    %v1528 = vld [vmem:[#allocation8 + $0x16e0] sm:$0xff]
    %v1529 = vld [vmem:[#allocation8 + $0x16e8] sm:$0xff]
    %v1530 = vld [vmem:[#allocation8 + $0x16f0] sm:$0xff]
    %v1531 = vld [vmem:[#allocation8 + $0x16f8] sm:$0xff]
    %v1532 = vld [vmem:[#allocation8 + $0x1700] sm:$0xff]
    %v1533 = vld [vmem:[#allocation8 + $0x1708] sm:$0xff]
    %v1534 = vld [vmem:[#allocation8 + $0x1710] sm:$0xff]
    %v1535 = vld [vmem:[#allocation8 + $0x1718] sm:$0xff]
    %v1536 = vld [vmem:[#allocation8 + $0x1720] sm:$0xff]
    %v1537 = vld [vmem:[#allocation8 + $0x1728] sm:$0xff]
    %v1538 = vld [vmem:[#allocation8 + $0x1730] sm:$0xff]
    %v1539 = vld [vmem:[#allocation8 + $0x1738] sm:$0xff]
    %v1540 = vld [vmem:[#allocation8 + $0x1740] sm:$0xff]
    %v1541 = vld [vmem:[#allocation8 + $0x1748] sm:$0xff]
    %v1542 = vld [vmem:[#allocation8 + $0x1750] sm:$0xff]
    %v1543 = vld [vmem:[#allocation8 + $0x1758] sm:$0xff]
    %v1544 = vld [vmem:[#allocation8 + $0x1760] sm:$0xff]
    %v1545 = vld [vmem:[#allocation8 + $0x1768] sm:$0xff]
    %v1546 = vld [vmem:[#allocation8 + $0x1770] sm:$0xff]
    %v1547 = vld [vmem:[#allocation8 + $0x1778] sm:$0xff]
    %v1548 = vld [vmem:[#allocation8 + $0x1780] sm:$0xff]
    %v1549 = vld [vmem:[#allocation8 + $0x1788] sm:$0xff]
    %v1550 = vld [vmem:[#allocation8 + $0x1790] sm:$0xff]
    %v1551 = vld [vmem:[#allocation8 + $0x1798] sm:$0xff]
    %v1552 = vld [vmem:[#allocation8 + $0x17a0] sm:$0xff]
    %v1553 = vld [vmem:[#allocation8 + $0x17a8] sm:$0xff]
    %v1554 = vld [vmem:[#allocation8 + $0x17b0] sm:$0xff]
    %v1555 = vld [vmem:[#allocation8 + $0x17b8] sm:$0xff]
    %v1556 = vld [vmem:[#allocation8 + $0x17c0] sm:$0xff]
    %v1557 = vld [vmem:[#allocation8 + $0x17c8] sm:$0xff]
    %v1558 = vld [vmem:[#allocation8 + $0x17d0] sm:$0xff]
    %v1559 = vld [vmem:[#allocation8 + $0x17d8] sm:$0xff]
    %v1560 = vld [vmem:[#allocation8 + $0x17e0] sm:$0xff]
    %v1561 = vld [vmem:[#allocation8 + $0x17e8] sm:$0xff]
    %v1562 = vld [vmem:[#allocation8 + $0x17f0] sm:$0xff]
    %v1563 = vld [vmem:[#allocation8 + $0x17f8] sm:$0xff]
    %v1564 = vld [vmem:[#allocation8 + $0x1800] sm:$0xff]
    %v1565 = vld [vmem:[#allocation8 + $0x1808] sm:$0xff]
    %v1566 = vld [vmem:[#allocation8 + $0x1810] sm:$0xff]
    %v1567 = vld [vmem:[#allocation8 + $0x1818] sm:$0xff]
    %v1568 = vld [vmem:[#allocation8 + $0x1820] sm:$0xff]
    %v1569 = vld [vmem:[#allocation8 + $0x1828] sm:$0xff]
    %v1570 = vld [vmem:[#allocation8 + $0x1830] sm:$0xff]
    %v1571 = vld [vmem:[#allocation8 + $0x1838] sm:$0xff]
    %v1572 = vld [vmem:[#allocation8 + $0x1840] sm:$0xff]
    %v1573 = vld [vmem:[#allocation8 + $0x1848] sm:$0xff]
    %v1574 = vld [vmem:[#allocation8 + $0x1850] sm:$0xff]
    %v1575 = vld [vmem:[#allocation8 + $0x1858] sm:$0xff]
    %v1576 = vld [vmem:[#allocation8 + $0x1860] sm:$0xff]
    %v1577 = vld [vmem:[#allocation8 + $0x1868] sm:$0xff]
    %v1578 = vld [vmem:[#allocation8 + $0x1870] sm:$0xff]
    %v1579 = vld [vmem:[#allocation8 + $0x1878] sm:$0xff]
    %v1580 = vld [vmem:[#allocation8 + $0x1880] sm:$0xff]
    %v1581 = vld [vmem:[#allocation8 + $0x1888] sm:$0xff]
    %v1582 = vld [vmem:[#allocation8 + $0x1890] sm:$0xff]
    %v1583 = vld [vmem:[#allocation8 + $0x1898] sm:$0xff]
    %v1584 = vld [vmem:[#allocation8 + $0x18a0] sm:$0xff]
    %v1585 = vld [vmem:[#allocation8 + $0x18a8] sm:$0xff]
    %v1586 = vld [vmem:[#allocation8 + $0x18b0] sm:$0xff]
    %v1587 = vld [vmem:[#allocation8 + $0x18b8] sm:$0xff]
    %v1588 = vld [vmem:[#allocation8 + $0x18c0] sm:$0xff]
    %v1589 = vld [vmem:[#allocation8 + $0x18c8] sm:$0xff]
    %v1590 = vld [vmem:[#allocation8 + $0x18d0] sm:$0xff]
    %v1591 = vld [vmem:[#allocation8 + $0x18d8] sm:$0xff]
    %v1592 = vld [vmem:[#allocation8 + $0x18e0] sm:$0xff]
    %v1593 = vld [vmem:[#allocation8 + $0x18e8] sm:$0xff]
    %v1594 = vld [vmem:[#allocation8 + $0x18f0] sm:$0xff]
    %v1595 = vld [vmem:[#allocation8 + $0x18f8] sm:$0xff]
    %v1596 = vld [vmem:[#allocation8 + $0x1900] sm:$0xff]
    %v1597 = vld [vmem:[#allocation8 + $0x1908] sm:$0xff]
    %v1598 = vld [vmem:[#allocation8 + $0x1910] sm:$0xff]
    %v1599 = vld [vmem:[#allocation8 + $0x1918] sm:$0xff]
    %v1600 = vld [vmem:[#allocation8 + $0x1920] sm:$0xff]
    %v1601 = vld [vmem:[#allocation8 + $0x1928] sm:$0xff]
    %v1602 = vld [vmem:[#allocation8 + $0x1930] sm:$0xff]
    %v1603 = vld [vmem:[#allocation8 + $0x1938] sm:$0xff]
    %v1604 = vld [vmem:[#allocation8 + $0x1940] sm:$0xff]
    %v1605 = vld [vmem:[#allocation8 + $0x1948] sm:$0xff]
    %v1606 = vld [vmem:[#allocation8 + $0x1950] sm:$0xff]
    %v1607 = vld [vmem:[#allocation8 + $0x1958] sm:$0xff]
    %v1608 = vld [vmem:[#allocation8 + $0x1960] sm:$0xff]
    %v1609 = vld [vmem:[#allocation8 + $0x1968] sm:$0xff]
    %v1610 = vld [vmem:[#allocation8 + $0x1970] sm:$0xff]
    %v1611 = vld [vmem:[#allocation8 + $0x1978] sm:$0xff]
    %v1612 = vld [vmem:[#allocation8 + $0x1980] sm:$0xff]
    %v1613 = vld [vmem:[#allocation8 + $0x1988] sm:$0xff]
    %v1614 = vld [vmem:[#allocation8 + $0x1990] sm:$0xff]
    %v1615 = vld [vmem:[#allocation8 + $0x1998] sm:$0xff]
    %v1616 = vld [vmem:[#allocation8 + $0x19a0] sm:$0xff]
    %v1617 = vld [vmem:[#allocation8 + $0x19a8] sm:$0xff]
    %v1618 = vld [vmem:[#allocation8 + $0x19b0] sm:$0xff]
    %v1619 = vld [vmem:[#allocation8 + $0x19b8] sm:$0xff]
    %v1620 = vld [vmem:[#allocation8 + $0x19c0] sm:$0xff]
    %v1621 = vld [vmem:[#allocation8 + $0x19c8] sm:$0xff]
    %v1622 = vld [vmem:[#allocation8 + $0x19d0] sm:$0xff]
    %v1623 = vld [vmem:[#allocation8 + $0x19d8] sm:$0xff]
    %v1624 = vld [vmem:[#allocation8 + $0x19e0] sm:$0xff]
    %v1625 = vld [vmem:[#allocation8 + $0x19e8] sm:$0xff]
    %v1626 = vld [vmem:[#allocation8 + $0x19f0] sm:$0xff]
    %v1627 = vld [vmem:[#allocation8 + $0x19f8] sm:$0xff]
    %v1628 = vld [vmem:[#allocation8 + $0x1a00] sm:$0xff]
    %v1629 = vld [vmem:[#allocation8 + $0x1a08] sm:$0xff]
    %v1630 = vld [vmem:[#allocation8 + $0x1a10] sm:$0xff]
    %v1631 = vld [vmem:[#allocation8 + $0x1a18] sm:$0xff]
    %v1632 = vld [vmem:[#allocation8 + $0x1a20] sm:$0xff]
    %v1633 = vld [vmem:[#allocation8 + $0x1a28] sm:$0xff]
    %v1634 = vld [vmem:[#allocation8 + $0x1a30] sm:$0xff]
    %v1635 = vld [vmem:[#allocation8 + $0x1a38] sm:$0xff]
    %v1636 = vld [vmem:[#allocation8 + $0x1a40] sm:$0xff]
    %v1637 = vld [vmem:[#allocation8 + $0x1a48] sm:$0xff]
    %v1638 = vld [vmem:[#allocation8 + $0x1a50] sm:$0xff]
    %v1639 = vld [vmem:[#allocation8 + $0x1a58] sm:$0xff]
    %v1640 = vld [vmem:[#allocation8 + $0x1a60] sm:$0xff]
    %v1641 = vld [vmem:[#allocation8 + $0x1a68] sm:$0xff]
    %v1642 = vld [vmem:[#allocation8 + $0x1a70] sm:$0xff]
    %v1643 = vld [vmem:[#allocation8 + $0x1a78] sm:$0xff]
    %v1644 = vld [vmem:[#allocation8 + $0x1a80] sm:$0xff]
    %v1645 = vld [vmem:[#allocation8 + $0x1a88] sm:$0xff]
    %v1646 = vld [vmem:[#allocation8 + $0x1a90] sm:$0xff]
    %v1647 = vld [vmem:[#allocation8 + $0x1a98] sm:$0xff]
    %v1648 = vld [vmem:[#allocation8 + $0x1aa0] sm:$0xff]
    %v1649 = vld [vmem:[#allocation8 + $0x1aa8] sm:$0xff]
    %v1650 = vld [vmem:[#allocation8 + $0x1ab0] sm:$0xff]
    %v1651 = vld [vmem:[#allocation8 + $0x1ab8] sm:$0xff]
    %v1652 = vld [vmem:[#allocation8 + $0x1ac0] sm:$0xff]
    %v1653 = vld [vmem:[#allocation8 + $0x1ac8] sm:$0xff]
    %v1654 = vld [vmem:[#allocation8 + $0x1ad0] sm:$0xff]
    %v1655 = vld [vmem:[#allocation8 + $0x1ad8] sm:$0xff]
    %v1656 = vld [vmem:[#allocation8 + $0x1ae0] sm:$0xff]
    %v1657 = vld [vmem:[#allocation8 + $0x1ae8] sm:$0xff]
    %v1658 = vld [vmem:[#allocation8 + $0x1af0] sm:$0xff]
    %v1659 = vld [vmem:[#allocation8 + $0x1af8] sm:$0xff]
    %v1660 = vld [vmem:[#allocation8 + $0x1b00] sm:$0xff]
    %v1661 = vld [vmem:[#allocation8 + $0x1b08] sm:$0xff]
    %v1662 = vld [vmem:[#allocation8 + $0x1b10] sm:$0xff]
    %v1663 = vld [vmem:[#allocation8 + $0x1b18] sm:$0xff]
    %v1664 = vld [vmem:[#allocation8 + $0x1b20] sm:$0xff]
    %v1665 = vld [vmem:[#allocation8 + $0x1b28] sm:$0xff]
    %v1666 = vld [vmem:[#allocation8 + $0x1b30] sm:$0xff]
    %v1667 = vld [vmem:[#allocation8 + $0x1b38] sm:$0xff]
    %v1668 = vld [vmem:[#allocation8 + $0x1b40] sm:$0xff]
    %v1669 = vld [vmem:[#allocation8 + $0x1b48] sm:$0xff]
    %v1670 = vld [vmem:[#allocation8 + $0x1b50] sm:$0xff]
    %v1671 = vld [vmem:[#allocation8 + $0x1b58] sm:$0xff]
    %v1672 = vld [vmem:[#allocation8 + $0x1b60] sm:$0xff]
    %v1673 = vld [vmem:[#allocation8 + $0x1b68] sm:$0xff]
    %v1674 = vld [vmem:[#allocation8 + $0x1b70] sm:$0xff]
    %v1675 = vld [vmem:[#allocation8 + $0x1b78] sm:$0xff]
    %v1676 = vld [vmem:[#allocation8 + $0x1b80] sm:$0xff]
    %v1677 = vld [vmem:[#allocation8 + $0x1b88] sm:$0xff]
    %v1678 = vld [vmem:[#allocation8 + $0x1b90] sm:$0xff]
    %v1679 = vld [vmem:[#allocation8 + $0x1b98] sm:$0xff]
    %v1680 = vld [vmem:[#allocation8 + $0x1ba0] sm:$0xff]
    %v1681 = vld [vmem:[#allocation8 + $0x1ba8] sm:$0xff]
    %v1682 = vld [vmem:[#allocation8 + $0x1bb0] sm:$0xff]
    %v1683 = vld [vmem:[#allocation8 + $0x1bb8] sm:$0xff]
    %v1684 = vld [vmem:[#allocation8 + $0x1bc0] sm:$0xff]
    %v1685 = vld [vmem:[#allocation8 + $0x1bc8] sm:$0xff]
    %v1686 = vld [vmem:[#allocation8 + $0x1bd0] sm:$0xff]
    %v1687 = vld [vmem:[#allocation8 + $0x1bd8] sm:$0xff]
    %v1688 = vld [vmem:[#allocation8 + $0x1be0] sm:$0xff]
    %v1689 = vld [vmem:[#allocation8 + $0x1be8] sm:$0xff]
    %v1690 = vld [vmem:[#allocation8 + $0x1bf0] sm:$0xff]
    %v1691 = vld [vmem:[#allocation8 + $0x1bf8] sm:$0xff]
    %v1692 = vld [vmem:[#allocation8 + $0x1c00] sm:$0xff]
    %v1693 = vld [vmem:[#allocation8 + $0x1c08] sm:$0xff]
    %v1694 = vld [vmem:[#allocation8 + $0x1c10] sm:$0xff]
    %v1695 = vld [vmem:[#allocation8 + $0x1c18] sm:$0xff]
    %v1696 = vld [vmem:[#allocation8 + $0x1c20] sm:$0xff]
    %v1697 = vld [vmem:[#allocation8 + $0x1c28] sm:$0xff]
    %v1698 = vld [vmem:[#allocation8 + $0x1c30] sm:$0xff]
    %v1699 = vld [vmem:[#allocation8 + $0x1c38] sm:$0xff]
    %v1700 = vld [vmem:[#allocation8 + $0x1c40] sm:$0xff]
    %v1701 = vld [vmem:[#allocation8 + $0x1c48] sm:$0xff]
    %v1702 = vld [vmem:[#allocation8 + $0x1c50] sm:$0xff]
    %v1703 = vld [vmem:[#allocation8 + $0x1c58] sm:$0xff]
    %v1704 = vld [vmem:[#allocation8 + $0x1c60] sm:$0xff]
    %v1705 = vld [vmem:[#allocation8 + $0x1c68] sm:$0xff]
    %v1706 = vld [vmem:[#allocation8 + $0x1c70] sm:$0xff]
    %v1707 = vld [vmem:[#allocation8 + $0x1c78] sm:$0xff]
    %v1708 = vld [vmem:[#allocation8 + $0x1c80] sm:$0xff]
    %v1709 = vld [vmem:[#allocation8 + $0x1c88] sm:$0xff]
    %v1710 = vld [vmem:[#allocation8 + $0x1c90] sm:$0xff]
    %v1711 = vld [vmem:[#allocation8 + $0x1c98] sm:$0xff]
    %v1712 = vld [vmem:[#allocation8 + $0x1ca0] sm:$0xff]
    %v1713 = vld [vmem:[#allocation8 + $0x1ca8] sm:$0xff]
    %v1714 = vld [vmem:[#allocation8 + $0x1cb0] sm:$0xff]
    %v1715 = vld [vmem:[#allocation8 + $0x1cb8] sm:$0xff]
    %v1716 = vld [vmem:[#allocation8 + $0x1cc0] sm:$0xff]
    %v1717 = vld [vmem:[#allocation8 + $0x1cc8] sm:$0xff]
    %v1718 = vld [vmem:[#allocation8 + $0x1cd0] sm:$0xff]
    %v1719 = vld [vmem:[#allocation8 + $0x1cd8] sm:$0xff]
    %v1720 = vld [vmem:[#allocation8 + $0x1ce0] sm:$0xff]
    %v1721 = vld [vmem:[#allocation8 + $0x1ce8] sm:$0xff]
    %v1722 = vld [vmem:[#allocation8 + $0x1cf0] sm:$0xff]
    %v1723 = vld [vmem:[#allocation8 + $0x1cf8] sm:$0xff]
    %v1724 = vld [vmem:[#allocation8 + $0x1d00] sm:$0xff]
    %v1725 = vld [vmem:[#allocation8 + $0x1d08] sm:$0xff]
    %v1726 = vld [vmem:[#allocation8 + $0x1d10] sm:$0xff]
    %v1727 = vld [vmem:[#allocation8 + $0x1d18] sm:$0xff]
    %v1728 = vld [vmem:[#allocation8 + $0x1d20] sm:$0xff]
    %v1729 = vld [vmem:[#allocation8 + $0x1d28] sm:$0xff]
    %v1730 = vld [vmem:[#allocation8 + $0x1d30] sm:$0xff]
    %v1731 = vld [vmem:[#allocation8 + $0x1d38] sm:$0xff]
    %v1732 = vld [vmem:[#allocation8 + $0x1d40] sm:$0xff]
    %v1733 = vld [vmem:[#allocation8 + $0x1d48] sm:$0xff]
    %v1734 = vld [vmem:[#allocation8 + $0x1d50] sm:$0xff]
    %v1735 = vld [vmem:[#allocation8 + $0x1d58] sm:$0xff]
    %v1736 = vld [vmem:[#allocation8 + $0x1d60] sm:$0xff]
    %v1737 = vld [vmem:[#allocation8 + $0x1d68] sm:$0xff]
    %v1738 = vld [vmem:[#allocation8 + $0x1d70] sm:$0xff]
    %v1739 = vld [vmem:[#allocation8 + $0x1d78] sm:$0xff]
    %v1740 = vld [vmem:[#allocation8 + $0x1d80] sm:$0xff]
    %v1741 = vld [vmem:[#allocation8 + $0x1d88] sm:$0xff]
    %v1742 = vld [vmem:[#allocation8 + $0x1d90] sm:$0xff]
    %v1743 = vld [vmem:[#allocation8 + $0x1d98] sm:$0xff]
    %v1744 = vld [vmem:[#allocation8 + $0x1da0] sm:$0xff]
    %v1745 = vld [vmem:[#allocation8 + $0x1da8] sm:$0xff]
    %v1746 = vld [vmem:[#allocation8 + $0x1db0] sm:$0xff]
    %v1747 = vld [vmem:[#allocation8 + $0x1db8] sm:$0xff]
    %v1748 = vld [vmem:[#allocation8 + $0x1dc0] sm:$0xff]
    %v1749 = vld [vmem:[#allocation8 + $0x1dc8] sm:$0xff]
    %v1750 = vld [vmem:[#allocation8 + $0x1dd0] sm:$0xff]
    %v1751 = vld [vmem:[#allocation8 + $0x1dd8] sm:$0xff]
    %v1752 = vld [vmem:[#allocation8 + $0x1de0] sm:$0xff]
    %v1753 = vld [vmem:[#allocation8 + $0x1de8] sm:$0xff]
    %v1754 = vld [vmem:[#allocation8 + $0x1df0] sm:$0xff]
    %v1755 = vld [vmem:[#allocation8 + $0x1df8] sm:$0xff]
    %v1756 = vld [vmem:[#allocation8 + $0x1e00] sm:$0xff]
    %v1757 = vld [vmem:[#allocation8 + $0x1e08] sm:$0xff]
    %v1758 = vld [vmem:[#allocation8 + $0x1e10] sm:$0xff]
    %v1759 = vld [vmem:[#allocation8 + $0x1e18] sm:$0xff]
    %v1760 = vld [vmem:[#allocation8 + $0x1e20] sm:$0xff]
    %v1761 = vld [vmem:[#allocation8 + $0x1e28] sm:$0xff]
    %v1762 = vld [vmem:[#allocation8 + $0x1e30] sm:$0xff]
    %v1763 = vld [vmem:[#allocation8 + $0x1e38] sm:$0xff]
    %v1764 = vld [vmem:[#allocation8 + $0x1e40] sm:$0xff]
    %v1765 = vld [vmem:[#allocation8 + $0x1e48] sm:$0xff]
    %v1766 = vld [vmem:[#allocation8 + $0x1e50] sm:$0xff]
    %v1767 = vld [vmem:[#allocation8 + $0x1e58] sm:$0xff]
    %v1768 = vld [vmem:[#allocation8 + $0x1e60] sm:$0xff]
    %v1769 = vld [vmem:[#allocation8 + $0x1e68] sm:$0xff]
    %v1770 = vld [vmem:[#allocation8 + $0x1e70] sm:$0xff]
    %v1771 = vld [vmem:[#allocation8 + $0x1e78] sm:$0xff]
    %v1772 = vld [vmem:[#allocation8 + $0x1e80] sm:$0xff]
    %v1773 = vld [vmem:[#allocation8 + $0x1e88] sm:$0xff]
    %v1774 = vld [vmem:[#allocation8 + $0x1e90] sm:$0xff]
    %v1775 = vld [vmem:[#allocation8 + $0x1e98] sm:$0xff]
    %v1776 = vld [vmem:[#allocation8 + $0x1ea0] sm:$0xff]
    %v1777 = vld [vmem:[#allocation8 + $0x1ea8] sm:$0xff]
    %v1778 = vld [vmem:[#allocation8 + $0x1eb0] sm:$0xff]
    %v1779 = vld [vmem:[#allocation8 + $0x1eb8] sm:$0xff]
    %v1780 = vld [vmem:[#allocation8 + $0x1ec0] sm:$0xff]
    %v1781 = vld [vmem:[#allocation8 + $0x1ec8] sm:$0xff]
    %v1782 = vld [vmem:[#allocation8 + $0x1ed0] sm:$0xff]
    %v1783 = vld [vmem:[#allocation8 + $0x1ed8] sm:$0xff]
    %v1784 = vld [vmem:[#allocation8 + $0x1ee0] sm:$0xff]
    %v1785 = vld [vmem:[#allocation8 + $0x1ee8] sm:$0xff]
    %v1786 = vld [vmem:[#allocation8 + $0x1ef0] sm:$0xff]
    %v1787 = vld [vmem:[#allocation8 + $0x1ef8] sm:$0xff]
    %v1788 = vld [vmem:[#allocation8 + $0x1f00] sm:$0xff]
    %v1789 = vld [vmem:[#allocation8 + $0x1f08] sm:$0xff]
    %v1790 = vld [vmem:[#allocation8 + $0x1f10] sm:$0xff]
    %v1791 = vld [vmem:[#allocation8 + $0x1f18] sm:$0xff]
    %v1792 = vld [vmem:[#allocation8 + $0x1f20] sm:$0xff]
    %v1793 = vld [vmem:[#allocation8 + $0x1f28] sm:$0xff]
    %v1794 = vld [vmem:[#allocation8 + $0x1f30] sm:$0xff]
    %v1795 = vld [vmem:[#allocation8 + $0x1f38] sm:$0xff]
    %v1796 = vld [vmem:[#allocation8 + $0x1f40] sm:$0xff]
    %v1797 = vld [vmem:[#allocation8 + $0x1f48] sm:$0xff]
    %v1798 = vld [vmem:[#allocation8 + $0x1f50] sm:$0xff]
    %v1799 = vld [vmem:[#allocation8 + $0x1f58] sm:$0xff]
    %v1800 = vld [vmem:[#allocation8 + $0x1f60] sm:$0xff]
    %v1801 = vld [vmem:[#allocation8 + $0x1f68] sm:$0xff]
    %v1802 = vld [vmem:[#allocation8 + $0x1f70] sm:$0xff]
    %v1803 = vld [vmem:[#allocation8 + $0x1f78] sm:$0xff]
    %v1804 = vld [vmem:[#allocation8 + $0x1f80] sm:$0xff]
    %v1805 = vld [vmem:[#allocation8 + $0x1f88] sm:$0xff]
    %v1806 = vld [vmem:[#allocation8 + $0x1f90] sm:$0xff]
    %v1807 = vld [vmem:[#allocation8 + $0x1f98] sm:$0xff]
    %v1808 = vld [vmem:[#allocation8 + $0x1fa0] sm:$0xff]
    %v1809 = vld [vmem:[#allocation8 + $0x1fa8] sm:$0xff]
    %v1810 = vld [vmem:[#allocation8 + $0x1fb0] sm:$0xff]
    %v1811 = vld [vmem:[#allocation8 + $0x1fb8] sm:$0xff]
    %v1812 = vld [vmem:[#allocation8 + $0x1fc0] sm:$0xff]
    %v1813 = vld [vmem:[#allocation8 + $0x1fc8] sm:$0xff]
    %v1814 = vld [vmem:[#allocation8 + $0x1fd0] sm:$0xff]
    %v1815 = vld [vmem:[#allocation8 + $0x1fd8] sm:$0xff]
    %v1816 = vld [vmem:[#allocation8 + $0x1fe0] sm:$0xff]
    %v1817 = vld [vmem:[#allocation8 + $0x1fe8] sm:$0xff]
    %v1818 = vld [vmem:[#allocation8 + $0x1ff0] sm:$0xff]
    %v1819 = vld [vmem:[#allocation8 + $0x1ff8] sm:$0xff]
    %v1820 = vld [vmem:[#allocation9] sm:$0xff]
    %v1822 = vlaneseq
    %v1823 = vshrl.u32 %v1822, 7
    %v1824 = vsub.s32 0, %v1823
    %v1825 = vrot.slane %v1820, %v1824
    %v1826 = vlaneseq
    %v1827 = vshrl.u32 %v1826, 7
    %v1828 = vsub.s32 1, %v1827
    %v1829 = vrot.slane %v1820, %v1828
    %v1830 = vlaneseq
    %v1831 = vshrl.u32 %v1830, 7
    %v1832 = vsub.s32 2, %v1831
    %v1833 = vrot.slane %v1820, %v1832
    %v1834 = vlaneseq
    %v1835 = vshrl.u32 %v1834, 7
    %v1836 = vsub.s32 3, %v1835
    %v1837 = vrot.slane %v1820, %v1836
    %v1838 = vlaneseq
    %v1839 = vshrl.u32 %v1838, 7
    %v1840 = vsub.s32 4, %v1839
    %v1841 = vrot.slane %v1820, %v1840
    %v1842 = vlaneseq
    %v1843 = vshrl.u32 %v1842, 7
    %v1844 = vsub.s32 5, %v1843
    %v1845 = vrot.slane %v1820, %v1844
    %v1846 = vlaneseq
    %v1847 = vshrl.u32 %v1846, 7
    %v1848 = vsub.s32 6, %v1847
    %v1849 = vrot.slane %v1820, %v1848
    %v1850 = vlaneseq
    %v1851 = vshrl.u32 %v1850, 7
    %v1852 = vsub.s32 7, %v1851
    %v1853 = vrot.slane %v1820, %v1852
    %v2886 = vunpack.c.l.b16 %v796
    %v2887 = vunpack.c.h.b16 %v796
    %v2888 = vunpack.c.l.b16 %v797
    %v2889 = vunpack.c.h.b16 %v797
    %v2890 = vunpack.c.l.b16 %v798
    %v2891 = vunpack.c.h.b16 %v798
    %v2892 = vunpack.c.l.b16 %v799
    %v2893 = vunpack.c.h.b16 %v799
    %v2894 = vunpack.c.l.b16 %v800
    %v2895 = vunpack.c.h.b16 %v800
    %v2896 = vunpack.c.l.b16 %v801
    %v2897 = vunpack.c.h.b16 %v801
    %v2898 = vunpack.c.l.b16 %v802
    %v2899 = vunpack.c.h.b16 %v802
    %v2900 = vunpack.c.l.b16 %v803
    %v2901 = vunpack.c.h.b16 %v803
    %v2902 = vunpack.c.l.b16 %v804
    %v2903 = vunpack.c.h.b16 %v804
    %v2904 = vunpack.c.l.b16 %v805
    %v2905 = vunpack.c.h.b16 %v805
    %v2906 = vunpack.c.l.b16 %v806
    %v2907 = vunpack.c.h.b16 %v806
    %v2908 = vunpack.c.l.b16 %v807
    %v2909 = vunpack.c.h.b16 %v807
    %v2910 = vunpack.c.l.b16 %v808
    %v2911 = vunpack.c.h.b16 %v808
    %v2912 = vunpack.c.l.b16 %v809
    %v2913 = vunpack.c.h.b16 %v809
    %v2914 = vunpack.c.l.b16 %v810
    %v2915 = vunpack.c.h.b16 %v810
    %v2916 = vunpack.c.l.b16 %v811
    %v2917 = vunpack.c.h.b16 %v811
    %v2918 = vunpack.c.l.b16 %v812
    %v2919 = vunpack.c.h.b16 %v812
    %v2920 = vunpack.c.l.b16 %v813
    %v2921 = vunpack.c.h.b16 %v813
    %v2922 = vunpack.c.l.b16 %v814
    %v2923 = vunpack.c.h.b16 %v814
    %v2924 = vunpack.c.l.b16 %v815
    %v2925 = vunpack.c.h.b16 %v815
    %v2926 = vunpack.c.l.b16 %v816
    %v2927 = vunpack.c.h.b16 %v816
    %v2928 = vunpack.c.l.b16 %v817
    %v2929 = vunpack.c.h.b16 %v817
    %v2930 = vunpack.c.l.b16 %v818
    %v2931 = vunpack.c.h.b16 %v818
    %v2932 = vunpack.c.l.b16 %v819
    %v2933 = vunpack.c.h.b16 %v819
    %v2934 = vunpack.c.l.b16 %v820
    %v2935 = vunpack.c.h.b16 %v820
    %v2936 = vunpack.c.l.b16 %v821
    %v2937 = vunpack.c.h.b16 %v821
    %v2938 = vunpack.c.l.b16 %v822
    %v2939 = vunpack.c.h.b16 %v822
    %v2940 = vunpack.c.l.b16 %v823
    %v2941 = vunpack.c.h.b16 %v823
    %v2942 = vunpack.c.l.b16 %v824
    %v2943 = vunpack.c.h.b16 %v824
    %v2944 = vunpack.c.l.b16 %v825
    %v2945 = vunpack.c.h.b16 %v825
    %v2946 = vunpack.c.l.b16 %v826
    %v2947 = vunpack.c.h.b16 %v826
    %v2948 = vunpack.c.l.b16 %v827
    %v2949 = vunpack.c.h.b16 %v827
    %v2950 = vunpack.c.l.b16 %v828
    %v2951 = vunpack.c.h.b16 %v828
    %v2952 = vunpack.c.l.b16 %v829
    %v2953 = vunpack.c.h.b16 %v829
    %v2954 = vunpack.c.l.b16 %v830
    %v2955 = vunpack.c.h.b16 %v830
    %v2956 = vunpack.c.l.b16 %v831
    %v2957 = vunpack.c.h.b16 %v831
    %v2958 = vunpack.c.l.b16 %v832
    %v2959 = vunpack.c.h.b16 %v832
    %v2960 = vunpack.c.l.b16 %v833
    %v2961 = vunpack.c.h.b16 %v833
    %v2962 = vunpack.c.l.b16 %v834
    %v2963 = vunpack.c.h.b16 %v834
    %v2964 = vunpack.c.l.b16 %v835
    %v2965 = vunpack.c.h.b16 %v835
    %v2966 = vunpack.c.l.b16 %v836
    %v2967 = vunpack.c.h.b16 %v836
    %v2968 = vunpack.c.l.b16 %v837
    %v2969 = vunpack.c.h.b16 %v837
    %v2970 = vunpack.c.l.b16 %v838
    %v2971 = vunpack.c.h.b16 %v838
    %v2972 = vunpack.c.l.b16 %v839
    %v2973 = vunpack.c.h.b16 %v839
    %v2974 = vunpack.c.l.b16 %v840
    %v2975 = vunpack.c.h.b16 %v840
    %v2976 = vunpack.c.l.b16 %v841
    %v2977 = vunpack.c.h.b16 %v841
    %v2978 = vunpack.c.l.b16 %v842
    %v2979 = vunpack.c.h.b16 %v842
    %v2980 = vunpack.c.l.b16 %v843
    %v2981 = vunpack.c.h.b16 %v843
    %v2982 = vunpack.c.l.b16 %v844
    %v2983 = vunpack.c.h.b16 %v844
    %v2984 = vunpack.c.l.b16 %v845
    %v2985 = vunpack.c.h.b16 %v845
    %v2986 = vunpack.c.l.b16 %v846
    %v2987 = vunpack.c.h.b16 %v846
    %v2988 = vunpack.c.l.b16 %v847
    %v2989 = vunpack.c.h.b16 %v847
    %v2990 = vunpack.c.l.b16 %v848
    %v2991 = vunpack.c.h.b16 %v848
    %v2992 = vunpack.c.l.b16 %v849
    %v2993 = vunpack.c.h.b16 %v849
    %v2994 = vunpack.c.l.b16 %v850
    %v2995 = vunpack.c.h.b16 %v850
    %v2996 = vunpack.c.l.b16 %v851
    %v2997 = vunpack.c.h.b16 %v851
    %v2998 = vunpack.c.l.b16 %v852
    %v2999 = vunpack.c.h.b16 %v852
    %v3000 = vunpack.c.l.b16 %v853
    %v3001 = vunpack.c.h.b16 %v853
    %v3002 = vunpack.c.l.b16 %v854
    %v3003 = vunpack.c.h.b16 %v854
    %v3004 = vunpack.c.l.b16 %v855
    %v3005 = vunpack.c.h.b16 %v855
    %v3006 = vunpack.c.l.b16 %v856
    %v3007 = vunpack.c.h.b16 %v856
    %v3008 = vunpack.c.l.b16 %v857
    %v3009 = vunpack.c.h.b16 %v857
    %v3010 = vunpack.c.l.b16 %v858
    %v3011 = vunpack.c.h.b16 %v858
    %v3012 = vunpack.c.l.b16 %v859
    %v3013 = vunpack.c.h.b16 %v859
    %v3014 = vunpack.c.l.b16 %v860
    %v3015 = vunpack.c.h.b16 %v860
    %v3016 = vunpack.c.l.b16 %v861
    %v3017 = vunpack.c.h.b16 %v861
    %v3018 = vunpack.c.l.b16 %v862
    %v3019 = vunpack.c.h.b16 %v862
    %v3020 = vunpack.c.l.b16 %v863
    %v3021 = vunpack.c.h.b16 %v863
    %v3022 = vunpack.c.l.b16 %v864
    %v3023 = vunpack.c.h.b16 %v864
    %v3024 = vunpack.c.l.b16 %v865
    %v3025 = vunpack.c.h.b16 %v865
    %v3026 = vunpack.c.l.b16 %v866
    %v3027 = vunpack.c.h.b16 %v866
    %v3028 = vunpack.c.l.b16 %v867
    %v3029 = vunpack.c.h.b16 %v867
    %v3030 = vunpack.c.l.b16 %v868
    %v3031 = vunpack.c.h.b16 %v868
    %v3032 = vunpack.c.l.b16 %v869
    %v3033 = vunpack.c.h.b16 %v869
    %v3034 = vunpack.c.l.b16 %v870
    %v3035 = vunpack.c.h.b16 %v870
    %v3036 = vunpack.c.l.b16 %v871
    %v3037 = vunpack.c.h.b16 %v871
    %v3038 = vunpack.c.l.b16 %v872
    %v3039 = vunpack.c.h.b16 %v872
    %v3040 = vunpack.c.l.b16 %v873
    %v3041 = vunpack.c.h.b16 %v873
    %v3042 = vunpack.c.l.b16 %v874
    %v3043 = vunpack.c.h.b16 %v874
    %v3044 = vunpack.c.l.b16 %v875
    %v3045 = vunpack.c.h.b16 %v875
    %v3046 = vunpack.c.l.b16 %v876
    %v3047 = vunpack.c.h.b16 %v876
    %v3048 = vunpack.c.l.b16 %v877
    %v3049 = vunpack.c.h.b16 %v877
    %v3050 = vunpack.c.l.b16 %v878
    %v3051 = vunpack.c.h.b16 %v878
    %v3052 = vunpack.c.l.b16 %v879
    %v3053 = vunpack.c.h.b16 %v879
    %v3054 = vunpack.c.l.b16 %v880
    %v3055 = vunpack.c.h.b16 %v880
    %v3056 = vunpack.c.l.b16 %v881
    %v3057 = vunpack.c.h.b16 %v881
    %v3058 = vunpack.c.l.b16 %v882
    %v3059 = vunpack.c.h.b16 %v882
    %v3060 = vunpack.c.l.b16 %v883
    %v3061 = vunpack.c.h.b16 %v883
    %v3062 = vunpack.c.l.b16 %v884
    %v3063 = vunpack.c.h.b16 %v884
    %v3064 = vunpack.c.l.b16 %v885
    %v3065 = vunpack.c.h.b16 %v885
    %v3066 = vunpack.c.l.b16 %v886
    %v3067 = vunpack.c.h.b16 %v886
    %v3068 = vunpack.c.l.b16 %v887
    %v3069 = vunpack.c.h.b16 %v887
    %v3070 = vunpack.c.l.b16 %v888
    %v3071 = vunpack.c.h.b16 %v888
    %v3072 = vunpack.c.l.b16 %v889
    %v3073 = vunpack.c.h.b16 %v889
    %v3074 = vunpack.c.l.b16 %v890
    %v3075 = vunpack.c.h.b16 %v890
    %v3076 = vunpack.c.l.b16 %v891
    %v3077 = vunpack.c.h.b16 %v891
    %v3078 = vunpack.c.l.b16 %v892
    %v3079 = vunpack.c.h.b16 %v892
    %v3080 = vunpack.c.l.b16 %v893
    %v3081 = vunpack.c.h.b16 %v893
    %v3082 = vunpack.c.l.b16 %v894
    %v3083 = vunpack.c.h.b16 %v894
    %v3084 = vunpack.c.l.b16 %v895
    %v3085 = vunpack.c.h.b16 %v895
    %v3086 = vunpack.c.l.b16 %v896
    %v3087 = vunpack.c.h.b16 %v896
    %v3088 = vunpack.c.l.b16 %v897
    %v3089 = vunpack.c.h.b16 %v897
    %v3090 = vunpack.c.l.b16 %v898
    %v3091 = vunpack.c.h.b16 %v898
    %v3092 = vunpack.c.l.b16 %v899
    %v3093 = vunpack.c.h.b16 %v899
    %v3094 = vunpack.c.l.b16 %v900
    %v3095 = vunpack.c.h.b16 %v900
    %v3096 = vunpack.c.l.b16 %v901
    %v3097 = vunpack.c.h.b16 %v901
    %v3098 = vunpack.c.l.b16 %v902
    %v3099 = vunpack.c.h.b16 %v902
    %v3100 = vunpack.c.l.b16 %v903
    %v3101 = vunpack.c.h.b16 %v903
    %v3102 = vunpack.c.l.b16 %v904
    %v3103 = vunpack.c.h.b16 %v904
    %v3104 = vunpack.c.l.b16 %v905
    %v3105 = vunpack.c.h.b16 %v905
    %v3106 = vunpack.c.l.b16 %v906
    %v3107 = vunpack.c.h.b16 %v906
    %v3108 = vunpack.c.l.b16 %v907
    %v3109 = vunpack.c.h.b16 %v907
    %v3110 = vunpack.c.l.b16 %v908
    %v3111 = vunpack.c.h.b16 %v908
    %v3112 = vunpack.c.l.b16 %v909
    %v3113 = vunpack.c.h.b16 %v909
    %v3114 = vunpack.c.l.b16 %v910
    %v3115 = vunpack.c.h.b16 %v910
    %v3116 = vunpack.c.l.b16 %v911
    %v3117 = vunpack.c.h.b16 %v911
    %v3118 = vunpack.c.l.b16 %v912
    %v3119 = vunpack.c.h.b16 %v912
    %v3120 = vunpack.c.l.b16 %v913
    %v3121 = vunpack.c.h.b16 %v913
    %v3122 = vunpack.c.l.b16 %v914
    %v3123 = vunpack.c.h.b16 %v914
    %v3124 = vunpack.c.l.b16 %v915
    %v3125 = vunpack.c.h.b16 %v915
    %v3126 = vunpack.c.l.b16 %v916
    %v3127 = vunpack.c.h.b16 %v916
    %v3128 = vunpack.c.l.b16 %v917
    %v3129 = vunpack.c.h.b16 %v917
    %v3130 = vunpack.c.l.b16 %v918
    %v3131 = vunpack.c.h.b16 %v918
    %v3132 = vunpack.c.l.b16 %v919
    %v3133 = vunpack.c.h.b16 %v919
    %v3134 = vunpack.c.l.b16 %v920
    %v3135 = vunpack.c.h.b16 %v920
    %v3136 = vunpack.c.l.b16 %v921
    %v3137 = vunpack.c.h.b16 %v921
    %v3138 = vunpack.c.l.b16 %v922
    %v3139 = vunpack.c.h.b16 %v922
    %v3140 = vunpack.c.l.b16 %v923
    %v3141 = vunpack.c.h.b16 %v923
    %v3142 = vunpack.c.l.b16 %v924
    %v3143 = vunpack.c.h.b16 %v924
    %v3144 = vunpack.c.l.b16 %v925
    %v3145 = vunpack.c.h.b16 %v925
    %v3146 = vunpack.c.l.b16 %v926
    %v3147 = vunpack.c.h.b16 %v926
    %v3148 = vunpack.c.l.b16 %v927
    %v3149 = vunpack.c.h.b16 %v927
    %v3150 = vunpack.c.l.b16 %v928
    %v3151 = vunpack.c.h.b16 %v928
    %v3152 = vunpack.c.l.b16 %v929
    %v3153 = vunpack.c.h.b16 %v929
    %v3154 = vunpack.c.l.b16 %v930
    %v3155 = vunpack.c.h.b16 %v930
    %v3156 = vunpack.c.l.b16 %v931
    %v3157 = vunpack.c.h.b16 %v931
    %v3158 = vunpack.c.l.b16 %v932
    %v3159 = vunpack.c.h.b16 %v932
    %v3160 = vunpack.c.l.b16 %v933
    %v3161 = vunpack.c.h.b16 %v933
    %v3162 = vunpack.c.l.b16 %v934
    %v3163 = vunpack.c.h.b16 %v934
    %v3164 = vunpack.c.l.b16 %v935
    %v3165 = vunpack.c.h.b16 %v935
    %v3166 = vunpack.c.l.b16 %v936
    %v3167 = vunpack.c.h.b16 %v936
    %v3168 = vunpack.c.l.b16 %v937
    %v3169 = vunpack.c.h.b16 %v937
    %v3170 = vunpack.c.l.b16 %v938
    %v3171 = vunpack.c.h.b16 %v938
    %v3172 = vunpack.c.l.b16 %v939
    %v3173 = vunpack.c.h.b16 %v939
    %v3174 = vunpack.c.l.b16 %v940
    %v3175 = vunpack.c.h.b16 %v940
    %v3176 = vunpack.c.l.b16 %v941
    %v3177 = vunpack.c.h.b16 %v941
    %v3178 = vunpack.c.l.b16 %v942
    %v3179 = vunpack.c.h.b16 %v942
    %v3180 = vunpack.c.l.b16 %v943
    %v3181 = vunpack.c.h.b16 %v943
    %v3182 = vunpack.c.l.b16 %v944
    %v3183 = vunpack.c.h.b16 %v944
    %v3184 = vunpack.c.l.b16 %v945
    %v3185 = vunpack.c.h.b16 %v945
    %v3186 = vunpack.c.l.b16 %v946
    %v3187 = vunpack.c.h.b16 %v946
    %v3188 = vunpack.c.l.b16 %v947
    %v3189 = vunpack.c.h.b16 %v947
    %v3190 = vunpack.c.l.b16 %v948
    %v3191 = vunpack.c.h.b16 %v948
    %v3192 = vunpack.c.l.b16 %v949
    %v3193 = vunpack.c.h.b16 %v949
    %v3194 = vunpack.c.l.b16 %v950
    %v3195 = vunpack.c.h.b16 %v950
    %v3196 = vunpack.c.l.b16 %v951
    %v3197 = vunpack.c.h.b16 %v951
    %v3198 = vunpack.c.l.b16 %v952
    %v3199 = vunpack.c.h.b16 %v952
    %v3200 = vunpack.c.l.b16 %v953
    %v3201 = vunpack.c.h.b16 %v953
    %v3202 = vunpack.c.l.b16 %v954
    %v3203 = vunpack.c.h.b16 %v954
    %v3204 = vunpack.c.l.b16 %v955
    %v3205 = vunpack.c.h.b16 %v955
    %v3206 = vunpack.c.l.b16 %v956
    %v3207 = vunpack.c.h.b16 %v956
    %v3208 = vunpack.c.l.b16 %v957
    %v3209 = vunpack.c.h.b16 %v957
    %v3210 = vunpack.c.l.b16 %v958
    %v3211 = vunpack.c.h.b16 %v958
    %v3212 = vunpack.c.l.b16 %v959
    %v3213 = vunpack.c.h.b16 %v959
    %v3214 = vunpack.c.l.b16 %v960
    %v3215 = vunpack.c.h.b16 %v960
    %v3216 = vunpack.c.l.b16 %v961
    %v3217 = vunpack.c.h.b16 %v961
    %v3218 = vunpack.c.l.b16 %v962
    %v3219 = vunpack.c.h.b16 %v962
    %v3220 = vunpack.c.l.b16 %v963
    %v3221 = vunpack.c.h.b16 %v963
    %v3222 = vunpack.c.l.b16 %v964
    %v3223 = vunpack.c.h.b16 %v964
    %v3224 = vunpack.c.l.b16 %v965
    %v3225 = vunpack.c.h.b16 %v965
    %v3226 = vunpack.c.l.b16 %v966
    %v3227 = vunpack.c.h.b16 %v966
    %v3228 = vunpack.c.l.b16 %v967
    %v3229 = vunpack.c.h.b16 %v967
    %v3230 = vunpack.c.l.b16 %v968
    %v3231 = vunpack.c.h.b16 %v968
    %v3232 = vunpack.c.l.b16 %v969
    %v3233 = vunpack.c.h.b16 %v969
    %v3234 = vunpack.c.l.b16 %v970
    %v3235 = vunpack.c.h.b16 %v970
    %v3236 = vunpack.c.l.b16 %v971
    %v3237 = vunpack.c.h.b16 %v971
    %v3238 = vunpack.c.l.b16 %v972
    %v3239 = vunpack.c.h.b16 %v972
    %v3240 = vunpack.c.l.b16 %v973
    %v3241 = vunpack.c.h.b16 %v973
    %v3242 = vunpack.c.l.b16 %v974
    %v3243 = vunpack.c.h.b16 %v974
    %v3244 = vunpack.c.l.b16 %v975
    %v3245 = vunpack.c.h.b16 %v975
    %v3246 = vunpack.c.l.b16 %v976
    %v3247 = vunpack.c.h.b16 %v976
    %v3248 = vunpack.c.l.b16 %v977
    %v3249 = vunpack.c.h.b16 %v977
    %v3250 = vunpack.c.l.b16 %v978
    %v3251 = vunpack.c.h.b16 %v978
    %v3252 = vunpack.c.l.b16 %v979
    %v3253 = vunpack.c.h.b16 %v979
    %v3254 = vunpack.c.l.b16 %v980
    %v3255 = vunpack.c.h.b16 %v980
    %v3256 = vunpack.c.l.b16 %v981
    %v3257 = vunpack.c.h.b16 %v981
    %v3258 = vunpack.c.l.b16 %v982
    %v3259 = vunpack.c.h.b16 %v982
    %v3260 = vunpack.c.l.b16 %v983
    %v3261 = vunpack.c.h.b16 %v983
    %v3262 = vunpack.c.l.b16 %v984
    %v3263 = vunpack.c.h.b16 %v984
    %v3264 = vunpack.c.l.b16 %v985
    %v3265 = vunpack.c.h.b16 %v985
    %v3266 = vunpack.c.l.b16 %v986
    %v3267 = vunpack.c.h.b16 %v986
    %v3268 = vunpack.c.l.b16 %v987
    %v3269 = vunpack.c.h.b16 %v987
    %v3270 = vunpack.c.l.b16 %v988
    %v3271 = vunpack.c.h.b16 %v988
    %v3272 = vunpack.c.l.b16 %v989
    %v3273 = vunpack.c.h.b16 %v989
    %v3274 = vunpack.c.l.b16 %v990
    %v3275 = vunpack.c.h.b16 %v990
    %v3276 = vunpack.c.l.b16 %v991
    %v3277 = vunpack.c.h.b16 %v991
    %v3278 = vunpack.c.l.b16 %v992
    %v3279 = vunpack.c.h.b16 %v992
    %v3280 = vunpack.c.l.b16 %v993
    %v3281 = vunpack.c.h.b16 %v993
    %v3282 = vunpack.c.l.b16 %v994
    %v3283 = vunpack.c.h.b16 %v994
    %v3284 = vunpack.c.l.b16 %v995
    %v3285 = vunpack.c.h.b16 %v995
    %v3286 = vunpack.c.l.b16 %v996
    %v3287 = vunpack.c.h.b16 %v996
    %v3288 = vunpack.c.l.b16 %v997
    %v3289 = vunpack.c.h.b16 %v997
    %v3290 = vunpack.c.l.b16 %v998
    %v3291 = vunpack.c.h.b16 %v998
    %v3292 = vunpack.c.l.b16 %v999
    %v3293 = vunpack.c.h.b16 %v999
    %v3294 = vunpack.c.l.b16 %v1000
    %v3295 = vunpack.c.h.b16 %v1000
    %v3296 = vunpack.c.l.b16 %v1001
    %v3297 = vunpack.c.h.b16 %v1001
    %v3298 = vunpack.c.l.b16 %v1002
    %v3299 = vunpack.c.h.b16 %v1002
    %v3300 = vunpack.c.l.b16 %v1003
    %v3301 = vunpack.c.h.b16 %v1003
    %v3302 = vunpack.c.l.b16 %v1004
    %v3303 = vunpack.c.h.b16 %v1004
    %v3304 = vunpack.c.l.b16 %v1005
    %v3305 = vunpack.c.h.b16 %v1005
    %v3306 = vunpack.c.l.b16 %v1006
    %v3307 = vunpack.c.h.b16 %v1006
    %v3308 = vunpack.c.l.b16 %v1007
    %v3309 = vunpack.c.h.b16 %v1007
    %v3310 = vunpack.c.l.b16 %v1008
    %v3311 = vunpack.c.h.b16 %v1008
    %v3312 = vunpack.c.l.b16 %v1009
    %v3313 = vunpack.c.h.b16 %v1009
    %v3314 = vunpack.c.l.b16 %v1010
    %v3315 = vunpack.c.h.b16 %v1010
    %v3316 = vunpack.c.l.b16 %v1011
    %v3317 = vunpack.c.h.b16 %v1011
    %v3318 = vunpack.c.l.b16 %v1012
    %v3319 = vunpack.c.h.b16 %v1012
    %v3320 = vunpack.c.l.b16 %v1013
    %v3321 = vunpack.c.h.b16 %v1013
    %v3322 = vunpack.c.l.b16 %v1014
    %v3323 = vunpack.c.h.b16 %v1014
    %v3324 = vunpack.c.l.b16 %v1015
    %v3325 = vunpack.c.h.b16 %v1015
    %v3326 = vunpack.c.l.b16 %v1016
    %v3327 = vunpack.c.h.b16 %v1016
    %v3328 = vunpack.c.l.b16 %v1017
    %v3329 = vunpack.c.h.b16 %v1017
    %v3330 = vunpack.c.l.b16 %v1018
    %v3331 = vunpack.c.h.b16 %v1018
    %v3332 = vunpack.c.l.b16 %v1019
    %v3333 = vunpack.c.h.b16 %v1019
    %v3334 = vunpack.c.l.b16 %v1020
    %v3335 = vunpack.c.h.b16 %v1020
    %v3336 = vunpack.c.l.b16 %v1021
    %v3337 = vunpack.c.h.b16 %v1021
    %v3338 = vunpack.c.l.b16 %v1022
    %v3339 = vunpack.c.h.b16 %v1022
    %v3340 = vunpack.c.l.b16 %v1023
    %v3341 = vunpack.c.h.b16 %v1023
    %v3342 = vunpack.c.l.b16 %v1024
    %v3343 = vunpack.c.h.b16 %v1024
    %v3344 = vunpack.c.l.b16 %v1025
    %v3345 = vunpack.c.h.b16 %v1025
    %v3346 = vunpack.c.l.b16 %v1026
    %v3347 = vunpack.c.h.b16 %v1026
    %v3348 = vunpack.c.l.b16 %v1027
    %v3349 = vunpack.c.h.b16 %v1027
    %v3350 = vunpack.c.l.b16 %v1028
    %v3351 = vunpack.c.h.b16 %v1028
    %v3352 = vunpack.c.l.b16 %v1029
    %v3353 = vunpack.c.h.b16 %v1029
    %v3354 = vunpack.c.l.b16 %v1030
    %v3355 = vunpack.c.h.b16 %v1030
    %v3356 = vunpack.c.l.b16 %v1031
    %v3357 = vunpack.c.h.b16 %v1031
    %v3358 = vunpack.c.l.b16 %v1032
    %v3359 = vunpack.c.h.b16 %v1032
    %v3360 = vunpack.c.l.b16 %v1033
    %v3361 = vunpack.c.h.b16 %v1033
    %v3362 = vunpack.c.l.b16 %v1034
    %v3363 = vunpack.c.h.b16 %v1034
    %v3364 = vunpack.c.l.b16 %v1035
    %v3365 = vunpack.c.h.b16 %v1035
    %v3366 = vunpack.c.l.b16 %v1036
    %v3367 = vunpack.c.h.b16 %v1036
    %v3368 = vunpack.c.l.b16 %v1037
    %v3369 = vunpack.c.h.b16 %v1037
    %v3370 = vunpack.c.l.b16 %v1038
    %v3371 = vunpack.c.h.b16 %v1038
    %v3372 = vunpack.c.l.b16 %v1039
    %v3373 = vunpack.c.h.b16 %v1039
    %v3374 = vunpack.c.l.b16 %v1040
    %v3375 = vunpack.c.h.b16 %v1040
    %v3376 = vunpack.c.l.b16 %v1041
    %v3377 = vunpack.c.h.b16 %v1041
    %v3378 = vunpack.c.l.b16 %v1042
    %v3379 = vunpack.c.h.b16 %v1042
    %v3380 = vunpack.c.l.b16 %v1043
    %v3381 = vunpack.c.h.b16 %v1043
    %v3382 = vunpack.c.l.b16 %v1044
    %v3383 = vunpack.c.h.b16 %v1044
    %v3384 = vunpack.c.l.b16 %v1045
    %v3385 = vunpack.c.h.b16 %v1045
    %v3386 = vunpack.c.l.b16 %v1046
    %v3387 = vunpack.c.h.b16 %v1046
    %v3388 = vunpack.c.l.b16 %v1047
    %v3389 = vunpack.c.h.b16 %v1047
    %v3390 = vunpack.c.l.b16 %v1048
    %v3391 = vunpack.c.h.b16 %v1048
    %v3392 = vunpack.c.l.b16 %v1049
    %v3393 = vunpack.c.h.b16 %v1049
    %v3394 = vunpack.c.l.b16 %v1050
    %v3395 = vunpack.c.h.b16 %v1050
    %v3396 = vunpack.c.l.b16 %v1051
    %v3397 = vunpack.c.h.b16 %v1051
    %v3398 = vunpack.c.l.b16 %v1052
    %v3399 = vunpack.c.h.b16 %v1052
    %v3400 = vunpack.c.l.b16 %v1053
    %v3401 = vunpack.c.h.b16 %v1053
    %v3402 = vunpack.c.l.b16 %v1054
    %v3403 = vunpack.c.h.b16 %v1054
    %v3404 = vunpack.c.l.b16 %v1055
    %v3405 = vunpack.c.h.b16 %v1055
    %v3406 = vunpack.c.l.b16 %v1056
    %v3407 = vunpack.c.h.b16 %v1056
    %v3408 = vunpack.c.l.b16 %v1057
    %v3409 = vunpack.c.h.b16 %v1057
    %v3410 = vunpack.c.l.b16 %v1058
    %v3411 = vunpack.c.h.b16 %v1058
    %v3412 = vunpack.c.l.b16 %v1059
    %v3413 = vunpack.c.h.b16 %v1059
    %v3414 = vunpack.c.l.b16 %v1060
    %v3415 = vunpack.c.h.b16 %v1060
    %v3416 = vunpack.c.l.b16 %v1061
    %v3417 = vunpack.c.h.b16 %v1061
    %v3418 = vunpack.c.l.b16 %v1062
    %v3419 = vunpack.c.h.b16 %v1062
    %v3420 = vunpack.c.l.b16 %v1063
    %v3421 = vunpack.c.h.b16 %v1063
    %v3422 = vunpack.c.l.b16 %v1064
    %v3423 = vunpack.c.h.b16 %v1064
    %v3424 = vunpack.c.l.b16 %v1065
    %v3425 = vunpack.c.h.b16 %v1065
    %v3426 = vunpack.c.l.b16 %v1066
    %v3427 = vunpack.c.h.b16 %v1066
    %v3428 = vunpack.c.l.b16 %v1067
    %v3429 = vunpack.c.h.b16 %v1067
    %v3430 = vunpack.c.l.b16 %v1068
    %v3431 = vunpack.c.h.b16 %v1068
    %v3432 = vunpack.c.l.b16 %v1069
    %v3433 = vunpack.c.h.b16 %v1069
    %v3434 = vunpack.c.l.b16 %v1070
    %v3435 = vunpack.c.h.b16 %v1070
    %v3436 = vunpack.c.l.b16 %v1071
    %v3437 = vunpack.c.h.b16 %v1071
    %v3438 = vunpack.c.l.b16 %v1072
    %v3439 = vunpack.c.h.b16 %v1072
    %v3440 = vunpack.c.l.b16 %v1073
    %v3441 = vunpack.c.h.b16 %v1073
    %v3442 = vunpack.c.l.b16 %v1074
    %v3443 = vunpack.c.h.b16 %v1074
    %v3444 = vunpack.c.l.b16 %v1075
    %v3445 = vunpack.c.h.b16 %v1075
    %v3446 = vunpack.c.l.b16 %v1076
    %v3447 = vunpack.c.h.b16 %v1076
    %v3448 = vunpack.c.l.b16 %v1077
    %v3449 = vunpack.c.h.b16 %v1077
    %v3450 = vunpack.c.l.b16 %v1078
    %v3451 = vunpack.c.h.b16 %v1078
    %v3452 = vunpack.c.l.b16 %v1079
    %v3453 = vunpack.c.h.b16 %v1079
    %v3454 = vunpack.c.l.b16 %v1080
    %v3455 = vunpack.c.h.b16 %v1080
    %v3456 = vunpack.c.l.b16 %v1081
    %v3457 = vunpack.c.h.b16 %v1081
    %v3458 = vunpack.c.l.b16 %v1082
    %v3459 = vunpack.c.h.b16 %v1082
    %v3460 = vunpack.c.l.b16 %v1083
    %v3461 = vunpack.c.h.b16 %v1083
    %v3462 = vunpack.c.l.b16 %v1084
    %v3463 = vunpack.c.h.b16 %v1084
    %v3464 = vunpack.c.l.b16 %v1085
    %v3465 = vunpack.c.h.b16 %v1085
    %v3466 = vunpack.c.l.b16 %v1086
    %v3467 = vunpack.c.h.b16 %v1086
    %v3468 = vunpack.c.l.b16 %v1087
    %v3469 = vunpack.c.h.b16 %v1087
    %v3470 = vunpack.c.l.b16 %v1088
    %v3471 = vunpack.c.h.b16 %v1088
    %v3472 = vunpack.c.l.b16 %v1089
    %v3473 = vunpack.c.h.b16 %v1089
    %v3474 = vunpack.c.l.b16 %v1090
    %v3475 = vunpack.c.h.b16 %v1090
    %v3476 = vunpack.c.l.b16 %v1091
    %v3477 = vunpack.c.h.b16 %v1091
    %v3478 = vunpack.c.l.b16 %v1092
    %v3479 = vunpack.c.h.b16 %v1092
    %v3480 = vunpack.c.l.b16 %v1093
    %v3481 = vunpack.c.h.b16 %v1093
    %v3482 = vunpack.c.l.b16 %v1094
    %v3483 = vunpack.c.h.b16 %v1094
    %v3484 = vunpack.c.l.b16 %v1095
    %v3485 = vunpack.c.h.b16 %v1095
    %v3486 = vunpack.c.l.b16 %v1096
    %v3487 = vunpack.c.h.b16 %v1096
    %v3488 = vunpack.c.l.b16 %v1097
    %v3489 = vunpack.c.h.b16 %v1097
    %v3490 = vunpack.c.l.b16 %v1098
    %v3491 = vunpack.c.h.b16 %v1098
    %v3492 = vunpack.c.l.b16 %v1099
    %v3493 = vunpack.c.h.b16 %v1099
    %v3494 = vunpack.c.l.b16 %v1100
    %v3495 = vunpack.c.h.b16 %v1100
    %v3496 = vunpack.c.l.b16 %v1101
    %v3497 = vunpack.c.h.b16 %v1101
    %v3498 = vunpack.c.l.b16 %v1102
    %v3499 = vunpack.c.h.b16 %v1102
    %v3500 = vunpack.c.l.b16 %v1103
    %v3501 = vunpack.c.h.b16 %v1103
    %v3502 = vunpack.c.l.b16 %v1104
    %v3503 = vunpack.c.h.b16 %v1104
    %v3504 = vunpack.c.l.b16 %v1105
    %v3505 = vunpack.c.h.b16 %v1105
    %v3506 = vunpack.c.l.b16 %v1106
    %v3507 = vunpack.c.h.b16 %v1106
    %v3508 = vunpack.c.l.b16 %v1107
    %v3509 = vunpack.c.h.b16 %v1107
    %v3510 = vunpack.c.l.b16 %v1108
    %v3511 = vunpack.c.h.b16 %v1108
    %v3512 = vunpack.c.l.b16 %v1109
    %v3513 = vunpack.c.h.b16 %v1109
    %v3514 = vunpack.c.l.b16 %v1110
    %v3515 = vunpack.c.h.b16 %v1110
    %v3516 = vunpack.c.l.b16 %v1111
    %v3517 = vunpack.c.h.b16 %v1111
    %v3518 = vunpack.c.l.b16 %v1112
    %v3519 = vunpack.c.h.b16 %v1112
    %v3520 = vunpack.c.l.b16 %v1113
    %v3521 = vunpack.c.h.b16 %v1113
    %v3522 = vunpack.c.l.b16 %v1114
    %v3523 = vunpack.c.h.b16 %v1114
    %v3524 = vunpack.c.l.b16 %v1115
    %v3525 = vunpack.c.h.b16 %v1115
    %v3526 = vunpack.c.l.b16 %v1116
    %v3527 = vunpack.c.h.b16 %v1116
    %v3528 = vunpack.c.l.b16 %v1117
    %v3529 = vunpack.c.h.b16 %v1117
    %v3530 = vunpack.c.l.b16 %v1118
    %v3531 = vunpack.c.h.b16 %v1118
    %v3532 = vunpack.c.l.b16 %v1119
    %v3533 = vunpack.c.h.b16 %v1119
    %v3534 = vunpack.c.l.b16 %v1120
    %v3535 = vunpack.c.h.b16 %v1120
    %v3536 = vunpack.c.l.b16 %v1121
    %v3537 = vunpack.c.h.b16 %v1121
    %v3538 = vunpack.c.l.b16 %v1122
    %v3539 = vunpack.c.h.b16 %v1122
    %v3540 = vunpack.c.l.b16 %v1123
    %v3541 = vunpack.c.h.b16 %v1123
    %v3542 = vunpack.c.l.b16 %v1124
    %v3543 = vunpack.c.h.b16 %v1124
    %v3544 = vunpack.c.l.b16 %v1125
    %v3545 = vunpack.c.h.b16 %v1125
    %v3546 = vunpack.c.l.b16 %v1126
    %v3547 = vunpack.c.h.b16 %v1126
    %v3548 = vunpack.c.l.b16 %v1127
    %v3549 = vunpack.c.h.b16 %v1127
    %v3550 = vunpack.c.l.b16 %v1128
    %v3551 = vunpack.c.h.b16 %v1128
    %v3552 = vunpack.c.l.b16 %v1129
    %v3553 = vunpack.c.h.b16 %v1129
    %v3554 = vunpack.c.l.b16 %v1130
    %v3555 = vunpack.c.h.b16 %v1130
    %v3556 = vunpack.c.l.b16 %v1131
    %v3557 = vunpack.c.h.b16 %v1131
    %v3558 = vunpack.c.l.b16 %v1132
    %v3559 = vunpack.c.h.b16 %v1132
    %v3560 = vunpack.c.l.b16 %v1133
    %v3561 = vunpack.c.h.b16 %v1133
    %v3562 = vunpack.c.l.b16 %v1134
    %v3563 = vunpack.c.h.b16 %v1134
    %v3564 = vunpack.c.l.b16 %v1135
    %v3565 = vunpack.c.h.b16 %v1135
    %v3566 = vunpack.c.l.b16 %v1136
    %v3567 = vunpack.c.h.b16 %v1136
    %v3568 = vunpack.c.l.b16 %v1137
    %v3569 = vunpack.c.h.b16 %v1137
    %v3570 = vunpack.c.l.b16 %v1138
    %v3571 = vunpack.c.h.b16 %v1138
    %v3572 = vunpack.c.l.b16 %v1139
    %v3573 = vunpack.c.h.b16 %v1139
    %v3574 = vunpack.c.l.b16 %v1140
    %v3575 = vunpack.c.h.b16 %v1140
    %v3576 = vunpack.c.l.b16 %v1141
    %v3577 = vunpack.c.h.b16 %v1141
    %v3578 = vunpack.c.l.b16 %v1142
    %v3579 = vunpack.c.h.b16 %v1142
    %v3580 = vunpack.c.l.b16 %v1143
    %v3581 = vunpack.c.h.b16 %v1143
    %v3582 = vunpack.c.l.b16 %v1144
    %v3583 = vunpack.c.h.b16 %v1144
    %v3584 = vunpack.c.l.b16 %v1145
    %v3585 = vunpack.c.h.b16 %v1145
    %v3586 = vunpack.c.l.b16 %v1146
    %v3587 = vunpack.c.h.b16 %v1146
    %v3588 = vunpack.c.l.b16 %v1147
    %v3589 = vunpack.c.h.b16 %v1147
    %v3590 = vunpack.c.l.b16 %v1148
    %v3591 = vunpack.c.h.b16 %v1148
    %v3592 = vunpack.c.l.b16 %v1149
    %v3593 = vunpack.c.h.b16 %v1149
    %v3594 = vunpack.c.l.b16 %v1150
    %v3595 = vunpack.c.h.b16 %v1150
    %v3596 = vunpack.c.l.b16 %v1151
    %v3597 = vunpack.c.h.b16 %v1151
    %v3598 = vunpack.c.l.b16 %v1152
    %v3599 = vunpack.c.h.b16 %v1152
    %v3600 = vunpack.c.l.b16 %v1153
    %v3601 = vunpack.c.h.b16 %v1153
    %v3602 = vunpack.c.l.b16 %v1154
    %v3603 = vunpack.c.h.b16 %v1154
    %v3604 = vunpack.c.l.b16 %v1155
    %v3605 = vunpack.c.h.b16 %v1155
    %v3606 = vunpack.c.l.b16 %v1156
    %v3607 = vunpack.c.h.b16 %v1156
    %v3608 = vunpack.c.l.b16 %v1157
    %v3609 = vunpack.c.h.b16 %v1157
    %v3610 = vunpack.c.l.b16 %v1158
    %v3611 = vunpack.c.h.b16 %v1158
    %v3612 = vunpack.c.l.b16 %v1159
    %v3613 = vunpack.c.h.b16 %v1159
    %v3614 = vunpack.c.l.b16 %v1160
    %v3615 = vunpack.c.h.b16 %v1160
    %v3616 = vunpack.c.l.b16 %v1161
    %v3617 = vunpack.c.h.b16 %v1161
    %v3618 = vunpack.c.l.b16 %v1162
    %v3619 = vunpack.c.h.b16 %v1162
    %v3620 = vunpack.c.l.b16 %v1163
    %v3621 = vunpack.c.h.b16 %v1163
    %v3622 = vunpack.c.l.b16 %v1164
    %v3623 = vunpack.c.h.b16 %v1164
    %v3624 = vunpack.c.l.b16 %v1165
    %v3625 = vunpack.c.h.b16 %v1165
    %v3626 = vunpack.c.l.b16 %v1166
    %v3627 = vunpack.c.h.b16 %v1166
    %v3628 = vunpack.c.l.b16 %v1167
    %v3629 = vunpack.c.h.b16 %v1167
    %v3630 = vunpack.c.l.b16 %v1168
    %v3631 = vunpack.c.h.b16 %v1168
    %v3632 = vunpack.c.l.b16 %v1169
    %v3633 = vunpack.c.h.b16 %v1169
    %v3634 = vunpack.c.l.b16 %v1170
    %v3635 = vunpack.c.h.b16 %v1170
    %v3636 = vunpack.c.l.b16 %v1171
    %v3637 = vunpack.c.h.b16 %v1171
    %v3638 = vunpack.c.l.b16 %v1172
    %v3639 = vunpack.c.h.b16 %v1172
    %v3640 = vunpack.c.l.b16 %v1173
    %v3641 = vunpack.c.h.b16 %v1173
    %v3642 = vunpack.c.l.b16 %v1174
    %v3643 = vunpack.c.h.b16 %v1174
    %v3644 = vunpack.c.l.b16 %v1175
    %v3645 = vunpack.c.h.b16 %v1175
    %v3646 = vunpack.c.l.b16 %v1176
    %v3647 = vunpack.c.h.b16 %v1176
    %v3648 = vunpack.c.l.b16 %v1177
    %v3649 = vunpack.c.h.b16 %v1177
    %v3650 = vunpack.c.l.b16 %v1178
    %v3651 = vunpack.c.h.b16 %v1178
    %v3652 = vunpack.c.l.b16 %v1179
    %v3653 = vunpack.c.h.b16 %v1179
    %v3654 = vunpack.c.l.b16 %v1180
    %v3655 = vunpack.c.h.b16 %v1180
    %v3656 = vunpack.c.l.b16 %v1181
    %v3657 = vunpack.c.h.b16 %v1181
    %v3658 = vunpack.c.l.b16 %v1182
    %v3659 = vunpack.c.h.b16 %v1182
    %v3660 = vunpack.c.l.b16 %v1183
    %v3661 = vunpack.c.h.b16 %v1183
    %v3662 = vunpack.c.l.b16 %v1184
    %v3663 = vunpack.c.h.b16 %v1184
    %v3664 = vunpack.c.l.b16 %v1185
    %v3665 = vunpack.c.h.b16 %v1185
    %v3666 = vunpack.c.l.b16 %v1186
    %v3667 = vunpack.c.h.b16 %v1186
    %v3668 = vunpack.c.l.b16 %v1187
    %v3669 = vunpack.c.h.b16 %v1187
    %v3670 = vunpack.c.l.b16 %v1188
    %v3671 = vunpack.c.h.b16 %v1188
    %v3672 = vunpack.c.l.b16 %v1189
    %v3673 = vunpack.c.h.b16 %v1189
    %v3674 = vunpack.c.l.b16 %v1190
    %v3675 = vunpack.c.h.b16 %v1190
    %v3676 = vunpack.c.l.b16 %v1191
    %v3677 = vunpack.c.h.b16 %v1191
    %v3678 = vunpack.c.l.b16 %v1192
    %v3679 = vunpack.c.h.b16 %v1192
    %v3680 = vunpack.c.l.b16 %v1193
    %v3681 = vunpack.c.h.b16 %v1193
    %v3682 = vunpack.c.l.b16 %v1194
    %v3683 = vunpack.c.h.b16 %v1194
    %v3684 = vunpack.c.l.b16 %v1195
    %v3685 = vunpack.c.h.b16 %v1195
    %v3686 = vunpack.c.l.b16 %v1196
    %v3687 = vunpack.c.h.b16 %v1196
    %v3688 = vunpack.c.l.b16 %v1197
    %v3689 = vunpack.c.h.b16 %v1197
    %v3690 = vunpack.c.l.b16 %v1198
    %v3691 = vunpack.c.h.b16 %v1198
    %v3692 = vunpack.c.l.b16 %v1199
    %v3693 = vunpack.c.h.b16 %v1199
    %v3694 = vunpack.c.l.b16 %v1200
    %v3695 = vunpack.c.h.b16 %v1200
    %v3696 = vunpack.c.l.b16 %v1201
    %v3697 = vunpack.c.h.b16 %v1201
    %v3698 = vunpack.c.l.b16 %v1202
    %v3699 = vunpack.c.h.b16 %v1202
    %v3700 = vunpack.c.l.b16 %v1203
    %v3701 = vunpack.c.h.b16 %v1203
    %v3702 = vunpack.c.l.b16 %v1204
    %v3703 = vunpack.c.h.b16 %v1204
    %v3704 = vunpack.c.l.b16 %v1205
    %v3705 = vunpack.c.h.b16 %v1205
    %v3706 = vunpack.c.l.b16 %v1206
    %v3707 = vunpack.c.h.b16 %v1206
    %v3708 = vunpack.c.l.b16 %v1207
    %v3709 = vunpack.c.h.b16 %v1207
    %v3710 = vunpack.c.l.b16 %v1208
    %v3711 = vunpack.c.h.b16 %v1208
    %v3712 = vunpack.c.l.b16 %v1209
    %v3713 = vunpack.c.h.b16 %v1209
    %v3714 = vunpack.c.l.b16 %v1210
    %v3715 = vunpack.c.h.b16 %v1210
    %v3716 = vunpack.c.l.b16 %v1211
    %v3717 = vunpack.c.h.b16 %v1211
    %v3718 = vunpack.c.l.b16 %v1212
    %v3719 = vunpack.c.h.b16 %v1212
    %v3720 = vunpack.c.l.b16 %v1213
    %v3721 = vunpack.c.h.b16 %v1213
    %v3722 = vunpack.c.l.b16 %v1214
    %v3723 = vunpack.c.h.b16 %v1214
    %v3724 = vunpack.c.l.b16 %v1215
    %v3725 = vunpack.c.h.b16 %v1215
    %v3726 = vunpack.c.l.b16 %v1216
    %v3727 = vunpack.c.h.b16 %v1216
    %v3728 = vunpack.c.l.b16 %v1217
    %v3729 = vunpack.c.h.b16 %v1217
    %v3730 = vunpack.c.l.b16 %v1218
    %v3731 = vunpack.c.h.b16 %v1218
    %v3732 = vunpack.c.l.b16 %v1219
    %v3733 = vunpack.c.h.b16 %v1219
    %v3734 = vunpack.c.l.b16 %v1220
    %v3735 = vunpack.c.h.b16 %v1220
    %v3736 = vunpack.c.l.b16 %v1221
    %v3737 = vunpack.c.h.b16 %v1221
    %v3738 = vunpack.c.l.b16 %v1222
    %v3739 = vunpack.c.h.b16 %v1222
    %v3740 = vunpack.c.l.b16 %v1223
    %v3741 = vunpack.c.h.b16 %v1223
    %v3742 = vunpack.c.l.b16 %v1224
    %v3743 = vunpack.c.h.b16 %v1224
    %v3744 = vunpack.c.l.b16 %v1225
    %v3745 = vunpack.c.h.b16 %v1225
    %v3746 = vunpack.c.l.b16 %v1226
    %v3747 = vunpack.c.h.b16 %v1226
    %v3748 = vunpack.c.l.b16 %v1227
    %v3749 = vunpack.c.h.b16 %v1227
    %v3750 = vunpack.c.l.b16 %v1228
    %v3751 = vunpack.c.h.b16 %v1228
    %v3752 = vunpack.c.l.b16 %v1229
    %v3753 = vunpack.c.h.b16 %v1229
    %v3754 = vunpack.c.l.b16 %v1230
    %v3755 = vunpack.c.h.b16 %v1230
    %v3756 = vunpack.c.l.b16 %v1231
    %v3757 = vunpack.c.h.b16 %v1231
    %v3758 = vunpack.c.l.b16 %v1232
    %v3759 = vunpack.c.h.b16 %v1232
    %v3760 = vunpack.c.l.b16 %v1233
    %v3761 = vunpack.c.h.b16 %v1233
    %v3762 = vunpack.c.l.b16 %v1234
    %v3763 = vunpack.c.h.b16 %v1234
    %v3764 = vunpack.c.l.b16 %v1235
    %v3765 = vunpack.c.h.b16 %v1235
    %v3766 = vunpack.c.l.b16 %v1236
    %v3767 = vunpack.c.h.b16 %v1236
    %v3768 = vunpack.c.l.b16 %v1237
    %v3769 = vunpack.c.h.b16 %v1237
    %v3770 = vunpack.c.l.b16 %v1238
    %v3771 = vunpack.c.h.b16 %v1238
    %v3772 = vunpack.c.l.b16 %v1239
    %v3773 = vunpack.c.h.b16 %v1239
    %v3774 = vunpack.c.l.b16 %v1240
    %v3775 = vunpack.c.h.b16 %v1240
    %v3776 = vunpack.c.l.b16 %v1241
    %v3777 = vunpack.c.h.b16 %v1241
    %v3778 = vunpack.c.l.b16 %v1242
    %v3779 = vunpack.c.h.b16 %v1242
    %v3780 = vunpack.c.l.b16 %v1243
    %v3781 = vunpack.c.h.b16 %v1243
    %v3782 = vunpack.c.l.b16 %v1244
    %v3783 = vunpack.c.h.b16 %v1244
    %v3784 = vunpack.c.l.b16 %v1245
    %v3785 = vunpack.c.h.b16 %v1245
    %v3786 = vunpack.c.l.b16 %v1246
    %v3787 = vunpack.c.h.b16 %v1246
    %v3788 = vunpack.c.l.b16 %v1247
    %v3789 = vunpack.c.h.b16 %v1247
    %v3790 = vunpack.c.l.b16 %v1248
    %v3791 = vunpack.c.h.b16 %v1248
    %v3792 = vunpack.c.l.b16 %v1249
    %v3793 = vunpack.c.h.b16 %v1249
    %v3794 = vunpack.c.l.b16 %v1250
    %v3795 = vunpack.c.h.b16 %v1250
    %v3796 = vunpack.c.l.b16 %v1251
    %v3797 = vunpack.c.h.b16 %v1251
    %v3798 = vunpack.c.l.b16 %v1252
    %v3799 = vunpack.c.h.b16 %v1252
    %v3800 = vunpack.c.l.b16 %v1253
    %v3801 = vunpack.c.h.b16 %v1253
    %v3802 = vunpack.c.l.b16 %v1254
    %v3803 = vunpack.c.h.b16 %v1254
    %v3804 = vunpack.c.l.b16 %v1255
    %v3805 = vunpack.c.h.b16 %v1255
    %v3806 = vunpack.c.l.b16 %v1256
    %v3807 = vunpack.c.h.b16 %v1256
    %v3808 = vunpack.c.l.b16 %v1257
    %v3809 = vunpack.c.h.b16 %v1257
    %v3810 = vunpack.c.l.b16 %v1258
    %v3811 = vunpack.c.h.b16 %v1258
    %v3812 = vunpack.c.l.b16 %v1259
    %v3813 = vunpack.c.h.b16 %v1259
    %v3814 = vunpack.c.l.b16 %v1260
    %v3815 = vunpack.c.h.b16 %v1260
    %v3816 = vunpack.c.l.b16 %v1261
    %v3817 = vunpack.c.h.b16 %v1261
    %v3818 = vunpack.c.l.b16 %v1262
    %v3819 = vunpack.c.h.b16 %v1262
    %v3820 = vunpack.c.l.b16 %v1263
    %v3821 = vunpack.c.h.b16 %v1263
    %v3822 = vunpack.c.l.b16 %v1264
    %v3823 = vunpack.c.h.b16 %v1264
    %v3824 = vunpack.c.l.b16 %v1265
    %v3825 = vunpack.c.h.b16 %v1265
    %v3826 = vunpack.c.l.b16 %v1266
    %v3827 = vunpack.c.h.b16 %v1266
    %v3828 = vunpack.c.l.b16 %v1267
    %v3829 = vunpack.c.h.b16 %v1267
    %v3830 = vunpack.c.l.b16 %v1268
    %v3831 = vunpack.c.h.b16 %v1268
    %v3832 = vunpack.c.l.b16 %v1269
    %v3833 = vunpack.c.h.b16 %v1269
    %v3834 = vunpack.c.l.b16 %v1270
    %v3835 = vunpack.c.h.b16 %v1270
    %v3836 = vunpack.c.l.b16 %v1271
    %v3837 = vunpack.c.h.b16 %v1271
    %v3838 = vunpack.c.l.b16 %v1272
    %v3839 = vunpack.c.h.b16 %v1272
    %v3840 = vunpack.c.l.b16 %v1273
    %v3841 = vunpack.c.h.b16 %v1273
    %v3842 = vunpack.c.l.b16 %v1274
    %v3843 = vunpack.c.h.b16 %v1274
    %v3844 = vunpack.c.l.b16 %v1275
    %v3845 = vunpack.c.h.b16 %v1275
    %v3846 = vunpack.c.l.b16 %v1276
    %v3847 = vunpack.c.h.b16 %v1276
    %v3848 = vunpack.c.l.b16 %v1277
    %v3849 = vunpack.c.h.b16 %v1277
    %v3850 = vunpack.c.l.b16 %v1278
    %v3851 = vunpack.c.h.b16 %v1278
    %v3852 = vunpack.c.l.b16 %v1279
    %v3853 = vunpack.c.h.b16 %v1279
    %v3854 = vunpack.c.l.b16 %v1280
    %v3855 = vunpack.c.h.b16 %v1280
    %v3856 = vunpack.c.l.b16 %v1281
    %v3857 = vunpack.c.h.b16 %v1281
    %v3858 = vunpack.c.l.b16 %v1282
    %v3859 = vunpack.c.h.b16 %v1282
    %v3860 = vunpack.c.l.b16 %v1283
    %v3861 = vunpack.c.h.b16 %v1283
    %v3862 = vunpack.c.l.b16 %v1284
    %v3863 = vunpack.c.h.b16 %v1284
    %v3864 = vunpack.c.l.b16 %v1285
    %v3865 = vunpack.c.h.b16 %v1285
    %v3866 = vunpack.c.l.b16 %v1286
    %v3867 = vunpack.c.h.b16 %v1286
    %v3868 = vunpack.c.l.b16 %v1287
    %v3869 = vunpack.c.h.b16 %v1287
    %v3870 = vunpack.c.l.b16 %v1288
    %v3871 = vunpack.c.h.b16 %v1288
    %v3872 = vunpack.c.l.b16 %v1289
    %v3873 = vunpack.c.h.b16 %v1289
    %v3874 = vunpack.c.l.b16 %v1290
    %v3875 = vunpack.c.h.b16 %v1290
    %v3876 = vunpack.c.l.b16 %v1291
    %v3877 = vunpack.c.h.b16 %v1291
    %v3878 = vunpack.c.l.b16 %v1292
    %v3879 = vunpack.c.h.b16 %v1292
    %v3880 = vunpack.c.l.b16 %v1293
    %v3881 = vunpack.c.h.b16 %v1293
    %v3882 = vunpack.c.l.b16 %v1294
    %v3883 = vunpack.c.h.b16 %v1294
    %v3884 = vunpack.c.l.b16 %v1295
    %v3885 = vunpack.c.h.b16 %v1295
    %v3886 = vunpack.c.l.b16 %v1296
    %v3887 = vunpack.c.h.b16 %v1296
    %v3888 = vunpack.c.l.b16 %v1297
    %v3889 = vunpack.c.h.b16 %v1297
    %v3890 = vunpack.c.l.b16 %v1298
    %v3891 = vunpack.c.h.b16 %v1298
    %v3892 = vunpack.c.l.b16 %v1299
    %v3893 = vunpack.c.h.b16 %v1299
    %v3894 = vunpack.c.l.b16 %v1300
    %v3895 = vunpack.c.h.b16 %v1300
    %v3896 = vunpack.c.l.b16 %v1301
    %v3897 = vunpack.c.h.b16 %v1301
    %v3898 = vunpack.c.l.b16 %v1302
    %v3899 = vunpack.c.h.b16 %v1302
    %v3900 = vunpack.c.l.b16 %v1303
    %v3901 = vunpack.c.h.b16 %v1303
    %v3902 = vunpack.c.l.b16 %v1304
    %v3903 = vunpack.c.h.b16 %v1304
    %v3904 = vunpack.c.l.b16 %v1305
    %v3905 = vunpack.c.h.b16 %v1305
    %v3906 = vunpack.c.l.b16 %v1306
    %v3907 = vunpack.c.h.b16 %v1306
    %v3908 = vunpack.c.l.b16 %v1307
    %v3909 = vunpack.c.h.b16 %v1307
    %v3910 = vunpack.c.l.b16 %v1308
    %v3911 = vunpack.c.h.b16 %v1308
    %v3912 = vunpack.c.l.b16 %v1309
    %v3913 = vunpack.c.h.b16 %v1309
    %v3914 = vunpack.c.l.b16 %v1310
    %v3915 = vunpack.c.h.b16 %v1310
    %v3916 = vunpack.c.l.b16 %v1311
    %v3917 = vunpack.c.h.b16 %v1311
    %v3918 = vunpack.c.l.b16 %v1312
    %v3919 = vunpack.c.h.b16 %v1312
    %v3920 = vunpack.c.l.b16 %v1313
    %v3921 = vunpack.c.h.b16 %v1313
    %v3922 = vunpack.c.l.b16 %v1314
    %v3923 = vunpack.c.h.b16 %v1314
    %v3924 = vunpack.c.l.b16 %v1315
    %v3925 = vunpack.c.h.b16 %v1315
    %v3926 = vunpack.c.l.b16 %v1316
    %v3927 = vunpack.c.h.b16 %v1316
    %v3928 = vunpack.c.l.b16 %v1317
    %v3929 = vunpack.c.h.b16 %v1317
    %v3930 = vunpack.c.l.b16 %v1318
    %v3931 = vunpack.c.h.b16 %v1318
    %v3932 = vunpack.c.l.b16 %v1319
    %v3933 = vunpack.c.h.b16 %v1319
    %v3934 = vunpack.c.l.b16 %v1320
    %v3935 = vunpack.c.h.b16 %v1320
    %v3936 = vunpack.c.l.b16 %v1321
    %v3937 = vunpack.c.h.b16 %v1321
    %v3938 = vunpack.c.l.b16 %v1322
    %v3939 = vunpack.c.h.b16 %v1322
    %v3940 = vunpack.c.l.b16 %v1323
    %v3941 = vunpack.c.h.b16 %v1323
    %v3942 = vunpack.c.l.b16 %v1324
    %v3943 = vunpack.c.h.b16 %v1324
    %v3944 = vunpack.c.l.b16 %v1325
    %v3945 = vunpack.c.h.b16 %v1325
    %v3946 = vunpack.c.l.b16 %v1326
    %v3947 = vunpack.c.h.b16 %v1326
    %v3948 = vunpack.c.l.b16 %v1327
    %v3949 = vunpack.c.h.b16 %v1327
    %v3950 = vunpack.c.l.b16 %v1328
    %v3951 = vunpack.c.h.b16 %v1328
    %v3952 = vunpack.c.l.b16 %v1329
    %v3953 = vunpack.c.h.b16 %v1329
    %v3954 = vunpack.c.l.b16 %v1330
    %v3955 = vunpack.c.h.b16 %v1330
    %v3956 = vunpack.c.l.b16 %v1331
    %v3957 = vunpack.c.h.b16 %v1331
    %v3958 = vunpack.c.l.b16 %v1332
    %v3959 = vunpack.c.h.b16 %v1332
    %v3960 = vunpack.c.l.b16 %v1333
    %v3961 = vunpack.c.h.b16 %v1333
    %v3962 = vunpack.c.l.b16 %v1334
    %v3963 = vunpack.c.h.b16 %v1334
    %v3964 = vunpack.c.l.b16 %v1335
    %v3965 = vunpack.c.h.b16 %v1335
    %v3966 = vunpack.c.l.b16 %v1336
    %v3967 = vunpack.c.h.b16 %v1336
    %v3968 = vunpack.c.l.b16 %v1337
    %v3969 = vunpack.c.h.b16 %v1337
    %v3970 = vunpack.c.l.b16 %v1338
    %v3971 = vunpack.c.h.b16 %v1338
    %v3972 = vunpack.c.l.b16 %v1339
    %v3973 = vunpack.c.h.b16 %v1339
    %v3974 = vunpack.c.l.b16 %v1340
    %v3975 = vunpack.c.h.b16 %v1340
    %v3976 = vunpack.c.l.b16 %v1341
    %v3977 = vunpack.c.h.b16 %v1341
    %v3978 = vunpack.c.l.b16 %v1342
    %v3979 = vunpack.c.h.b16 %v1342
    %v3980 = vunpack.c.l.b16 %v1343
    %v3981 = vunpack.c.h.b16 %v1343
    %v3982 = vunpack.c.l.b16 %v1344
    %v3983 = vunpack.c.h.b16 %v1344
    %v3984 = vunpack.c.l.b16 %v1345
    %v3985 = vunpack.c.h.b16 %v1345
    %v3986 = vunpack.c.l.b16 %v1346
    %v3987 = vunpack.c.h.b16 %v1346
    %v3988 = vunpack.c.l.b16 %v1347
    %v3989 = vunpack.c.h.b16 %v1347
    %v3990 = vunpack.c.l.b16 %v1348
    %v3991 = vunpack.c.h.b16 %v1348
    %v3992 = vunpack.c.l.b16 %v1349
    %v3993 = vunpack.c.h.b16 %v1349
    %v3994 = vunpack.c.l.b16 %v1350
    %v3995 = vunpack.c.h.b16 %v1350
    %v3996 = vunpack.c.l.b16 %v1351
    %v3997 = vunpack.c.h.b16 %v1351
    %v3998 = vunpack.c.l.b16 %v1352
    %v3999 = vunpack.c.h.b16 %v1352
    %v4000 = vunpack.c.l.b16 %v1353
    %v4001 = vunpack.c.h.b16 %v1353
    %v4002 = vunpack.c.l.b16 %v1354
    %v4003 = vunpack.c.h.b16 %v1354
    %v4004 = vunpack.c.l.b16 %v1355
    %v4005 = vunpack.c.h.b16 %v1355
    %v4006 = vunpack.c.l.b16 %v1356
    %v4007 = vunpack.c.h.b16 %v1356
    %v4008 = vunpack.c.l.b16 %v1357
    %v4009 = vunpack.c.h.b16 %v1357
    %v4010 = vunpack.c.l.b16 %v1358
    %v4011 = vunpack.c.h.b16 %v1358
    %v4012 = vunpack.c.l.b16 %v1359
    %v4013 = vunpack.c.h.b16 %v1359
    %v4014 = vunpack.c.l.b16 %v1360
    %v4015 = vunpack.c.h.b16 %v1360
    %v4016 = vunpack.c.l.b16 %v1361
    %v4017 = vunpack.c.h.b16 %v1361
    %v4018 = vunpack.c.l.b16 %v1362
    %v4019 = vunpack.c.h.b16 %v1362
    %v4020 = vunpack.c.l.b16 %v1363
    %v4021 = vunpack.c.h.b16 %v1363
    %v4022 = vunpack.c.l.b16 %v1364
    %v4023 = vunpack.c.h.b16 %v1364
    %v4024 = vunpack.c.l.b16 %v1365
    %v4025 = vunpack.c.h.b16 %v1365
    %v4026 = vunpack.c.l.b16 %v1366
    %v4027 = vunpack.c.h.b16 %v1366
    %v4028 = vunpack.c.l.b16 %v1367
    %v4029 = vunpack.c.h.b16 %v1367
    %v4030 = vunpack.c.l.b16 %v1368
    %v4031 = vunpack.c.h.b16 %v1368
    %v4032 = vunpack.c.l.b16 %v1369
    %v4033 = vunpack.c.h.b16 %v1369
    %v4034 = vunpack.c.l.b16 %v1370
    %v4035 = vunpack.c.h.b16 %v1370
    %v4036 = vunpack.c.l.b16 %v1371
    %v4037 = vunpack.c.h.b16 %v1371
    %v4038 = vunpack.c.l.b16 %v1372
    %v4039 = vunpack.c.h.b16 %v1372
    %v4040 = vunpack.c.l.b16 %v1373
    %v4041 = vunpack.c.h.b16 %v1373
    %v4042 = vunpack.c.l.b16 %v1374
    %v4043 = vunpack.c.h.b16 %v1374
    %v4044 = vunpack.c.l.b16 %v1375
    %v4045 = vunpack.c.h.b16 %v1375
    %v4046 = vunpack.c.l.b16 %v1376
    %v4047 = vunpack.c.h.b16 %v1376
    %v4048 = vunpack.c.l.b16 %v1377
    %v4049 = vunpack.c.h.b16 %v1377
    %v4050 = vunpack.c.l.b16 %v1378
    %v4051 = vunpack.c.h.b16 %v1378
    %v4052 = vunpack.c.l.b16 %v1379
    %v4053 = vunpack.c.h.b16 %v1379
    %v4054 = vunpack.c.l.b16 %v1380
    %v4055 = vunpack.c.h.b16 %v1380
    %v4056 = vunpack.c.l.b16 %v1381
    %v4057 = vunpack.c.h.b16 %v1381
    %v4058 = vunpack.c.l.b16 %v1382
    %v4059 = vunpack.c.h.b16 %v1382
    %v4060 = vunpack.c.l.b16 %v1383
    %v4061 = vunpack.c.h.b16 %v1383
    %v4062 = vunpack.c.l.b16 %v1384
    %v4063 = vunpack.c.h.b16 %v1384
    %v4064 = vunpack.c.l.b16 %v1385
    %v4065 = vunpack.c.h.b16 %v1385
    %v4066 = vunpack.c.l.b16 %v1386
    %v4067 = vunpack.c.h.b16 %v1386
    %v4068 = vunpack.c.l.b16 %v1387
    %v4069 = vunpack.c.h.b16 %v1387
    %v4070 = vunpack.c.l.b16 %v1388
    %v4071 = vunpack.c.h.b16 %v1388
    %v4072 = vunpack.c.l.b16 %v1389
    %v4073 = vunpack.c.h.b16 %v1389
    %v4074 = vunpack.c.l.b16 %v1390
    %v4075 = vunpack.c.h.b16 %v1390
    %v4076 = vunpack.c.l.b16 %v1391
    %v4077 = vunpack.c.h.b16 %v1391
    %v4078 = vunpack.c.l.b16 %v1392
    %v4079 = vunpack.c.h.b16 %v1392
    %v4080 = vunpack.c.l.b16 %v1393
    %v4081 = vunpack.c.h.b16 %v1393
    %v4082 = vunpack.c.l.b16 %v1394
    %v4083 = vunpack.c.h.b16 %v1394
    %v4084 = vunpack.c.l.b16 %v1395
    %v4085 = vunpack.c.h.b16 %v1395
    %v4086 = vunpack.c.l.b16 %v1396
    %v4087 = vunpack.c.h.b16 %v1396
    %v4088 = vunpack.c.l.b16 %v1397
    %v4089 = vunpack.c.h.b16 %v1397
    %v4090 = vunpack.c.l.b16 %v1398
    %v4091 = vunpack.c.h.b16 %v1398
    %v4092 = vunpack.c.l.b16 %v1399
    %v4093 = vunpack.c.h.b16 %v1399
    %v4094 = vunpack.c.l.b16 %v1400
    %v4095 = vunpack.c.h.b16 %v1400
    %v4096 = vunpack.c.l.b16 %v1401
    %v4097 = vunpack.c.h.b16 %v1401
    %v4098 = vunpack.c.l.b16 %v1402
    %v4099 = vunpack.c.h.b16 %v1402
    %v4100 = vunpack.c.l.b16 %v1403
    %v4101 = vunpack.c.h.b16 %v1403
    %v4102 = vunpack.c.l.b16 %v1404
    %v4103 = vunpack.c.h.b16 %v1404
    %v4104 = vunpack.c.l.b16 %v1405
    %v4105 = vunpack.c.h.b16 %v1405
    %v4106 = vunpack.c.l.b16 %v1406
    %v4107 = vunpack.c.h.b16 %v1406
    %v4108 = vunpack.c.l.b16 %v1407
    %v4109 = vunpack.c.h.b16 %v1407
    %v4110 = vunpack.c.l.b16 %v1408
    %v4111 = vunpack.c.h.b16 %v1408
    %v4112 = vunpack.c.l.b16 %v1409
    %v4113 = vunpack.c.h.b16 %v1409
    %v4114 = vunpack.c.l.b16 %v1410
    %v4115 = vunpack.c.h.b16 %v1410
    %v4116 = vunpack.c.l.b16 %v1411
    %v4117 = vunpack.c.h.b16 %v1411
    %v4118 = vunpack.c.l.b16 %v1412
    %v4119 = vunpack.c.h.b16 %v1412
    %v4120 = vunpack.c.l.b16 %v1413
    %v4121 = vunpack.c.h.b16 %v1413
    %v4122 = vunpack.c.l.b16 %v1414
    %v4123 = vunpack.c.h.b16 %v1414
    %v4124 = vunpack.c.l.b16 %v1415
    %v4125 = vunpack.c.h.b16 %v1415
    %v4126 = vunpack.c.l.b16 %v1416
    %v4127 = vunpack.c.h.b16 %v1416
    %v4128 = vunpack.c.l.b16 %v1417
    %v4129 = vunpack.c.h.b16 %v1417
    %v4130 = vunpack.c.l.b16 %v1418
    %v4131 = vunpack.c.h.b16 %v1418
    %v4132 = vunpack.c.l.b16 %v1419
    %v4133 = vunpack.c.h.b16 %v1419
    %v4134 = vunpack.c.l.b16 %v1420
    %v4135 = vunpack.c.h.b16 %v1420
    %v4136 = vunpack.c.l.b16 %v1421
    %v4137 = vunpack.c.h.b16 %v1421
    %v4138 = vunpack.c.l.b16 %v1422
    %v4139 = vunpack.c.h.b16 %v1422
    %v4140 = vunpack.c.l.b16 %v1423
    %v4141 = vunpack.c.h.b16 %v1423
    %v4142 = vunpack.c.l.b16 %v1424
    %v4143 = vunpack.c.h.b16 %v1424
    %v4144 = vunpack.c.l.b16 %v1425
    %v4145 = vunpack.c.h.b16 %v1425
    %v4146 = vunpack.c.l.b16 %v1426
    %v4147 = vunpack.c.h.b16 %v1426
    %v4148 = vunpack.c.l.b16 %v1427
    %v4149 = vunpack.c.h.b16 %v1427
    %v4150 = vunpack.c.l.b16 %v1428
    %v4151 = vunpack.c.h.b16 %v1428
    %v4152 = vunpack.c.l.b16 %v1429
    %v4153 = vunpack.c.h.b16 %v1429
    %v4154 = vunpack.c.l.b16 %v1430
    %v4155 = vunpack.c.h.b16 %v1430
    %v4156 = vunpack.c.l.b16 %v1431
    %v4157 = vunpack.c.h.b16 %v1431
    %v4158 = vunpack.c.l.b16 %v1432
    %v4159 = vunpack.c.h.b16 %v1432
    %v4160 = vunpack.c.l.b16 %v1433
    %v4161 = vunpack.c.h.b16 %v1433
    %v4162 = vunpack.c.l.b16 %v1434
    %v4163 = vunpack.c.h.b16 %v1434
    %v4164 = vunpack.c.l.b16 %v1435
    %v4165 = vunpack.c.h.b16 %v1435
    %v4166 = vunpack.c.l.b16 %v1436
    %v4167 = vunpack.c.h.b16 %v1436
    %v4168 = vunpack.c.l.b16 %v1437
    %v4169 = vunpack.c.h.b16 %v1437
    %v4170 = vunpack.c.l.b16 %v1438
    %v4171 = vunpack.c.h.b16 %v1438
    %v4172 = vunpack.c.l.b16 %v1439
    %v4173 = vunpack.c.h.b16 %v1439
    %v4174 = vunpack.c.l.b16 %v1440
    %v4175 = vunpack.c.h.b16 %v1440
    %v4176 = vunpack.c.l.b16 %v1441
    %v4177 = vunpack.c.h.b16 %v1441
    %v4178 = vunpack.c.l.b16 %v1442
    %v4179 = vunpack.c.h.b16 %v1442
    %v4180 = vunpack.c.l.b16 %v1443
    %v4181 = vunpack.c.h.b16 %v1443
    %v4182 = vunpack.c.l.b16 %v1444
    %v4183 = vunpack.c.h.b16 %v1444
    %v4184 = vunpack.c.l.b16 %v1445
    %v4185 = vunpack.c.h.b16 %v1445
    %v4186 = vunpack.c.l.b16 %v1446
    %v4187 = vunpack.c.h.b16 %v1446
    %v4188 = vunpack.c.l.b16 %v1447
    %v4189 = vunpack.c.h.b16 %v1447
    %v4190 = vunpack.c.l.b16 %v1448
    %v4191 = vunpack.c.h.b16 %v1448
    %v4192 = vunpack.c.l.b16 %v1449
    %v4193 = vunpack.c.h.b16 %v1449
    %v4194 = vunpack.c.l.b16 %v1450
    %v4195 = vunpack.c.h.b16 %v1450
    %v4196 = vunpack.c.l.b16 %v1451
    %v4197 = vunpack.c.h.b16 %v1451
    %v4198 = vunpack.c.l.b16 %v1452
    %v4199 = vunpack.c.h.b16 %v1452
    %v4200 = vunpack.c.l.b16 %v1453
    %v4201 = vunpack.c.h.b16 %v1453
    %v4202 = vunpack.c.l.b16 %v1454
    %v4203 = vunpack.c.h.b16 %v1454
    %v4204 = vunpack.c.l.b16 %v1455
    %v4205 = vunpack.c.h.b16 %v1455
    %v4206 = vunpack.c.l.b16 %v1456
    %v4207 = vunpack.c.h.b16 %v1456
    %v4208 = vunpack.c.l.b16 %v1457
    %v4209 = vunpack.c.h.b16 %v1457
    %v4210 = vunpack.c.l.b16 %v1458
    %v4211 = vunpack.c.h.b16 %v1458
    %v4212 = vunpack.c.l.b16 %v1459
    %v4213 = vunpack.c.h.b16 %v1459
    %v4214 = vunpack.c.l.b16 %v1460
    %v4215 = vunpack.c.h.b16 %v1460
    %v4216 = vunpack.c.l.b16 %v1461
    %v4217 = vunpack.c.h.b16 %v1461
    %v4218 = vunpack.c.l.b16 %v1462
    %v4219 = vunpack.c.h.b16 %v1462
    %v4220 = vunpack.c.l.b16 %v1463
    %v4221 = vunpack.c.h.b16 %v1463
    %v4222 = vunpack.c.l.b16 %v1464
    %v4223 = vunpack.c.h.b16 %v1464
    %v4224 = vunpack.c.l.b16 %v1465
    %v4225 = vunpack.c.h.b16 %v1465
    %v4226 = vunpack.c.l.b16 %v1466
    %v4227 = vunpack.c.h.b16 %v1466
    %v4228 = vunpack.c.l.b16 %v1467
    %v4229 = vunpack.c.h.b16 %v1467
    %v4230 = vunpack.c.l.b16 %v1468
    %v4231 = vunpack.c.h.b16 %v1468
    %v4232 = vunpack.c.l.b16 %v1469
    %v4233 = vunpack.c.h.b16 %v1469
    %v4234 = vunpack.c.l.b16 %v1470
    %v4235 = vunpack.c.h.b16 %v1470
    %v4236 = vunpack.c.l.b16 %v1471
    %v4237 = vunpack.c.h.b16 %v1471
    %v4238 = vunpack.c.l.b16 %v1472
    %v4239 = vunpack.c.h.b16 %v1472
    %v4240 = vunpack.c.l.b16 %v1473
    %v4241 = vunpack.c.h.b16 %v1473
    %v4242 = vunpack.c.l.b16 %v1474
    %v4243 = vunpack.c.h.b16 %v1474
    %v4244 = vunpack.c.l.b16 %v1475
    %v4245 = vunpack.c.h.b16 %v1475
    %v4246 = vunpack.c.l.b16 %v1476
    %v4247 = vunpack.c.h.b16 %v1476
    %v4248 = vunpack.c.l.b16 %v1477
    %v4249 = vunpack.c.h.b16 %v1477
    %v4250 = vunpack.c.l.b16 %v1478
    %v4251 = vunpack.c.h.b16 %v1478
    %v4252 = vunpack.c.l.b16 %v1479
    %v4253 = vunpack.c.h.b16 %v1479
    %v4254 = vunpack.c.l.b16 %v1480
    %v4255 = vunpack.c.h.b16 %v1480
    %v4256 = vunpack.c.l.b16 %v1481
    %v4257 = vunpack.c.h.b16 %v1481
    %v4258 = vunpack.c.l.b16 %v1482
    %v4259 = vunpack.c.h.b16 %v1482
    %v4260 = vunpack.c.l.b16 %v1483
    %v4261 = vunpack.c.h.b16 %v1483
    %v4262 = vunpack.c.l.b16 %v1484
    %v4263 = vunpack.c.h.b16 %v1484
    %v4264 = vunpack.c.l.b16 %v1485
    %v4265 = vunpack.c.h.b16 %v1485
    %v4266 = vunpack.c.l.b16 %v1486
    %v4267 = vunpack.c.h.b16 %v1486
    %v4268 = vunpack.c.l.b16 %v1487
    %v4269 = vunpack.c.h.b16 %v1487
    %v4270 = vunpack.c.l.b16 %v1488
    %v4271 = vunpack.c.h.b16 %v1488
    %v4272 = vunpack.c.l.b16 %v1489
    %v4273 = vunpack.c.h.b16 %v1489
    %v4274 = vunpack.c.l.b16 %v1490
    %v4275 = vunpack.c.h.b16 %v1490
    %v4276 = vunpack.c.l.b16 %v1491
    %v4277 = vunpack.c.h.b16 %v1491
    %v4278 = vunpack.c.l.b16 %v1492
    %v4279 = vunpack.c.h.b16 %v1492
    %v4280 = vunpack.c.l.b16 %v1493
    %v4281 = vunpack.c.h.b16 %v1493
    %v4282 = vunpack.c.l.b16 %v1494
    %v4283 = vunpack.c.h.b16 %v1494
    %v4284 = vunpack.c.l.b16 %v1495
    %v4285 = vunpack.c.h.b16 %v1495
    %v4286 = vunpack.c.l.b16 %v1496
    %v4287 = vunpack.c.h.b16 %v1496
    %v4288 = vunpack.c.l.b16 %v1497
    %v4289 = vunpack.c.h.b16 %v1497
    %v4290 = vunpack.c.l.b16 %v1498
    %v4291 = vunpack.c.h.b16 %v1498
    %v4292 = vunpack.c.l.b16 %v1499
    %v4293 = vunpack.c.h.b16 %v1499
    %v4294 = vunpack.c.l.b16 %v1500
    %v4295 = vunpack.c.h.b16 %v1500
    %v4296 = vunpack.c.l.b16 %v1501
    %v4297 = vunpack.c.h.b16 %v1501
    %v4298 = vunpack.c.l.b16 %v1502
    %v4299 = vunpack.c.h.b16 %v1502
    %v4300 = vunpack.c.l.b16 %v1503
    %v4301 = vunpack.c.h.b16 %v1503
    %v4302 = vunpack.c.l.b16 %v1504
    %v4303 = vunpack.c.h.b16 %v1504
    %v4304 = vunpack.c.l.b16 %v1505
    %v4305 = vunpack.c.h.b16 %v1505
    %v4306 = vunpack.c.l.b16 %v1506
    %v4307 = vunpack.c.h.b16 %v1506
    %v4308 = vunpack.c.l.b16 %v1507
    %v4309 = vunpack.c.h.b16 %v1507
    %v4310 = vunpack.c.l.b16 %v1508
    %v4311 = vunpack.c.h.b16 %v1508
    %v4312 = vunpack.c.l.b16 %v1509
    %v4313 = vunpack.c.h.b16 %v1509
    %v4314 = vunpack.c.l.b16 %v1510
    %v4315 = vunpack.c.h.b16 %v1510
    %v4316 = vunpack.c.l.b16 %v1511
    %v4317 = vunpack.c.h.b16 %v1511
    %v4318 = vunpack.c.l.b16 %v1512
    %v4319 = vunpack.c.h.b16 %v1512
    %v4320 = vunpack.c.l.b16 %v1513
    %v4321 = vunpack.c.h.b16 %v1513
    %v4322 = vunpack.c.l.b16 %v1514
    %v4323 = vunpack.c.h.b16 %v1514
    %v4324 = vunpack.c.l.b16 %v1515
    %v4325 = vunpack.c.h.b16 %v1515
    %v4326 = vunpack.c.l.b16 %v1516
    %v4327 = vunpack.c.h.b16 %v1516
    %v4328 = vunpack.c.l.b16 %v1517
    %v4329 = vunpack.c.h.b16 %v1517
    %v4330 = vunpack.c.l.b16 %v1518
    %v4331 = vunpack.c.h.b16 %v1518
    %v4332 = vunpack.c.l.b16 %v1519
    %v4333 = vunpack.c.h.b16 %v1519
    %v4334 = vunpack.c.l.b16 %v1520
    %v4335 = vunpack.c.h.b16 %v1520
    %v4336 = vunpack.c.l.b16 %v1521
    %v4337 = vunpack.c.h.b16 %v1521
    %v4338 = vunpack.c.l.b16 %v1522
    %v4339 = vunpack.c.h.b16 %v1522
    %v4340 = vunpack.c.l.b16 %v1523
    %v4341 = vunpack.c.h.b16 %v1523
    %v4342 = vunpack.c.l.b16 %v1524
    %v4343 = vunpack.c.h.b16 %v1524
    %v4344 = vunpack.c.l.b16 %v1525
    %v4345 = vunpack.c.h.b16 %v1525
    %v4346 = vunpack.c.l.b16 %v1526
    %v4347 = vunpack.c.h.b16 %v1526
    %v4348 = vunpack.c.l.b16 %v1527
    %v4349 = vunpack.c.h.b16 %v1527
    %v4350 = vunpack.c.l.b16 %v1528
    %v4351 = vunpack.c.h.b16 %v1528
    %v4352 = vunpack.c.l.b16 %v1529
    %v4353 = vunpack.c.h.b16 %v1529
    %v4354 = vunpack.c.l.b16 %v1530
    %v4355 = vunpack.c.h.b16 %v1530
    %v4356 = vunpack.c.l.b16 %v1531
    %v4357 = vunpack.c.h.b16 %v1531
    %v4358 = vunpack.c.l.b16 %v1532
    %v4359 = vunpack.c.h.b16 %v1532
    %v4360 = vunpack.c.l.b16 %v1533
    %v4361 = vunpack.c.h.b16 %v1533
    %v4362 = vunpack.c.l.b16 %v1534
    %v4363 = vunpack.c.h.b16 %v1534
    %v4364 = vunpack.c.l.b16 %v1535
    %v4365 = vunpack.c.h.b16 %v1535
    %v4366 = vunpack.c.l.b16 %v1536
    %v4367 = vunpack.c.h.b16 %v1536
    %v4368 = vunpack.c.l.b16 %v1537
    %v4369 = vunpack.c.h.b16 %v1537
    %v4370 = vunpack.c.l.b16 %v1538
    %v4371 = vunpack.c.h.b16 %v1538
    %v4372 = vunpack.c.l.b16 %v1539
    %v4373 = vunpack.c.h.b16 %v1539
    %v4374 = vunpack.c.l.b16 %v1540
    %v4375 = vunpack.c.h.b16 %v1540
    %v4376 = vunpack.c.l.b16 %v1541
    %v4377 = vunpack.c.h.b16 %v1541
    %v4378 = vunpack.c.l.b16 %v1542
    %v4379 = vunpack.c.h.b16 %v1542
    %v4380 = vunpack.c.l.b16 %v1543
    %v4381 = vunpack.c.h.b16 %v1543
    %v4382 = vunpack.c.l.b16 %v1544
    %v4383 = vunpack.c.h.b16 %v1544
    %v4384 = vunpack.c.l.b16 %v1545
    %v4385 = vunpack.c.h.b16 %v1545
    %v4386 = vunpack.c.l.b16 %v1546
    %v4387 = vunpack.c.h.b16 %v1546
    %v4388 = vunpack.c.l.b16 %v1547
    %v4389 = vunpack.c.h.b16 %v1547
    %v4390 = vunpack.c.l.b16 %v1548
    %v4391 = vunpack.c.h.b16 %v1548
    %v4392 = vunpack.c.l.b16 %v1549
    %v4393 = vunpack.c.h.b16 %v1549
    %v4394 = vunpack.c.l.b16 %v1550
    %v4395 = vunpack.c.h.b16 %v1550
    %v4396 = vunpack.c.l.b16 %v1551
    %v4397 = vunpack.c.h.b16 %v1551
    %v4398 = vunpack.c.l.b16 %v1552
    %v4399 = vunpack.c.h.b16 %v1552
    %v4400 = vunpack.c.l.b16 %v1553
    %v4401 = vunpack.c.h.b16 %v1553
    %v4402 = vunpack.c.l.b16 %v1554
    %v4403 = vunpack.c.h.b16 %v1554
    %v4404 = vunpack.c.l.b16 %v1555
    %v4405 = vunpack.c.h.b16 %v1555
    %v4406 = vunpack.c.l.b16 %v1556
    %v4407 = vunpack.c.h.b16 %v1556
    %v4408 = vunpack.c.l.b16 %v1557
    %v4409 = vunpack.c.h.b16 %v1557
    %v4410 = vunpack.c.l.b16 %v1558
    %v4411 = vunpack.c.h.b16 %v1558
    %v4412 = vunpack.c.l.b16 %v1559
    %v4413 = vunpack.c.h.b16 %v1559
    %v4414 = vunpack.c.l.b16 %v1560
    %v4415 = vunpack.c.h.b16 %v1560
    %v4416 = vunpack.c.l.b16 %v1561
    %v4417 = vunpack.c.h.b16 %v1561
    %v4418 = vunpack.c.l.b16 %v1562
    %v4419 = vunpack.c.h.b16 %v1562
    %v4420 = vunpack.c.l.b16 %v1563
    %v4421 = vunpack.c.h.b16 %v1563
    %v4422 = vunpack.c.l.b16 %v1564
    %v4423 = vunpack.c.h.b16 %v1564
    %v4424 = vunpack.c.l.b16 %v1565
    %v4425 = vunpack.c.h.b16 %v1565
    %v4426 = vunpack.c.l.b16 %v1566
    %v4427 = vunpack.c.h.b16 %v1566
    %v4428 = vunpack.c.l.b16 %v1567
    %v4429 = vunpack.c.h.b16 %v1567
    %v4430 = vunpack.c.l.b16 %v1568
    %v4431 = vunpack.c.h.b16 %v1568
    %v4432 = vunpack.c.l.b16 %v1569
    %v4433 = vunpack.c.h.b16 %v1569
    %v4434 = vunpack.c.l.b16 %v1570
    %v4435 = vunpack.c.h.b16 %v1570
    %v4436 = vunpack.c.l.b16 %v1571
    %v4437 = vunpack.c.h.b16 %v1571
    %v4438 = vunpack.c.l.b16 %v1572
    %v4439 = vunpack.c.h.b16 %v1572
    %v4440 = vunpack.c.l.b16 %v1573
    %v4441 = vunpack.c.h.b16 %v1573
    %v4442 = vunpack.c.l.b16 %v1574
    %v4443 = vunpack.c.h.b16 %v1574
    %v4444 = vunpack.c.l.b16 %v1575
    %v4445 = vunpack.c.h.b16 %v1575
    %v4446 = vunpack.c.l.b16 %v1576
    %v4447 = vunpack.c.h.b16 %v1576
    %v4448 = vunpack.c.l.b16 %v1577
    %v4449 = vunpack.c.h.b16 %v1577
    %v4450 = vunpack.c.l.b16 %v1578
    %v4451 = vunpack.c.h.b16 %v1578
    %v4452 = vunpack.c.l.b16 %v1579
    %v4453 = vunpack.c.h.b16 %v1579
    %v4454 = vunpack.c.l.b16 %v1580
    %v4455 = vunpack.c.h.b16 %v1580
    %v4456 = vunpack.c.l.b16 %v1581
    %v4457 = vunpack.c.h.b16 %v1581
    %v4458 = vunpack.c.l.b16 %v1582
    %v4459 = vunpack.c.h.b16 %v1582
    %v4460 = vunpack.c.l.b16 %v1583
    %v4461 = vunpack.c.h.b16 %v1583
    %v4462 = vunpack.c.l.b16 %v1584
    %v4463 = vunpack.c.h.b16 %v1584
    %v4464 = vunpack.c.l.b16 %v1585
    %v4465 = vunpack.c.h.b16 %v1585
    %v4466 = vunpack.c.l.b16 %v1586
    %v4467 = vunpack.c.h.b16 %v1586
    %v4468 = vunpack.c.l.b16 %v1587
    %v4469 = vunpack.c.h.b16 %v1587
    %v4470 = vunpack.c.l.b16 %v1588
    %v4471 = vunpack.c.h.b16 %v1588
    %v4472 = vunpack.c.l.b16 %v1589
    %v4473 = vunpack.c.h.b16 %v1589
    %v4474 = vunpack.c.l.b16 %v1590
    %v4475 = vunpack.c.h.b16 %v1590
    %v4476 = vunpack.c.l.b16 %v1591
    %v4477 = vunpack.c.h.b16 %v1591
    %v4478 = vunpack.c.l.b16 %v1592
    %v4479 = vunpack.c.h.b16 %v1592
    %v4480 = vunpack.c.l.b16 %v1593
    %v4481 = vunpack.c.h.b16 %v1593
    %v4482 = vunpack.c.l.b16 %v1594
    %v4483 = vunpack.c.h.b16 %v1594
    %v4484 = vunpack.c.l.b16 %v1595
    %v4485 = vunpack.c.h.b16 %v1595
    %v4486 = vunpack.c.l.b16 %v1596
    %v4487 = vunpack.c.h.b16 %v1596
    %v4488 = vunpack.c.l.b16 %v1597
    %v4489 = vunpack.c.h.b16 %v1597
    %v4490 = vunpack.c.l.b16 %v1598
    %v4491 = vunpack.c.h.b16 %v1598
    %v4492 = vunpack.c.l.b16 %v1599
    %v4493 = vunpack.c.h.b16 %v1599
    %v4494 = vunpack.c.l.b16 %v1600
    %v4495 = vunpack.c.h.b16 %v1600
    %v4496 = vunpack.c.l.b16 %v1601
    %v4497 = vunpack.c.h.b16 %v1601
    %v4498 = vunpack.c.l.b16 %v1602
    %v4499 = vunpack.c.h.b16 %v1602
    %v4500 = vunpack.c.l.b16 %v1603
    %v4501 = vunpack.c.h.b16 %v1603
    %v4502 = vunpack.c.l.b16 %v1604
    %v4503 = vunpack.c.h.b16 %v1604
    %v4504 = vunpack.c.l.b16 %v1605
    %v4505 = vunpack.c.h.b16 %v1605
    %v4506 = vunpack.c.l.b16 %v1606
    %v4507 = vunpack.c.h.b16 %v1606
    %v4508 = vunpack.c.l.b16 %v1607
    %v4509 = vunpack.c.h.b16 %v1607
    %v4510 = vunpack.c.l.b16 %v1608
    %v4511 = vunpack.c.h.b16 %v1608
    %v4512 = vunpack.c.l.b16 %v1609
    %v4513 = vunpack.c.h.b16 %v1609
    %v4514 = vunpack.c.l.b16 %v1610
    %v4515 = vunpack.c.h.b16 %v1610
    %v4516 = vunpack.c.l.b16 %v1611
    %v4517 = vunpack.c.h.b16 %v1611
    %v4518 = vunpack.c.l.b16 %v1612
    %v4519 = vunpack.c.h.b16 %v1612
    %v4520 = vunpack.c.l.b16 %v1613
    %v4521 = vunpack.c.h.b16 %v1613
    %v4522 = vunpack.c.l.b16 %v1614
    %v4523 = vunpack.c.h.b16 %v1614
    %v4524 = vunpack.c.l.b16 %v1615
    %v4525 = vunpack.c.h.b16 %v1615
    %v4526 = vunpack.c.l.b16 %v1616
    %v4527 = vunpack.c.h.b16 %v1616
    %v4528 = vunpack.c.l.b16 %v1617
    %v4529 = vunpack.c.h.b16 %v1617
    %v4530 = vunpack.c.l.b16 %v1618
    %v4531 = vunpack.c.h.b16 %v1618
    %v4532 = vunpack.c.l.b16 %v1619
    %v4533 = vunpack.c.h.b16 %v1619
    %v4534 = vunpack.c.l.b16 %v1620
    %v4535 = vunpack.c.h.b16 %v1620
    %v4536 = vunpack.c.l.b16 %v1621
    %v4537 = vunpack.c.h.b16 %v1621
    %v4538 = vunpack.c.l.b16 %v1622
    %v4539 = vunpack.c.h.b16 %v1622
    %v4540 = vunpack.c.l.b16 %v1623
    %v4541 = vunpack.c.h.b16 %v1623
    %v4542 = vunpack.c.l.b16 %v1624
    %v4543 = vunpack.c.h.b16 %v1624
    %v4544 = vunpack.c.l.b16 %v1625
    %v4545 = vunpack.c.h.b16 %v1625
    %v4546 = vunpack.c.l.b16 %v1626
    %v4547 = vunpack.c.h.b16 %v1626
    %v4548 = vunpack.c.l.b16 %v1627
    %v4549 = vunpack.c.h.b16 %v1627
    %v4550 = vunpack.c.l.b16 %v1628
    %v4551 = vunpack.c.h.b16 %v1628
    %v4552 = vunpack.c.l.b16 %v1629
    %v4553 = vunpack.c.h.b16 %v1629
    %v4554 = vunpack.c.l.b16 %v1630
    %v4555 = vunpack.c.h.b16 %v1630
    %v4556 = vunpack.c.l.b16 %v1631
    %v4557 = vunpack.c.h.b16 %v1631
    %v4558 = vunpack.c.l.b16 %v1632
    %v4559 = vunpack.c.h.b16 %v1632
    %v4560 = vunpack.c.l.b16 %v1633
    %v4561 = vunpack.c.h.b16 %v1633
    %v4562 = vunpack.c.l.b16 %v1634
    %v4563 = vunpack.c.h.b16 %v1634
    %v4564 = vunpack.c.l.b16 %v1635
    %v4565 = vunpack.c.h.b16 %v1635
    %v4566 = vunpack.c.l.b16 %v1636
    %v4567 = vunpack.c.h.b16 %v1636
    %v4568 = vunpack.c.l.b16 %v1637
    %v4569 = vunpack.c.h.b16 %v1637
    %v4570 = vunpack.c.l.b16 %v1638
    %v4571 = vunpack.c.h.b16 %v1638
    %v4572 = vunpack.c.l.b16 %v1639
    %v4573 = vunpack.c.h.b16 %v1639
    %v4574 = vunpack.c.l.b16 %v1640
    %v4575 = vunpack.c.h.b16 %v1640
    %v4576 = vunpack.c.l.b16 %v1641
    %v4577 = vunpack.c.h.b16 %v1641
    %v4578 = vunpack.c.l.b16 %v1642
    %v4579 = vunpack.c.h.b16 %v1642
    %v4580 = vunpack.c.l.b16 %v1643
    %v4581 = vunpack.c.h.b16 %v1643
    %v4582 = vunpack.c.l.b16 %v1644
    %v4583 = vunpack.c.h.b16 %v1644
    %v4584 = vunpack.c.l.b16 %v1645
    %v4585 = vunpack.c.h.b16 %v1645
    %v4586 = vunpack.c.l.b16 %v1646
    %v4587 = vunpack.c.h.b16 %v1646
    %v4588 = vunpack.c.l.b16 %v1647
    %v4589 = vunpack.c.h.b16 %v1647
    %v4590 = vunpack.c.l.b16 %v1648
    %v4591 = vunpack.c.h.b16 %v1648
    %v4592 = vunpack.c.l.b16 %v1649
    %v4593 = vunpack.c.h.b16 %v1649
    %v4594 = vunpack.c.l.b16 %v1650
    %v4595 = vunpack.c.h.b16 %v1650
    %v4596 = vunpack.c.l.b16 %v1651
    %v4597 = vunpack.c.h.b16 %v1651
    %v4598 = vunpack.c.l.b16 %v1652
    %v4599 = vunpack.c.h.b16 %v1652
    %v4600 = vunpack.c.l.b16 %v1653
    %v4601 = vunpack.c.h.b16 %v1653
    %v4602 = vunpack.c.l.b16 %v1654
    %v4603 = vunpack.c.h.b16 %v1654
    %v4604 = vunpack.c.l.b16 %v1655
    %v4605 = vunpack.c.h.b16 %v1655
    %v4606 = vunpack.c.l.b16 %v1656
    %v4607 = vunpack.c.h.b16 %v1656
    %v4608 = vunpack.c.l.b16 %v1657
    %v4609 = vunpack.c.h.b16 %v1657
    %v4610 = vunpack.c.l.b16 %v1658
    %v4611 = vunpack.c.h.b16 %v1658
    %v4612 = vunpack.c.l.b16 %v1659
    %v4613 = vunpack.c.h.b16 %v1659
    %v4614 = vunpack.c.l.b16 %v1660
    %v4615 = vunpack.c.h.b16 %v1660
    %v4616 = vunpack.c.l.b16 %v1661
    %v4617 = vunpack.c.h.b16 %v1661
    %v4618 = vunpack.c.l.b16 %v1662
    %v4619 = vunpack.c.h.b16 %v1662
    %v4620 = vunpack.c.l.b16 %v1663
    %v4621 = vunpack.c.h.b16 %v1663
    %v4622 = vunpack.c.l.b16 %v1664
    %v4623 = vunpack.c.h.b16 %v1664
    %v4624 = vunpack.c.l.b16 %v1665
    %v4625 = vunpack.c.h.b16 %v1665
    %v4626 = vunpack.c.l.b16 %v1666
    %v4627 = vunpack.c.h.b16 %v1666
    %v4628 = vunpack.c.l.b16 %v1667
    %v4629 = vunpack.c.h.b16 %v1667
    %v4630 = vunpack.c.l.b16 %v1668
    %v4631 = vunpack.c.h.b16 %v1668
    %v4632 = vunpack.c.l.b16 %v1669
    %v4633 = vunpack.c.h.b16 %v1669
    %v4634 = vunpack.c.l.b16 %v1670
    %v4635 = vunpack.c.h.b16 %v1670
    %v4636 = vunpack.c.l.b16 %v1671
    %v4637 = vunpack.c.h.b16 %v1671
    %v4638 = vunpack.c.l.b16 %v1672
    %v4639 = vunpack.c.h.b16 %v1672
    %v4640 = vunpack.c.l.b16 %v1673
    %v4641 = vunpack.c.h.b16 %v1673
    %v4642 = vunpack.c.l.b16 %v1674
    %v4643 = vunpack.c.h.b16 %v1674
    %v4644 = vunpack.c.l.b16 %v1675
    %v4645 = vunpack.c.h.b16 %v1675
    %v4646 = vunpack.c.l.b16 %v1676
    %v4647 = vunpack.c.h.b16 %v1676
    %v4648 = vunpack.c.l.b16 %v1677
    %v4649 = vunpack.c.h.b16 %v1677
    %v4650 = vunpack.c.l.b16 %v1678
    %v4651 = vunpack.c.h.b16 %v1678
    %v4652 = vunpack.c.l.b16 %v1679
    %v4653 = vunpack.c.h.b16 %v1679
    %v4654 = vunpack.c.l.b16 %v1680
    %v4655 = vunpack.c.h.b16 %v1680
    %v4656 = vunpack.c.l.b16 %v1681
    %v4657 = vunpack.c.h.b16 %v1681
    %v4658 = vunpack.c.l.b16 %v1682
    %v4659 = vunpack.c.h.b16 %v1682
    %v4660 = vunpack.c.l.b16 %v1683
    %v4661 = vunpack.c.h.b16 %v1683
    %v4662 = vunpack.c.l.b16 %v1684
    %v4663 = vunpack.c.h.b16 %v1684
    %v4664 = vunpack.c.l.b16 %v1685
    %v4665 = vunpack.c.h.b16 %v1685
    %v4666 = vunpack.c.l.b16 %v1686
    %v4667 = vunpack.c.h.b16 %v1686
    %v4668 = vunpack.c.l.b16 %v1687
    %v4669 = vunpack.c.h.b16 %v1687
    %v4670 = vunpack.c.l.b16 %v1688
    %v4671 = vunpack.c.h.b16 %v1688
    %v4672 = vunpack.c.l.b16 %v1689
    %v4673 = vunpack.c.h.b16 %v1689
    %v4674 = vunpack.c.l.b16 %v1690
    %v4675 = vunpack.c.h.b16 %v1690
    %v4676 = vunpack.c.l.b16 %v1691
    %v4677 = vunpack.c.h.b16 %v1691
    %v4678 = vunpack.c.l.b16 %v1692
    %v4679 = vunpack.c.h.b16 %v1692
    %v4680 = vunpack.c.l.b16 %v1693
    %v4681 = vunpack.c.h.b16 %v1693
    %v4682 = vunpack.c.l.b16 %v1694
    %v4683 = vunpack.c.h.b16 %v1694
    %v4684 = vunpack.c.l.b16 %v1695
    %v4685 = vunpack.c.h.b16 %v1695
    %v4686 = vunpack.c.l.b16 %v1696
    %v4687 = vunpack.c.h.b16 %v1696
    %v4688 = vunpack.c.l.b16 %v1697
    %v4689 = vunpack.c.h.b16 %v1697
    %v4690 = vunpack.c.l.b16 %v1698
    %v4691 = vunpack.c.h.b16 %v1698
    %v4692 = vunpack.c.l.b16 %v1699
    %v4693 = vunpack.c.h.b16 %v1699
    %v4694 = vunpack.c.l.b16 %v1700
    %v4695 = vunpack.c.h.b16 %v1700
    %v4696 = vunpack.c.l.b16 %v1701
    %v4697 = vunpack.c.h.b16 %v1701
    %v4698 = vunpack.c.l.b16 %v1702
    %v4699 = vunpack.c.h.b16 %v1702
    %v4700 = vunpack.c.l.b16 %v1703
    %v4701 = vunpack.c.h.b16 %v1703
    %v4702 = vunpack.c.l.b16 %v1704
    %v4703 = vunpack.c.h.b16 %v1704
    %v4704 = vunpack.c.l.b16 %v1705
    %v4705 = vunpack.c.h.b16 %v1705
    %v4706 = vunpack.c.l.b16 %v1706
    %v4707 = vunpack.c.h.b16 %v1706
    %v4708 = vunpack.c.l.b16 %v1707
    %v4709 = vunpack.c.h.b16 %v1707
    %v4710 = vunpack.c.l.b16 %v1708
    %v4711 = vunpack.c.h.b16 %v1708
    %v4712 = vunpack.c.l.b16 %v1709
    %v4713 = vunpack.c.h.b16 %v1709
    %v4714 = vunpack.c.l.b16 %v1710
    %v4715 = vunpack.c.h.b16 %v1710
    %v4716 = vunpack.c.l.b16 %v1711
    %v4717 = vunpack.c.h.b16 %v1711
    %v4718 = vunpack.c.l.b16 %v1712
    %v4719 = vunpack.c.h.b16 %v1712
    %v4720 = vunpack.c.l.b16 %v1713
    %v4721 = vunpack.c.h.b16 %v1713
    %v4722 = vunpack.c.l.b16 %v1714
    %v4723 = vunpack.c.h.b16 %v1714
    %v4724 = vunpack.c.l.b16 %v1715
    %v4725 = vunpack.c.h.b16 %v1715
    %v4726 = vunpack.c.l.b16 %v1716
    %v4727 = vunpack.c.h.b16 %v1716
    %v4728 = vunpack.c.l.b16 %v1717
    %v4729 = vunpack.c.h.b16 %v1717
    %v4730 = vunpack.c.l.b16 %v1718
    %v4731 = vunpack.c.h.b16 %v1718
    %v4732 = vunpack.c.l.b16 %v1719
    %v4733 = vunpack.c.h.b16 %v1719
    %v4734 = vunpack.c.l.b16 %v1720
    %v4735 = vunpack.c.h.b16 %v1720
    %v4736 = vunpack.c.l.b16 %v1721
    %v4737 = vunpack.c.h.b16 %v1721
    %v4738 = vunpack.c.l.b16 %v1722
    %v4739 = vunpack.c.h.b16 %v1722
    %v4740 = vunpack.c.l.b16 %v1723
    %v4741 = vunpack.c.h.b16 %v1723
    %v4742 = vunpack.c.l.b16 %v1724
    %v4743 = vunpack.c.h.b16 %v1724
    %v4744 = vunpack.c.l.b16 %v1725
    %v4745 = vunpack.c.h.b16 %v1725
    %v4746 = vunpack.c.l.b16 %v1726
    %v4747 = vunpack.c.h.b16 %v1726
    %v4748 = vunpack.c.l.b16 %v1727
    %v4749 = vunpack.c.h.b16 %v1727
    %v4750 = vunpack.c.l.b16 %v1728
    %v4751 = vunpack.c.h.b16 %v1728
    %v4752 = vunpack.c.l.b16 %v1729
    %v4753 = vunpack.c.h.b16 %v1729
    %v4754 = vunpack.c.l.b16 %v1730
    %v4755 = vunpack.c.h.b16 %v1730
    %v4756 = vunpack.c.l.b16 %v1731
    %v4757 = vunpack.c.h.b16 %v1731
    %v4758 = vunpack.c.l.b16 %v1732
    %v4759 = vunpack.c.h.b16 %v1732
    %v4760 = vunpack.c.l.b16 %v1733
    %v4761 = vunpack.c.h.b16 %v1733
    %v4762 = vunpack.c.l.b16 %v1734
    %v4763 = vunpack.c.h.b16 %v1734
    %v4764 = vunpack.c.l.b16 %v1735
    %v4765 = vunpack.c.h.b16 %v1735
    %v4766 = vunpack.c.l.b16 %v1736
    %v4767 = vunpack.c.h.b16 %v1736
    %v4768 = vunpack.c.l.b16 %v1737
    %v4769 = vunpack.c.h.b16 %v1737
    %v4770 = vunpack.c.l.b16 %v1738
    %v4771 = vunpack.c.h.b16 %v1738
    %v4772 = vunpack.c.l.b16 %v1739
    %v4773 = vunpack.c.h.b16 %v1739
    %v4774 = vunpack.c.l.b16 %v1740
    %v4775 = vunpack.c.h.b16 %v1740
    %v4776 = vunpack.c.l.b16 %v1741
    %v4777 = vunpack.c.h.b16 %v1741
    %v4778 = vunpack.c.l.b16 %v1742
    %v4779 = vunpack.c.h.b16 %v1742
    %v4780 = vunpack.c.l.b16 %v1743
    %v4781 = vunpack.c.h.b16 %v1743
    %v4782 = vunpack.c.l.b16 %v1744
    %v4783 = vunpack.c.h.b16 %v1744
    %v4784 = vunpack.c.l.b16 %v1745
    %v4785 = vunpack.c.h.b16 %v1745
    %v4786 = vunpack.c.l.b16 %v1746
    %v4787 = vunpack.c.h.b16 %v1746
    %v4788 = vunpack.c.l.b16 %v1747
    %v4789 = vunpack.c.h.b16 %v1747
    %v4790 = vunpack.c.l.b16 %v1748
    %v4791 = vunpack.c.h.b16 %v1748
    %v4792 = vunpack.c.l.b16 %v1749
    %v4793 = vunpack.c.h.b16 %v1749
    %v4794 = vunpack.c.l.b16 %v1750
    %v4795 = vunpack.c.h.b16 %v1750
    %v4796 = vunpack.c.l.b16 %v1751
    %v4797 = vunpack.c.h.b16 %v1751
    %v4798 = vunpack.c.l.b16 %v1752
    %v4799 = vunpack.c.h.b16 %v1752
    %v4800 = vunpack.c.l.b16 %v1753
    %v4801 = vunpack.c.h.b16 %v1753
    %v4802 = vunpack.c.l.b16 %v1754
    %v4803 = vunpack.c.h.b16 %v1754
    %v4804 = vunpack.c.l.b16 %v1755
    %v4805 = vunpack.c.h.b16 %v1755
    %v4806 = vunpack.c.l.b16 %v1756
    %v4807 = vunpack.c.h.b16 %v1756
    %v4808 = vunpack.c.l.b16 %v1757
    %v4809 = vunpack.c.h.b16 %v1757
    %v4810 = vunpack.c.l.b16 %v1758
    %v4811 = vunpack.c.h.b16 %v1758
    %v4812 = vunpack.c.l.b16 %v1759
    %v4813 = vunpack.c.h.b16 %v1759
    %v4814 = vunpack.c.l.b16 %v1760
    %v4815 = vunpack.c.h.b16 %v1760
    %v4816 = vunpack.c.l.b16 %v1761
    %v4817 = vunpack.c.h.b16 %v1761
    %v4818 = vunpack.c.l.b16 %v1762
    %v4819 = vunpack.c.h.b16 %v1762
    %v4820 = vunpack.c.l.b16 %v1763
    %v4821 = vunpack.c.h.b16 %v1763
    %v4822 = vunpack.c.l.b16 %v1764
    %v4823 = vunpack.c.h.b16 %v1764
    %v4824 = vunpack.c.l.b16 %v1765
    %v4825 = vunpack.c.h.b16 %v1765
    %v4826 = vunpack.c.l.b16 %v1766
    %v4827 = vunpack.c.h.b16 %v1766
    %v4828 = vunpack.c.l.b16 %v1767
    %v4829 = vunpack.c.h.b16 %v1767
    %v4830 = vunpack.c.l.b16 %v1768
    %v4831 = vunpack.c.h.b16 %v1768
    %v4832 = vunpack.c.l.b16 %v1769
    %v4833 = vunpack.c.h.b16 %v1769
    %v4834 = vunpack.c.l.b16 %v1770
    %v4835 = vunpack.c.h.b16 %v1770
    %v4836 = vunpack.c.l.b16 %v1771
    %v4837 = vunpack.c.h.b16 %v1771
    %v4838 = vunpack.c.l.b16 %v1772
    %v4839 = vunpack.c.h.b16 %v1772
    %v4840 = vunpack.c.l.b16 %v1773
    %v4841 = vunpack.c.h.b16 %v1773
    %v4842 = vunpack.c.l.b16 %v1774
    %v4843 = vunpack.c.h.b16 %v1774
    %v4844 = vunpack.c.l.b16 %v1775
    %v4845 = vunpack.c.h.b16 %v1775
    %v4846 = vunpack.c.l.b16 %v1776
    %v4847 = vunpack.c.h.b16 %v1776
    %v4848 = vunpack.c.l.b16 %v1777
    %v4849 = vunpack.c.h.b16 %v1777
    %v4850 = vunpack.c.l.b16 %v1778
    %v4851 = vunpack.c.h.b16 %v1778
    %v4852 = vunpack.c.l.b16 %v1779
    %v4853 = vunpack.c.h.b16 %v1779
    %v4854 = vunpack.c.l.b16 %v1780
    %v4855 = vunpack.c.h.b16 %v1780
    %v4856 = vunpack.c.l.b16 %v1781
    %v4857 = vunpack.c.h.b16 %v1781
    %v4858 = vunpack.c.l.b16 %v1782
    %v4859 = vunpack.c.h.b16 %v1782
    %v4860 = vunpack.c.l.b16 %v1783
    %v4861 = vunpack.c.h.b16 %v1783
    %v4862 = vunpack.c.l.b16 %v1784
    %v4863 = vunpack.c.h.b16 %v1784
    %v4864 = vunpack.c.l.b16 %v1785
    %v4865 = vunpack.c.h.b16 %v1785
    %v4866 = vunpack.c.l.b16 %v1786
    %v4867 = vunpack.c.h.b16 %v1786
    %v4868 = vunpack.c.l.b16 %v1787
    %v4869 = vunpack.c.h.b16 %v1787
    %v4870 = vunpack.c.l.b16 %v1788
    %v4871 = vunpack.c.h.b16 %v1788
    %v4872 = vunpack.c.l.b16 %v1789
    %v4873 = vunpack.c.h.b16 %v1789
    %v4874 = vunpack.c.l.b16 %v1790
    %v4875 = vunpack.c.h.b16 %v1790
    %v4876 = vunpack.c.l.b16 %v1791
    %v4877 = vunpack.c.h.b16 %v1791
    %v4878 = vunpack.c.l.b16 %v1792
    %v4879 = vunpack.c.h.b16 %v1792
    %v4880 = vunpack.c.l.b16 %v1793
    %v4881 = vunpack.c.h.b16 %v1793
    %v4882 = vunpack.c.l.b16 %v1794
    %v4883 = vunpack.c.h.b16 %v1794
    %v4884 = vunpack.c.l.b16 %v1795
    %v4885 = vunpack.c.h.b16 %v1795
    %v4886 = vunpack.c.l.b16 %v1796
    %v4887 = vunpack.c.h.b16 %v1796
    %v4888 = vunpack.c.l.b16 %v1797
    %v4889 = vunpack.c.h.b16 %v1797
    %v4890 = vunpack.c.l.b16 %v1798
    %v4891 = vunpack.c.h.b16 %v1798
    %v4892 = vunpack.c.l.b16 %v1799
    %v4893 = vunpack.c.h.b16 %v1799
    %v4894 = vunpack.c.l.b16 %v1800
    %v4895 = vunpack.c.h.b16 %v1800
    %v4896 = vunpack.c.l.b16 %v1801
    %v4897 = vunpack.c.h.b16 %v1801
    %v4898 = vunpack.c.l.b16 %v1802
    %v4899 = vunpack.c.h.b16 %v1802
    %v4900 = vunpack.c.l.b16 %v1803
    %v4901 = vunpack.c.h.b16 %v1803
    %v4902 = vunpack.c.l.b16 %v1804
    %v4903 = vunpack.c.h.b16 %v1804
    %v4904 = vunpack.c.l.b16 %v1805
    %v4905 = vunpack.c.h.b16 %v1805
    %v4906 = vunpack.c.l.b16 %v1806
    %v4907 = vunpack.c.h.b16 %v1806
    %v4908 = vunpack.c.l.b16 %v1807
    %v4909 = vunpack.c.h.b16 %v1807
    %v4910 = vunpack.c.l.b16 %v1808
    %v4911 = vunpack.c.h.b16 %v1808
    %v4912 = vunpack.c.l.b16 %v1809
    %v4913 = vunpack.c.h.b16 %v1809
    %v4914 = vunpack.c.l.b16 %v1810
    %v4915 = vunpack.c.h.b16 %v1810
    %v4916 = vunpack.c.l.b16 %v1811
    %v4917 = vunpack.c.h.b16 %v1811
    %v4918 = vunpack.c.l.b16 %v1812
    %v4919 = vunpack.c.h.b16 %v1812
    %v4920 = vunpack.c.l.b16 %v1813
    %v4921 = vunpack.c.h.b16 %v1813
    %v4922 = vunpack.c.l.b16 %v1814
    %v4923 = vunpack.c.h.b16 %v1814
    %v4924 = vunpack.c.l.b16 %v1815
    %v4925 = vunpack.c.h.b16 %v1815
    %v4926 = vunpack.c.l.b16 %v1816
    %v4927 = vunpack.c.h.b16 %v1816
    %v4928 = vunpack.c.l.b16 %v1817
    %v4929 = vunpack.c.h.b16 %v1817
    %v4930 = vunpack.c.l.b16 %v1818
    %v4931 = vunpack.c.h.b16 %v1818
    %v4932 = vunpack.c.l.b16 %v1819
    %v4933 = vunpack.c.h.b16 %v1819
    %v4934 = vpack.c.b16 %v2894, %v2886
    %v4935 = vpack.c.b16 %v2895, %v2887
    %v4936 = vpack.c.b16 %v2896, %v2888
    %v4937 = vpack.c.b16 %v2897, %v2889
    %v4938 = vpack.c.b16 %v2898, %v2890
    %v4939 = vpack.c.b16 %v2899, %v2891
    %v4940 = vpack.c.b16 %v2900, %v2892
    %v4941 = vpack.c.b16 %v2901, %v2893
    %v4942 = vpack.c.b16 %v2910, %v2902
    %v4943 = vpack.c.b16 %v2911, %v2903
    %v4944 = vpack.c.b16 %v2912, %v2904
    %v4945 = vpack.c.b16 %v2913, %v2905
    %v4946 = vpack.c.b16 %v2914, %v2906
    %v4947 = vpack.c.b16 %v2915, %v2907
    %v4948 = vpack.c.b16 %v2916, %v2908
    %v4949 = vpack.c.b16 %v2917, %v2909
    %v4950 = vpack.c.b16 %v2926, %v2918
    %v4951 = vpack.c.b16 %v2927, %v2919
    %v4952 = vpack.c.b16 %v2928, %v2920
    %v4953 = vpack.c.b16 %v2929, %v2921
    %v4954 = vpack.c.b16 %v2930, %v2922
    %v4955 = vpack.c.b16 %v2931, %v2923
    %v4956 = vpack.c.b16 %v2932, %v2924
    %v4957 = vpack.c.b16 %v2933, %v2925
    %v4958 = vpack.c.b16 %v2942, %v2934
    %v4959 = vpack.c.b16 %v2943, %v2935
    %v4960 = vpack.c.b16 %v2944, %v2936
    %v4961 = vpack.c.b16 %v2945, %v2937
    %v4962 = vpack.c.b16 %v2946, %v2938
    %v4963 = vpack.c.b16 %v2947, %v2939
    %v4964 = vpack.c.b16 %v2948, %v2940
    %v4965 = vpack.c.b16 %v2949, %v2941
    %v4966 = vpack.c.b16 %v2958, %v2950
    %v4967 = vpack.c.b16 %v2959, %v2951
    %v4968 = vpack.c.b16 %v2960, %v2952
    %v4969 = vpack.c.b16 %v2961, %v2953
    %v4970 = vpack.c.b16 %v2962, %v2954
    %v4971 = vpack.c.b16 %v2963, %v2955
    %v4972 = vpack.c.b16 %v2964, %v2956
    %v4973 = vpack.c.b16 %v2965, %v2957
    %v4974 = vpack.c.b16 %v2974, %v2966
    %v4975 = vpack.c.b16 %v2975, %v2967
    %v4976 = vpack.c.b16 %v2976, %v2968
    %v4977 = vpack.c.b16 %v2977, %v2969
    %v4978 = vpack.c.b16 %v2978, %v2970
    %v4979 = vpack.c.b16 %v2979, %v2971
    %v4980 = vpack.c.b16 %v2980, %v2972
    %v4981 = vpack.c.b16 %v2981, %v2973
    %v4982 = vpack.c.b16 %v2990, %v2982
    %v4983 = vpack.c.b16 %v2991, %v2983
    %v4984 = vpack.c.b16 %v2992, %v2984
    %v4985 = vpack.c.b16 %v2993, %v2985
    %v4986 = vpack.c.b16 %v2994, %v2986
    %v4987 = vpack.c.b16 %v2995, %v2987
    %v4988 = vpack.c.b16 %v2996, %v2988
    %v4989 = vpack.c.b16 %v2997, %v2989
    %v4990 = vpack.c.b16 %v3006, %v2998
    %v4991 = vpack.c.b16 %v3007, %v2999
    %v4992 = vpack.c.b16 %v3008, %v3000
    %v4993 = vpack.c.b16 %v3009, %v3001
    %v4994 = vpack.c.b16 %v3010, %v3002
    %v4995 = vpack.c.b16 %v3011, %v3003
    %v4996 = vpack.c.b16 %v3012, %v3004
    %v4997 = vpack.c.b16 %v3013, %v3005
    %v4998 = vpack.c.b16 %v3022, %v3014
    %v4999 = vpack.c.b16 %v3023, %v3015
    %v5000 = vpack.c.b16 %v3024, %v3016
    %v5001 = vpack.c.b16 %v3025, %v3017
    %v5002 = vpack.c.b16 %v3026, %v3018
    %v5003 = vpack.c.b16 %v3027, %v3019
    %v5004 = vpack.c.b16 %v3028, %v3020
    %v5005 = vpack.c.b16 %v3029, %v3021
    %v5006 = vpack.c.b16 %v3038, %v3030
    %v5007 = vpack.c.b16 %v3039, %v3031
    %v5008 = vpack.c.b16 %v3040, %v3032
    %v5009 = vpack.c.b16 %v3041, %v3033
    %v5010 = vpack.c.b16 %v3042, %v3034
    %v5011 = vpack.c.b16 %v3043, %v3035
    %v5012 = vpack.c.b16 %v3044, %v3036
    %v5013 = vpack.c.b16 %v3045, %v3037
    %v5014 = vpack.c.b16 %v3054, %v3046
    %v5015 = vpack.c.b16 %v3055, %v3047
    %v5016 = vpack.c.b16 %v3056, %v3048
    %v5017 = vpack.c.b16 %v3057, %v3049
    %v5018 = vpack.c.b16 %v3058, %v3050
    %v5019 = vpack.c.b16 %v3059, %v3051
    %v5020 = vpack.c.b16 %v3060, %v3052
    %v5021 = vpack.c.b16 %v3061, %v3053
    %v5022 = vpack.c.b16 %v3070, %v3062
    %v5023 = vpack.c.b16 %v3071, %v3063
    %v5024 = vpack.c.b16 %v3072, %v3064
    %v5025 = vpack.c.b16 %v3073, %v3065
    %v5026 = vpack.c.b16 %v3074, %v3066
    %v5027 = vpack.c.b16 %v3075, %v3067
    %v5028 = vpack.c.b16 %v3076, %v3068
    %v5029 = vpack.c.b16 %v3077, %v3069
    %v5030 = vpack.c.b16 %v3086, %v3078
    %v5031 = vpack.c.b16 %v3087, %v3079
    %v5032 = vpack.c.b16 %v3088, %v3080
    %v5033 = vpack.c.b16 %v3089, %v3081
    %v5034 = vpack.c.b16 %v3090, %v3082
    %v5035 = vpack.c.b16 %v3091, %v3083
    %v5036 = vpack.c.b16 %v3092, %v3084
    %v5037 = vpack.c.b16 %v3093, %v3085
    %v5038 = vpack.c.b16 %v3102, %v3094
    %v5039 = vpack.c.b16 %v3103, %v3095
    %v5040 = vpack.c.b16 %v3104, %v3096
    %v5041 = vpack.c.b16 %v3105, %v3097
    %v5042 = vpack.c.b16 %v3106, %v3098
    %v5043 = vpack.c.b16 %v3107, %v3099
    %v5044 = vpack.c.b16 %v3108, %v3100
    %v5045 = vpack.c.b16 %v3109, %v3101
    %v5046 = vpack.c.b16 %v3118, %v3110
    %v5047 = vpack.c.b16 %v3119, %v3111
    %v5048 = vpack.c.b16 %v3120, %v3112
    %v5049 = vpack.c.b16 %v3121, %v3113
    %v5050 = vpack.c.b16 %v3122, %v3114
    %v5051 = vpack.c.b16 %v3123, %v3115
    %v5052 = vpack.c.b16 %v3124, %v3116
    %v5053 = vpack.c.b16 %v3125, %v3117
    %v5054 = vpack.c.b16 %v3134, %v3126
    %v5055 = vpack.c.b16 %v3135, %v3127
    %v5056 = vpack.c.b16 %v3136, %v3128
    %v5057 = vpack.c.b16 %v3137, %v3129
    %v5058 = vpack.c.b16 %v3138, %v3130
    %v5059 = vpack.c.b16 %v3139, %v3131
    %v5060 = vpack.c.b16 %v3140, %v3132
    %v5061 = vpack.c.b16 %v3141, %v3133
    %v5062 = vpack.c.b16 %v3150, %v3142
    %v5063 = vpack.c.b16 %v3151, %v3143
    %v5064 = vpack.c.b16 %v3152, %v3144
    %v5065 = vpack.c.b16 %v3153, %v3145
    %v5066 = vpack.c.b16 %v3154, %v3146
    %v5067 = vpack.c.b16 %v3155, %v3147
    %v5068 = vpack.c.b16 %v3156, %v3148
    %v5069 = vpack.c.b16 %v3157, %v3149
    %v5070 = vpack.c.b16 %v3166, %v3158
    %v5071 = vpack.c.b16 %v3167, %v3159
    %v5072 = vpack.c.b16 %v3168, %v3160
    %v5073 = vpack.c.b16 %v3169, %v3161
    %v5074 = vpack.c.b16 %v3170, %v3162
    %v5075 = vpack.c.b16 %v3171, %v3163
    %v5076 = vpack.c.b16 %v3172, %v3164
    %v5077 = vpack.c.b16 %v3173, %v3165
    %v5078 = vpack.c.b16 %v3182, %v3174
    %v5079 = vpack.c.b16 %v3183, %v3175
    %v5080 = vpack.c.b16 %v3184, %v3176
    %v5081 = vpack.c.b16 %v3185, %v3177
    %v5082 = vpack.c.b16 %v3186, %v3178
    %v5083 = vpack.c.b16 %v3187, %v3179
    %v5084 = vpack.c.b16 %v3188, %v3180
    %v5085 = vpack.c.b16 %v3189, %v3181
    %v5086 = vpack.c.b16 %v3198, %v3190
    %v5087 = vpack.c.b16 %v3199, %v3191
    %v5088 = vpack.c.b16 %v3200, %v3192
    %v5089 = vpack.c.b16 %v3201, %v3193
    %v5090 = vpack.c.b16 %v3202, %v3194
    %v5091 = vpack.c.b16 %v3203, %v3195
    %v5092 = vpack.c.b16 %v3204, %v3196
    %v5093 = vpack.c.b16 %v3205, %v3197
    %v5094 = vpack.c.b16 %v3214, %v3206
    %v5095 = vpack.c.b16 %v3215, %v3207
    %v5096 = vpack.c.b16 %v3216, %v3208
    %v5097 = vpack.c.b16 %v3217, %v3209
    %v5098 = vpack.c.b16 %v3218, %v3210
    %v5099 = vpack.c.b16 %v3219, %v3211
    %v5100 = vpack.c.b16 %v3220, %v3212
    %v5101 = vpack.c.b16 %v3221, %v3213
    %v5102 = vpack.c.b16 %v3230, %v3222
    %v5103 = vpack.c.b16 %v3231, %v3223
    %v5104 = vpack.c.b16 %v3232, %v3224
    %v5105 = vpack.c.b16 %v3233, %v3225
    %v5106 = vpack.c.b16 %v3234, %v3226
    %v5107 = vpack.c.b16 %v3235, %v3227
    %v5108 = vpack.c.b16 %v3236, %v3228
    %v5109 = vpack.c.b16 %v3237, %v3229
    %v5110 = vpack.c.b16 %v3246, %v3238
    %v5111 = vpack.c.b16 %v3247, %v3239
    %v5112 = vpack.c.b16 %v3248, %v3240
    %v5113 = vpack.c.b16 %v3249, %v3241
    %v5114 = vpack.c.b16 %v3250, %v3242
    %v5115 = vpack.c.b16 %v3251, %v3243
    %v5116 = vpack.c.b16 %v3252, %v3244
    %v5117 = vpack.c.b16 %v3253, %v3245
    %v5118 = vpack.c.b16 %v3262, %v3254
    %v5119 = vpack.c.b16 %v3263, %v3255
    %v5120 = vpack.c.b16 %v3264, %v3256
    %v5121 = vpack.c.b16 %v3265, %v3257
    %v5122 = vpack.c.b16 %v3266, %v3258
    %v5123 = vpack.c.b16 %v3267, %v3259
    %v5124 = vpack.c.b16 %v3268, %v3260
    %v5125 = vpack.c.b16 %v3269, %v3261
    %v5126 = vpack.c.b16 %v3278, %v3270
    %v5127 = vpack.c.b16 %v3279, %v3271
    %v5128 = vpack.c.b16 %v3280, %v3272
    %v5129 = vpack.c.b16 %v3281, %v3273
    %v5130 = vpack.c.b16 %v3282, %v3274
    %v5131 = vpack.c.b16 %v3283, %v3275
    %v5132 = vpack.c.b16 %v3284, %v3276
    %v5133 = vpack.c.b16 %v3285, %v3277
    %v5134 = vpack.c.b16 %v3294, %v3286
    %v5135 = vpack.c.b16 %v3295, %v3287
    %v5136 = vpack.c.b16 %v3296, %v3288
    %v5137 = vpack.c.b16 %v3297, %v3289
    %v5138 = vpack.c.b16 %v3298, %v3290
    %v5139 = vpack.c.b16 %v3299, %v3291
    %v5140 = vpack.c.b16 %v3300, %v3292
    %v5141 = vpack.c.b16 %v3301, %v3293
    %v5142 = vpack.c.b16 %v3310, %v3302
    %v5143 = vpack.c.b16 %v3311, %v3303
    %v5144 = vpack.c.b16 %v3312, %v3304
    %v5145 = vpack.c.b16 %v3313, %v3305
    %v5146 = vpack.c.b16 %v3314, %v3306
    %v5147 = vpack.c.b16 %v3315, %v3307
    %v5148 = vpack.c.b16 %v3316, %v3308
    %v5149 = vpack.c.b16 %v3317, %v3309
    %v5150 = vpack.c.b16 %v3326, %v3318
    %v5151 = vpack.c.b16 %v3327, %v3319
    %v5152 = vpack.c.b16 %v3328, %v3320
    %v5153 = vpack.c.b16 %v3329, %v3321
    %v5154 = vpack.c.b16 %v3330, %v3322
    %v5155 = vpack.c.b16 %v3331, %v3323
    %v5156 = vpack.c.b16 %v3332, %v3324
    %v5157 = vpack.c.b16 %v3333, %v3325
    %v5158 = vpack.c.b16 %v3342, %v3334
    %v5159 = vpack.c.b16 %v3343, %v3335
    %v5160 = vpack.c.b16 %v3344, %v3336
    %v5161 = vpack.c.b16 %v3345, %v3337
    %v5162 = vpack.c.b16 %v3346, %v3338
    %v5163 = vpack.c.b16 %v3347, %v3339
    %v5164 = vpack.c.b16 %v3348, %v3340
    %v5165 = vpack.c.b16 %v3349, %v3341
    %v5166 = vpack.c.b16 %v3358, %v3350
    %v5167 = vpack.c.b16 %v3359, %v3351
    %v5168 = vpack.c.b16 %v3360, %v3352
    %v5169 = vpack.c.b16 %v3361, %v3353
    %v5170 = vpack.c.b16 %v3362, %v3354
    %v5171 = vpack.c.b16 %v3363, %v3355
    %v5172 = vpack.c.b16 %v3364, %v3356
    %v5173 = vpack.c.b16 %v3365, %v3357
    %v5174 = vpack.c.b16 %v3374, %v3366
    %v5175 = vpack.c.b16 %v3375, %v3367
    %v5176 = vpack.c.b16 %v3376, %v3368
    %v5177 = vpack.c.b16 %v3377, %v3369
    %v5178 = vpack.c.b16 %v3378, %v3370
    %v5179 = vpack.c.b16 %v3379, %v3371
    %v5180 = vpack.c.b16 %v3380, %v3372
    %v5181 = vpack.c.b16 %v3381, %v3373
    %v5182 = vpack.c.b16 %v3390, %v3382
    %v5183 = vpack.c.b16 %v3391, %v3383
    %v5184 = vpack.c.b16 %v3392, %v3384
    %v5185 = vpack.c.b16 %v3393, %v3385
    %v5186 = vpack.c.b16 %v3394, %v3386
    %v5187 = vpack.c.b16 %v3395, %v3387
    %v5188 = vpack.c.b16 %v3396, %v3388
    %v5189 = vpack.c.b16 %v3397, %v3389
    %v5190 = vpack.c.b16 %v3406, %v3398
    %v5191 = vpack.c.b16 %v3407, %v3399
    %v5192 = vpack.c.b16 %v3408, %v3400
    %v5193 = vpack.c.b16 %v3409, %v3401
    %v5194 = vpack.c.b16 %v3410, %v3402
    %v5195 = vpack.c.b16 %v3411, %v3403
    %v5196 = vpack.c.b16 %v3412, %v3404
    %v5197 = vpack.c.b16 %v3413, %v3405
    %v5198 = vpack.c.b16 %v3422, %v3414
    %v5199 = vpack.c.b16 %v3423, %v3415
    %v5200 = vpack.c.b16 %v3424, %v3416
    %v5201 = vpack.c.b16 %v3425, %v3417
    %v5202 = vpack.c.b16 %v3426, %v3418
    %v5203 = vpack.c.b16 %v3427, %v3419
    %v5204 = vpack.c.b16 %v3428, %v3420
    %v5205 = vpack.c.b16 %v3429, %v3421
    %v5206 = vpack.c.b16 %v3438, %v3430
    %v5207 = vpack.c.b16 %v3439, %v3431
    %v5208 = vpack.c.b16 %v3440, %v3432
    %v5209 = vpack.c.b16 %v3441, %v3433
    %v5210 = vpack.c.b16 %v3442, %v3434
    %v5211 = vpack.c.b16 %v3443, %v3435
    %v5212 = vpack.c.b16 %v3444, %v3436
    %v5213 = vpack.c.b16 %v3445, %v3437
    %v5214 = vpack.c.b16 %v3454, %v3446
    %v5215 = vpack.c.b16 %v3455, %v3447
    %v5216 = vpack.c.b16 %v3456, %v3448
    %v5217 = vpack.c.b16 %v3457, %v3449
    %v5218 = vpack.c.b16 %v3458, %v3450
    %v5219 = vpack.c.b16 %v3459, %v3451
    %v5220 = vpack.c.b16 %v3460, %v3452
    %v5221 = vpack.c.b16 %v3461, %v3453
    %v5222 = vpack.c.b16 %v3470, %v3462
    %v5223 = vpack.c.b16 %v3471, %v3463
    %v5224 = vpack.c.b16 %v3472, %v3464
    %v5225 = vpack.c.b16 %v3473, %v3465
    %v5226 = vpack.c.b16 %v3474, %v3466
    %v5227 = vpack.c.b16 %v3475, %v3467
    %v5228 = vpack.c.b16 %v3476, %v3468
    %v5229 = vpack.c.b16 %v3477, %v3469
    %v5230 = vpack.c.b16 %v3486, %v3478
    %v5231 = vpack.c.b16 %v3487, %v3479
    %v5232 = vpack.c.b16 %v3488, %v3480
    %v5233 = vpack.c.b16 %v3489, %v3481
    %v5234 = vpack.c.b16 %v3490, %v3482
    %v5235 = vpack.c.b16 %v3491, %v3483
    %v5236 = vpack.c.b16 %v3492, %v3484
    %v5237 = vpack.c.b16 %v3493, %v3485
    %v5238 = vpack.c.b16 %v3502, %v3494
    %v5239 = vpack.c.b16 %v3503, %v3495
    %v5240 = vpack.c.b16 %v3504, %v3496
    %v5241 = vpack.c.b16 %v3505, %v3497
    %v5242 = vpack.c.b16 %v3506, %v3498
    %v5243 = vpack.c.b16 %v3507, %v3499
    %v5244 = vpack.c.b16 %v3508, %v3500
    %v5245 = vpack.c.b16 %v3509, %v3501
    %v5246 = vpack.c.b16 %v3518, %v3510
    %v5247 = vpack.c.b16 %v3519, %v3511
    %v5248 = vpack.c.b16 %v3520, %v3512
    %v5249 = vpack.c.b16 %v3521, %v3513
    %v5250 = vpack.c.b16 %v3522, %v3514
    %v5251 = vpack.c.b16 %v3523, %v3515
    %v5252 = vpack.c.b16 %v3524, %v3516
    %v5253 = vpack.c.b16 %v3525, %v3517
    %v5254 = vpack.c.b16 %v3534, %v3526
    %v5255 = vpack.c.b16 %v3535, %v3527
    %v5256 = vpack.c.b16 %v3536, %v3528
    %v5257 = vpack.c.b16 %v3537, %v3529
    %v5258 = vpack.c.b16 %v3538, %v3530
    %v5259 = vpack.c.b16 %v3539, %v3531
    %v5260 = vpack.c.b16 %v3540, %v3532
    %v5261 = vpack.c.b16 %v3541, %v3533
    %v5262 = vpack.c.b16 %v3550, %v3542
    %v5263 = vpack.c.b16 %v3551, %v3543
    %v5264 = vpack.c.b16 %v3552, %v3544
    %v5265 = vpack.c.b16 %v3553, %v3545
    %v5266 = vpack.c.b16 %v3554, %v3546
    %v5267 = vpack.c.b16 %v3555, %v3547
    %v5268 = vpack.c.b16 %v3556, %v3548
    %v5269 = vpack.c.b16 %v3557, %v3549
    %v5270 = vpack.c.b16 %v3566, %v3558
    %v5271 = vpack.c.b16 %v3567, %v3559
    %v5272 = vpack.c.b16 %v3568, %v3560
    %v5273 = vpack.c.b16 %v3569, %v3561
    %v5274 = vpack.c.b16 %v3570, %v3562
    %v5275 = vpack.c.b16 %v3571, %v3563
    %v5276 = vpack.c.b16 %v3572, %v3564
    %v5277 = vpack.c.b16 %v3573, %v3565
    %v5278 = vpack.c.b16 %v3582, %v3574
    %v5279 = vpack.c.b16 %v3583, %v3575
    %v5280 = vpack.c.b16 %v3584, %v3576
    %v5281 = vpack.c.b16 %v3585, %v3577
    %v5282 = vpack.c.b16 %v3586, %v3578
    %v5283 = vpack.c.b16 %v3587, %v3579
    %v5284 = vpack.c.b16 %v3588, %v3580
    %v5285 = vpack.c.b16 %v3589, %v3581
    %v5286 = vpack.c.b16 %v3598, %v3590
    %v5287 = vpack.c.b16 %v3599, %v3591
    %v5288 = vpack.c.b16 %v3600, %v3592
    %v5289 = vpack.c.b16 %v3601, %v3593
    %v5290 = vpack.c.b16 %v3602, %v3594
    %v5291 = vpack.c.b16 %v3603, %v3595
    %v5292 = vpack.c.b16 %v3604, %v3596
    %v5293 = vpack.c.b16 %v3605, %v3597
    %v5294 = vpack.c.b16 %v3614, %v3606
    %v5295 = vpack.c.b16 %v3615, %v3607
    %v5296 = vpack.c.b16 %v3616, %v3608
    %v5297 = vpack.c.b16 %v3617, %v3609
    %v5298 = vpack.c.b16 %v3618, %v3610
    %v5299 = vpack.c.b16 %v3619, %v3611
    %v5300 = vpack.c.b16 %v3620, %v3612
    %v5301 = vpack.c.b16 %v3621, %v3613
    %v5302 = vpack.c.b16 %v3630, %v3622
    %v5303 = vpack.c.b16 %v3631, %v3623
    %v5304 = vpack.c.b16 %v3632, %v3624
    %v5305 = vpack.c.b16 %v3633, %v3625
    %v5306 = vpack.c.b16 %v3634, %v3626
    %v5307 = vpack.c.b16 %v3635, %v3627
    %v5308 = vpack.c.b16 %v3636, %v3628
    %v5309 = vpack.c.b16 %v3637, %v3629
    %v5310 = vpack.c.b16 %v3646, %v3638
    %v5311 = vpack.c.b16 %v3647, %v3639
    %v5312 = vpack.c.b16 %v3648, %v3640
    %v5313 = vpack.c.b16 %v3649, %v3641
    %v5314 = vpack.c.b16 %v3650, %v3642
    %v5315 = vpack.c.b16 %v3651, %v3643
    %v5316 = vpack.c.b16 %v3652, %v3644
    %v5317 = vpack.c.b16 %v3653, %v3645
    %v5318 = vpack.c.b16 %v3662, %v3654
    %v5319 = vpack.c.b16 %v3663, %v3655
    %v5320 = vpack.c.b16 %v3664, %v3656
    %v5321 = vpack.c.b16 %v3665, %v3657
    %v5322 = vpack.c.b16 %v3666, %v3658
    %v5323 = vpack.c.b16 %v3667, %v3659
    %v5324 = vpack.c.b16 %v3668, %v3660
    %v5325 = vpack.c.b16 %v3669, %v3661
    %v5326 = vpack.c.b16 %v3678, %v3670
    %v5327 = vpack.c.b16 %v3679, %v3671
    %v5328 = vpack.c.b16 %v3680, %v3672
    %v5329 = vpack.c.b16 %v3681, %v3673
    %v5330 = vpack.c.b16 %v3682, %v3674
    %v5331 = vpack.c.b16 %v3683, %v3675
    %v5332 = vpack.c.b16 %v3684, %v3676
    %v5333 = vpack.c.b16 %v3685, %v3677
    %v5334 = vpack.c.b16 %v3694, %v3686
    %v5335 = vpack.c.b16 %v3695, %v3687
    %v5336 = vpack.c.b16 %v3696, %v3688
    %v5337 = vpack.c.b16 %v3697, %v3689
    %v5338 = vpack.c.b16 %v3698, %v3690
    %v5339 = vpack.c.b16 %v3699, %v3691
    %v5340 = vpack.c.b16 %v3700, %v3692
    %v5341 = vpack.c.b16 %v3701, %v3693
    %v5342 = vpack.c.b16 %v3710, %v3702
    %v5343 = vpack.c.b16 %v3711, %v3703
    %v5344 = vpack.c.b16 %v3712, %v3704
    %v5345 = vpack.c.b16 %v3713, %v3705
    %v5346 = vpack.c.b16 %v3714, %v3706
    %v5347 = vpack.c.b16 %v3715, %v3707
    %v5348 = vpack.c.b16 %v3716, %v3708
    %v5349 = vpack.c.b16 %v3717, %v3709
    %v5350 = vpack.c.b16 %v3726, %v3718
    %v5351 = vpack.c.b16 %v3727, %v3719
    %v5352 = vpack.c.b16 %v3728, %v3720
    %v5353 = vpack.c.b16 %v3729, %v3721
    %v5354 = vpack.c.b16 %v3730, %v3722
    %v5355 = vpack.c.b16 %v3731, %v3723
    %v5356 = vpack.c.b16 %v3732, %v3724
    %v5357 = vpack.c.b16 %v3733, %v3725
    %v5358 = vpack.c.b16 %v3742, %v3734
    %v5359 = vpack.c.b16 %v3743, %v3735
    %v5360 = vpack.c.b16 %v3744, %v3736
    %v5361 = vpack.c.b16 %v3745, %v3737
    %v5362 = vpack.c.b16 %v3746, %v3738
    %v5363 = vpack.c.b16 %v3747, %v3739
    %v5364 = vpack.c.b16 %v3748, %v3740
    %v5365 = vpack.c.b16 %v3749, %v3741
    %v5366 = vpack.c.b16 %v3758, %v3750
    %v5367 = vpack.c.b16 %v3759, %v3751
    %v5368 = vpack.c.b16 %v3760, %v3752
    %v5369 = vpack.c.b16 %v3761, %v3753
    %v5370 = vpack.c.b16 %v3762, %v3754
    %v5371 = vpack.c.b16 %v3763, %v3755
    %v5372 = vpack.c.b16 %v3764, %v3756
    %v5373 = vpack.c.b16 %v3765, %v3757
    %v5374 = vpack.c.b16 %v3774, %v3766
    %v5375 = vpack.c.b16 %v3775, %v3767
    %v5376 = vpack.c.b16 %v3776, %v3768
    %v5377 = vpack.c.b16 %v3777, %v3769
    %v5378 = vpack.c.b16 %v3778, %v3770
    %v5379 = vpack.c.b16 %v3779, %v3771
    %v5380 = vpack.c.b16 %v3780, %v3772
    %v5381 = vpack.c.b16 %v3781, %v3773
    %v5382 = vpack.c.b16 %v3790, %v3782
    %v5383 = vpack.c.b16 %v3791, %v3783
    %v5384 = vpack.c.b16 %v3792, %v3784
    %v5385 = vpack.c.b16 %v3793, %v3785
    %v5386 = vpack.c.b16 %v3794, %v3786
    %v5387 = vpack.c.b16 %v3795, %v3787
    %v5388 = vpack.c.b16 %v3796, %v3788
    %v5389 = vpack.c.b16 %v3797, %v3789
    %v5390 = vpack.c.b16 %v3806, %v3798
    %v5391 = vpack.c.b16 %v3807, %v3799
    %v5392 = vpack.c.b16 %v3808, %v3800
    %v5393 = vpack.c.b16 %v3809, %v3801
    %v5394 = vpack.c.b16 %v3810, %v3802
    %v5395 = vpack.c.b16 %v3811, %v3803
    %v5396 = vpack.c.b16 %v3812, %v3804
    %v5397 = vpack.c.b16 %v3813, %v3805
    %v5398 = vpack.c.b16 %v3822, %v3814
    %v5399 = vpack.c.b16 %v3823, %v3815
    %v5400 = vpack.c.b16 %v3824, %v3816
    %v5401 = vpack.c.b16 %v3825, %v3817
    %v5402 = vpack.c.b16 %v3826, %v3818
    %v5403 = vpack.c.b16 %v3827, %v3819
    %v5404 = vpack.c.b16 %v3828, %v3820
    %v5405 = vpack.c.b16 %v3829, %v3821
    %v5406 = vpack.c.b16 %v3838, %v3830
    %v5407 = vpack.c.b16 %v3839, %v3831
    %v5408 = vpack.c.b16 %v3840, %v3832
    %v5409 = vpack.c.b16 %v3841, %v3833
    %v5410 = vpack.c.b16 %v3842, %v3834
    %v5411 = vpack.c.b16 %v3843, %v3835
    %v5412 = vpack.c.b16 %v3844, %v3836
    %v5413 = vpack.c.b16 %v3845, %v3837
    %v5414 = vpack.c.b16 %v3854, %v3846
    %v5415 = vpack.c.b16 %v3855, %v3847
    %v5416 = vpack.c.b16 %v3856, %v3848
    %v5417 = vpack.c.b16 %v3857, %v3849
    %v5418 = vpack.c.b16 %v3858, %v3850
    %v5419 = vpack.c.b16 %v3859, %v3851
    %v5420 = vpack.c.b16 %v3860, %v3852
    %v5421 = vpack.c.b16 %v3861, %v3853
    %v5422 = vpack.c.b16 %v3870, %v3862
    %v5423 = vpack.c.b16 %v3871, %v3863
    %v5424 = vpack.c.b16 %v3872, %v3864
    %v5425 = vpack.c.b16 %v3873, %v3865
    %v5426 = vpack.c.b16 %v3874, %v3866
    %v5427 = vpack.c.b16 %v3875, %v3867
    %v5428 = vpack.c.b16 %v3876, %v3868
    %v5429 = vpack.c.b16 %v3877, %v3869
    %v5430 = vpack.c.b16 %v3886, %v3878
    %v5431 = vpack.c.b16 %v3887, %v3879
    %v5432 = vpack.c.b16 %v3888, %v3880
    %v5433 = vpack.c.b16 %v3889, %v3881
    %v5434 = vpack.c.b16 %v3890, %v3882
    %v5435 = vpack.c.b16 %v3891, %v3883
    %v5436 = vpack.c.b16 %v3892, %v3884
    %v5437 = vpack.c.b16 %v3893, %v3885
    %v5438 = vpack.c.b16 %v3902, %v3894
    %v5439 = vpack.c.b16 %v3903, %v3895
    %v5440 = vpack.c.b16 %v3904, %v3896
    %v5441 = vpack.c.b16 %v3905, %v3897
    %v5442 = vpack.c.b16 %v3906, %v3898
    %v5443 = vpack.c.b16 %v3907, %v3899
    %v5444 = vpack.c.b16 %v3908, %v3900
    %v5445 = vpack.c.b16 %v3909, %v3901
    %v5446 = vpack.c.b16 %v3918, %v3910
    %v5447 = vpack.c.b16 %v3919, %v3911
    %v5448 = vpack.c.b16 %v3920, %v3912
    %v5449 = vpack.c.b16 %v3921, %v3913
    %v5450 = vpack.c.b16 %v3922, %v3914
    %v5451 = vpack.c.b16 %v3923, %v3915
    %v5452 = vpack.c.b16 %v3924, %v3916
    %v5453 = vpack.c.b16 %v3925, %v3917
    %v5454 = vpack.c.b16 %v3934, %v3926
    %v5455 = vpack.c.b16 %v3935, %v3927
    %v5456 = vpack.c.b16 %v3936, %v3928
    %v5457 = vpack.c.b16 %v3937, %v3929
    %v5458 = vpack.c.b16 %v3938, %v3930
    %v5459 = vpack.c.b16 %v3939, %v3931
    %v5460 = vpack.c.b16 %v3940, %v3932
    %v5461 = vpack.c.b16 %v3941, %v3933
    %v5462 = vpack.c.b16 %v3950, %v3942
    %v5463 = vpack.c.b16 %v3951, %v3943
    %v5464 = vpack.c.b16 %v3952, %v3944
    %v5465 = vpack.c.b16 %v3953, %v3945
    %v5466 = vpack.c.b16 %v3954, %v3946
    %v5467 = vpack.c.b16 %v3955, %v3947
    %v5468 = vpack.c.b16 %v3956, %v3948
    %v5469 = vpack.c.b16 %v3957, %v3949
    %v5470 = vpack.c.b16 %v3966, %v3958
    %v5471 = vpack.c.b16 %v3967, %v3959
    %v5472 = vpack.c.b16 %v3968, %v3960
    %v5473 = vpack.c.b16 %v3969, %v3961
    %v5474 = vpack.c.b16 %v3970, %v3962
    %v5475 = vpack.c.b16 %v3971, %v3963
    %v5476 = vpack.c.b16 %v3972, %v3964
    %v5477 = vpack.c.b16 %v3973, %v3965
    %v5478 = vpack.c.b16 %v3982, %v3974
    %v5479 = vpack.c.b16 %v3983, %v3975
    %v5480 = vpack.c.b16 %v3984, %v3976
    %v5481 = vpack.c.b16 %v3985, %v3977
    %v5482 = vpack.c.b16 %v3986, %v3978
    %v5483 = vpack.c.b16 %v3987, %v3979
    %v5484 = vpack.c.b16 %v3988, %v3980
    %v5485 = vpack.c.b16 %v3989, %v3981
    %v5486 = vpack.c.b16 %v3998, %v3990
    %v5487 = vpack.c.b16 %v3999, %v3991
    %v5488 = vpack.c.b16 %v4000, %v3992
    %v5489 = vpack.c.b16 %v4001, %v3993
    %v5490 = vpack.c.b16 %v4002, %v3994
    %v5491 = vpack.c.b16 %v4003, %v3995
    %v5492 = vpack.c.b16 %v4004, %v3996
    %v5493 = vpack.c.b16 %v4005, %v3997
    %v5494 = vpack.c.b16 %v4014, %v4006
    %v5495 = vpack.c.b16 %v4015, %v4007
    %v5496 = vpack.c.b16 %v4016, %v4008
    %v5497 = vpack.c.b16 %v4017, %v4009
    %v5498 = vpack.c.b16 %v4018, %v4010
    %v5499 = vpack.c.b16 %v4019, %v4011
    %v5500 = vpack.c.b16 %v4020, %v4012
    %v5501 = vpack.c.b16 %v4021, %v4013
    %v5502 = vpack.c.b16 %v4030, %v4022
    %v5503 = vpack.c.b16 %v4031, %v4023
    %v5504 = vpack.c.b16 %v4032, %v4024
    %v5505 = vpack.c.b16 %v4033, %v4025
    %v5506 = vpack.c.b16 %v4034, %v4026
    %v5507 = vpack.c.b16 %v4035, %v4027
    %v5508 = vpack.c.b16 %v4036, %v4028
    %v5509 = vpack.c.b16 %v4037, %v4029
    %v5510 = vpack.c.b16 %v4046, %v4038
    %v5511 = vpack.c.b16 %v4047, %v4039
    %v5512 = vpack.c.b16 %v4048, %v4040
    %v5513 = vpack.c.b16 %v4049, %v4041
    %v5514 = vpack.c.b16 %v4050, %v4042
    %v5515 = vpack.c.b16 %v4051, %v4043
    %v5516 = vpack.c.b16 %v4052, %v4044
    %v5517 = vpack.c.b16 %v4053, %v4045
    %v5518 = vpack.c.b16 %v4062, %v4054
    %v5519 = vpack.c.b16 %v4063, %v4055
    %v5520 = vpack.c.b16 %v4064, %v4056
    %v5521 = vpack.c.b16 %v4065, %v4057
    %v5522 = vpack.c.b16 %v4066, %v4058
    %v5523 = vpack.c.b16 %v4067, %v4059
    %v5524 = vpack.c.b16 %v4068, %v4060
    %v5525 = vpack.c.b16 %v4069, %v4061
    %v5526 = vpack.c.b16 %v4078, %v4070
    %v5527 = vpack.c.b16 %v4079, %v4071
    %v5528 = vpack.c.b16 %v4080, %v4072
    %v5529 = vpack.c.b16 %v4081, %v4073
    %v5530 = vpack.c.b16 %v4082, %v4074
    %v5531 = vpack.c.b16 %v4083, %v4075
    %v5532 = vpack.c.b16 %v4084, %v4076
    %v5533 = vpack.c.b16 %v4085, %v4077
    %v5534 = vpack.c.b16 %v4094, %v4086
    %v5535 = vpack.c.b16 %v4095, %v4087
    %v5536 = vpack.c.b16 %v4096, %v4088
    %v5537 = vpack.c.b16 %v4097, %v4089
    %v5538 = vpack.c.b16 %v4098, %v4090
    %v5539 = vpack.c.b16 %v4099, %v4091
    %v5540 = vpack.c.b16 %v4100, %v4092
    %v5541 = vpack.c.b16 %v4101, %v4093
    %v5542 = vpack.c.b16 %v4110, %v4102
    %v5543 = vpack.c.b16 %v4111, %v4103
    %v5544 = vpack.c.b16 %v4112, %v4104
    %v5545 = vpack.c.b16 %v4113, %v4105
    %v5546 = vpack.c.b16 %v4114, %v4106
    %v5547 = vpack.c.b16 %v4115, %v4107
    %v5548 = vpack.c.b16 %v4116, %v4108
    %v5549 = vpack.c.b16 %v4117, %v4109
    %v5550 = vpack.c.b16 %v4126, %v4118
    %v5551 = vpack.c.b16 %v4127, %v4119
    %v5552 = vpack.c.b16 %v4128, %v4120
    %v5553 = vpack.c.b16 %v4129, %v4121
    %v5554 = vpack.c.b16 %v4130, %v4122
    %v5555 = vpack.c.b16 %v4131, %v4123
    %v5556 = vpack.c.b16 %v4132, %v4124
    %v5557 = vpack.c.b16 %v4133, %v4125
    %v5558 = vpack.c.b16 %v4142, %v4134
    %v5559 = vpack.c.b16 %v4143, %v4135
    %v5560 = vpack.c.b16 %v4144, %v4136
    %v5561 = vpack.c.b16 %v4145, %v4137
    %v5562 = vpack.c.b16 %v4146, %v4138
    %v5563 = vpack.c.b16 %v4147, %v4139
    %v5564 = vpack.c.b16 %v4148, %v4140
    %v5565 = vpack.c.b16 %v4149, %v4141
    %v5566 = vpack.c.b16 %v4158, %v4150
    %v5567 = vpack.c.b16 %v4159, %v4151
    %v5568 = vpack.c.b16 %v4160, %v4152
    %v5569 = vpack.c.b16 %v4161, %v4153
    %v5570 = vpack.c.b16 %v4162, %v4154
    %v5571 = vpack.c.b16 %v4163, %v4155
    %v5572 = vpack.c.b16 %v4164, %v4156
    %v5573 = vpack.c.b16 %v4165, %v4157
    %v5574 = vpack.c.b16 %v4174, %v4166
    %v5575 = vpack.c.b16 %v4175, %v4167
    %v5576 = vpack.c.b16 %v4176, %v4168
    %v5577 = vpack.c.b16 %v4177, %v4169
    %v5578 = vpack.c.b16 %v4178, %v4170
    %v5579 = vpack.c.b16 %v4179, %v4171
    %v5580 = vpack.c.b16 %v4180, %v4172
    %v5581 = vpack.c.b16 %v4181, %v4173
    %v5582 = vpack.c.b16 %v4190, %v4182
    %v5583 = vpack.c.b16 %v4191, %v4183
    %v5584 = vpack.c.b16 %v4192, %v4184
    %v5585 = vpack.c.b16 %v4193, %v4185
    %v5586 = vpack.c.b16 %v4194, %v4186
    %v5587 = vpack.c.b16 %v4195, %v4187
    %v5588 = vpack.c.b16 %v4196, %v4188
    %v5589 = vpack.c.b16 %v4197, %v4189
    %v5590 = vpack.c.b16 %v4206, %v4198
    %v5591 = vpack.c.b16 %v4207, %v4199
    %v5592 = vpack.c.b16 %v4208, %v4200
    %v5593 = vpack.c.b16 %v4209, %v4201
    %v5594 = vpack.c.b16 %v4210, %v4202
    %v5595 = vpack.c.b16 %v4211, %v4203
    %v5596 = vpack.c.b16 %v4212, %v4204
    %v5597 = vpack.c.b16 %v4213, %v4205
    %v5598 = vpack.c.b16 %v4222, %v4214
    %v5599 = vpack.c.b16 %v4223, %v4215
    %v5600 = vpack.c.b16 %v4224, %v4216
    %v5601 = vpack.c.b16 %v4225, %v4217
    %v5602 = vpack.c.b16 %v4226, %v4218
    %v5603 = vpack.c.b16 %v4227, %v4219
    %v5604 = vpack.c.b16 %v4228, %v4220
    %v5605 = vpack.c.b16 %v4229, %v4221
    %v5606 = vpack.c.b16 %v4238, %v4230
    %v5607 = vpack.c.b16 %v4239, %v4231
    %v5608 = vpack.c.b16 %v4240, %v4232
    %v5609 = vpack.c.b16 %v4241, %v4233
    %v5610 = vpack.c.b16 %v4242, %v4234
    %v5611 = vpack.c.b16 %v4243, %v4235
    %v5612 = vpack.c.b16 %v4244, %v4236
    %v5613 = vpack.c.b16 %v4245, %v4237
    %v5614 = vpack.c.b16 %v4254, %v4246
    %v5615 = vpack.c.b16 %v4255, %v4247
    %v5616 = vpack.c.b16 %v4256, %v4248
    %v5617 = vpack.c.b16 %v4257, %v4249
    %v5618 = vpack.c.b16 %v4258, %v4250
    %v5619 = vpack.c.b16 %v4259, %v4251
    %v5620 = vpack.c.b16 %v4260, %v4252
    %v5621 = vpack.c.b16 %v4261, %v4253
    %v5622 = vpack.c.b16 %v4270, %v4262
    %v5623 = vpack.c.b16 %v4271, %v4263
    %v5624 = vpack.c.b16 %v4272, %v4264
    %v5625 = vpack.c.b16 %v4273, %v4265
    %v5626 = vpack.c.b16 %v4274, %v4266
    %v5627 = vpack.c.b16 %v4275, %v4267
    %v5628 = vpack.c.b16 %v4276, %v4268
    %v5629 = vpack.c.b16 %v4277, %v4269
    %v5630 = vpack.c.b16 %v4286, %v4278
    %v5631 = vpack.c.b16 %v4287, %v4279
    %v5632 = vpack.c.b16 %v4288, %v4280
    %v5633 = vpack.c.b16 %v4289, %v4281
    %v5634 = vpack.c.b16 %v4290, %v4282
    %v5635 = vpack.c.b16 %v4291, %v4283
    %v5636 = vpack.c.b16 %v4292, %v4284
    %v5637 = vpack.c.b16 %v4293, %v4285
    %v5638 = vpack.c.b16 %v4302, %v4294
    %v5639 = vpack.c.b16 %v4303, %v4295
    %v5640 = vpack.c.b16 %v4304, %v4296
    %v5641 = vpack.c.b16 %v4305, %v4297
    %v5642 = vpack.c.b16 %v4306, %v4298
    %v5643 = vpack.c.b16 %v4307, %v4299
    %v5644 = vpack.c.b16 %v4308, %v4300
    %v5645 = vpack.c.b16 %v4309, %v4301
    %v5646 = vpack.c.b16 %v4318, %v4310
    %v5647 = vpack.c.b16 %v4319, %v4311
    %v5648 = vpack.c.b16 %v4320, %v4312
    %v5649 = vpack.c.b16 %v4321, %v4313
    %v5650 = vpack.c.b16 %v4322, %v4314
    %v5651 = vpack.c.b16 %v4323, %v4315
    %v5652 = vpack.c.b16 %v4324, %v4316
    %v5653 = vpack.c.b16 %v4325, %v4317
    %v5654 = vpack.c.b16 %v4334, %v4326
    %v5655 = vpack.c.b16 %v4335, %v4327
    %v5656 = vpack.c.b16 %v4336, %v4328
    %v5657 = vpack.c.b16 %v4337, %v4329
    %v5658 = vpack.c.b16 %v4338, %v4330
    %v5659 = vpack.c.b16 %v4339, %v4331
    %v5660 = vpack.c.b16 %v4340, %v4332
    %v5661 = vpack.c.b16 %v4341, %v4333
    %v5662 = vpack.c.b16 %v4350, %v4342
    %v5663 = vpack.c.b16 %v4351, %v4343
    %v5664 = vpack.c.b16 %v4352, %v4344
    %v5665 = vpack.c.b16 %v4353, %v4345
    %v5666 = vpack.c.b16 %v4354, %v4346
    %v5667 = vpack.c.b16 %v4355, %v4347
    %v5668 = vpack.c.b16 %v4356, %v4348
    %v5669 = vpack.c.b16 %v4357, %v4349
    %v5670 = vpack.c.b16 %v4366, %v4358
    %v5671 = vpack.c.b16 %v4367, %v4359
    %v5672 = vpack.c.b16 %v4368, %v4360
    %v5673 = vpack.c.b16 %v4369, %v4361
    %v5674 = vpack.c.b16 %v4370, %v4362
    %v5675 = vpack.c.b16 %v4371, %v4363
    %v5676 = vpack.c.b16 %v4372, %v4364
    %v5677 = vpack.c.b16 %v4373, %v4365
    %v5678 = vpack.c.b16 %v4382, %v4374
    %v5679 = vpack.c.b16 %v4383, %v4375
    %v5680 = vpack.c.b16 %v4384, %v4376
    %v5681 = vpack.c.b16 %v4385, %v4377
    %v5682 = vpack.c.b16 %v4386, %v4378
    %v5683 = vpack.c.b16 %v4387, %v4379
    %v5684 = vpack.c.b16 %v4388, %v4380
    %v5685 = vpack.c.b16 %v4389, %v4381
    %v5686 = vpack.c.b16 %v4398, %v4390
    %v5687 = vpack.c.b16 %v4399, %v4391
    %v5688 = vpack.c.b16 %v4400, %v4392
    %v5689 = vpack.c.b16 %v4401, %v4393
    %v5690 = vpack.c.b16 %v4402, %v4394
    %v5691 = vpack.c.b16 %v4403, %v4395
    %v5692 = vpack.c.b16 %v4404, %v4396
    %v5693 = vpack.c.b16 %v4405, %v4397
    %v5694 = vpack.c.b16 %v4414, %v4406
    %v5695 = vpack.c.b16 %v4415, %v4407
    %v5696 = vpack.c.b16 %v4416, %v4408
    %v5697 = vpack.c.b16 %v4417, %v4409
    %v5698 = vpack.c.b16 %v4418, %v4410
    %v5699 = vpack.c.b16 %v4419, %v4411
    %v5700 = vpack.c.b16 %v4420, %v4412
    %v5701 = vpack.c.b16 %v4421, %v4413
    %v5702 = vpack.c.b16 %v4430, %v4422
    %v5703 = vpack.c.b16 %v4431, %v4423
    %v5704 = vpack.c.b16 %v4432, %v4424
    %v5705 = vpack.c.b16 %v4433, %v4425
    %v5706 = vpack.c.b16 %v4434, %v4426
    %v5707 = vpack.c.b16 %v4435, %v4427
    %v5708 = vpack.c.b16 %v4436, %v4428
    %v5709 = vpack.c.b16 %v4437, %v4429
    %v5710 = vpack.c.b16 %v4446, %v4438
    %v5711 = vpack.c.b16 %v4447, %v4439
    %v5712 = vpack.c.b16 %v4448, %v4440
    %v5713 = vpack.c.b16 %v4449, %v4441
    %v5714 = vpack.c.b16 %v4450, %v4442
    %v5715 = vpack.c.b16 %v4451, %v4443
    %v5716 = vpack.c.b16 %v4452, %v4444
    %v5717 = vpack.c.b16 %v4453, %v4445
    %v5718 = vpack.c.b16 %v4462, %v4454
    %v5719 = vpack.c.b16 %v4463, %v4455
    %v5720 = vpack.c.b16 %v4464, %v4456
    %v5721 = vpack.c.b16 %v4465, %v4457
    %v5722 = vpack.c.b16 %v4466, %v4458
    %v5723 = vpack.c.b16 %v4467, %v4459
    %v5724 = vpack.c.b16 %v4468, %v4460
    %v5725 = vpack.c.b16 %v4469, %v4461
    %v5726 = vpack.c.b16 %v4478, %v4470
    %v5727 = vpack.c.b16 %v4479, %v4471
    %v5728 = vpack.c.b16 %v4480, %v4472
    %v5729 = vpack.c.b16 %v4481, %v4473
    %v5730 = vpack.c.b16 %v4482, %v4474
    %v5731 = vpack.c.b16 %v4483, %v4475
    %v5732 = vpack.c.b16 %v4484, %v4476
    %v5733 = vpack.c.b16 %v4485, %v4477
    %v5734 = vpack.c.b16 %v4494, %v4486
    %v5735 = vpack.c.b16 %v4495, %v4487
    %v5736 = vpack.c.b16 %v4496, %v4488
    %v5737 = vpack.c.b16 %v4497, %v4489
    %v5738 = vpack.c.b16 %v4498, %v4490
    %v5739 = vpack.c.b16 %v4499, %v4491
    %v5740 = vpack.c.b16 %v4500, %v4492
    %v5741 = vpack.c.b16 %v4501, %v4493
    %v5742 = vpack.c.b16 %v4510, %v4502
    %v5743 = vpack.c.b16 %v4511, %v4503
    %v5744 = vpack.c.b16 %v4512, %v4504
    %v5745 = vpack.c.b16 %v4513, %v4505
    %v5746 = vpack.c.b16 %v4514, %v4506
    %v5747 = vpack.c.b16 %v4515, %v4507
    %v5748 = vpack.c.b16 %v4516, %v4508
    %v5749 = vpack.c.b16 %v4517, %v4509
    %v5750 = vpack.c.b16 %v4526, %v4518
    %v5751 = vpack.c.b16 %v4527, %v4519
    %v5752 = vpack.c.b16 %v4528, %v4520
    %v5753 = vpack.c.b16 %v4529, %v4521
    %v5754 = vpack.c.b16 %v4530, %v4522
    %v5755 = vpack.c.b16 %v4531, %v4523
    %v5756 = vpack.c.b16 %v4532, %v4524
    %v5757 = vpack.c.b16 %v4533, %v4525
    %v5758 = vpack.c.b16 %v4542, %v4534
    %v5759 = vpack.c.b16 %v4543, %v4535
    %v5760 = vpack.c.b16 %v4544, %v4536
    %v5761 = vpack.c.b16 %v4545, %v4537
    %v5762 = vpack.c.b16 %v4546, %v4538
    %v5763 = vpack.c.b16 %v4547, %v4539
    %v5764 = vpack.c.b16 %v4548, %v4540
    %v5765 = vpack.c.b16 %v4549, %v4541
    %v5766 = vpack.c.b16 %v4558, %v4550
    %v5767 = vpack.c.b16 %v4559, %v4551
    %v5768 = vpack.c.b16 %v4560, %v4552
    %v5769 = vpack.c.b16 %v4561, %v4553
    %v5770 = vpack.c.b16 %v4562, %v4554
    %v5771 = vpack.c.b16 %v4563, %v4555
    %v5772 = vpack.c.b16 %v4564, %v4556
    %v5773 = vpack.c.b16 %v4565, %v4557
    %v5774 = vpack.c.b16 %v4574, %v4566
    %v5775 = vpack.c.b16 %v4575, %v4567
    %v5776 = vpack.c.b16 %v4576, %v4568
    %v5777 = vpack.c.b16 %v4577, %v4569
    %v5778 = vpack.c.b16 %v4578, %v4570
    %v5779 = vpack.c.b16 %v4579, %v4571
    %v5780 = vpack.c.b16 %v4580, %v4572
    %v5781 = vpack.c.b16 %v4581, %v4573
    %v5782 = vpack.c.b16 %v4590, %v4582
    %v5783 = vpack.c.b16 %v4591, %v4583
    %v5784 = vpack.c.b16 %v4592, %v4584
    %v5785 = vpack.c.b16 %v4593, %v4585
    %v5786 = vpack.c.b16 %v4594, %v4586
    %v5787 = vpack.c.b16 %v4595, %v4587
    %v5788 = vpack.c.b16 %v4596, %v4588
    %v5789 = vpack.c.b16 %v4597, %v4589
    %v5790 = vpack.c.b16 %v4606, %v4598
    %v5791 = vpack.c.b16 %v4607, %v4599
    %v5792 = vpack.c.b16 %v4608, %v4600
    %v5793 = vpack.c.b16 %v4609, %v4601
    %v5794 = vpack.c.b16 %v4610, %v4602
    %v5795 = vpack.c.b16 %v4611, %v4603
    %v5796 = vpack.c.b16 %v4612, %v4604
    %v5797 = vpack.c.b16 %v4613, %v4605
    %v5798 = vpack.c.b16 %v4622, %v4614
    %v5799 = vpack.c.b16 %v4623, %v4615
    %v5800 = vpack.c.b16 %v4624, %v4616
    %v5801 = vpack.c.b16 %v4625, %v4617
    %v5802 = vpack.c.b16 %v4626, %v4618
    %v5803 = vpack.c.b16 %v4627, %v4619
    %v5804 = vpack.c.b16 %v4628, %v4620
    %v5805 = vpack.c.b16 %v4629, %v4621
    %v5806 = vpack.c.b16 %v4638, %v4630
    %v5807 = vpack.c.b16 %v4639, %v4631
    %v5808 = vpack.c.b16 %v4640, %v4632
    %v5809 = vpack.c.b16 %v4641, %v4633
    %v5810 = vpack.c.b16 %v4642, %v4634
    %v5811 = vpack.c.b16 %v4643, %v4635
    %v5812 = vpack.c.b16 %v4644, %v4636
    %v5813 = vpack.c.b16 %v4645, %v4637
    %v5814 = vpack.c.b16 %v4654, %v4646
    %v5815 = vpack.c.b16 %v4655, %v4647
    %v5816 = vpack.c.b16 %v4656, %v4648
    %v5817 = vpack.c.b16 %v4657, %v4649
    %v5818 = vpack.c.b16 %v4658, %v4650
    %v5819 = vpack.c.b16 %v4659, %v4651
    %v5820 = vpack.c.b16 %v4660, %v4652
    %v5821 = vpack.c.b16 %v4661, %v4653
    %v5822 = vpack.c.b16 %v4670, %v4662
    %v5823 = vpack.c.b16 %v4671, %v4663
    %v5824 = vpack.c.b16 %v4672, %v4664
    %v5825 = vpack.c.b16 %v4673, %v4665
    %v5826 = vpack.c.b16 %v4674, %v4666
    %v5827 = vpack.c.b16 %v4675, %v4667
    %v5828 = vpack.c.b16 %v4676, %v4668
    %v5829 = vpack.c.b16 %v4677, %v4669
    %v5830 = vpack.c.b16 %v4686, %v4678
    %v5831 = vpack.c.b16 %v4687, %v4679
    %v5832 = vpack.c.b16 %v4688, %v4680
    %v5833 = vpack.c.b16 %v4689, %v4681
    %v5834 = vpack.c.b16 %v4690, %v4682
    %v5835 = vpack.c.b16 %v4691, %v4683
    %v5836 = vpack.c.b16 %v4692, %v4684
    %v5837 = vpack.c.b16 %v4693, %v4685
    %v5838 = vpack.c.b16 %v4702, %v4694
    %v5839 = vpack.c.b16 %v4703, %v4695
    %v5840 = vpack.c.b16 %v4704, %v4696
    %v5841 = vpack.c.b16 %v4705, %v4697
    %v5842 = vpack.c.b16 %v4706, %v4698
    %v5843 = vpack.c.b16 %v4707, %v4699
    %v5844 = vpack.c.b16 %v4708, %v4700
    %v5845 = vpack.c.b16 %v4709, %v4701
    %v5846 = vpack.c.b16 %v4718, %v4710
    %v5847 = vpack.c.b16 %v4719, %v4711
    %v5848 = vpack.c.b16 %v4720, %v4712
    %v5849 = vpack.c.b16 %v4721, %v4713
    %v5850 = vpack.c.b16 %v4722, %v4714
    %v5851 = vpack.c.b16 %v4723, %v4715
    %v5852 = vpack.c.b16 %v4724, %v4716
    %v5853 = vpack.c.b16 %v4725, %v4717
    %v5854 = vpack.c.b16 %v4734, %v4726
    %v5855 = vpack.c.b16 %v4735, %v4727
    %v5856 = vpack.c.b16 %v4736, %v4728
    %v5857 = vpack.c.b16 %v4737, %v4729
    %v5858 = vpack.c.b16 %v4738, %v4730
    %v5859 = vpack.c.b16 %v4739, %v4731
    %v5860 = vpack.c.b16 %v4740, %v4732
    %v5861 = vpack.c.b16 %v4741, %v4733
    %v5862 = vpack.c.b16 %v4750, %v4742
    %v5863 = vpack.c.b16 %v4751, %v4743
    %v5864 = vpack.c.b16 %v4752, %v4744
    %v5865 = vpack.c.b16 %v4753, %v4745
    %v5866 = vpack.c.b16 %v4754, %v4746
    %v5867 = vpack.c.b16 %v4755, %v4747
    %v5868 = vpack.c.b16 %v4756, %v4748
    %v5869 = vpack.c.b16 %v4757, %v4749
    %v5870 = vpack.c.b16 %v4766, %v4758
    %v5871 = vpack.c.b16 %v4767, %v4759
    %v5872 = vpack.c.b16 %v4768, %v4760
    %v5873 = vpack.c.b16 %v4769, %v4761
    %v5874 = vpack.c.b16 %v4770, %v4762
    %v5875 = vpack.c.b16 %v4771, %v4763
    %v5876 = vpack.c.b16 %v4772, %v4764
    %v5877 = vpack.c.b16 %v4773, %v4765
    %v5878 = vpack.c.b16 %v4782, %v4774
    %v5879 = vpack.c.b16 %v4783, %v4775
    %v5880 = vpack.c.b16 %v4784, %v4776
    %v5881 = vpack.c.b16 %v4785, %v4777
    %v5882 = vpack.c.b16 %v4786, %v4778
    %v5883 = vpack.c.b16 %v4787, %v4779
    %v5884 = vpack.c.b16 %v4788, %v4780
    %v5885 = vpack.c.b16 %v4789, %v4781
    %v5886 = vpack.c.b16 %v4798, %v4790
    %v5887 = vpack.c.b16 %v4799, %v4791
    %v5888 = vpack.c.b16 %v4800, %v4792
    %v5889 = vpack.c.b16 %v4801, %v4793
    %v5890 = vpack.c.b16 %v4802, %v4794
    %v5891 = vpack.c.b16 %v4803, %v4795
    %v5892 = vpack.c.b16 %v4804, %v4796
    %v5893 = vpack.c.b16 %v4805, %v4797
    %v5894 = vpack.c.b16 %v4814, %v4806
    %v5895 = vpack.c.b16 %v4815, %v4807
    %v5896 = vpack.c.b16 %v4816, %v4808
    %v5897 = vpack.c.b16 %v4817, %v4809
    %v5898 = vpack.c.b16 %v4818, %v4810
    %v5899 = vpack.c.b16 %v4819, %v4811
    %v5900 = vpack.c.b16 %v4820, %v4812
    %v5901 = vpack.c.b16 %v4821, %v4813
    %v5902 = vpack.c.b16 %v4830, %v4822
    %v5903 = vpack.c.b16 %v4831, %v4823
    %v5904 = vpack.c.b16 %v4832, %v4824
    %v5905 = vpack.c.b16 %v4833, %v4825
    %v5906 = vpack.c.b16 %v4834, %v4826
    %v5907 = vpack.c.b16 %v4835, %v4827
    %v5908 = vpack.c.b16 %v4836, %v4828
    %v5909 = vpack.c.b16 %v4837, %v4829
    %v5910 = vpack.c.b16 %v4846, %v4838
    %v5911 = vpack.c.b16 %v4847, %v4839
    %v5912 = vpack.c.b16 %v4848, %v4840
    %v5913 = vpack.c.b16 %v4849, %v4841
    %v5914 = vpack.c.b16 %v4850, %v4842
    %v5915 = vpack.c.b16 %v4851, %v4843
    %v5916 = vpack.c.b16 %v4852, %v4844
    %v5917 = vpack.c.b16 %v4853, %v4845
    %v5918 = vpack.c.b16 %v4862, %v4854
    %v5919 = vpack.c.b16 %v4863, %v4855
    %v5920 = vpack.c.b16 %v4864, %v4856
    %v5921 = vpack.c.b16 %v4865, %v4857
    %v5922 = vpack.c.b16 %v4866, %v4858
    %v5923 = vpack.c.b16 %v4867, %v4859
    %v5924 = vpack.c.b16 %v4868, %v4860
    %v5925 = vpack.c.b16 %v4869, %v4861
    %v5926 = vpack.c.b16 %v4878, %v4870
    %v5927 = vpack.c.b16 %v4879, %v4871
    %v5928 = vpack.c.b16 %v4880, %v4872
    %v5929 = vpack.c.b16 %v4881, %v4873
    %v5930 = vpack.c.b16 %v4882, %v4874
    %v5931 = vpack.c.b16 %v4883, %v4875
    %v5932 = vpack.c.b16 %v4884, %v4876
    %v5933 = vpack.c.b16 %v4885, %v4877
    %v5934 = vpack.c.b16 %v4894, %v4886
    %v5935 = vpack.c.b16 %v4895, %v4887
    %v5936 = vpack.c.b16 %v4896, %v4888
    %v5937 = vpack.c.b16 %v4897, %v4889
    %v5938 = vpack.c.b16 %v4898, %v4890
    %v5939 = vpack.c.b16 %v4899, %v4891
    %v5940 = vpack.c.b16 %v4900, %v4892
    %v5941 = vpack.c.b16 %v4901, %v4893
    %v5942 = vpack.c.b16 %v4910, %v4902
    %v5943 = vpack.c.b16 %v4911, %v4903
    %v5944 = vpack.c.b16 %v4912, %v4904
    %v5945 = vpack.c.b16 %v4913, %v4905
    %v5946 = vpack.c.b16 %v4914, %v4906
    %v5947 = vpack.c.b16 %v4915, %v4907
    %v5948 = vpack.c.b16 %v4916, %v4908
    %v5949 = vpack.c.b16 %v4917, %v4909
    %v5950 = vpack.c.b16 %v4926, %v4918
    %v5951 = vpack.c.b16 %v4927, %v4919
    %v5952 = vpack.c.b16 %v4928, %v4920
    %v5953 = vpack.c.b16 %v4929, %v4921
    %v5954 = vpack.c.b16 %v4930, %v4922
    %v5955 = vpack.c.b16 %v4931, %v4923
    %v5956 = vpack.c.b16 %v4932, %v4924
    %v5957 = vpack.c.b16 %v4933, %v4925
    %6982 = vmatprep.subr.bf16.mxu0 %v4991
    %6983 = vmatpush1.bf16.msra.mxu0 %v4990
    %6984 = vmatprep.subr.bf16.mxu0 %v4983
    %6985 = vmatpush1.bf16.msra.mxu0 %v4982
    %6986 = vmatprep.subr.bf16.mxu0 %v4975
    %6987 = vmatpush1.bf16.msra.mxu0 %v4974
    %6988 = vmatprep.subr.bf16.mxu0 %v4967
    %6989 = vmatpush1.bf16.msra.mxu0 %v4966
    %6990 = vmatprep.subr.bf16.mxu0 %v4959
    %6991 = vmatpush1.bf16.msra.mxu0 %v4958
    %6992 = vmatprep.subr.bf16.mxu0 %v4951
    %6993 = vmatpush1.bf16.msra.mxu0 %v4950
    %6994 = vmatprep.subr.bf16.mxu0 %v4943
    %6995 = vmatpush1.bf16.msra.mxu0 %v4942
    %6996 = vmatprep.subr.bf16.mxu0 %v4935
    %6997 = vmatpush1.bf16.msra.mxu0 %v4934
    %6998 = vmatprep.subr.bf16.mxu0 %v5055
    %6999 = vmatpush2.bf16.msra.mxu0 %v5054
    %7000 = vmatprep.subr.bf16.mxu0 %v5047
    %7001 = vmatpush2.bf16.msra.mxu0 %v5046
    %7002 = vmatprep.subr.bf16.mxu0 %v5039
    %7003 = vmatpush2.bf16.msra.mxu0 %v5038
    %7004 = vmatprep.subr.bf16.mxu0 %v5031
    %7005 = vmatpush2.bf16.msra.mxu0 %v5030
    %7006 = vmatprep.subr.bf16.mxu0 %v5023
    %7007 = vmatpush2.bf16.msra.mxu0 %v5022
    %7008 = vmatprep.subr.bf16.mxu0 %v5015
    %7009 = vmatpush2.bf16.msra.mxu0 %v5014
    %7010 = vmatprep.subr.bf16.mxu0 %v5007
    %7011 = vmatpush2.bf16.msra.mxu0 %v5006
    %7012 = vmatprep.subr.bf16.mxu0 %v4999
    %7013 = vmatpush2.bf16.msra.mxu0 %v4998
    %7014 = vmatprep.mubr.bf16.mxu0 %v781
    %7015 = vmatmul.mubr.bf16.gmra.mxu0 %v780
    %v7016 = vpop.f32.mrf.mxu0
    %v7017 = vadd.f32 %v1825, %v7016
    %v7018 = vpop.f32.mrf.mxu0
    %v7019 = vadd.f32 %v1829, %v7018
    %v7020 = vpop.f32.mrf.mxu0
    %v7021 = vpop.f32.mrf.mxu0
    %7022 = vdwg.mxu0
    %7023 = vmatprep.subr.bf16.mxu0 %v5119
    %7024 = vmatpush1.bf16.msra.mxu0 %v5118
    %7025 = vmatprep.subr.bf16.mxu0 %v5111
    %7026 = vmatpush1.bf16.msra.mxu0 %v5110
    %7027 = vmatprep.subr.bf16.mxu0 %v5103
    %7028 = vmatpush1.bf16.msra.mxu0 %v5102
    %7029 = vmatprep.subr.bf16.mxu0 %v5095
    %7030 = vmatpush1.bf16.msra.mxu0 %v5094
    %7031 = vmatprep.subr.bf16.mxu0 %v5087
    %7032 = vmatpush1.bf16.msra.mxu0 %v5086
    %7033 = vmatprep.subr.bf16.mxu0 %v5079
    %7034 = vmatpush1.bf16.msra.mxu0 %v5078
    %7035 = vmatprep.subr.bf16.mxu0 %v5071
    %7036 = vmatpush1.bf16.msra.mxu0 %v5070
    %7037 = vmatprep.subr.bf16.mxu0 %v5063
    %7038 = vmatpush1.bf16.msra.mxu0 %v5062
    %7039 = vmatprep.subr.bf16.mxu0 %v5183
    %7040 = vmatpush2.bf16.msra.mxu0 %v5182
    %7041 = vmatprep.subr.bf16.mxu0 %v5175
    %7042 = vmatpush2.bf16.msra.mxu0 %v5174
    %7043 = vmatprep.subr.bf16.mxu0 %v5167
    %7044 = vmatpush2.bf16.msra.mxu0 %v5166
    %7045 = vmatprep.subr.bf16.mxu0 %v5159
    %7046 = vmatpush2.bf16.msra.mxu0 %v5158
    %7047 = vmatprep.subr.bf16.mxu0 %v5151
    %7048 = vmatpush2.bf16.msra.mxu0 %v5150
    %7049 = vmatprep.subr.bf16.mxu0 %v5143
    %7050 = vmatpush2.bf16.msra.mxu0 %v5142
    %7051 = vmatprep.subr.bf16.mxu0 %v5135
    %7052 = vmatpush2.bf16.msra.mxu0 %v5134
    %7053 = vmatprep.subr.bf16.mxu0 %v5127
    %7054 = vmatpush2.bf16.msra.mxu0 %v5126
    %7055 = vmatprep.mubr.bf16.mxu0 %v783
    %7056 = vmatmul.mubr.bf16.gmra.mxu0 %v782
    %v7057 = vpop.f32.mrf.mxu0
    %v7058 = vadd.f32 %v7017, %v7057
    %v7059 = vpop.f32.mrf.mxu0
    %v7060 = vadd.f32 %v7019, %v7059
    %v7061 = vpop.f32.mrf.mxu0
    %v7062 = vpop.f32.mrf.mxu0
    %7063 = vdwg.mxu0
    %7064 = vmatprep.subr.bf16.mxu0 %v5247
    %7065 = vmatpush1.bf16.msra.mxu0 %v5246
    %7066 = vmatprep.subr.bf16.mxu0 %v5239
    %7067 = vmatpush1.bf16.msra.mxu0 %v5238
    %7068 = vmatprep.subr.bf16.mxu0 %v5231
    %7069 = vmatpush1.bf16.msra.mxu0 %v5230
    %7070 = vmatprep.subr.bf16.mxu0 %v5223
    %7071 = vmatpush1.bf16.msra.mxu0 %v5222
    %7072 = vmatprep.subr.bf16.mxu0 %v5215
    %7073 = vmatpush1.bf16.msra.mxu0 %v5214
    %7074 = vmatprep.subr.bf16.mxu0 %v5207
    %7075 = vmatpush1.bf16.msra.mxu0 %v5206
    %7076 = vmatprep.subr.bf16.mxu0 %v5199
    %7077 = vmatpush1.bf16.msra.mxu0 %v5198
    %7078 = vmatprep.subr.bf16.mxu0 %v5191
    %7079 = vmatpush1.bf16.msra.mxu0 %v5190
    %7080 = vmatprep.subr.bf16.mxu0 %v5311
    %7081 = vmatpush2.bf16.msra.mxu0 %v5310
    %7082 = vmatprep.subr.bf16.mxu0 %v5303
    %7083 = vmatpush2.bf16.msra.mxu0 %v5302
    %7084 = vmatprep.subr.bf16.mxu0 %v5295
    %7085 = vmatpush2.bf16.msra.mxu0 %v5294
    %7086 = vmatprep.subr.bf16.mxu0 %v5287
    %7087 = vmatpush2.bf16.msra.mxu0 %v5286
    %7088 = vmatprep.subr.bf16.mxu0 %v5279
    %7089 = vmatpush2.bf16.msra.mxu0 %v5278
    %7090 = vmatprep.subr.bf16.mxu0 %v5271
    %7091 = vmatpush2.bf16.msra.mxu0 %v5270
    %7092 = vmatprep.subr.bf16.mxu0 %v5263
    %7093 = vmatpush2.bf16.msra.mxu0 %v5262
    %7094 = vmatprep.subr.bf16.mxu0 %v5255
    %7095 = vmatpush2.bf16.msra.mxu0 %v5254
    %7096 = vmatprep.mubr.bf16.mxu0 %v785
    %7097 = vmatmul.mubr.bf16.gmra.mxu0 %v784
    %v7098 = vpop.f32.mrf.mxu0
    %v7099 = vadd.f32 %v7058, %v7098
    %v7100 = vpop.f32.mrf.mxu0
    %v7101 = vadd.f32 %v7060, %v7100
    %v7102 = vpop.f32.mrf.mxu0
    %v7103 = vpop.f32.mrf.mxu0
    %7104 = vdwg.mxu0
    %7105 = vmatprep.subr.bf16.mxu0 %v5375
    %7106 = vmatpush1.bf16.msra.mxu0 %v5374
    %7107 = vmatprep.subr.bf16.mxu0 %v5367
    %7108 = vmatpush1.bf16.msra.mxu0 %v5366
    %7109 = vmatprep.subr.bf16.mxu0 %v5359
    %7110 = vmatpush1.bf16.msra.mxu0 %v5358
    %7111 = vmatprep.subr.bf16.mxu0 %v5351
    %7112 = vmatpush1.bf16.msra.mxu0 %v5350
    %7113 = vmatprep.subr.bf16.mxu0 %v5343
    %7114 = vmatpush1.bf16.msra.mxu0 %v5342
    %7115 = vmatprep.subr.bf16.mxu0 %v5335
    %7116 = vmatpush1.bf16.msra.mxu0 %v5334
    %7117 = vmatprep.subr.bf16.mxu0 %v5327
    %7118 = vmatpush1.bf16.msra.mxu0 %v5326
    %7119 = vmatprep.subr.bf16.mxu0 %v5319
    %7120 = vmatpush1.bf16.msra.mxu0 %v5318
    %7121 = vmatprep.subr.bf16.mxu0 %v5439
    %7122 = vmatpush2.bf16.msra.mxu0 %v5438
    %7123 = vmatprep.subr.bf16.mxu0 %v5431
    %7124 = vmatpush2.bf16.msra.mxu0 %v5430
    %7125 = vmatprep.subr.bf16.mxu0 %v5423
    %7126 = vmatpush2.bf16.msra.mxu0 %v5422
    %7127 = vmatprep.subr.bf16.mxu0 %v5415
    %7128 = vmatpush2.bf16.msra.mxu0 %v5414
    %7129 = vmatprep.subr.bf16.mxu0 %v5407
    %7130 = vmatpush2.bf16.msra.mxu0 %v5406
    %7131 = vmatprep.subr.bf16.mxu0 %v5399
    %7132 = vmatpush2.bf16.msra.mxu0 %v5398
    %7133 = vmatprep.subr.bf16.mxu0 %v5391
    %7134 = vmatpush2.bf16.msra.mxu0 %v5390
    %7135 = vmatprep.subr.bf16.mxu0 %v5383
    %7136 = vmatpush2.bf16.msra.mxu0 %v5382
    %7137 = vmatprep.mubr.bf16.mxu0 %v787
    %7138 = vmatmul.mubr.bf16.gmra.mxu0 %v786
    %v7139 = vpop.f32.mrf.mxu0
    %v7140 = vadd.f32 %v7099, %v7139
    %v7141 = vpop.f32.mrf.mxu0
    %v7142 = vadd.f32 %v7101, %v7141
    %v7143 = vpop.f32.mrf.mxu0
    %v7144 = vpop.f32.mrf.mxu0
    %7145 = vdwg.mxu0
    %7146 = vmatprep.subr.bf16.mxu0 %v5503
    %7147 = vmatpush1.bf16.msra.mxu0 %v5502
    %7148 = vmatprep.subr.bf16.mxu0 %v5495
    %7149 = vmatpush1.bf16.msra.mxu0 %v5494
    %7150 = vmatprep.subr.bf16.mxu0 %v5487
    %7151 = vmatpush1.bf16.msra.mxu0 %v5486
    %7152 = vmatprep.subr.bf16.mxu0 %v5479
    %7153 = vmatpush1.bf16.msra.mxu0 %v5478
    %7154 = vmatprep.subr.bf16.mxu0 %v5471
    %7155 = vmatpush1.bf16.msra.mxu0 %v5470
    %7156 = vmatprep.subr.bf16.mxu0 %v5463
    %7157 = vmatpush1.bf16.msra.mxu0 %v5462
    %7158 = vmatprep.subr.bf16.mxu0 %v5455
    %7159 = vmatpush1.bf16.msra.mxu0 %v5454
    %7160 = vmatprep.subr.bf16.mxu0 %v5447
    %7161 = vmatpush1.bf16.msra.mxu0 %v5446
    %7162 = vmatprep.subr.bf16.mxu0 %v5567
    %7163 = vmatpush2.bf16.msra.mxu0 %v5566
    %7164 = vmatprep.subr.bf16.mxu0 %v5559
    %7165 = vmatpush2.bf16.msra.mxu0 %v5558
    %7166 = vmatprep.subr.bf16.mxu0 %v5551
    %7167 = vmatpush2.bf16.msra.mxu0 %v5550
    %7168 = vmatprep.subr.bf16.mxu0 %v5543
    %7169 = vmatpush2.bf16.msra.mxu0 %v5542
    %7170 = vmatprep.subr.bf16.mxu0 %v5535
    %7171 = vmatpush2.bf16.msra.mxu0 %v5534
    %7172 = vmatprep.subr.bf16.mxu0 %v5527
    %7173 = vmatpush2.bf16.msra.mxu0 %v5526
    %7174 = vmatprep.subr.bf16.mxu0 %v5519
    %7175 = vmatpush2.bf16.msra.mxu0 %v5518
    %7176 = vmatprep.subr.bf16.mxu0 %v5511
    %7177 = vmatpush2.bf16.msra.mxu0 %v5510
    %7178 = vmatprep.mubr.bf16.mxu0 %v789
    %7179 = vmatmul.mubr.bf16.gmra.mxu0 %v788
    %v7180 = vpop.f32.mrf.mxu0
    %v7181 = vadd.f32 %v7140, %v7180
    %v7182 = vpop.f32.mrf.mxu0
    %v7183 = vadd.f32 %v7142, %v7182
    %v7184 = vpop.f32.mrf.mxu0
    %v7185 = vpop.f32.mrf.mxu0
    %7186 = vdwg.mxu0
    %7187 = vmatprep.subr.bf16.mxu0 %v5631
    %7188 = vmatpush1.bf16.msra.mxu0 %v5630
    %7189 = vmatprep.subr.bf16.mxu0 %v5623
    %7190 = vmatpush1.bf16.msra.mxu0 %v5622
    %7191 = vmatprep.subr.bf16.mxu0 %v5615
    %7192 = vmatpush1.bf16.msra.mxu0 %v5614
    %7193 = vmatprep.subr.bf16.mxu0 %v5607
    %7194 = vmatpush1.bf16.msra.mxu0 %v5606
    %7195 = vmatprep.subr.bf16.mxu0 %v5599
    %7196 = vmatpush1.bf16.msra.mxu0 %v5598
    %7197 = vmatprep.subr.bf16.mxu0 %v5591
    %7198 = vmatpush1.bf16.msra.mxu0 %v5590
    %7199 = vmatprep.subr.bf16.mxu0 %v5583
    %7200 = vmatpush1.bf16.msra.mxu0 %v5582
    %7201 = vmatprep.subr.bf16.mxu0 %v5575
    %7202 = vmatpush1.bf16.msra.mxu0 %v5574
    %7203 = vmatprep.subr.bf16.mxu0 %v5695
    %7204 = vmatpush2.bf16.msra.mxu0 %v5694
    %7205 = vmatprep.subr.bf16.mxu0 %v5687
    %7206 = vmatpush2.bf16.msra.mxu0 %v5686
    %7207 = vmatprep.subr.bf16.mxu0 %v5679
    %7208 = vmatpush2.bf16.msra.mxu0 %v5678
    %7209 = vmatprep.subr.bf16.mxu0 %v5671
    %7210 = vmatpush2.bf16.msra.mxu0 %v5670
    %7211 = vmatprep.subr.bf16.mxu0 %v5663
    %7212 = vmatpush2.bf16.msra.mxu0 %v5662
    %7213 = vmatprep.subr.bf16.mxu0 %v5655
    %7214 = vmatpush2.bf16.msra.mxu0 %v5654
    %7215 = vmatprep.subr.bf16.mxu0 %v5647
    %7216 = vmatpush2.bf16.msra.mxu0 %v5646
    %7217 = vmatprep.subr.bf16.mxu0 %v5639
    %7218 = vmatpush2.bf16.msra.mxu0 %v5638
    %7219 = vmatprep.mubr.bf16.mxu0 %v791
    %7220 = vmatmul.mubr.bf16.gmra.mxu0 %v790
    %v7221 = vpop.f32.mrf.mxu0
    %v7222 = vadd.f32 %v7181, %v7221
    %v7223 = vpop.f32.mrf.mxu0
    %v7224 = vadd.f32 %v7183, %v7223
    %v7225 = vpop.f32.mrf.mxu0
    %v7226 = vpop.f32.mrf.mxu0
    %7227 = vdwg.mxu0
    %7228 = vmatprep.subr.bf16.mxu0 %v5759
    %7229 = vmatpush1.bf16.msra.mxu0 %v5758
    %7230 = vmatprep.subr.bf16.mxu0 %v5751
    %7231 = vmatpush1.bf16.msra.mxu0 %v5750
    %7232 = vmatprep.subr.bf16.mxu0 %v5743
    %7233 = vmatpush1.bf16.msra.mxu0 %v5742
    %7234 = vmatprep.subr.bf16.mxu0 %v5735
    %7235 = vmatpush1.bf16.msra.mxu0 %v5734
    %7236 = vmatprep.subr.bf16.mxu0 %v5727
    %7237 = vmatpush1.bf16.msra.mxu0 %v5726
    %7238 = vmatprep.subr.bf16.mxu0 %v5719
    %7239 = vmatpush1.bf16.msra.mxu0 %v5718
    %7240 = vmatprep.subr.bf16.mxu0 %v5711
    %7241 = vmatpush1.bf16.msra.mxu0 %v5710
    %7242 = vmatprep.subr.bf16.mxu0 %v5703
    %7243 = vmatpush1.bf16.msra.mxu0 %v5702
    %7244 = vmatprep.subr.bf16.mxu0 %v5823
    %7245 = vmatpush2.bf16.msra.mxu0 %v5822
    %7246 = vmatprep.subr.bf16.mxu0 %v5815
    %7247 = vmatpush2.bf16.msra.mxu0 %v5814
    %7248 = vmatprep.subr.bf16.mxu0 %v5807
    %7249 = vmatpush2.bf16.msra.mxu0 %v5806
    %7250 = vmatprep.subr.bf16.mxu0 %v5799
    %7251 = vmatpush2.bf16.msra.mxu0 %v5798
    %7252 = vmatprep.subr.bf16.mxu0 %v5791
    %7253 = vmatpush2.bf16.msra.mxu0 %v5790
    %7254 = vmatprep.subr.bf16.mxu0 %v5783
    %7255 = vmatpush2.bf16.msra.mxu0 %v5782
    %7256 = vmatprep.subr.bf16.mxu0 %v5775
    %7257 = vmatpush2.bf16.msra.mxu0 %v5774
    %7258 = vmatprep.subr.bf16.mxu0 %v5767
    %7259 = vmatpush2.bf16.msra.mxu0 %v5766
    %7260 = vmatprep.mubr.bf16.mxu0 %v793
    %7261 = vmatmul.mubr.bf16.gmra.mxu0 %v792
    %v7262 = vpop.f32.mrf.mxu0
    %v7263 = vadd.f32 %v7222, %v7262
    %v7264 = vpop.f32.mrf.mxu0
    %v7265 = vadd.f32 %v7224, %v7264
    %v7266 = vpop.f32.mrf.mxu0
    %v7267 = vpop.f32.mrf.mxu0
    %7268 = vdwg.mxu0
    %7269 = vmatprep.subr.bf16.mxu0 %v5887
    %7270 = vmatpush1.bf16.msra.mxu0 %v5886
    %7271 = vmatprep.subr.bf16.mxu0 %v5879
    %7272 = vmatpush1.bf16.msra.mxu0 %v5878
    %7273 = vmatprep.subr.bf16.mxu0 %v5871
    %7274 = vmatpush1.bf16.msra.mxu0 %v5870
    %7275 = vmatprep.subr.bf16.mxu0 %v5863
    %7276 = vmatpush1.bf16.msra.mxu0 %v5862
    %7277 = vmatprep.subr.bf16.mxu0 %v5855
    %7278 = vmatpush1.bf16.msra.mxu0 %v5854
    %7279 = vmatprep.subr.bf16.mxu0 %v5847
    %7280 = vmatpush1.bf16.msra.mxu0 %v5846
    %7281 = vmatprep.subr.bf16.mxu0 %v5839
    %7282 = vmatpush1.bf16.msra.mxu0 %v5838
    %7283 = vmatprep.subr.bf16.mxu0 %v5831
    %7284 = vmatpush1.bf16.msra.mxu0 %v5830
    %7285 = vmatprep.subr.bf16.mxu0 %v5951
    %7286 = vmatpush2.bf16.msra.mxu0 %v5950
    %7287 = vmatprep.subr.bf16.mxu0 %v5943
    %7288 = vmatpush2.bf16.msra.mxu0 %v5942
    %7289 = vmatprep.subr.bf16.mxu0 %v5935
    %7290 = vmatpush2.bf16.msra.mxu0 %v5934
    %7291 = vmatprep.subr.bf16.mxu0 %v5927
    %7292 = vmatpush2.bf16.msra.mxu0 %v5926
    %7293 = vmatprep.subr.bf16.mxu0 %v5919
    %7294 = vmatpush2.bf16.msra.mxu0 %v5918
    %7295 = vmatprep.subr.bf16.mxu0 %v5911
    %7296 = vmatpush2.bf16.msra.mxu0 %v5910
    %7297 = vmatprep.subr.bf16.mxu0 %v5903
    %7298 = vmatpush2.bf16.msra.mxu0 %v5902
    %7299 = vmatprep.subr.bf16.mxu0 %v5895
    %7300 = vmatpush2.bf16.msra.mxu0 %v5894
    %7301 = vmatprep.mubr.bf16.mxu0 %v795
    %7302 = vmatmul.mubr.bf16.gmra.mxu0 %v794
    %v7303 = vpop.f32.mrf.mxu0
    %v7304 = vadd.f32 %v7263, %v7303
    %v7305 = vpop.f32.mrf.mxu0
    %v7306 = vadd.f32 %v7265, %v7305
    %v7307 = vpop.f32.mrf.mxu0
    %v7308 = vpop.f32.mrf.mxu0
    %7309 = vdwg.mxu0
    %7310 = vmatprep.subr.bf16.mxu0 %v4993
    %7311 = vmatpush1.bf16.msra.mxu0 %v4992
    %7312 = vmatprep.subr.bf16.mxu0 %v4985
    %7313 = vmatpush1.bf16.msra.mxu0 %v4984
    %7314 = vmatprep.subr.bf16.mxu0 %v4977
    %7315 = vmatpush1.bf16.msra.mxu0 %v4976
    %7316 = vmatprep.subr.bf16.mxu0 %v4969
    %7317 = vmatpush1.bf16.msra.mxu0 %v4968
    %7318 = vmatprep.subr.bf16.mxu0 %v4961
    %7319 = vmatpush1.bf16.msra.mxu0 %v4960
    %7320 = vmatprep.subr.bf16.mxu0 %v4953
    %7321 = vmatpush1.bf16.msra.mxu0 %v4952
    %7322 = vmatprep.subr.bf16.mxu0 %v4945
    %7323 = vmatpush1.bf16.msra.mxu0 %v4944
    %7324 = vmatprep.subr.bf16.mxu0 %v4937
    %7325 = vmatpush1.bf16.msra.mxu0 %v4936
    %7326 = vmatprep.subr.bf16.mxu0 %v5057
    %7327 = vmatpush2.bf16.msra.mxu0 %v5056
    %7328 = vmatprep.subr.bf16.mxu0 %v5049
    %7329 = vmatpush2.bf16.msra.mxu0 %v5048
    %7330 = vmatprep.subr.bf16.mxu0 %v5041
    %7331 = vmatpush2.bf16.msra.mxu0 %v5040
    %7332 = vmatprep.subr.bf16.mxu0 %v5033
    %7333 = vmatpush2.bf16.msra.mxu0 %v5032
    %7334 = vmatprep.subr.bf16.mxu0 %v5025
    %7335 = vmatpush2.bf16.msra.mxu0 %v5024
    %7336 = vmatprep.subr.bf16.mxu0 %v5017
    %7337 = vmatpush2.bf16.msra.mxu0 %v5016
    %7338 = vmatprep.subr.bf16.mxu0 %v5009
    %7339 = vmatpush2.bf16.msra.mxu0 %v5008
    %7340 = vmatprep.subr.bf16.mxu0 %v5001
    %7341 = vmatpush2.bf16.msra.mxu0 %v5000
    %7342 = vmatprep.mubr.bf16.mxu0 %v781
    %7343 = vmatmul.mubr.bf16.gmra.mxu0 %v780
    %v7344 = vpop.f32.mrf.mxu0
    %v7345 = vadd.f32 %v1833, %v7344
    %v7346 = vpop.f32.mrf.mxu0
    %v7347 = vadd.f32 %v1837, %v7346
    %v7348 = vpop.f32.mrf.mxu0
    %v7349 = vpop.f32.mrf.mxu0
    %7350 = vdwg.mxu0
    %7351 = vmatprep.subr.bf16.mxu0 %v5121
    %7352 = vmatpush1.bf16.msra.mxu0 %v5120
    %7353 = vmatprep.subr.bf16.mxu0 %v5113
    %7354 = vmatpush1.bf16.msra.mxu0 %v5112
    %7355 = vmatprep.subr.bf16.mxu0 %v5105
    %7356 = vmatpush1.bf16.msra.mxu0 %v5104
    %7357 = vmatprep.subr.bf16.mxu0 %v5097
    %7358 = vmatpush1.bf16.msra.mxu0 %v5096
    %7359 = vmatprep.subr.bf16.mxu0 %v5089
    %7360 = vmatpush1.bf16.msra.mxu0 %v5088
    %7361 = vmatprep.subr.bf16.mxu0 %v5081
    %7362 = vmatpush1.bf16.msra.mxu0 %v5080
    %7363 = vmatprep.subr.bf16.mxu0 %v5073
    %7364 = vmatpush1.bf16.msra.mxu0 %v5072
    %7365 = vmatprep.subr.bf16.mxu0 %v5065
    %7366 = vmatpush1.bf16.msra.mxu0 %v5064
    %7367 = vmatprep.subr.bf16.mxu0 %v5185
    %7368 = vmatpush2.bf16.msra.mxu0 %v5184
    %7369 = vmatprep.subr.bf16.mxu0 %v5177
    %7370 = vmatpush2.bf16.msra.mxu0 %v5176
    %7371 = vmatprep.subr.bf16.mxu0 %v5169
    %7372 = vmatpush2.bf16.msra.mxu0 %v5168
    %7373 = vmatprep.subr.bf16.mxu0 %v5161
    %7374 = vmatpush2.bf16.msra.mxu0 %v5160
    %7375 = vmatprep.subr.bf16.mxu0 %v5153
    %7376 = vmatpush2.bf16.msra.mxu0 %v5152
    %7377 = vmatprep.subr.bf16.mxu0 %v5145
    %7378 = vmatpush2.bf16.msra.mxu0 %v5144
    %7379 = vmatprep.subr.bf16.mxu0 %v5137
    %7380 = vmatpush2.bf16.msra.mxu0 %v5136
    %7381 = vmatprep.subr.bf16.mxu0 %v5129
    %7382 = vmatpush2.bf16.msra.mxu0 %v5128
    %7383 = vmatprep.mubr.bf16.mxu0 %v783
    %7384 = vmatmul.mubr.bf16.gmra.mxu0 %v782
    %v7385 = vpop.f32.mrf.mxu0
    %v7386 = vadd.f32 %v7345, %v7385
    %v7387 = vpop.f32.mrf.mxu0
    %v7388 = vadd.f32 %v7347, %v7387
    %v7389 = vpop.f32.mrf.mxu0
    %v7390 = vpop.f32.mrf.mxu0
    %7391 = vdwg.mxu0
    %7392 = vmatprep.subr.bf16.mxu0 %v5249
    %7393 = vmatpush1.bf16.msra.mxu0 %v5248
    %7394 = vmatprep.subr.bf16.mxu0 %v5241
    %7395 = vmatpush1.bf16.msra.mxu0 %v5240
    %7396 = vmatprep.subr.bf16.mxu0 %v5233
    %7397 = vmatpush1.bf16.msra.mxu0 %v5232
    %7398 = vmatprep.subr.bf16.mxu0 %v5225
    %7399 = vmatpush1.bf16.msra.mxu0 %v5224
    %7400 = vmatprep.subr.bf16.mxu0 %v5217
    %7401 = vmatpush1.bf16.msra.mxu0 %v5216
    %7402 = vmatprep.subr.bf16.mxu0 %v5209
    %7403 = vmatpush1.bf16.msra.mxu0 %v5208
    %7404 = vmatprep.subr.bf16.mxu0 %v5201
    %7405 = vmatpush1.bf16.msra.mxu0 %v5200
    %7406 = vmatprep.subr.bf16.mxu0 %v5193
    %7407 = vmatpush1.bf16.msra.mxu0 %v5192
    %7408 = vmatprep.subr.bf16.mxu0 %v5313
    %7409 = vmatpush2.bf16.msra.mxu0 %v5312
    %7410 = vmatprep.subr.bf16.mxu0 %v5305
    %7411 = vmatpush2.bf16.msra.mxu0 %v5304
    %7412 = vmatprep.subr.bf16.mxu0 %v5297
    %7413 = vmatpush2.bf16.msra.mxu0 %v5296
    %7414 = vmatprep.subr.bf16.mxu0 %v5289
    %7415 = vmatpush2.bf16.msra.mxu0 %v5288
    %7416 = vmatprep.subr.bf16.mxu0 %v5281
    %7417 = vmatpush2.bf16.msra.mxu0 %v5280
    %7418 = vmatprep.subr.bf16.mxu0 %v5273
    %7419 = vmatpush2.bf16.msra.mxu0 %v5272
    %7420 = vmatprep.subr.bf16.mxu0 %v5265
    %7421 = vmatpush2.bf16.msra.mxu0 %v5264
    %7422 = vmatprep.subr.bf16.mxu0 %v5257
    %7423 = vmatpush2.bf16.msra.mxu0 %v5256
    %7424 = vmatprep.mubr.bf16.mxu0 %v785
    %7425 = vmatmul.mubr.bf16.gmra.mxu0 %v784
    %v7426 = vpop.f32.mrf.mxu0
    %v7427 = vadd.f32 %v7386, %v7426
    %v7428 = vpop.f32.mrf.mxu0
    %v7429 = vadd.f32 %v7388, %v7428
    %v7430 = vpop.f32.mrf.mxu0
    %v7431 = vpop.f32.mrf.mxu0
    %7432 = vdwg.mxu0
    %7433 = vmatprep.subr.bf16.mxu0 %v5377
    %7434 = vmatpush1.bf16.msra.mxu0 %v5376
    %7435 = vmatprep.subr.bf16.mxu0 %v5369
    %7436 = vmatpush1.bf16.msra.mxu0 %v5368
    %7437 = vmatprep.subr.bf16.mxu0 %v5361
    %7438 = vmatpush1.bf16.msra.mxu0 %v5360
    %7439 = vmatprep.subr.bf16.mxu0 %v5353
    %7440 = vmatpush1.bf16.msra.mxu0 %v5352
    %7441 = vmatprep.subr.bf16.mxu0 %v5345
    %7442 = vmatpush1.bf16.msra.mxu0 %v5344
    %7443 = vmatprep.subr.bf16.mxu0 %v5337
    %7444 = vmatpush1.bf16.msra.mxu0 %v5336
    %7445 = vmatprep.subr.bf16.mxu0 %v5329
    %7446 = vmatpush1.bf16.msra.mxu0 %v5328
    %7447 = vmatprep.subr.bf16.mxu0 %v5321
    %7448 = vmatpush1.bf16.msra.mxu0 %v5320
    %7449 = vmatprep.subr.bf16.mxu0 %v5441
    %7450 = vmatpush2.bf16.msra.mxu0 %v5440
    %7451 = vmatprep.subr.bf16.mxu0 %v5433
    %7452 = vmatpush2.bf16.msra.mxu0 %v5432
    %7453 = vmatprep.subr.bf16.mxu0 %v5425
    %7454 = vmatpush2.bf16.msra.mxu0 %v5424
    %7455 = vmatprep.subr.bf16.mxu0 %v5417
    %7456 = vmatpush2.bf16.msra.mxu0 %v5416
    %7457 = vmatprep.subr.bf16.mxu0 %v5409
    %7458 = vmatpush2.bf16.msra.mxu0 %v5408
    %7459 = vmatprep.subr.bf16.mxu0 %v5401
    %7460 = vmatpush2.bf16.msra.mxu0 %v5400
    %7461 = vmatprep.subr.bf16.mxu0 %v5393
    %7462 = vmatpush2.bf16.msra.mxu0 %v5392
    %7463 = vmatprep.subr.bf16.mxu0 %v5385
    %7464 = vmatpush2.bf16.msra.mxu0 %v5384
    %7465 = vmatprep.mubr.bf16.mxu0 %v787
    %7466 = vmatmul.mubr.bf16.gmra.mxu0 %v786
    %v7467 = vpop.f32.mrf.mxu0
    %v7468 = vadd.f32 %v7427, %v7467
    %v7469 = vpop.f32.mrf.mxu0
    %v7470 = vadd.f32 %v7429, %v7469
    %v7471 = vpop.f32.mrf.mxu0
    %v7472 = vpop.f32.mrf.mxu0
    %7473 = vdwg.mxu0
    %7474 = vmatprep.subr.bf16.mxu0 %v5505
    %7475 = vmatpush1.bf16.msra.mxu0 %v5504
    %7476 = vmatprep.subr.bf16.mxu0 %v5497
    %7477 = vmatpush1.bf16.msra.mxu0 %v5496
    %7478 = vmatprep.subr.bf16.mxu0 %v5489
    %7479 = vmatpush1.bf16.msra.mxu0 %v5488
    %7480 = vmatprep.subr.bf16.mxu0 %v5481
    %7481 = vmatpush1.bf16.msra.mxu0 %v5480
    %7482 = vmatprep.subr.bf16.mxu0 %v5473
    %7483 = vmatpush1.bf16.msra.mxu0 %v5472
    %7484 = vmatprep.subr.bf16.mxu0 %v5465
    %7485 = vmatpush1.bf16.msra.mxu0 %v5464
    %7486 = vmatprep.subr.bf16.mxu0 %v5457
    %7487 = vmatpush1.bf16.msra.mxu0 %v5456
    %7488 = vmatprep.subr.bf16.mxu0 %v5449
    %7489 = vmatpush1.bf16.msra.mxu0 %v5448
    %7490 = vmatprep.subr.bf16.mxu0 %v5569
    %7491 = vmatpush2.bf16.msra.mxu0 %v5568
    %7492 = vmatprep.subr.bf16.mxu0 %v5561
    %7493 = vmatpush2.bf16.msra.mxu0 %v5560
    %7494 = vmatprep.subr.bf16.mxu0 %v5553
    %7495 = vmatpush2.bf16.msra.mxu0 %v5552
    %7496 = vmatprep.subr.bf16.mxu0 %v5545
    %7497 = vmatpush2.bf16.msra.mxu0 %v5544
    %7498 = vmatprep.subr.bf16.mxu0 %v5537
    %7499 = vmatpush2.bf16.msra.mxu0 %v5536
    %7500 = vmatprep.subr.bf16.mxu0 %v5529
    %7501 = vmatpush2.bf16.msra.mxu0 %v5528
    %7502 = vmatprep.subr.bf16.mxu0 %v5521
    %7503 = vmatpush2.bf16.msra.mxu0 %v5520
    %7504 = vmatprep.subr.bf16.mxu0 %v5513
    %7505 = vmatpush2.bf16.msra.mxu0 %v5512
    %7506 = vmatprep.mubr.bf16.mxu0 %v789
    %7507 = vmatmul.mubr.bf16.gmra.mxu0 %v788
    %v7508 = vpop.f32.mrf.mxu0
    %v7509 = vadd.f32 %v7468, %v7508
    %v7510 = vpop.f32.mrf.mxu0
    %v7511 = vadd.f32 %v7470, %v7510
    %v7512 = vpop.f32.mrf.mxu0
    %v7513 = vpop.f32.mrf.mxu0
    %7514 = vdwg.mxu0
    %7515 = vmatprep.subr.bf16.mxu0 %v5633
    %7516 = vmatpush1.bf16.msra.mxu0 %v5632
    %7517 = vmatprep.subr.bf16.mxu0 %v5625
    %7518 = vmatpush1.bf16.msra.mxu0 %v5624
    %7519 = vmatprep.subr.bf16.mxu0 %v5617
    %7520 = vmatpush1.bf16.msra.mxu0 %v5616
    %7521 = vmatprep.subr.bf16.mxu0 %v5609
    %7522 = vmatpush1.bf16.msra.mxu0 %v5608
    %7523 = vmatprep.subr.bf16.mxu0 %v5601
    %7524 = vmatpush1.bf16.msra.mxu0 %v5600
    %7525 = vmatprep.subr.bf16.mxu0 %v5593
    %7526 = vmatpush1.bf16.msra.mxu0 %v5592
    %7527 = vmatprep.subr.bf16.mxu0 %v5585
    %7528 = vmatpush1.bf16.msra.mxu0 %v5584
    %7529 = vmatprep.subr.bf16.mxu0 %v5577
    %7530 = vmatpush1.bf16.msra.mxu0 %v5576
    %7531 = vmatprep.subr.bf16.mxu0 %v5697
    %7532 = vmatpush2.bf16.msra.mxu0 %v5696
    %7533 = vmatprep.subr.bf16.mxu0 %v5689
    %7534 = vmatpush2.bf16.msra.mxu0 %v5688
    %7535 = vmatprep.subr.bf16.mxu0 %v5681
    %7536 = vmatpush2.bf16.msra.mxu0 %v5680
    %7537 = vmatprep.subr.bf16.mxu0 %v5673
    %7538 = vmatpush2.bf16.msra.mxu0 %v5672
    %7539 = vmatprep.subr.bf16.mxu0 %v5665
    %7540 = vmatpush2.bf16.msra.mxu0 %v5664
    %7541 = vmatprep.subr.bf16.mxu0 %v5657
    %7542 = vmatpush2.bf16.msra.mxu0 %v5656
    %7543 = vmatprep.subr.bf16.mxu0 %v5649
    %7544 = vmatpush2.bf16.msra.mxu0 %v5648
    %7545 = vmatprep.subr.bf16.mxu0 %v5641
    %7546 = vmatpush2.bf16.msra.mxu0 %v5640
    %7547 = vmatprep.mubr.bf16.mxu0 %v791
    %7548 = vmatmul.mubr.bf16.gmra.mxu0 %v790
    %v7549 = vpop.f32.mrf.mxu0
    %v7550 = vadd.f32 %v7509, %v7549
    %v7551 = vpop.f32.mrf.mxu0
    %v7552 = vadd.f32 %v7511, %v7551
    %v7553 = vpop.f32.mrf.mxu0
    %v7554 = vpop.f32.mrf.mxu0
    %7555 = vdwg.mxu0
    %7556 = vmatprep.subr.bf16.mxu0 %v5761
    %7557 = vmatpush1.bf16.msra.mxu0 %v5760
    %7558 = vmatprep.subr.bf16.mxu0 %v5753
    %7559 = vmatpush1.bf16.msra.mxu0 %v5752
    %7560 = vmatprep.subr.bf16.mxu0 %v5745
    %7561 = vmatpush1.bf16.msra.mxu0 %v5744
    %7562 = vmatprep.subr.bf16.mxu0 %v5737
    %7563 = vmatpush1.bf16.msra.mxu0 %v5736
    %7564 = vmatprep.subr.bf16.mxu0 %v5729
    %7565 = vmatpush1.bf16.msra.mxu0 %v5728
    %7566 = vmatprep.subr.bf16.mxu0 %v5721
    %7567 = vmatpush1.bf16.msra.mxu0 %v5720
    %7568 = vmatprep.subr.bf16.mxu0 %v5713
    %7569 = vmatpush1.bf16.msra.mxu0 %v5712
    %7570 = vmatprep.subr.bf16.mxu0 %v5705
    %7571 = vmatpush1.bf16.msra.mxu0 %v5704
    %7572 = vmatprep.subr.bf16.mxu0 %v5825
    %7573 = vmatpush2.bf16.msra.mxu0 %v5824
    %7574 = vmatprep.subr.bf16.mxu0 %v5817
    %7575 = vmatpush2.bf16.msra.mxu0 %v5816
    %7576 = vmatprep.subr.bf16.mxu0 %v5809
    %7577 = vmatpush2.bf16.msra.mxu0 %v5808
    %7578 = vmatprep.subr.bf16.mxu0 %v5801
    %7579 = vmatpush2.bf16.msra.mxu0 %v5800
    %7580 = vmatprep.subr.bf16.mxu0 %v5793
    %7581 = vmatpush2.bf16.msra.mxu0 %v5792
    %7582 = vmatprep.subr.bf16.mxu0 %v5785
    %7583 = vmatpush2.bf16.msra.mxu0 %v5784
    %7584 = vmatprep.subr.bf16.mxu0 %v5777
    %7585 = vmatpush2.bf16.msra.mxu0 %v5776
    %7586 = vmatprep.subr.bf16.mxu0 %v5769
    %7587 = vmatpush2.bf16.msra.mxu0 %v5768
    %7588 = vmatprep.mubr.bf16.mxu0 %v793
    %7589 = vmatmul.mubr.bf16.gmra.mxu0 %v792
    %v7590 = vpop.f32.mrf.mxu0
    %v7591 = vadd.f32 %v7550, %v7590
    %v7592 = vpop.f32.mrf.mxu0
    %v7593 = vadd.f32 %v7552, %v7592
    %v7594 = vpop.f32.mrf.mxu0
    %v7595 = vpop.f32.mrf.mxu0
    %7596 = vdwg.mxu0
    %7597 = vmatprep.subr.bf16.mxu0 %v5889
    %7598 = vmatpush1.bf16.msra.mxu0 %v5888
    %7599 = vmatprep.subr.bf16.mxu0 %v5881
    %7600 = vmatpush1.bf16.msra.mxu0 %v5880
    %7601 = vmatprep.subr.bf16.mxu0 %v5873
    %7602 = vmatpush1.bf16.msra.mxu0 %v5872
    %7603 = vmatprep.subr.bf16.mxu0 %v5865
    %7604 = vmatpush1.bf16.msra.mxu0 %v5864
    %7605 = vmatprep.subr.bf16.mxu0 %v5857
    %7606 = vmatpush1.bf16.msra.mxu0 %v5856
    %7607 = vmatprep.subr.bf16.mxu0 %v5849
    %7608 = vmatpush1.bf16.msra.mxu0 %v5848
    %7609 = vmatprep.subr.bf16.mxu0 %v5841
    %7610 = vmatpush1.bf16.msra.mxu0 %v5840
    %7611 = vmatprep.subr.bf16.mxu0 %v5833
    %7612 = vmatpush1.bf16.msra.mxu0 %v5832
    %7613 = vmatprep.subr.bf16.mxu0 %v5953
    %7614 = vmatpush2.bf16.msra.mxu0 %v5952
    %7615 = vmatprep.subr.bf16.mxu0 %v5945
    %7616 = vmatpush2.bf16.msra.mxu0 %v5944
    %7617 = vmatprep.subr.bf16.mxu0 %v5937
    %7618 = vmatpush2.bf16.msra.mxu0 %v5936
    %7619 = vmatprep.subr.bf16.mxu0 %v5929
    %7620 = vmatpush2.bf16.msra.mxu0 %v5928
    %7621 = vmatprep.subr.bf16.mxu0 %v5921
    %7622 = vmatpush2.bf16.msra.mxu0 %v5920
    %7623 = vmatprep.subr.bf16.mxu0 %v5913
    %7624 = vmatpush2.bf16.msra.mxu0 %v5912
    %7625 = vmatprep.subr.bf16.mxu0 %v5905
    %7626 = vmatpush2.bf16.msra.mxu0 %v5904
    %7627 = vmatprep.subr.bf16.mxu0 %v5897
    %7628 = vmatpush2.bf16.msra.mxu0 %v5896
    %7629 = vmatprep.mubr.bf16.mxu0 %v795
    %7630 = vmatmul.mubr.bf16.gmra.mxu0 %v794
    %v7631 = vpop.f32.mrf.mxu0
    %v7632 = vadd.f32 %v7591, %v7631
    %v7633 = vpop.f32.mrf.mxu0
    %v7634 = vadd.f32 %v7593, %v7633
    %v7635 = vpop.f32.mrf.mxu0
    %v7636 = vpop.f32.mrf.mxu0
    %7637 = vdwg.mxu0
    %7638 = vmatprep.subr.bf16.mxu0 %v4995
    %7639 = vmatpush1.bf16.msra.mxu0 %v4994
    %7640 = vmatprep.subr.bf16.mxu0 %v4987
    %7641 = vmatpush1.bf16.msra.mxu0 %v4986
    %7642 = vmatprep.subr.bf16.mxu0 %v4979
    %7643 = vmatpush1.bf16.msra.mxu0 %v4978
    %7644 = vmatprep.subr.bf16.mxu0 %v4971
    %7645 = vmatpush1.bf16.msra.mxu0 %v4970
    %7646 = vmatprep.subr.bf16.mxu0 %v4963
    %7647 = vmatpush1.bf16.msra.mxu0 %v4962
    %7648 = vmatprep.subr.bf16.mxu0 %v4955
    %7649 = vmatpush1.bf16.msra.mxu0 %v4954
    %7650 = vmatprep.subr.bf16.mxu0 %v4947
    %7651 = vmatpush1.bf16.msra.mxu0 %v4946
    %7652 = vmatprep.subr.bf16.mxu0 %v4939
    %7653 = vmatpush1.bf16.msra.mxu0 %v4938
    %7654 = vmatprep.subr.bf16.mxu0 %v5059
    %7655 = vmatpush2.bf16.msra.mxu0 %v5058
    %7656 = vmatprep.subr.bf16.mxu0 %v5051
    %7657 = vmatpush2.bf16.msra.mxu0 %v5050
    %7658 = vmatprep.subr.bf16.mxu0 %v5043
    %7659 = vmatpush2.bf16.msra.mxu0 %v5042
    %7660 = vmatprep.subr.bf16.mxu0 %v5035
    %7661 = vmatpush2.bf16.msra.mxu0 %v5034
    %7662 = vmatprep.subr.bf16.mxu0 %v5027
    %7663 = vmatpush2.bf16.msra.mxu0 %v5026
    %7664 = vmatprep.subr.bf16.mxu0 %v5019
    %7665 = vmatpush2.bf16.msra.mxu0 %v5018
    %7666 = vmatprep.subr.bf16.mxu0 %v5011
    %7667 = vmatpush2.bf16.msra.mxu0 %v5010
    %7668 = vmatprep.subr.bf16.mxu0 %v5003
    %7669 = vmatpush2.bf16.msra.mxu0 %v5002
    %7670 = vmatprep.mubr.bf16.mxu0 %v781
    %7671 = vmatmul.mubr.bf16.gmra.mxu0 %v780
    %v7672 = vpop.f32.mrf.mxu0
    %v7673 = vadd.f32 %v1841, %v7672
    %v7674 = vpop.f32.mrf.mxu0
    %v7675 = vadd.f32 %v1845, %v7674
    %v7676 = vpop.f32.mrf.mxu0
    %v7677 = vpop.f32.mrf.mxu0
    %7678 = vdwg.mxu0
    %7679 = vmatprep.subr.bf16.mxu0 %v5123
    %7680 = vmatpush1.bf16.msra.mxu0 %v5122
    %7681 = vmatprep.subr.bf16.mxu0 %v5115
    %7682 = vmatpush1.bf16.msra.mxu0 %v5114
    %7683 = vmatprep.subr.bf16.mxu0 %v5107
    %7684 = vmatpush1.bf16.msra.mxu0 %v5106
    %7685 = vmatprep.subr.bf16.mxu0 %v5099
    %7686 = vmatpush1.bf16.msra.mxu0 %v5098
    %7687 = vmatprep.subr.bf16.mxu0 %v5091
    %7688 = vmatpush1.bf16.msra.mxu0 %v5090
    %7689 = vmatprep.subr.bf16.mxu0 %v5083
    %7690 = vmatpush1.bf16.msra.mxu0 %v5082
    %7691 = vmatprep.subr.bf16.mxu0 %v5075
    %7692 = vmatpush1.bf16.msra.mxu0 %v5074
    %7693 = vmatprep.subr.bf16.mxu0 %v5067
    %7694 = vmatpush1.bf16.msra.mxu0 %v5066
    %7695 = vmatprep.subr.bf16.mxu0 %v5187
    %7696 = vmatpush2.bf16.msra.mxu0 %v5186
    %7697 = vmatprep.subr.bf16.mxu0 %v5179
    %7698 = vmatpush2.bf16.msra.mxu0 %v5178
    %7699 = vmatprep.subr.bf16.mxu0 %v5171
    %7700 = vmatpush2.bf16.msra.mxu0 %v5170
    %7701 = vmatprep.subr.bf16.mxu0 %v5163
    %7702 = vmatpush2.bf16.msra.mxu0 %v5162
    %7703 = vmatprep.subr.bf16.mxu0 %v5155
    %7704 = vmatpush2.bf16.msra.mxu0 %v5154
    %7705 = vmatprep.subr.bf16.mxu0 %v5147
    %7706 = vmatpush2.bf16.msra.mxu0 %v5146
    %7707 = vmatprep.subr.bf16.mxu0 %v5139
    %7708 = vmatpush2.bf16.msra.mxu0 %v5138
    %7709 = vmatprep.subr.bf16.mxu0 %v5131
    %7710 = vmatpush2.bf16.msra.mxu0 %v5130
    %7711 = vmatprep.mubr.bf16.mxu0 %v783
    %7712 = vmatmul.mubr.bf16.gmra.mxu0 %v782
    %v7713 = vpop.f32.mrf.mxu0
    %v7714 = vadd.f32 %v7673, %v7713
    %v7715 = vpop.f32.mrf.mxu0
    %v7716 = vadd.f32 %v7675, %v7715
    %v7717 = vpop.f32.mrf.mxu0
    %v7718 = vpop.f32.mrf.mxu0
    %7719 = vdwg.mxu0
    %7720 = vmatprep.subr.bf16.mxu0 %v5251
    %7721 = vmatpush1.bf16.msra.mxu0 %v5250
    %7722 = vmatprep.subr.bf16.mxu0 %v5243
    %7723 = vmatpush1.bf16.msra.mxu0 %v5242
    %7724 = vmatprep.subr.bf16.mxu0 %v5235
    %7725 = vmatpush1.bf16.msra.mxu0 %v5234
    %7726 = vmatprep.subr.bf16.mxu0 %v5227
    %7727 = vmatpush1.bf16.msra.mxu0 %v5226
    %7728 = vmatprep.subr.bf16.mxu0 %v5219
    %7729 = vmatpush1.bf16.msra.mxu0 %v5218
    %7730 = vmatprep.subr.bf16.mxu0 %v5211
    %7731 = vmatpush1.bf16.msra.mxu0 %v5210
    %7732 = vmatprep.subr.bf16.mxu0 %v5203
    %7733 = vmatpush1.bf16.msra.mxu0 %v5202
    %7734 = vmatprep.subr.bf16.mxu0 %v5195
    %7735 = vmatpush1.bf16.msra.mxu0 %v5194
    %7736 = vmatprep.subr.bf16.mxu0 %v5315
    %7737 = vmatpush2.bf16.msra.mxu0 %v5314
    %7738 = vmatprep.subr.bf16.mxu0 %v5307
    %7739 = vmatpush2.bf16.msra.mxu0 %v5306
    %7740 = vmatprep.subr.bf16.mxu0 %v5299
    %7741 = vmatpush2.bf16.msra.mxu0 %v5298
    %7742 = vmatprep.subr.bf16.mxu0 %v5291
    %7743 = vmatpush2.bf16.msra.mxu0 %v5290
    %7744 = vmatprep.subr.bf16.mxu0 %v5283
    %7745 = vmatpush2.bf16.msra.mxu0 %v5282
    %7746 = vmatprep.subr.bf16.mxu0 %v5275
    %7747 = vmatpush2.bf16.msra.mxu0 %v5274
    %7748 = vmatprep.subr.bf16.mxu0 %v5267
    %7749 = vmatpush2.bf16.msra.mxu0 %v5266
    %7750 = vmatprep.subr.bf16.mxu0 %v5259
    %7751 = vmatpush2.bf16.msra.mxu0 %v5258
    %7752 = vmatprep.mubr.bf16.mxu0 %v785
    %7753 = vmatmul.mubr.bf16.gmra.mxu0 %v784
    %v7754 = vpop.f32.mrf.mxu0
    %v7755 = vadd.f32 %v7714, %v7754
    %v7756 = vpop.f32.mrf.mxu0
    %v7757 = vadd.f32 %v7716, %v7756
    %v7758 = vpop.f32.mrf.mxu0
    %v7759 = vpop.f32.mrf.mxu0
    %7760 = vdwg.mxu0
    %7761 = vmatprep.subr.bf16.mxu0 %v5379
    %7762 = vmatpush1.bf16.msra.mxu0 %v5378
    %7763 = vmatprep.subr.bf16.mxu0 %v5371
    %7764 = vmatpush1.bf16.msra.mxu0 %v5370
    %7765 = vmatprep.subr.bf16.mxu0 %v5363
    %7766 = vmatpush1.bf16.msra.mxu0 %v5362
    %7767 = vmatprep.subr.bf16.mxu0 %v5355
    %7768 = vmatpush1.bf16.msra.mxu0 %v5354
    %7769 = vmatprep.subr.bf16.mxu0 %v5347
    %7770 = vmatpush1.bf16.msra.mxu0 %v5346
    %7771 = vmatprep.subr.bf16.mxu0 %v5339
    %7772 = vmatpush1.bf16.msra.mxu0 %v5338
    %7773 = vmatprep.subr.bf16.mxu0 %v5331
    %7774 = vmatpush1.bf16.msra.mxu0 %v5330
    %7775 = vmatprep.subr.bf16.mxu0 %v5323
    %7776 = vmatpush1.bf16.msra.mxu0 %v5322
    %7777 = vmatprep.subr.bf16.mxu0 %v5443
    %7778 = vmatpush2.bf16.msra.mxu0 %v5442
    %7779 = vmatprep.subr.bf16.mxu0 %v5435
    %7780 = vmatpush2.bf16.msra.mxu0 %v5434
    %7781 = vmatprep.subr.bf16.mxu0 %v5427
    %7782 = vmatpush2.bf16.msra.mxu0 %v5426
    %7783 = vmatprep.subr.bf16.mxu0 %v5419
    %7784 = vmatpush2.bf16.msra.mxu0 %v5418
    %7785 = vmatprep.subr.bf16.mxu0 %v5411
    %7786 = vmatpush2.bf16.msra.mxu0 %v5410
    %7787 = vmatprep.subr.bf16.mxu0 %v5403
    %7788 = vmatpush2.bf16.msra.mxu0 %v5402
    %7789 = vmatprep.subr.bf16.mxu0 %v5395
    %7790 = vmatpush2.bf16.msra.mxu0 %v5394
    %7791 = vmatprep.subr.bf16.mxu0 %v5387
    %7792 = vmatpush2.bf16.msra.mxu0 %v5386
    %7793 = vmatprep.mubr.bf16.mxu0 %v787
    %7794 = vmatmul.mubr.bf16.gmra.mxu0 %v786
    %v7795 = vpop.f32.mrf.mxu0
    %v7796 = vadd.f32 %v7755, %v7795
    %v7797 = vpop.f32.mrf.mxu0
    %v7798 = vadd.f32 %v7757, %v7797
    %v7799 = vpop.f32.mrf.mxu0
    %v7800 = vpop.f32.mrf.mxu0
    %7801 = vdwg.mxu0
    %7802 = vmatprep.subr.bf16.mxu0 %v5507
    %7803 = vmatpush1.bf16.msra.mxu0 %v5506
    %7804 = vmatprep.subr.bf16.mxu0 %v5499
    %7805 = vmatpush1.bf16.msra.mxu0 %v5498
    %7806 = vmatprep.subr.bf16.mxu0 %v5491
    %7807 = vmatpush1.bf16.msra.mxu0 %v5490
    %7808 = vmatprep.subr.bf16.mxu0 %v5483
    %7809 = vmatpush1.bf16.msra.mxu0 %v5482
    %7810 = vmatprep.subr.bf16.mxu0 %v5475
    %7811 = vmatpush1.bf16.msra.mxu0 %v5474
    %7812 = vmatprep.subr.bf16.mxu0 %v5467
    %7813 = vmatpush1.bf16.msra.mxu0 %v5466
    %7814 = vmatprep.subr.bf16.mxu0 %v5459
    %7815 = vmatpush1.bf16.msra.mxu0 %v5458
    %7816 = vmatprep.subr.bf16.mxu0 %v5451
    %7817 = vmatpush1.bf16.msra.mxu0 %v5450
    %7818 = vmatprep.subr.bf16.mxu0 %v5571
    %7819 = vmatpush2.bf16.msra.mxu0 %v5570
    %7820 = vmatprep.subr.bf16.mxu0 %v5563
    %7821 = vmatpush2.bf16.msra.mxu0 %v5562
    %7822 = vmatprep.subr.bf16.mxu0 %v5555
    %7823 = vmatpush2.bf16.msra.mxu0 %v5554
    %7824 = vmatprep.subr.bf16.mxu0 %v5547
    %7825 = vmatpush2.bf16.msra.mxu0 %v5546
    %7826 = vmatprep.subr.bf16.mxu0 %v5539
    %7827 = vmatpush2.bf16.msra.mxu0 %v5538
    %7828 = vmatprep.subr.bf16.mxu0 %v5531
    %7829 = vmatpush2.bf16.msra.mxu0 %v5530
    %7830 = vmatprep.subr.bf16.mxu0 %v5523
    %7831 = vmatpush2.bf16.msra.mxu0 %v5522
    %7832 = vmatprep.subr.bf16.mxu0 %v5515
    %7833 = vmatpush2.bf16.msra.mxu0 %v5514
    %7834 = vmatprep.mubr.bf16.mxu0 %v789
    %7835 = vmatmul.mubr.bf16.gmra.mxu0 %v788
    %v7836 = vpop.f32.mrf.mxu0
    %v7837 = vadd.f32 %v7796, %v7836
    %v7838 = vpop.f32.mrf.mxu0
    %v7839 = vadd.f32 %v7798, %v7838
    %v7840 = vpop.f32.mrf.mxu0
    %v7841 = vpop.f32.mrf.mxu0
    %7842 = vdwg.mxu0
    %7843 = vmatprep.subr.bf16.mxu0 %v5635
    %7844 = vmatpush1.bf16.msra.mxu0 %v5634
    %7845 = vmatprep.subr.bf16.mxu0 %v5627
    %7846 = vmatpush1.bf16.msra.mxu0 %v5626
    %7847 = vmatprep.subr.bf16.mxu0 %v5619
    %7848 = vmatpush1.bf16.msra.mxu0 %v5618
    %7849 = vmatprep.subr.bf16.mxu0 %v5611
    %7850 = vmatpush1.bf16.msra.mxu0 %v5610
    %7851 = vmatprep.subr.bf16.mxu0 %v5603
    %7852 = vmatpush1.bf16.msra.mxu0 %v5602
    %7853 = vmatprep.subr.bf16.mxu0 %v5595
    %7854 = vmatpush1.bf16.msra.mxu0 %v5594
    %7855 = vmatprep.subr.bf16.mxu0 %v5587
    %7856 = vmatpush1.bf16.msra.mxu0 %v5586
    %7857 = vmatprep.subr.bf16.mxu0 %v5579
    %7858 = vmatpush1.bf16.msra.mxu0 %v5578
    %7859 = vmatprep.subr.bf16.mxu0 %v5699
    %7860 = vmatpush2.bf16.msra.mxu0 %v5698
    %7861 = vmatprep.subr.bf16.mxu0 %v5691
    %7862 = vmatpush2.bf16.msra.mxu0 %v5690
    %7863 = vmatprep.subr.bf16.mxu0 %v5683
    %7864 = vmatpush2.bf16.msra.mxu0 %v5682
    %7865 = vmatprep.subr.bf16.mxu0 %v5675
    %7866 = vmatpush2.bf16.msra.mxu0 %v5674
    %7867 = vmatprep.subr.bf16.mxu0 %v5667
    %7868 = vmatpush2.bf16.msra.mxu0 %v5666
    %7869 = vmatprep.subr.bf16.mxu0 %v5659
    %7870 = vmatpush2.bf16.msra.mxu0 %v5658
    %7871 = vmatprep.subr.bf16.mxu0 %v5651
    %7872 = vmatpush2.bf16.msra.mxu0 %v5650
    %7873 = vmatprep.subr.bf16.mxu0 %v5643
    %7874 = vmatpush2.bf16.msra.mxu0 %v5642
    %7875 = vmatprep.mubr.bf16.mxu0 %v791
    %7876 = vmatmul.mubr.bf16.gmra.mxu0 %v790
    %v7877 = vpop.f32.mrf.mxu0
    %v7878 = vadd.f32 %v7837, %v7877
    %v7879 = vpop.f32.mrf.mxu0
    %v7880 = vadd.f32 %v7839, %v7879
    %v7881 = vpop.f32.mrf.mxu0
    %v7882 = vpop.f32.mrf.mxu0
    %7883 = vdwg.mxu0
    %7884 = vmatprep.subr.bf16.mxu0 %v5763
    %7885 = vmatpush1.bf16.msra.mxu0 %v5762
    %7886 = vmatprep.subr.bf16.mxu0 %v5755
    %7887 = vmatpush1.bf16.msra.mxu0 %v5754
    %7888 = vmatprep.subr.bf16.mxu0 %v5747
    %7889 = vmatpush1.bf16.msra.mxu0 %v5746
    %7890 = vmatprep.subr.bf16.mxu0 %v5739
    %7891 = vmatpush1.bf16.msra.mxu0 %v5738
    %7892 = vmatprep.subr.bf16.mxu0 %v5731
    %7893 = vmatpush1.bf16.msra.mxu0 %v5730
    %7894 = vmatprep.subr.bf16.mxu0 %v5723
    %7895 = vmatpush1.bf16.msra.mxu0 %v5722
    %7896 = vmatprep.subr.bf16.mxu0 %v5715
    %7897 = vmatpush1.bf16.msra.mxu0 %v5714
    %7898 = vmatprep.subr.bf16.mxu0 %v5707
    %7899 = vmatpush1.bf16.msra.mxu0 %v5706
    %7900 = vmatprep.subr.bf16.mxu0 %v5827
    %7901 = vmatpush2.bf16.msra.mxu0 %v5826
    %7902 = vmatprep.subr.bf16.mxu0 %v5819
    %7903 = vmatpush2.bf16.msra.mxu0 %v5818
    %7904 = vmatprep.subr.bf16.mxu0 %v5811
    %7905 = vmatpush2.bf16.msra.mxu0 %v5810
    %7906 = vmatprep.subr.bf16.mxu0 %v5803
    %7907 = vmatpush2.bf16.msra.mxu0 %v5802
    %7908 = vmatprep.subr.bf16.mxu0 %v5795
    %7909 = vmatpush2.bf16.msra.mxu0 %v5794
    %7910 = vmatprep.subr.bf16.mxu0 %v5787
    %7911 = vmatpush2.bf16.msra.mxu0 %v5786
    %7912 = vmatprep.subr.bf16.mxu0 %v5779
    %7913 = vmatpush2.bf16.msra.mxu0 %v5778
    %7914 = vmatprep.subr.bf16.mxu0 %v5771
    %7915 = vmatpush2.bf16.msra.mxu0 %v5770
    %7916 = vmatprep.mubr.bf16.mxu0 %v793
    %7917 = vmatmul.mubr.bf16.gmra.mxu0 %v792
    %v7918 = vpop.f32.mrf.mxu0
    %v7919 = vadd.f32 %v7878, %v7918
    %v7920 = vpop.f32.mrf.mxu0
    %v7921 = vadd.f32 %v7880, %v7920
    %v7922 = vpop.f32.mrf.mxu0
    %v7923 = vpop.f32.mrf.mxu0
    %7924 = vdwg.mxu0
    %7925 = vmatprep.subr.bf16.mxu0 %v5891
    %7926 = vmatpush1.bf16.msra.mxu0 %v5890
    %7927 = vmatprep.subr.bf16.mxu0 %v5883
    %7928 = vmatpush1.bf16.msra.mxu0 %v5882
    %7929 = vmatprep.subr.bf16.mxu0 %v5875
    %7930 = vmatpush1.bf16.msra.mxu0 %v5874
    %7931 = vmatprep.subr.bf16.mxu0 %v5867
    %7932 = vmatpush1.bf16.msra.mxu0 %v5866
    %7933 = vmatprep.subr.bf16.mxu0 %v5859
    %7934 = vmatpush1.bf16.msra.mxu0 %v5858
    %7935 = vmatprep.subr.bf16.mxu0 %v5851
    %7936 = vmatpush1.bf16.msra.mxu0 %v5850
    %7937 = vmatprep.subr.bf16.mxu0 %v5843
    %7938 = vmatpush1.bf16.msra.mxu0 %v5842
    %7939 = vmatprep.subr.bf16.mxu0 %v5835
    %7940 = vmatpush1.bf16.msra.mxu0 %v5834
    %7941 = vmatprep.subr.bf16.mxu0 %v5955
    %7942 = vmatpush2.bf16.msra.mxu0 %v5954
    %7943 = vmatprep.subr.bf16.mxu0 %v5947
    %7944 = vmatpush2.bf16.msra.mxu0 %v5946
    %7945 = vmatprep.subr.bf16.mxu0 %v5939
    %7946 = vmatpush2.bf16.msra.mxu0 %v5938
    %7947 = vmatprep.subr.bf16.mxu0 %v5931
    %7948 = vmatpush2.bf16.msra.mxu0 %v5930
    %7949 = vmatprep.subr.bf16.mxu0 %v5923
    %7950 = vmatpush2.bf16.msra.mxu0 %v5922
    %7951 = vmatprep.subr.bf16.mxu0 %v5915
    %7952 = vmatpush2.bf16.msra.mxu0 %v5914
    %7953 = vmatprep.subr.bf16.mxu0 %v5907
    %7954 = vmatpush2.bf16.msra.mxu0 %v5906
    %7955 = vmatprep.subr.bf16.mxu0 %v5899
    %7956 = vmatpush2.bf16.msra.mxu0 %v5898
    %7957 = vmatprep.mubr.bf16.mxu0 %v795
    %7958 = vmatmul.mubr.bf16.gmra.mxu0 %v794
    %v7959 = vpop.f32.mrf.mxu0
    %v7960 = vadd.f32 %v7919, %v7959
    %v7961 = vpop.f32.mrf.mxu0
    %v7962 = vadd.f32 %v7921, %v7961
    %v7963 = vpop.f32.mrf.mxu0
    %v7964 = vpop.f32.mrf.mxu0
    %7965 = vdwg.mxu0
    %7966 = vmatprep.subr.bf16.mxu0 %v4997
    %7967 = vmatpush1.bf16.msra.mxu0 %v4996
    %7968 = vmatprep.subr.bf16.mxu0 %v4989
    %7969 = vmatpush1.bf16.msra.mxu0 %v4988
    %7970 = vmatprep.subr.bf16.mxu0 %v4981
    %7971 = vmatpush1.bf16.msra.mxu0 %v4980
    %7972 = vmatprep.subr.bf16.mxu0 %v4973
    %7973 = vmatpush1.bf16.msra.mxu0 %v4972
    %7974 = vmatprep.subr.bf16.mxu0 %v4965
    %7975 = vmatpush1.bf16.msra.mxu0 %v4964
    %7976 = vmatprep.subr.bf16.mxu0 %v4957
    %7977 = vmatpush1.bf16.msra.mxu0 %v4956
    %7978 = vmatprep.subr.bf16.mxu0 %v4949
    %7979 = vmatpush1.bf16.msra.mxu0 %v4948
    %7980 = vmatprep.subr.bf16.mxu0 %v4941
    %7981 = vmatpush1.bf16.msra.mxu0 %v4940
    %7982 = vmatprep.subr.bf16.mxu0 %v5061
    %7983 = vmatpush2.bf16.msra.mxu0 %v5060
    %7984 = vmatprep.subr.bf16.mxu0 %v5053
    %7985 = vmatpush2.bf16.msra.mxu0 %v5052
    %7986 = vmatprep.subr.bf16.mxu0 %v5045
    %7987 = vmatpush2.bf16.msra.mxu0 %v5044
    %7988 = vmatprep.subr.bf16.mxu0 %v5037
    %7989 = vmatpush2.bf16.msra.mxu0 %v5036
    %7990 = vmatprep.subr.bf16.mxu0 %v5029
    %7991 = vmatpush2.bf16.msra.mxu0 %v5028
    %7992 = vmatprep.subr.bf16.mxu0 %v5021
    %7993 = vmatpush2.bf16.msra.mxu0 %v5020
    %7994 = vmatprep.subr.bf16.mxu0 %v5013
    %7995 = vmatpush2.bf16.msra.mxu0 %v5012
    %7996 = vmatprep.subr.bf16.mxu0 %v5005
    %7997 = vmatpush2.bf16.msra.mxu0 %v5004
    %7998 = vmatprep.mubr.bf16.mxu0 %v781
    %7999 = vmatmul.mubr.bf16.gmra.mxu0 %v780
    %v8000 = vpop.f32.mrf.mxu0
    %v8001 = vadd.f32 %v1849, %v8000
    %v8002 = vpop.f32.mrf.mxu0
    %v8003 = vadd.f32 %v1853, %v8002
    %v8004 = vpop.f32.mrf.mxu0
    %v8005 = vpop.f32.mrf.mxu0
    %8006 = vdwg.mxu0
    %8007 = vmatprep.subr.bf16.mxu0 %v5125
    %8008 = vmatpush1.bf16.msra.mxu0 %v5124
    %8009 = vmatprep.subr.bf16.mxu0 %v5117
    %8010 = vmatpush1.bf16.msra.mxu0 %v5116
    %8011 = vmatprep.subr.bf16.mxu0 %v5109
    %8012 = vmatpush1.bf16.msra.mxu0 %v5108
    %8013 = vmatprep.subr.bf16.mxu0 %v5101
    %8014 = vmatpush1.bf16.msra.mxu0 %v5100
    %8015 = vmatprep.subr.bf16.mxu0 %v5093
    %8016 = vmatpush1.bf16.msra.mxu0 %v5092
    %8017 = vmatprep.subr.bf16.mxu0 %v5085
    %8018 = vmatpush1.bf16.msra.mxu0 %v5084
    %8019 = vmatprep.subr.bf16.mxu0 %v5077
    %8020 = vmatpush1.bf16.msra.mxu0 %v5076
    %8021 = vmatprep.subr.bf16.mxu0 %v5069
    %8022 = vmatpush1.bf16.msra.mxu0 %v5068
    %8023 = vmatprep.subr.bf16.mxu0 %v5189
    %8024 = vmatpush2.bf16.msra.mxu0 %v5188
    %8025 = vmatprep.subr.bf16.mxu0 %v5181
    %8026 = vmatpush2.bf16.msra.mxu0 %v5180
    %8027 = vmatprep.subr.bf16.mxu0 %v5173
    %8028 = vmatpush2.bf16.msra.mxu0 %v5172
    %8029 = vmatprep.subr.bf16.mxu0 %v5165
    %8030 = vmatpush2.bf16.msra.mxu0 %v5164
    %8031 = vmatprep.subr.bf16.mxu0 %v5157
    %8032 = vmatpush2.bf16.msra.mxu0 %v5156
    %8033 = vmatprep.subr.bf16.mxu0 %v5149
    %8034 = vmatpush2.bf16.msra.mxu0 %v5148
    %8035 = vmatprep.subr.bf16.mxu0 %v5141
    %8036 = vmatpush2.bf16.msra.mxu0 %v5140
    %8037 = vmatprep.subr.bf16.mxu0 %v5133
    %8038 = vmatpush2.bf16.msra.mxu0 %v5132
    %8039 = vmatprep.mubr.bf16.mxu0 %v783
    %8040 = vmatmul.mubr.bf16.gmra.mxu0 %v782
    %v8041 = vpop.f32.mrf.mxu0
    %v8042 = vadd.f32 %v8001, %v8041
    %v8043 = vpop.f32.mrf.mxu0
    %v8044 = vadd.f32 %v8003, %v8043
    %v8045 = vpop.f32.mrf.mxu0
    %v8046 = vpop.f32.mrf.mxu0
    %8047 = vdwg.mxu0
    %8048 = vmatprep.subr.bf16.mxu0 %v5253
    %8049 = vmatpush1.bf16.msra.mxu0 %v5252
    %8050 = vmatprep.subr.bf16.mxu0 %v5245
    %8051 = vmatpush1.bf16.msra.mxu0 %v5244
    %8052 = vmatprep.subr.bf16.mxu0 %v5237
    %8053 = vmatpush1.bf16.msra.mxu0 %v5236
    %8054 = vmatprep.subr.bf16.mxu0 %v5229
    %8055 = vmatpush1.bf16.msra.mxu0 %v5228
    %8056 = vmatprep.subr.bf16.mxu0 %v5221
    %8057 = vmatpush1.bf16.msra.mxu0 %v5220
    %8058 = vmatprep.subr.bf16.mxu0 %v5213
    %8059 = vmatpush1.bf16.msra.mxu0 %v5212
    %8060 = vmatprep.subr.bf16.mxu0 %v5205
    %8061 = vmatpush1.bf16.msra.mxu0 %v5204
    %8062 = vmatprep.subr.bf16.mxu0 %v5197
    %8063 = vmatpush1.bf16.msra.mxu0 %v5196
    %8064 = vmatprep.subr.bf16.mxu0 %v5317
    %8065 = vmatpush2.bf16.msra.mxu0 %v5316
    %8066 = vmatprep.subr.bf16.mxu0 %v5309
    %8067 = vmatpush2.bf16.msra.mxu0 %v5308
    %8068 = vmatprep.subr.bf16.mxu0 %v5301
    %8069 = vmatpush2.bf16.msra.mxu0 %v5300
    %8070 = vmatprep.subr.bf16.mxu0 %v5293
    %8071 = vmatpush2.bf16.msra.mxu0 %v5292
    %8072 = vmatprep.subr.bf16.mxu0 %v5285
    %8073 = vmatpush2.bf16.msra.mxu0 %v5284
    %8074 = vmatprep.subr.bf16.mxu0 %v5277
    %8075 = vmatpush2.bf16.msra.mxu0 %v5276
    %8076 = vmatprep.subr.bf16.mxu0 %v5269
    %8077 = vmatpush2.bf16.msra.mxu0 %v5268
    %8078 = vmatprep.subr.bf16.mxu0 %v5261
    %8079 = vmatpush2.bf16.msra.mxu0 %v5260
    %8080 = vmatprep.mubr.bf16.mxu0 %v785
    %8081 = vmatmul.mubr.bf16.gmra.mxu0 %v784
    %v8082 = vpop.f32.mrf.mxu0
    %v8083 = vadd.f32 %v8042, %v8082
    %v8084 = vpop.f32.mrf.mxu0
    %v8085 = vadd.f32 %v8044, %v8084
    %v8086 = vpop.f32.mrf.mxu0
    %v8087 = vpop.f32.mrf.mxu0
    %8088 = vdwg.mxu0
    %8089 = vmatprep.subr.bf16.mxu0 %v5381
    %8090 = vmatpush1.bf16.msra.mxu0 %v5380
    %8091 = vmatprep.subr.bf16.mxu0 %v5373
    %8092 = vmatpush1.bf16.msra.mxu0 %v5372
    %8093 = vmatprep.subr.bf16.mxu0 %v5365
    %8094 = vmatpush1.bf16.msra.mxu0 %v5364
    %8095 = vmatprep.subr.bf16.mxu0 %v5357
    %8096 = vmatpush1.bf16.msra.mxu0 %v5356
    %8097 = vmatprep.subr.bf16.mxu0 %v5349
    %8098 = vmatpush1.bf16.msra.mxu0 %v5348
    %8099 = vmatprep.subr.bf16.mxu0 %v5341
    %8100 = vmatpush1.bf16.msra.mxu0 %v5340
    %8101 = vmatprep.subr.bf16.mxu0 %v5333
    %8102 = vmatpush1.bf16.msra.mxu0 %v5332
    %8103 = vmatprep.subr.bf16.mxu0 %v5325
    %8104 = vmatpush1.bf16.msra.mxu0 %v5324
    %8105 = vmatprep.subr.bf16.mxu0 %v5445
    %8106 = vmatpush2.bf16.msra.mxu0 %v5444
    %8107 = vmatprep.subr.bf16.mxu0 %v5437
    %8108 = vmatpush2.bf16.msra.mxu0 %v5436
    %8109 = vmatprep.subr.bf16.mxu0 %v5429
    %8110 = vmatpush2.bf16.msra.mxu0 %v5428
    %8111 = vmatprep.subr.bf16.mxu0 %v5421
    %8112 = vmatpush2.bf16.msra.mxu0 %v5420
    %8113 = vmatprep.subr.bf16.mxu0 %v5413
    %8114 = vmatpush2.bf16.msra.mxu0 %v5412
    %8115 = vmatprep.subr.bf16.mxu0 %v5405
    %8116 = vmatpush2.bf16.msra.mxu0 %v5404
    %8117 = vmatprep.subr.bf16.mxu0 %v5397
    %8118 = vmatpush2.bf16.msra.mxu0 %v5396
    %8119 = vmatprep.subr.bf16.mxu0 %v5389
    %8120 = vmatpush2.bf16.msra.mxu0 %v5388
    %8121 = vmatprep.mubr.bf16.mxu0 %v787
    %8122 = vmatmul.mubr.bf16.gmra.mxu0 %v786
    %v8123 = vpop.f32.mrf.mxu0
    %v8124 = vadd.f32 %v8083, %v8123
    %v8125 = vpop.f32.mrf.mxu0
    %v8126 = vadd.f32 %v8085, %v8125
    %v8127 = vpop.f32.mrf.mxu0
    %v8128 = vpop.f32.mrf.mxu0
    %8129 = vdwg.mxu0
    %8130 = vmatprep.subr.bf16.mxu0 %v5509
    %8131 = vmatpush1.bf16.msra.mxu0 %v5508
    %8132 = vmatprep.subr.bf16.mxu0 %v5501
    %8133 = vmatpush1.bf16.msra.mxu0 %v5500
    %8134 = vmatprep.subr.bf16.mxu0 %v5493
    %8135 = vmatpush1.bf16.msra.mxu0 %v5492
    %8136 = vmatprep.subr.bf16.mxu0 %v5485
    %8137 = vmatpush1.bf16.msra.mxu0 %v5484
    %8138 = vmatprep.subr.bf16.mxu0 %v5477
    %8139 = vmatpush1.bf16.msra.mxu0 %v5476
    %8140 = vmatprep.subr.bf16.mxu0 %v5469
    %8141 = vmatpush1.bf16.msra.mxu0 %v5468
    %8142 = vmatprep.subr.bf16.mxu0 %v5461
    %8143 = vmatpush1.bf16.msra.mxu0 %v5460
    %8144 = vmatprep.subr.bf16.mxu0 %v5453
    %8145 = vmatpush1.bf16.msra.mxu0 %v5452
    %8146 = vmatprep.subr.bf16.mxu0 %v5573
    %8147 = vmatpush2.bf16.msra.mxu0 %v5572
    %8148 = vmatprep.subr.bf16.mxu0 %v5565
    %8149 = vmatpush2.bf16.msra.mxu0 %v5564
    %8150 = vmatprep.subr.bf16.mxu0 %v5557
    %8151 = vmatpush2.bf16.msra.mxu0 %v5556
    %8152 = vmatprep.subr.bf16.mxu0 %v5549
    %8153 = vmatpush2.bf16.msra.mxu0 %v5548
    %8154 = vmatprep.subr.bf16.mxu0 %v5541
    %8155 = vmatpush2.bf16.msra.mxu0 %v5540
    %8156 = vmatprep.subr.bf16.mxu0 %v5533
    %8157 = vmatpush2.bf16.msra.mxu0 %v5532
    %8158 = vmatprep.subr.bf16.mxu0 %v5525
    %8159 = vmatpush2.bf16.msra.mxu0 %v5524
    %8160 = vmatprep.subr.bf16.mxu0 %v5517
    %8161 = vmatpush2.bf16.msra.mxu0 %v5516
    %8162 = vmatprep.mubr.bf16.mxu0 %v789
    %8163 = vmatmul.mubr.bf16.gmra.mxu0 %v788
    %v8164 = vpop.f32.mrf.mxu0
    %v8165 = vadd.f32 %v8124, %v8164
    %v8166 = vpop.f32.mrf.mxu0
    %v8167 = vadd.f32 %v8126, %v8166
    %v8168 = vpop.f32.mrf.mxu0
    %v8169 = vpop.f32.mrf.mxu0
    %8170 = vdwg.mxu0
    %8171 = vmatprep.subr.bf16.mxu0 %v5637
    %8172 = vmatpush1.bf16.msra.mxu0 %v5636
    %8173 = vmatprep.subr.bf16.mxu0 %v5629
    %8174 = vmatpush1.bf16.msra.mxu0 %v5628
    %8175 = vmatprep.subr.bf16.mxu0 %v5621
    %8176 = vmatpush1.bf16.msra.mxu0 %v5620
    %8177 = vmatprep.subr.bf16.mxu0 %v5613
    %8178 = vmatpush1.bf16.msra.mxu0 %v5612
    %8179 = vmatprep.subr.bf16.mxu0 %v5605
    %8180 = vmatpush1.bf16.msra.mxu0 %v5604
    %8181 = vmatprep.subr.bf16.mxu0 %v5597
    %8182 = vmatpush1.bf16.msra.mxu0 %v5596
    %8183 = vmatprep.subr.bf16.mxu0 %v5589
    %8184 = vmatpush1.bf16.msra.mxu0 %v5588
    %8185 = vmatprep.subr.bf16.mxu0 %v5581
    %8186 = vmatpush1.bf16.msra.mxu0 %v5580
    %8187 = vmatprep.subr.bf16.mxu0 %v5701
    %8188 = vmatpush2.bf16.msra.mxu0 %v5700
    %8189 = vmatprep.subr.bf16.mxu0 %v5693
    %8190 = vmatpush2.bf16.msra.mxu0 %v5692
    %8191 = vmatprep.subr.bf16.mxu0 %v5685
    %8192 = vmatpush2.bf16.msra.mxu0 %v5684
    %8193 = vmatprep.subr.bf16.mxu0 %v5677
    %8194 = vmatpush2.bf16.msra.mxu0 %v5676
    %8195 = vmatprep.subr.bf16.mxu0 %v5669
    %8196 = vmatpush2.bf16.msra.mxu0 %v5668
    %8197 = vmatprep.subr.bf16.mxu0 %v5661
    %8198 = vmatpush2.bf16.msra.mxu0 %v5660
    %8199 = vmatprep.subr.bf16.mxu0 %v5653
    %8200 = vmatpush2.bf16.msra.mxu0 %v5652
    %8201 = vmatprep.subr.bf16.mxu0 %v5645
    %8202 = vmatpush2.bf16.msra.mxu0 %v5644
    %8203 = vmatprep.mubr.bf16.mxu0 %v791
    %8204 = vmatmul.mubr.bf16.gmra.mxu0 %v790
    %v8205 = vpop.f32.mrf.mxu0
    %v8206 = vadd.f32 %v8165, %v8205
    %v8207 = vpop.f32.mrf.mxu0
    %v8208 = vadd.f32 %v8167, %v8207
    %v8209 = vpop.f32.mrf.mxu0
    %v8210 = vpop.f32.mrf.mxu0
    %8211 = vdwg.mxu0
    %8212 = vmatprep.subr.bf16.mxu0 %v5765
    %8213 = vmatpush1.bf16.msra.mxu0 %v5764
    %8214 = vmatprep.subr.bf16.mxu0 %v5757
    %8215 = vmatpush1.bf16.msra.mxu0 %v5756
    %8216 = vmatprep.subr.bf16.mxu0 %v5749
    %8217 = vmatpush1.bf16.msra.mxu0 %v5748
    %8218 = vmatprep.subr.bf16.mxu0 %v5741
    %8219 = vmatpush1.bf16.msra.mxu0 %v5740
    %8220 = vmatprep.subr.bf16.mxu0 %v5733
    %8221 = vmatpush1.bf16.msra.mxu0 %v5732
    %8222 = vmatprep.subr.bf16.mxu0 %v5725
    %8223 = vmatpush1.bf16.msra.mxu0 %v5724
    %8224 = vmatprep.subr.bf16.mxu0 %v5717
    %8225 = vmatpush1.bf16.msra.mxu0 %v5716
    %8226 = vmatprep.subr.bf16.mxu0 %v5709
    %8227 = vmatpush1.bf16.msra.mxu0 %v5708
    %8228 = vmatprep.subr.bf16.mxu0 %v5829
    %8229 = vmatpush2.bf16.msra.mxu0 %v5828
    %8230 = vmatprep.subr.bf16.mxu0 %v5821
    %8231 = vmatpush2.bf16.msra.mxu0 %v5820
    %8232 = vmatprep.subr.bf16.mxu0 %v5813
    %8233 = vmatpush2.bf16.msra.mxu0 %v5812
    %8234 = vmatprep.subr.bf16.mxu0 %v5805
    %8235 = vmatpush2.bf16.msra.mxu0 %v5804
    %8236 = vmatprep.subr.bf16.mxu0 %v5797
    %8237 = vmatpush2.bf16.msra.mxu0 %v5796
    %8238 = vmatprep.subr.bf16.mxu0 %v5789
    %8239 = vmatpush2.bf16.msra.mxu0 %v5788
    %8240 = vmatprep.subr.bf16.mxu0 %v5781
    %8241 = vmatpush2.bf16.msra.mxu0 %v5780
    %8242 = vmatprep.subr.bf16.mxu0 %v5773
    %8243 = vmatpush2.bf16.msra.mxu0 %v5772
    %8244 = vmatprep.mubr.bf16.mxu0 %v793
    %8245 = vmatmul.mubr.bf16.gmra.mxu0 %v792
    %v8246 = vpop.f32.mrf.mxu0
    %v8247 = vadd.f32 %v8206, %v8246
    %v8248 = vpop.f32.mrf.mxu0
    %v8249 = vadd.f32 %v8208, %v8248
    %v8250 = vpop.f32.mrf.mxu0
    %v8251 = vpop.f32.mrf.mxu0
    %8252 = vdwg.mxu0
    %8253 = vmatprep.subr.bf16.mxu0 %v5893
    %8254 = vmatpush1.bf16.msra.mxu0 %v5892
    %8255 = vmatprep.subr.bf16.mxu0 %v5885
    %8256 = vmatpush1.bf16.msra.mxu0 %v5884
    %8257 = vmatprep.subr.bf16.mxu0 %v5877
    %8258 = vmatpush1.bf16.msra.mxu0 %v5876
    %8259 = vmatprep.subr.bf16.mxu0 %v5869
    %8260 = vmatpush1.bf16.msra.mxu0 %v5868
    %8261 = vmatprep.subr.bf16.mxu0 %v5861
    %8262 = vmatpush1.bf16.msra.mxu0 %v5860
    %8263 = vmatprep.subr.bf16.mxu0 %v5853
    %8264 = vmatpush1.bf16.msra.mxu0 %v5852
    %8265 = vmatprep.subr.bf16.mxu0 %v5845
    %8266 = vmatpush1.bf16.msra.mxu0 %v5844
    %8267 = vmatprep.subr.bf16.mxu0 %v5837
    %8268 = vmatpush1.bf16.msra.mxu0 %v5836
    %8269 = vmatprep.subr.bf16.mxu0 %v5957
    %8270 = vmatpush2.bf16.msra.mxu0 %v5956
    %8271 = vmatprep.subr.bf16.mxu0 %v5949
    %8272 = vmatpush2.bf16.msra.mxu0 %v5948
    %8273 = vmatprep.subr.bf16.mxu0 %v5941
    %8274 = vmatpush2.bf16.msra.mxu0 %v5940
    %8275 = vmatprep.subr.bf16.mxu0 %v5933
    %8276 = vmatpush2.bf16.msra.mxu0 %v5932
    %8277 = vmatprep.subr.bf16.mxu0 %v5925
    %8278 = vmatpush2.bf16.msra.mxu0 %v5924
    %8279 = vmatprep.subr.bf16.mxu0 %v5917
    %8280 = vmatpush2.bf16.msra.mxu0 %v5916
    %8281 = vmatprep.subr.bf16.mxu0 %v5909
    %8282 = vmatpush2.bf16.msra.mxu0 %v5908
    %8283 = vmatprep.subr.bf16.mxu0 %v5901
    %8284 = vmatpush2.bf16.msra.mxu0 %v5900
    %8285 = vmatprep.mubr.bf16.mxu0 %v795
    %8286 = vmatmul.mubr.bf16.gmra.mxu0 %v794
    %v8287 = vpop.f32.mrf.mxu0
    %v8288 = vadd.f32 %v8247, %v8287
    %v8289 = vpop.f32.mrf.mxu0
    %v8290 = vadd.f32 %v8249, %v8289
    %v8291 = vpop.f32.mrf.mxu0
    %v8292 = vpop.f32.mrf.mxu0
    %8293 = vdwg.mxu0
    %vm8294 = vcmp.gt.f32.partialorder %v7304, 0.0
    %vm8295 = vcmp.gt.f32.partialorder %v7306, 0.0
    %vm8296 = vcmp.gt.f32.partialorder %v7632, 0.0
    %vm8297 = vcmp.gt.f32.partialorder %v7634, 0.0
    %vm8298 = vcmp.gt.f32.partialorder %v7960, 0.0
    %vm8299 = vcmp.gt.f32.partialorder %v7962, 0.0
    %vm8300 = vcmp.gt.f32.partialorder %v8288, 0.0
    %vm8301 = vcmp.gt.f32.partialorder %v8290, 0.0
    %v8302 = vmul.f32 %v7304, 0.2
    %v8303 = vmul.f32 %v7306, 0.2
    %v8304 = vmul.f32 %v7632, 0.2
    %v8305 = vmul.f32 %v7634, 0.2
    %v8306 = vmul.f32 %v7960, 0.2
    %v8307 = vmul.f32 %v7962, 0.2
    %v8308 = vmul.f32 %v8288, 0.2
    %v8309 = vmul.f32 %v8290, 0.2
    %v8310 = vsel %vm8294, %v7304, %v8302
    %v8311 = vsel %vm8295, %v7306, %v8303
    %v8312 = vsel %vm8296, %v7632, %v8304
    %v8313 = vsel %vm8297, %v7634, %v8305
    %v8314 = vsel %vm8298, %v7960, %v8306
    %v8315 = vsel %vm8299, %v7962, %v8307
    %v8316 = vsel %vm8300, %v8288, %v8308
    %v8317 = vsel %vm8301, %v8290, %v8309
    %v8318 = vpack.c.bf16 %v8310, %v8310
    %v8319 = vpack.c.bf16 %v8311, %v8311
    %v8320 = vpack.c.bf16 %v8312, %v8312
    %v8321 = vpack.c.bf16 %v8313, %v8313
    %v8322 = vpack.c.bf16 %v8314, %v8314
    %v8323 = vpack.c.bf16 %v8315, %v8315
    %v8324 = vpack.c.bf16 %v8316, %v8316
    %v8325 = vpack.c.bf16 %v8317, %v8317
    %v8326 = vld [vmem:[#allocation11] sm:$0xff]
    %v8327 = vld [vmem:[#allocation11 + $0x8] sm:$0xff]
    %v8328 = vld [vmem:[#allocation11 + $0x10] sm:$0xff]
    %v8329 = vld [vmem:[#allocation11 + $0x18] sm:$0xff]
    %v8330 = vld [vmem:[#allocation11 + $0x20] sm:$0xff]
    %v8331 = vld [vmem:[#allocation11 + $0x28] sm:$0xff]
    %v8332 = vld [vmem:[#allocation11 + $0x30] sm:$0xff]
    %v8333 = vld [vmem:[#allocation11 + $0x38] sm:$0xff]
    %v8334 = vld [vmem:[#allocation11 + $0x40] sm:$0xff]
    %v8335 = vld [vmem:[#allocation11 + $0x48] sm:$0xff]
    %v8336 = vld [vmem:[#allocation11 + $0x50] sm:$0xff]
    %v8337 = vld [vmem:[#allocation11 + $0x58] sm:$0xff]
    %v8338 = vld [vmem:[#allocation11 + $0x60] sm:$0xff]
    %v8339 = vld [vmem:[#allocation11 + $0x68] sm:$0xff]
    %v8340 = vld [vmem:[#allocation11 + $0x70] sm:$0xff]
    %v8341 = vld [vmem:[#allocation11 + $0x78] sm:$0xff]
    %v8342 = vld [vmem:[#allocation11 + $0x80] sm:$0xff]
    %v8343 = vld [vmem:[#allocation11 + $0x88] sm:$0xff]
    %v8344 = vld [vmem:[#allocation11 + $0x90] sm:$0xff]
    %v8345 = vld [vmem:[#allocation11 + $0x98] sm:$0xff]
    %v8346 = vld [vmem:[#allocation11 + $0xa0] sm:$0xff]
    %v8347 = vld [vmem:[#allocation11 + $0xa8] sm:$0xff]
    %v8348 = vld [vmem:[#allocation11 + $0xb0] sm:$0xff]
    %v8349 = vld [vmem:[#allocation11 + $0xb8] sm:$0xff]
    %v8350 = vld [vmem:[#allocation11 + $0xc0] sm:$0xff]
    %v8351 = vld [vmem:[#allocation11 + $0xc8] sm:$0xff]
    %v8352 = vld [vmem:[#allocation11 + $0xd0] sm:$0xff]
    %v8353 = vld [vmem:[#allocation11 + $0xd8] sm:$0xff]
    %v8354 = vld [vmem:[#allocation11 + $0xe0] sm:$0xff]
    %v8355 = vld [vmem:[#allocation11 + $0xe8] sm:$0xff]
    %v8356 = vld [vmem:[#allocation11 + $0xf0] sm:$0xff]
    %v8357 = vld [vmem:[#allocation11 + $0xf8] sm:$0xff]
    %v8358 = vld [vmem:[#allocation11 + $0x100] sm:$0xff]
    %v8359 = vld [vmem:[#allocation11 + $0x108] sm:$0xff]
    %v8360 = vld [vmem:[#allocation11 + $0x110] sm:$0xff]
    %v8361 = vld [vmem:[#allocation11 + $0x118] sm:$0xff]
    %v8362 = vld [vmem:[#allocation11 + $0x120] sm:$0xff]
    %v8363 = vld [vmem:[#allocation11 + $0x128] sm:$0xff]
    %v8364 = vld [vmem:[#allocation11 + $0x130] sm:$0xff]
    %v8365 = vld [vmem:[#allocation11 + $0x138] sm:$0xff]
    %v8366 = vld [vmem:[#allocation11 + $0x140] sm:$0xff]
    %v8367 = vld [vmem:[#allocation11 + $0x148] sm:$0xff]
    %v8368 = vld [vmem:[#allocation11 + $0x150] sm:$0xff]
    %v8369 = vld [vmem:[#allocation11 + $0x158] sm:$0xff]
    %v8370 = vld [vmem:[#allocation11 + $0x160] sm:$0xff]
    %v8371 = vld [vmem:[#allocation11 + $0x168] sm:$0xff]
    %v8372 = vld [vmem:[#allocation11 + $0x170] sm:$0xff]
    %v8373 = vld [vmem:[#allocation11 + $0x178] sm:$0xff]
    %v8374 = vld [vmem:[#allocation11 + $0x180] sm:$0xff]
    %v8375 = vld [vmem:[#allocation11 + $0x188] sm:$0xff]
    %v8376 = vld [vmem:[#allocation11 + $0x190] sm:$0xff]
    %v8377 = vld [vmem:[#allocation11 + $0x198] sm:$0xff]
    %v8378 = vld [vmem:[#allocation11 + $0x1a0] sm:$0xff]
    %v8379 = vld [vmem:[#allocation11 + $0x1a8] sm:$0xff]
    %v8380 = vld [vmem:[#allocation11 + $0x1b0] sm:$0xff]
    %v8381 = vld [vmem:[#allocation11 + $0x1b8] sm:$0xff]
    %v8382 = vld [vmem:[#allocation11 + $0x1c0] sm:$0xff]
    %v8383 = vld [vmem:[#allocation11 + $0x1c8] sm:$0xff]
    %v8384 = vld [vmem:[#allocation11 + $0x1d0] sm:$0xff]
    %v8385 = vld [vmem:[#allocation11 + $0x1d8] sm:$0xff]
    %v8386 = vld [vmem:[#allocation11 + $0x1e0] sm:$0xff]
    %v8387 = vld [vmem:[#allocation11 + $0x1e8] sm:$0xff]
    %v8388 = vld [vmem:[#allocation11 + $0x1f0] sm:$0xff]
    %v8389 = vld [vmem:[#allocation11 + $0x1f8] sm:$0xff]
    %v8390 = vld [vmem:[#allocation11 + $0x200] sm:$0xff]
    %v8391 = vld [vmem:[#allocation11 + $0x208] sm:$0xff]
    %v8392 = vld [vmem:[#allocation11 + $0x210] sm:$0xff]
    %v8393 = vld [vmem:[#allocation11 + $0x218] sm:$0xff]
    %v8394 = vld [vmem:[#allocation11 + $0x220] sm:$0xff]
    %v8395 = vld [vmem:[#allocation11 + $0x228] sm:$0xff]
    %v8396 = vld [vmem:[#allocation11 + $0x230] sm:$0xff]
    %v8397 = vld [vmem:[#allocation11 + $0x238] sm:$0xff]
    %v8398 = vld [vmem:[#allocation11 + $0x240] sm:$0xff]
    %v8399 = vld [vmem:[#allocation11 + $0x248] sm:$0xff]
    %v8400 = vld [vmem:[#allocation11 + $0x250] sm:$0xff]
    %v8401 = vld [vmem:[#allocation11 + $0x258] sm:$0xff]
    %v8402 = vld [vmem:[#allocation11 + $0x260] sm:$0xff]
    %v8403 = vld [vmem:[#allocation11 + $0x268] sm:$0xff]
    %v8404 = vld [vmem:[#allocation11 + $0x270] sm:$0xff]
    %v8405 = vld [vmem:[#allocation11 + $0x278] sm:$0xff]
    %v8406 = vld [vmem:[#allocation11 + $0x280] sm:$0xff]
    %v8407 = vld [vmem:[#allocation11 + $0x288] sm:$0xff]
    %v8408 = vld [vmem:[#allocation11 + $0x290] sm:$0xff]
    %v8409 = vld [vmem:[#allocation11 + $0x298] sm:$0xff]
    %v8410 = vld [vmem:[#allocation11 + $0x2a0] sm:$0xff]
    %v8411 = vld [vmem:[#allocation11 + $0x2a8] sm:$0xff]
    %v8412 = vld [vmem:[#allocation11 + $0x2b0] sm:$0xff]
    %v8413 = vld [vmem:[#allocation11 + $0x2b8] sm:$0xff]
    %v8414 = vld [vmem:[#allocation11 + $0x2c0] sm:$0xff]
    %v8415 = vld [vmem:[#allocation11 + $0x2c8] sm:$0xff]
    %v8416 = vld [vmem:[#allocation11 + $0x2d0] sm:$0xff]
    %v8417 = vld [vmem:[#allocation11 + $0x2d8] sm:$0xff]
    %v8418 = vld [vmem:[#allocation11 + $0x2e0] sm:$0xff]
    %v8419 = vld [vmem:[#allocation11 + $0x2e8] sm:$0xff]
    %v8420 = vld [vmem:[#allocation11 + $0x2f0] sm:$0xff]
    %v8421 = vld [vmem:[#allocation11 + $0x2f8] sm:$0xff]
    %v8422 = vld [vmem:[#allocation11 + $0x300] sm:$0xff]
    %v8423 = vld [vmem:[#allocation11 + $0x308] sm:$0xff]
    %v8424 = vld [vmem:[#allocation11 + $0x310] sm:$0xff]
    %v8425 = vld [vmem:[#allocation11 + $0x318] sm:$0xff]
    %v8426 = vld [vmem:[#allocation11 + $0x320] sm:$0xff]
    %v8427 = vld [vmem:[#allocation11 + $0x328] sm:$0xff]
    %v8428 = vld [vmem:[#allocation11 + $0x330] sm:$0xff]
    %v8429 = vld [vmem:[#allocation11 + $0x338] sm:$0xff]
    %v8430 = vld [vmem:[#allocation11 + $0x340] sm:$0xff]
    %v8431 = vld [vmem:[#allocation11 + $0x348] sm:$0xff]
    %v8432 = vld [vmem:[#allocation11 + $0x350] sm:$0xff]
    %v8433 = vld [vmem:[#allocation11 + $0x358] sm:$0xff]
    %v8434 = vld [vmem:[#allocation11 + $0x360] sm:$0xff]
    %v8435 = vld [vmem:[#allocation11 + $0x368] sm:$0xff]
    %v8436 = vld [vmem:[#allocation11 + $0x370] sm:$0xff]
    %v8437 = vld [vmem:[#allocation11 + $0x378] sm:$0xff]
    %v8438 = vld [vmem:[#allocation11 + $0x380] sm:$0xff]
    %v8439 = vld [vmem:[#allocation11 + $0x388] sm:$0xff]
    %v8440 = vld [vmem:[#allocation11 + $0x390] sm:$0xff]
    %v8441 = vld [vmem:[#allocation11 + $0x398] sm:$0xff]
    %v8442 = vld [vmem:[#allocation11 + $0x3a0] sm:$0xff]
    %v8443 = vld [vmem:[#allocation11 + $0x3a8] sm:$0xff]
    %v8444 = vld [vmem:[#allocation11 + $0x3b0] sm:$0xff]
    %v8445 = vld [vmem:[#allocation11 + $0x3b8] sm:$0xff]
    %v8446 = vld [vmem:[#allocation11 + $0x3c0] sm:$0xff]
    %v8447 = vld [vmem:[#allocation11 + $0x3c8] sm:$0xff]
    %v8448 = vld [vmem:[#allocation11 + $0x3d0] sm:$0xff]
    %v8449 = vld [vmem:[#allocation11 + $0x3d8] sm:$0xff]
    %v8450 = vld [vmem:[#allocation11 + $0x3e0] sm:$0xff]
    %v8451 = vld [vmem:[#allocation11 + $0x3e8] sm:$0xff]
    %v8452 = vld [vmem:[#allocation11 + $0x3f0] sm:$0xff]
    %v8453 = vld [vmem:[#allocation11 + $0x3f8] sm:$0xff]
    %v8454 = vld [vmem:[#allocation11 + $0x400] sm:$0xff]
    %v8455 = vld [vmem:[#allocation11 + $0x408] sm:$0xff]
    %v8456 = vld [vmem:[#allocation11 + $0x410] sm:$0xff]
    %v8457 = vld [vmem:[#allocation11 + $0x418] sm:$0xff]
    %v8458 = vld [vmem:[#allocation11 + $0x420] sm:$0xff]
    %v8459 = vld [vmem:[#allocation11 + $0x428] sm:$0xff]
    %v8460 = vld [vmem:[#allocation11 + $0x430] sm:$0xff]
    %v8461 = vld [vmem:[#allocation11 + $0x438] sm:$0xff]
    %v8462 = vld [vmem:[#allocation11 + $0x440] sm:$0xff]
    %v8463 = vld [vmem:[#allocation11 + $0x448] sm:$0xff]
    %v8464 = vld [vmem:[#allocation11 + $0x450] sm:$0xff]
    %v8465 = vld [vmem:[#allocation11 + $0x458] sm:$0xff]
    %v8466 = vld [vmem:[#allocation11 + $0x460] sm:$0xff]
    %v8467 = vld [vmem:[#allocation11 + $0x468] sm:$0xff]
    %v8468 = vld [vmem:[#allocation11 + $0x470] sm:$0xff]
    %v8469 = vld [vmem:[#allocation11 + $0x478] sm:$0xff]
    %v8470 = vld [vmem:[#allocation11 + $0x480] sm:$0xff]
    %v8471 = vld [vmem:[#allocation11 + $0x488] sm:$0xff]
    %v8472 = vld [vmem:[#allocation11 + $0x490] sm:$0xff]
    %v8473 = vld [vmem:[#allocation11 + $0x498] sm:$0xff]
    %v8474 = vld [vmem:[#allocation11 + $0x4a0] sm:$0xff]
    %v8475 = vld [vmem:[#allocation11 + $0x4a8] sm:$0xff]
    %v8476 = vld [vmem:[#allocation11 + $0x4b0] sm:$0xff]
    %v8477 = vld [vmem:[#allocation11 + $0x4b8] sm:$0xff]
    %v8478 = vld [vmem:[#allocation11 + $0x4c0] sm:$0xff]
    %v8479 = vld [vmem:[#allocation11 + $0x4c8] sm:$0xff]
    %v8480 = vld [vmem:[#allocation11 + $0x4d0] sm:$0xff]
    %v8481 = vld [vmem:[#allocation11 + $0x4d8] sm:$0xff]
    %v8482 = vld [vmem:[#allocation11 + $0x4e0] sm:$0xff]
    %v8483 = vld [vmem:[#allocation11 + $0x4e8] sm:$0xff]
    %v8484 = vld [vmem:[#allocation11 + $0x4f0] sm:$0xff]
    %v8485 = vld [vmem:[#allocation11 + $0x4f8] sm:$0xff]
    %v8486 = vld [vmem:[#allocation11 + $0x500] sm:$0xff]
    %v8487 = vld [vmem:[#allocation11 + $0x508] sm:$0xff]
    %v8488 = vld [vmem:[#allocation11 + $0x510] sm:$0xff]
    %v8489 = vld [vmem:[#allocation11 + $0x518] sm:$0xff]
    %v8490 = vld [vmem:[#allocation11 + $0x520] sm:$0xff]
    %v8491 = vld [vmem:[#allocation11 + $0x528] sm:$0xff]
    %v8492 = vld [vmem:[#allocation11 + $0x530] sm:$0xff]
    %v8493 = vld [vmem:[#allocation11 + $0x538] sm:$0xff]
    %v8494 = vld [vmem:[#allocation11 + $0x540] sm:$0xff]
    %v8495 = vld [vmem:[#allocation11 + $0x548] sm:$0xff]
    %v8496 = vld [vmem:[#allocation11 + $0x550] sm:$0xff]
    %v8497 = vld [vmem:[#allocation11 + $0x558] sm:$0xff]
    %v8498 = vld [vmem:[#allocation11 + $0x560] sm:$0xff]
    %v8499 = vld [vmem:[#allocation11 + $0x568] sm:$0xff]
    %v8500 = vld [vmem:[#allocation11 + $0x570] sm:$0xff]
    %v8501 = vld [vmem:[#allocation11 + $0x578] sm:$0xff]
    %v8502 = vld [vmem:[#allocation11 + $0x580] sm:$0xff]
    %v8503 = vld [vmem:[#allocation11 + $0x588] sm:$0xff]
    %v8504 = vld [vmem:[#allocation11 + $0x590] sm:$0xff]
    %v8505 = vld [vmem:[#allocation11 + $0x598] sm:$0xff]
    %v8506 = vld [vmem:[#allocation11 + $0x5a0] sm:$0xff]
    %v8507 = vld [vmem:[#allocation11 + $0x5a8] sm:$0xff]
    %v8508 = vld [vmem:[#allocation11 + $0x5b0] sm:$0xff]
    %v8509 = vld [vmem:[#allocation11 + $0x5b8] sm:$0xff]
    %v8510 = vld [vmem:[#allocation11 + $0x5c0] sm:$0xff]
    %v8511 = vld [vmem:[#allocation11 + $0x5c8] sm:$0xff]
    %v8512 = vld [vmem:[#allocation11 + $0x5d0] sm:$0xff]
    %v8513 = vld [vmem:[#allocation11 + $0x5d8] sm:$0xff]
    %v8514 = vld [vmem:[#allocation11 + $0x5e0] sm:$0xff]
    %v8515 = vld [vmem:[#allocation11 + $0x5e8] sm:$0xff]
    %v8516 = vld [vmem:[#allocation11 + $0x5f0] sm:$0xff]
    %v8517 = vld [vmem:[#allocation11 + $0x5f8] sm:$0xff]
    %v8518 = vld [vmem:[#allocation11 + $0x600] sm:$0xff]
    %v8519 = vld [vmem:[#allocation11 + $0x608] sm:$0xff]
    %v8520 = vld [vmem:[#allocation11 + $0x610] sm:$0xff]
    %v8521 = vld [vmem:[#allocation11 + $0x618] sm:$0xff]
    %v8522 = vld [vmem:[#allocation11 + $0x620] sm:$0xff]
    %v8523 = vld [vmem:[#allocation11 + $0x628] sm:$0xff]
    %v8524 = vld [vmem:[#allocation11 + $0x630] sm:$0xff]
    %v8525 = vld [vmem:[#allocation11 + $0x638] sm:$0xff]
    %v8526 = vld [vmem:[#allocation11 + $0x640] sm:$0xff]
    %v8527 = vld [vmem:[#allocation11 + $0x648] sm:$0xff]
    %v8528 = vld [vmem:[#allocation11 + $0x650] sm:$0xff]
    %v8529 = vld [vmem:[#allocation11 + $0x658] sm:$0xff]
    %v8530 = vld [vmem:[#allocation11 + $0x660] sm:$0xff]
    %v8531 = vld [vmem:[#allocation11 + $0x668] sm:$0xff]
    %v8532 = vld [vmem:[#allocation11 + $0x670] sm:$0xff]
    %v8533 = vld [vmem:[#allocation11 + $0x678] sm:$0xff]
    %v8534 = vld [vmem:[#allocation11 + $0x680] sm:$0xff]
    %v8535 = vld [vmem:[#allocation11 + $0x688] sm:$0xff]
    %v8536 = vld [vmem:[#allocation11 + $0x690] sm:$0xff]
    %v8537 = vld [vmem:[#allocation11 + $0x698] sm:$0xff]
    %v8538 = vld [vmem:[#allocation11 + $0x6a0] sm:$0xff]
    %v8539 = vld [vmem:[#allocation11 + $0x6a8] sm:$0xff]
    %v8540 = vld [vmem:[#allocation11 + $0x6b0] sm:$0xff]
    %v8541 = vld [vmem:[#allocation11 + $0x6b8] sm:$0xff]
    %v8542 = vld [vmem:[#allocation11 + $0x6c0] sm:$0xff]
    %v8543 = vld [vmem:[#allocation11 + $0x6c8] sm:$0xff]
    %v8544 = vld [vmem:[#allocation11 + $0x6d0] sm:$0xff]
    %v8545 = vld [vmem:[#allocation11 + $0x6d8] sm:$0xff]
    %v8546 = vld [vmem:[#allocation11 + $0x6e0] sm:$0xff]
    %v8547 = vld [vmem:[#allocation11 + $0x6e8] sm:$0xff]
    %v8548 = vld [vmem:[#allocation11 + $0x6f0] sm:$0xff]
    %v8549 = vld [vmem:[#allocation11 + $0x6f8] sm:$0xff]
    %v8550 = vld [vmem:[#allocation11 + $0x700] sm:$0xff]
    %v8551 = vld [vmem:[#allocation11 + $0x708] sm:$0xff]
    %v8552 = vld [vmem:[#allocation11 + $0x710] sm:$0xff]
    %v8553 = vld [vmem:[#allocation11 + $0x718] sm:$0xff]
    %v8554 = vld [vmem:[#allocation11 + $0x720] sm:$0xff]
    %v8555 = vld [vmem:[#allocation11 + $0x728] sm:$0xff]
    %v8556 = vld [vmem:[#allocation11 + $0x730] sm:$0xff]
    %v8557 = vld [vmem:[#allocation11 + $0x738] sm:$0xff]
    %v8558 = vld [vmem:[#allocation11 + $0x740] sm:$0xff]
    %v8559 = vld [vmem:[#allocation11 + $0x748] sm:$0xff]
    %v8560 = vld [vmem:[#allocation11 + $0x750] sm:$0xff]
    %v8561 = vld [vmem:[#allocation11 + $0x758] sm:$0xff]
    %v8562 = vld [vmem:[#allocation11 + $0x760] sm:$0xff]
    %v8563 = vld [vmem:[#allocation11 + $0x768] sm:$0xff]
    %v8564 = vld [vmem:[#allocation11 + $0x770] sm:$0xff]
    %v8565 = vld [vmem:[#allocation11 + $0x778] sm:$0xff]
    %v8566 = vld [vmem:[#allocation11 + $0x780] sm:$0xff]
    %v8567 = vld [vmem:[#allocation11 + $0x788] sm:$0xff]
    %v8568 = vld [vmem:[#allocation11 + $0x790] sm:$0xff]
    %v8569 = vld [vmem:[#allocation11 + $0x798] sm:$0xff]
    %v8570 = vld [vmem:[#allocation11 + $0x7a0] sm:$0xff]
    %v8571 = vld [vmem:[#allocation11 + $0x7a8] sm:$0xff]
    %v8572 = vld [vmem:[#allocation11 + $0x7b0] sm:$0xff]
    %v8573 = vld [vmem:[#allocation11 + $0x7b8] sm:$0xff]
    %v8574 = vld [vmem:[#allocation11 + $0x7c0] sm:$0xff]
    %v8575 = vld [vmem:[#allocation11 + $0x7c8] sm:$0xff]
    %v8576 = vld [vmem:[#allocation11 + $0x7d0] sm:$0xff]
    %v8577 = vld [vmem:[#allocation11 + $0x7d8] sm:$0xff]
    %v8578 = vld [vmem:[#allocation11 + $0x7e0] sm:$0xff]
    %v8579 = vld [vmem:[#allocation11 + $0x7e8] sm:$0xff]
    %v8580 = vld [vmem:[#allocation11 + $0x7f0] sm:$0xff]
    %v8581 = vld [vmem:[#allocation11 + $0x7f8] sm:$0xff]
    %v8582 = vld [vmem:[#allocation12] sm:$0xf]
    %v8584 = vlaneseq
    %v8585 = vshrl.u32 %v8584, 7
    %v8586 = vsub.s32 0, %v8585
    %v8587 = vrot.slane %v8582, %v8586
    %v8588 = vlaneseq
    %v8589 = vshrl.u32 %v8588, 7
    %v8590 = vsub.s32 1, %v8589
    %v8591 = vrot.slane %v8582, %v8590
    %v8592 = vlaneseq
    %v8593 = vshrl.u32 %v8592, 7
    %v8594 = vsub.s32 2, %v8593
    %v8595 = vrot.slane %v8582, %v8594
    %v8596 = vlaneseq
    %v8597 = vshrl.u32 %v8596, 7
    %v8598 = vsub.s32 3, %v8597
    %v8599 = vrot.slane %v8582, %v8598
    %v8860 = vunpack.c.l.b16 %v8326
    %v8861 = vunpack.c.h.b16 %v8326
    %v8862 = vunpack.c.l.b16 %v8327
    %v8863 = vunpack.c.h.b16 %v8327
    %v8864 = vunpack.c.l.b16 %v8328
    %v8865 = vunpack.c.h.b16 %v8328
    %v8866 = vunpack.c.l.b16 %v8329
    %v8867 = vunpack.c.h.b16 %v8329
    %v8868 = vunpack.c.l.b16 %v8330
    %v8869 = vunpack.c.h.b16 %v8330
    %v8870 = vunpack.c.l.b16 %v8331
    %v8871 = vunpack.c.h.b16 %v8331
    %v8872 = vunpack.c.l.b16 %v8332
    %v8873 = vunpack.c.h.b16 %v8332
    %v8874 = vunpack.c.l.b16 %v8333
    %v8875 = vunpack.c.h.b16 %v8333
    %v8876 = vunpack.c.l.b16 %v8334
    %v8877 = vunpack.c.h.b16 %v8334
    %v8878 = vunpack.c.l.b16 %v8335
    %v8879 = vunpack.c.h.b16 %v8335
    %v8880 = vunpack.c.l.b16 %v8336
    %v8881 = vunpack.c.h.b16 %v8336
    %v8882 = vunpack.c.l.b16 %v8337
    %v8883 = vunpack.c.h.b16 %v8337
    %v8884 = vunpack.c.l.b16 %v8338
    %v8885 = vunpack.c.h.b16 %v8338
    %v8886 = vunpack.c.l.b16 %v8339
    %v8887 = vunpack.c.h.b16 %v8339
    %v8888 = vunpack.c.l.b16 %v8340
    %v8889 = vunpack.c.h.b16 %v8340
    %v8890 = vunpack.c.l.b16 %v8341
    %v8891 = vunpack.c.h.b16 %v8341
    %v8892 = vunpack.c.l.b16 %v8342
    %v8893 = vunpack.c.h.b16 %v8342
    %v8894 = vunpack.c.l.b16 %v8343
    %v8895 = vunpack.c.h.b16 %v8343
    %v8896 = vunpack.c.l.b16 %v8344
    %v8897 = vunpack.c.h.b16 %v8344
    %v8898 = vunpack.c.l.b16 %v8345
    %v8899 = vunpack.c.h.b16 %v8345
    %v8900 = vunpack.c.l.b16 %v8346
    %v8901 = vunpack.c.h.b16 %v8346
    %v8902 = vunpack.c.l.b16 %v8347
    %v8903 = vunpack.c.h.b16 %v8347
    %v8904 = vunpack.c.l.b16 %v8348
    %v8905 = vunpack.c.h.b16 %v8348
    %v8906 = vunpack.c.l.b16 %v8349
    %v8907 = vunpack.c.h.b16 %v8349
    %v8908 = vunpack.c.l.b16 %v8350
    %v8909 = vunpack.c.h.b16 %v8350
    %v8910 = vunpack.c.l.b16 %v8351
    %v8911 = vunpack.c.h.b16 %v8351
    %v8912 = vunpack.c.l.b16 %v8352
    %v8913 = vunpack.c.h.b16 %v8352
    %v8914 = vunpack.c.l.b16 %v8353
    %v8915 = vunpack.c.h.b16 %v8353
    %v8916 = vunpack.c.l.b16 %v8354
    %v8917 = vunpack.c.h.b16 %v8354
    %v8918 = vunpack.c.l.b16 %v8355
    %v8919 = vunpack.c.h.b16 %v8355
    %v8920 = vunpack.c.l.b16 %v8356
    %v8921 = vunpack.c.h.b16 %v8356
    %v8922 = vunpack.c.l.b16 %v8357
    %v8923 = vunpack.c.h.b16 %v8357
    %v8924 = vunpack.c.l.b16 %v8358
    %v8925 = vunpack.c.h.b16 %v8358
    %v8926 = vunpack.c.l.b16 %v8359
    %v8927 = vunpack.c.h.b16 %v8359
    %v8928 = vunpack.c.l.b16 %v8360
    %v8929 = vunpack.c.h.b16 %v8360
    %v8930 = vunpack.c.l.b16 %v8361
    %v8931 = vunpack.c.h.b16 %v8361
    %v8932 = vunpack.c.l.b16 %v8362
    %v8933 = vunpack.c.h.b16 %v8362
    %v8934 = vunpack.c.l.b16 %v8363
    %v8935 = vunpack.c.h.b16 %v8363
    %v8936 = vunpack.c.l.b16 %v8364
    %v8937 = vunpack.c.h.b16 %v8364
    %v8938 = vunpack.c.l.b16 %v8365
    %v8939 = vunpack.c.h.b16 %v8365
    %v8940 = vunpack.c.l.b16 %v8366
    %v8941 = vunpack.c.h.b16 %v8366
    %v8942 = vunpack.c.l.b16 %v8367
    %v8943 = vunpack.c.h.b16 %v8367
    %v8944 = vunpack.c.l.b16 %v8368
    %v8945 = vunpack.c.h.b16 %v8368
    %v8946 = vunpack.c.l.b16 %v8369
    %v8947 = vunpack.c.h.b16 %v8369
    %v8948 = vunpack.c.l.b16 %v8370
    %v8949 = vunpack.c.h.b16 %v8370
    %v8950 = vunpack.c.l.b16 %v8371
    %v8951 = vunpack.c.h.b16 %v8371
    %v8952 = vunpack.c.l.b16 %v8372
    %v8953 = vunpack.c.h.b16 %v8372
    %v8954 = vunpack.c.l.b16 %v8373
    %v8955 = vunpack.c.h.b16 %v8373
    %v8956 = vunpack.c.l.b16 %v8374
    %v8957 = vunpack.c.h.b16 %v8374
    %v8958 = vunpack.c.l.b16 %v8375
    %v8959 = vunpack.c.h.b16 %v8375
    %v8960 = vunpack.c.l.b16 %v8376
    %v8961 = vunpack.c.h.b16 %v8376
    %v8962 = vunpack.c.l.b16 %v8377
    %v8963 = vunpack.c.h.b16 %v8377
    %v8964 = vunpack.c.l.b16 %v8378
    %v8965 = vunpack.c.h.b16 %v8378
    %v8966 = vunpack.c.l.b16 %v8379
    %v8967 = vunpack.c.h.b16 %v8379
    %v8968 = vunpack.c.l.b16 %v8380
    %v8969 = vunpack.c.h.b16 %v8380
    %v8970 = vunpack.c.l.b16 %v8381
    %v8971 = vunpack.c.h.b16 %v8381
    %v8972 = vunpack.c.l.b16 %v8382
    %v8973 = vunpack.c.h.b16 %v8382
    %v8974 = vunpack.c.l.b16 %v8383
    %v8975 = vunpack.c.h.b16 %v8383
    %v8976 = vunpack.c.l.b16 %v8384
    %v8977 = vunpack.c.h.b16 %v8384
    %v8978 = vunpack.c.l.b16 %v8385
    %v8979 = vunpack.c.h.b16 %v8385
    %v8980 = vunpack.c.l.b16 %v8386
    %v8981 = vunpack.c.h.b16 %v8386
    %v8982 = vunpack.c.l.b16 %v8387
    %v8983 = vunpack.c.h.b16 %v8387
    %v8984 = vunpack.c.l.b16 %v8388
    %v8985 = vunpack.c.h.b16 %v8388
    %v8986 = vunpack.c.l.b16 %v8389
    %v8987 = vunpack.c.h.b16 %v8389
    %v8988 = vunpack.c.l.b16 %v8390
    %v8989 = vunpack.c.h.b16 %v8390
    %v8990 = vunpack.c.l.b16 %v8391
    %v8991 = vunpack.c.h.b16 %v8391
    %v8992 = vunpack.c.l.b16 %v8392
    %v8993 = vunpack.c.h.b16 %v8392
    %v8994 = vunpack.c.l.b16 %v8393
    %v8995 = vunpack.c.h.b16 %v8393
    %v8996 = vunpack.c.l.b16 %v8394
    %v8997 = vunpack.c.h.b16 %v8394
    %v8998 = vunpack.c.l.b16 %v8395
    %v8999 = vunpack.c.h.b16 %v8395
    %v9000 = vunpack.c.l.b16 %v8396
    %v9001 = vunpack.c.h.b16 %v8396
    %v9002 = vunpack.c.l.b16 %v8397
    %v9003 = vunpack.c.h.b16 %v8397
    %v9004 = vunpack.c.l.b16 %v8398
    %v9005 = vunpack.c.h.b16 %v8398
    %v9006 = vunpack.c.l.b16 %v8399
    %v9007 = vunpack.c.h.b16 %v8399
    %v9008 = vunpack.c.l.b16 %v8400
    %v9009 = vunpack.c.h.b16 %v8400
    %v9010 = vunpack.c.l.b16 %v8401
    %v9011 = vunpack.c.h.b16 %v8401
    %v9012 = vunpack.c.l.b16 %v8402
    %v9013 = vunpack.c.h.b16 %v8402
    %v9014 = vunpack.c.l.b16 %v8403
    %v9015 = vunpack.c.h.b16 %v8403
    %v9016 = vunpack.c.l.b16 %v8404
    %v9017 = vunpack.c.h.b16 %v8404
    %v9018 = vunpack.c.l.b16 %v8405
    %v9019 = vunpack.c.h.b16 %v8405
    %v9020 = vunpack.c.l.b16 %v8406
    %v9021 = vunpack.c.h.b16 %v8406
    %v9022 = vunpack.c.l.b16 %v8407
    %v9023 = vunpack.c.h.b16 %v8407
    %v9024 = vunpack.c.l.b16 %v8408
    %v9025 = vunpack.c.h.b16 %v8408
    %v9026 = vunpack.c.l.b16 %v8409
    %v9027 = vunpack.c.h.b16 %v8409
    %v9028 = vunpack.c.l.b16 %v8410
    %v9029 = vunpack.c.h.b16 %v8410
    %v9030 = vunpack.c.l.b16 %v8411
    %v9031 = vunpack.c.h.b16 %v8411
    %v9032 = vunpack.c.l.b16 %v8412
    %v9033 = vunpack.c.h.b16 %v8412
    %v9034 = vunpack.c.l.b16 %v8413
    %v9035 = vunpack.c.h.b16 %v8413
    %v9036 = vunpack.c.l.b16 %v8414
    %v9037 = vunpack.c.h.b16 %v8414
    %v9038 = vunpack.c.l.b16 %v8415
    %v9039 = vunpack.c.h.b16 %v8415
    %v9040 = vunpack.c.l.b16 %v8416
    %v9041 = vunpack.c.h.b16 %v8416
    %v9042 = vunpack.c.l.b16 %v8417
    %v9043 = vunpack.c.h.b16 %v8417
    %v9044 = vunpack.c.l.b16 %v8418
    %v9045 = vunpack.c.h.b16 %v8418
    %v9046 = vunpack.c.l.b16 %v8419
    %v9047 = vunpack.c.h.b16 %v8419
    %v9048 = vunpack.c.l.b16 %v8420
    %v9049 = vunpack.c.h.b16 %v8420
    %v9050 = vunpack.c.l.b16 %v8421
    %v9051 = vunpack.c.h.b16 %v8421
    %v9052 = vunpack.c.l.b16 %v8422
    %v9053 = vunpack.c.h.b16 %v8422
    %v9054 = vunpack.c.l.b16 %v8423
    %v9055 = vunpack.c.h.b16 %v8423
    %v9056 = vunpack.c.l.b16 %v8424
    %v9057 = vunpack.c.h.b16 %v8424
    %v9058 = vunpack.c.l.b16 %v8425
    %v9059 = vunpack.c.h.b16 %v8425
    %v9060 = vunpack.c.l.b16 %v8426
    %v9061 = vunpack.c.h.b16 %v8426
    %v9062 = vunpack.c.l.b16 %v8427
    %v9063 = vunpack.c.h.b16 %v8427
    %v9064 = vunpack.c.l.b16 %v8428
    %v9065 = vunpack.c.h.b16 %v8428
    %v9066 = vunpack.c.l.b16 %v8429
    %v9067 = vunpack.c.h.b16 %v8429
    %v9068 = vunpack.c.l.b16 %v8430
    %v9069 = vunpack.c.h.b16 %v8430
    %v9070 = vunpack.c.l.b16 %v8431
    %v9071 = vunpack.c.h.b16 %v8431
    %v9072 = vunpack.c.l.b16 %v8432
    %v9073 = vunpack.c.h.b16 %v8432
    %v9074 = vunpack.c.l.b16 %v8433
    %v9075 = vunpack.c.h.b16 %v8433
    %v9076 = vunpack.c.l.b16 %v8434
    %v9077 = vunpack.c.h.b16 %v8434
    %v9078 = vunpack.c.l.b16 %v8435
    %v9079 = vunpack.c.h.b16 %v8435
    %v9080 = vunpack.c.l.b16 %v8436
    %v9081 = vunpack.c.h.b16 %v8436
    %v9082 = vunpack.c.l.b16 %v8437
    %v9083 = vunpack.c.h.b16 %v8437
    %v9084 = vunpack.c.l.b16 %v8438
    %v9085 = vunpack.c.h.b16 %v8438
    %v9086 = vunpack.c.l.b16 %v8439
    %v9087 = vunpack.c.h.b16 %v8439
    %v9088 = vunpack.c.l.b16 %v8440
    %v9089 = vunpack.c.h.b16 %v8440
    %v9090 = vunpack.c.l.b16 %v8441
    %v9091 = vunpack.c.h.b16 %v8441
    %v9092 = vunpack.c.l.b16 %v8442
    %v9093 = vunpack.c.h.b16 %v8442
    %v9094 = vunpack.c.l.b16 %v8443
    %v9095 = vunpack.c.h.b16 %v8443
    %v9096 = vunpack.c.l.b16 %v8444
    %v9097 = vunpack.c.h.b16 %v8444
    %v9098 = vunpack.c.l.b16 %v8445
    %v9099 = vunpack.c.h.b16 %v8445
    %v9100 = vunpack.c.l.b16 %v8446
    %v9101 = vunpack.c.h.b16 %v8446
    %v9102 = vunpack.c.l.b16 %v8447
    %v9103 = vunpack.c.h.b16 %v8447
    %v9104 = vunpack.c.l.b16 %v8448
    %v9105 = vunpack.c.h.b16 %v8448
    %v9106 = vunpack.c.l.b16 %v8449
    %v9107 = vunpack.c.h.b16 %v8449
    %v9108 = vunpack.c.l.b16 %v8450
    %v9109 = vunpack.c.h.b16 %v8450
    %v9110 = vunpack.c.l.b16 %v8451
    %v9111 = vunpack.c.h.b16 %v8451
    %v9112 = vunpack.c.l.b16 %v8452
    %v9113 = vunpack.c.h.b16 %v8452
    %v9114 = vunpack.c.l.b16 %v8453
    %v9115 = vunpack.c.h.b16 %v8453
    %v9116 = vunpack.c.l.b16 %v8454
    %v9117 = vunpack.c.h.b16 %v8454
    %v9118 = vunpack.c.l.b16 %v8455
    %v9119 = vunpack.c.h.b16 %v8455
    %v9120 = vunpack.c.l.b16 %v8456
    %v9121 = vunpack.c.h.b16 %v8456
    %v9122 = vunpack.c.l.b16 %v8457
    %v9123 = vunpack.c.h.b16 %v8457
    %v9124 = vunpack.c.l.b16 %v8458
    %v9125 = vunpack.c.h.b16 %v8458
    %v9126 = vunpack.c.l.b16 %v8459
    %v9127 = vunpack.c.h.b16 %v8459
    %v9128 = vunpack.c.l.b16 %v8460
    %v9129 = vunpack.c.h.b16 %v8460
    %v9130 = vunpack.c.l.b16 %v8461
    %v9131 = vunpack.c.h.b16 %v8461
    %v9132 = vunpack.c.l.b16 %v8462
    %v9133 = vunpack.c.h.b16 %v8462
    %v9134 = vunpack.c.l.b16 %v8463
    %v9135 = vunpack.c.h.b16 %v8463
    %v9136 = vunpack.c.l.b16 %v8464
    %v9137 = vunpack.c.h.b16 %v8464
    %v9138 = vunpack.c.l.b16 %v8465
    %v9139 = vunpack.c.h.b16 %v8465
    %v9140 = vunpack.c.l.b16 %v8466
    %v9141 = vunpack.c.h.b16 %v8466
    %v9142 = vunpack.c.l.b16 %v8467
    %v9143 = vunpack.c.h.b16 %v8467
    %v9144 = vunpack.c.l.b16 %v8468
    %v9145 = vunpack.c.h.b16 %v8468
    %v9146 = vunpack.c.l.b16 %v8469
    %v9147 = vunpack.c.h.b16 %v8469
    %v9148 = vunpack.c.l.b16 %v8470
    %v9149 = vunpack.c.h.b16 %v8470
    %v9150 = vunpack.c.l.b16 %v8471
    %v9151 = vunpack.c.h.b16 %v8471
    %v9152 = vunpack.c.l.b16 %v8472
    %v9153 = vunpack.c.h.b16 %v8472
    %v9154 = vunpack.c.l.b16 %v8473
    %v9155 = vunpack.c.h.b16 %v8473
    %v9156 = vunpack.c.l.b16 %v8474
    %v9157 = vunpack.c.h.b16 %v8474
    %v9158 = vunpack.c.l.b16 %v8475
    %v9159 = vunpack.c.h.b16 %v8475
    %v9160 = vunpack.c.l.b16 %v8476
    %v9161 = vunpack.c.h.b16 %v8476
    %v9162 = vunpack.c.l.b16 %v8477
    %v9163 = vunpack.c.h.b16 %v8477
    %v9164 = vunpack.c.l.b16 %v8478
    %v9165 = vunpack.c.h.b16 %v8478
    %v9166 = vunpack.c.l.b16 %v8479
    %v9167 = vunpack.c.h.b16 %v8479
    %v9168 = vunpack.c.l.b16 %v8480
    %v9169 = vunpack.c.h.b16 %v8480
    %v9170 = vunpack.c.l.b16 %v8481
    %v9171 = vunpack.c.h.b16 %v8481
    %v9172 = vunpack.c.l.b16 %v8482
    %v9173 = vunpack.c.h.b16 %v8482
    %v9174 = vunpack.c.l.b16 %v8483
    %v9175 = vunpack.c.h.b16 %v8483
    %v9176 = vunpack.c.l.b16 %v8484
    %v9177 = vunpack.c.h.b16 %v8484
    %v9178 = vunpack.c.l.b16 %v8485
    %v9179 = vunpack.c.h.b16 %v8485
    %v9180 = vunpack.c.l.b16 %v8486
    %v9181 = vunpack.c.h.b16 %v8486
    %v9182 = vunpack.c.l.b16 %v8487
    %v9183 = vunpack.c.h.b16 %v8487
    %v9184 = vunpack.c.l.b16 %v8488
    %v9185 = vunpack.c.h.b16 %v8488
    %v9186 = vunpack.c.l.b16 %v8489
    %v9187 = vunpack.c.h.b16 %v8489
    %v9188 = vunpack.c.l.b16 %v8490
    %v9189 = vunpack.c.h.b16 %v8490
    %v9190 = vunpack.c.l.b16 %v8491
    %v9191 = vunpack.c.h.b16 %v8491
    %v9192 = vunpack.c.l.b16 %v8492
    %v9193 = vunpack.c.h.b16 %v8492
    %v9194 = vunpack.c.l.b16 %v8493
    %v9195 = vunpack.c.h.b16 %v8493
    %v9196 = vunpack.c.l.b16 %v8494
    %v9197 = vunpack.c.h.b16 %v8494
    %v9198 = vunpack.c.l.b16 %v8495
    %v9199 = vunpack.c.h.b16 %v8495
    %v9200 = vunpack.c.l.b16 %v8496
    %v9201 = vunpack.c.h.b16 %v8496
    %v9202 = vunpack.c.l.b16 %v8497
    %v9203 = vunpack.c.h.b16 %v8497
    %v9204 = vunpack.c.l.b16 %v8498
    %v9205 = vunpack.c.h.b16 %v8498
    %v9206 = vunpack.c.l.b16 %v8499
    %v9207 = vunpack.c.h.b16 %v8499
    %v9208 = vunpack.c.l.b16 %v8500
    %v9209 = vunpack.c.h.b16 %v8500
    %v9210 = vunpack.c.l.b16 %v8501
    %v9211 = vunpack.c.h.b16 %v8501
    %v9212 = vunpack.c.l.b16 %v8502
    %v9213 = vunpack.c.h.b16 %v8502
    %v9214 = vunpack.c.l.b16 %v8503
    %v9215 = vunpack.c.h.b16 %v8503
    %v9216 = vunpack.c.l.b16 %v8504
    %v9217 = vunpack.c.h.b16 %v8504
    %v9218 = vunpack.c.l.b16 %v8505
    %v9219 = vunpack.c.h.b16 %v8505
    %v9220 = vunpack.c.l.b16 %v8506
    %v9221 = vunpack.c.h.b16 %v8506
    %v9222 = vunpack.c.l.b16 %v8507
    %v9223 = vunpack.c.h.b16 %v8507
    %v9224 = vunpack.c.l.b16 %v8508
    %v9225 = vunpack.c.h.b16 %v8508
    %v9226 = vunpack.c.l.b16 %v8509
    %v9227 = vunpack.c.h.b16 %v8509
    %v9228 = vunpack.c.l.b16 %v8510
    %v9229 = vunpack.c.h.b16 %v8510
    %v9230 = vunpack.c.l.b16 %v8511
    %v9231 = vunpack.c.h.b16 %v8511
    %v9232 = vunpack.c.l.b16 %v8512
    %v9233 = vunpack.c.h.b16 %v8512
    %v9234 = vunpack.c.l.b16 %v8513
    %v9235 = vunpack.c.h.b16 %v8513
    %v9236 = vunpack.c.l.b16 %v8514
    %v9237 = vunpack.c.h.b16 %v8514
    %v9238 = vunpack.c.l.b16 %v8515
    %v9239 = vunpack.c.h.b16 %v8515
    %v9240 = vunpack.c.l.b16 %v8516
    %v9241 = vunpack.c.h.b16 %v8516
    %v9242 = vunpack.c.l.b16 %v8517
    %v9243 = vunpack.c.h.b16 %v8517
    %v9244 = vunpack.c.l.b16 %v8518
    %v9245 = vunpack.c.h.b16 %v8518
    %v9246 = vunpack.c.l.b16 %v8519
    %v9247 = vunpack.c.h.b16 %v8519
    %v9248 = vunpack.c.l.b16 %v8520
    %v9249 = vunpack.c.h.b16 %v8520
    %v9250 = vunpack.c.l.b16 %v8521
    %v9251 = vunpack.c.h.b16 %v8521
    %v9252 = vunpack.c.l.b16 %v8522
    %v9253 = vunpack.c.h.b16 %v8522
    %v9254 = vunpack.c.l.b16 %v8523
    %v9255 = vunpack.c.h.b16 %v8523
    %v9256 = vunpack.c.l.b16 %v8524
    %v9257 = vunpack.c.h.b16 %v8524
    %v9258 = vunpack.c.l.b16 %v8525
    %v9259 = vunpack.c.h.b16 %v8525
    %v9260 = vunpack.c.l.b16 %v8526
    %v9261 = vunpack.c.h.b16 %v8526
    %v9262 = vunpack.c.l.b16 %v8527
    %v9263 = vunpack.c.h.b16 %v8527
    %v9264 = vunpack.c.l.b16 %v8528
    %v9265 = vunpack.c.h.b16 %v8528
    %v9266 = vunpack.c.l.b16 %v8529
    %v9267 = vunpack.c.h.b16 %v8529
    %v9268 = vunpack.c.l.b16 %v8530
    %v9269 = vunpack.c.h.b16 %v8530
    %v9270 = vunpack.c.l.b16 %v8531
    %v9271 = vunpack.c.h.b16 %v8531
    %v9272 = vunpack.c.l.b16 %v8532
    %v9273 = vunpack.c.h.b16 %v8532
    %v9274 = vunpack.c.l.b16 %v8533
    %v9275 = vunpack.c.h.b16 %v8533
    %v9276 = vunpack.c.l.b16 %v8534
    %v9277 = vunpack.c.h.b16 %v8534
    %v9278 = vunpack.c.l.b16 %v8535
    %v9279 = vunpack.c.h.b16 %v8535
    %v9280 = vunpack.c.l.b16 %v8536
    %v9281 = vunpack.c.h.b16 %v8536
    %v9282 = vunpack.c.l.b16 %v8537
    %v9283 = vunpack.c.h.b16 %v8537
    %v9284 = vunpack.c.l.b16 %v8538
    %v9285 = vunpack.c.h.b16 %v8538
    %v9286 = vunpack.c.l.b16 %v8539
    %v9287 = vunpack.c.h.b16 %v8539
    %v9288 = vunpack.c.l.b16 %v8540
    %v9289 = vunpack.c.h.b16 %v8540
    %v9290 = vunpack.c.l.b16 %v8541
    %v9291 = vunpack.c.h.b16 %v8541
    %v9292 = vunpack.c.l.b16 %v8542
    %v9293 = vunpack.c.h.b16 %v8542
    %v9294 = vunpack.c.l.b16 %v8543
    %v9295 = vunpack.c.h.b16 %v8543
    %v9296 = vunpack.c.l.b16 %v8544
    %v9297 = vunpack.c.h.b16 %v8544
    %v9298 = vunpack.c.l.b16 %v8545
    %v9299 = vunpack.c.h.b16 %v8545
    %v9300 = vunpack.c.l.b16 %v8546
    %v9301 = vunpack.c.h.b16 %v8546
    %v9302 = vunpack.c.l.b16 %v8547
    %v9303 = vunpack.c.h.b16 %v8547
    %v9304 = vunpack.c.l.b16 %v8548
    %v9305 = vunpack.c.h.b16 %v8548
    %v9306 = vunpack.c.l.b16 %v8549
    %v9307 = vunpack.c.h.b16 %v8549
    %v9308 = vunpack.c.l.b16 %v8550
    %v9309 = vunpack.c.h.b16 %v8550
    %v9310 = vunpack.c.l.b16 %v8551
    %v9311 = vunpack.c.h.b16 %v8551
    %v9312 = vunpack.c.l.b16 %v8552
    %v9313 = vunpack.c.h.b16 %v8552
    %v9314 = vunpack.c.l.b16 %v8553
    %v9315 = vunpack.c.h.b16 %v8553
    %v9316 = vunpack.c.l.b16 %v8554
    %v9317 = vunpack.c.h.b16 %v8554
    %v9318 = vunpack.c.l.b16 %v8555
    %v9319 = vunpack.c.h.b16 %v8555
    %v9320 = vunpack.c.l.b16 %v8556
    %v9321 = vunpack.c.h.b16 %v8556
    %v9322 = vunpack.c.l.b16 %v8557
    %v9323 = vunpack.c.h.b16 %v8557
    %v9324 = vunpack.c.l.b16 %v8558
    %v9325 = vunpack.c.h.b16 %v8558
    %v9326 = vunpack.c.l.b16 %v8559
    %v9327 = vunpack.c.h.b16 %v8559
    %v9328 = vunpack.c.l.b16 %v8560
    %v9329 = vunpack.c.h.b16 %v8560
    %v9330 = vunpack.c.l.b16 %v8561
    %v9331 = vunpack.c.h.b16 %v8561
    %v9332 = vunpack.c.l.b16 %v8562
    %v9333 = vunpack.c.h.b16 %v8562
    %v9334 = vunpack.c.l.b16 %v8563
    %v9335 = vunpack.c.h.b16 %v8563
    %v9336 = vunpack.c.l.b16 %v8564
    %v9337 = vunpack.c.h.b16 %v8564
    %v9338 = vunpack.c.l.b16 %v8565
    %v9339 = vunpack.c.h.b16 %v8565
    %v9340 = vunpack.c.l.b16 %v8566
    %v9341 = vunpack.c.h.b16 %v8566
    %v9342 = vunpack.c.l.b16 %v8567
    %v9343 = vunpack.c.h.b16 %v8567
    %v9344 = vunpack.c.l.b16 %v8568
    %v9345 = vunpack.c.h.b16 %v8568
    %v9346 = vunpack.c.l.b16 %v8569
    %v9347 = vunpack.c.h.b16 %v8569
    %v9348 = vunpack.c.l.b16 %v8570
    %v9349 = vunpack.c.h.b16 %v8570
    %v9350 = vunpack.c.l.b16 %v8571
    %v9351 = vunpack.c.h.b16 %v8571
    %v9352 = vunpack.c.l.b16 %v8572
    %v9353 = vunpack.c.h.b16 %v8572
    %v9354 = vunpack.c.l.b16 %v8573
    %v9355 = vunpack.c.h.b16 %v8573
    %v9356 = vunpack.c.l.b16 %v8574
    %v9357 = vunpack.c.h.b16 %v8574
    %v9358 = vunpack.c.l.b16 %v8575
    %v9359 = vunpack.c.h.b16 %v8575
    %v9360 = vunpack.c.l.b16 %v8576
    %v9361 = vunpack.c.h.b16 %v8576
    %v9362 = vunpack.c.l.b16 %v8577
    %v9363 = vunpack.c.h.b16 %v8577
    %v9364 = vunpack.c.l.b16 %v8578
    %v9365 = vunpack.c.h.b16 %v8578
    %v9366 = vunpack.c.l.b16 %v8579
    %v9367 = vunpack.c.h.b16 %v8579
    %v9368 = vunpack.c.l.b16 %v8580
    %v9369 = vunpack.c.h.b16 %v8580
    %v9370 = vunpack.c.l.b16 %v8581
    %v9371 = vunpack.c.h.b16 %v8581
    %v9372 = vpack.c.b16 %v8864, %v8860
    %v9373 = vpack.c.b16 %v8865, %v8861
    %v9374 = vpack.c.b16 %v8866, %v8862
    %v9375 = vpack.c.b16 %v8867, %v8863
    %v9376 = vpack.c.b16 %v8872, %v8868
    %v9377 = vpack.c.b16 %v8873, %v8869
    %v9378 = vpack.c.b16 %v8874, %v8870
    %v9379 = vpack.c.b16 %v8875, %v8871
    %v9380 = vpack.c.b16 %v8880, %v8876
    %v9381 = vpack.c.b16 %v8881, %v8877
    %v9382 = vpack.c.b16 %v8882, %v8878
    %v9383 = vpack.c.b16 %v8883, %v8879
    %v9384 = vpack.c.b16 %v8888, %v8884
    %v9385 = vpack.c.b16 %v8889, %v8885
    %v9386 = vpack.c.b16 %v8890, %v8886
    %v9387 = vpack.c.b16 %v8891, %v8887
    %v9388 = vpack.c.b16 %v8896, %v8892
    %v9389 = vpack.c.b16 %v8897, %v8893
    %v9390 = vpack.c.b16 %v8898, %v8894
    %v9391 = vpack.c.b16 %v8899, %v8895
    %v9392 = vpack.c.b16 %v8904, %v8900
    %v9393 = vpack.c.b16 %v8905, %v8901
    %v9394 = vpack.c.b16 %v8906, %v8902
    %v9395 = vpack.c.b16 %v8907, %v8903
    %v9396 = vpack.c.b16 %v8912, %v8908
    %v9397 = vpack.c.b16 %v8913, %v8909
    %v9398 = vpack.c.b16 %v8914, %v8910
    %v9399 = vpack.c.b16 %v8915, %v8911
    %v9400 = vpack.c.b16 %v8920, %v8916
    %v9401 = vpack.c.b16 %v8921, %v8917
    %v9402 = vpack.c.b16 %v8922, %v8918
    %v9403 = vpack.c.b16 %v8923, %v8919
    %v9404 = vpack.c.b16 %v8928, %v8924
    %v9405 = vpack.c.b16 %v8929, %v8925
    %v9406 = vpack.c.b16 %v8930, %v8926
    %v9407 = vpack.c.b16 %v8931, %v8927
    %v9408 = vpack.c.b16 %v8936, %v8932
    %v9409 = vpack.c.b16 %v8937, %v8933
    %v9410 = vpack.c.b16 %v8938, %v8934
    %v9411 = vpack.c.b16 %v8939, %v8935
    %v9412 = vpack.c.b16 %v8944, %v8940
    %v9413 = vpack.c.b16 %v8945, %v8941
    %v9414 = vpack.c.b16 %v8946, %v8942
    %v9415 = vpack.c.b16 %v8947, %v8943
    %v9416 = vpack.c.b16 %v8952, %v8948
    %v9417 = vpack.c.b16 %v8953, %v8949
    %v9418 = vpack.c.b16 %v8954, %v8950
    %v9419 = vpack.c.b16 %v8955, %v8951
    %v9420 = vpack.c.b16 %v8960, %v8956
    %v9421 = vpack.c.b16 %v8961, %v8957
    %v9422 = vpack.c.b16 %v8962, %v8958
    %v9423 = vpack.c.b16 %v8963, %v8959
    %v9424 = vpack.c.b16 %v8968, %v8964
    %v9425 = vpack.c.b16 %v8969, %v8965
    %v9426 = vpack.c.b16 %v8970, %v8966
    %v9427 = vpack.c.b16 %v8971, %v8967
    %v9428 = vpack.c.b16 %v8976, %v8972
    %v9429 = vpack.c.b16 %v8977, %v8973
    %v9430 = vpack.c.b16 %v8978, %v8974
    %v9431 = vpack.c.b16 %v8979, %v8975
    %v9432 = vpack.c.b16 %v8984, %v8980
    %v9433 = vpack.c.b16 %v8985, %v8981
    %v9434 = vpack.c.b16 %v8986, %v8982
    %v9435 = vpack.c.b16 %v8987, %v8983
    %v9436 = vpack.c.b16 %v8992, %v8988
    %v9437 = vpack.c.b16 %v8993, %v8989
    %v9438 = vpack.c.b16 %v8994, %v8990
    %v9439 = vpack.c.b16 %v8995, %v8991
    %v9440 = vpack.c.b16 %v9000, %v8996
    %v9441 = vpack.c.b16 %v9001, %v8997
    %v9442 = vpack.c.b16 %v9002, %v8998
    %v9443 = vpack.c.b16 %v9003, %v8999
    %v9444 = vpack.c.b16 %v9008, %v9004
    %v9445 = vpack.c.b16 %v9009, %v9005
    %v9446 = vpack.c.b16 %v9010, %v9006
    %v9447 = vpack.c.b16 %v9011, %v9007
    %v9448 = vpack.c.b16 %v9016, %v9012
    %v9449 = vpack.c.b16 %v9017, %v9013
    %v9450 = vpack.c.b16 %v9018, %v9014
    %v9451 = vpack.c.b16 %v9019, %v9015
    %v9452 = vpack.c.b16 %v9024, %v9020
    %v9453 = vpack.c.b16 %v9025, %v9021
    %v9454 = vpack.c.b16 %v9026, %v9022
    %v9455 = vpack.c.b16 %v9027, %v9023
    %v9456 = vpack.c.b16 %v9032, %v9028
    %v9457 = vpack.c.b16 %v9033, %v9029
    %v9458 = vpack.c.b16 %v9034, %v9030
    %v9459 = vpack.c.b16 %v9035, %v9031
    %v9460 = vpack.c.b16 %v9040, %v9036
    %v9461 = vpack.c.b16 %v9041, %v9037
    %v9462 = vpack.c.b16 %v9042, %v9038
    %v9463 = vpack.c.b16 %v9043, %v9039
    %v9464 = vpack.c.b16 %v9048, %v9044
    %v9465 = vpack.c.b16 %v9049, %v9045
    %v9466 = vpack.c.b16 %v9050, %v9046
    %v9467 = vpack.c.b16 %v9051, %v9047
    %v9468 = vpack.c.b16 %v9056, %v9052
    %v9469 = vpack.c.b16 %v9057, %v9053
    %v9470 = vpack.c.b16 %v9058, %v9054
    %v9471 = vpack.c.b16 %v9059, %v9055
    %v9472 = vpack.c.b16 %v9064, %v9060
    %v9473 = vpack.c.b16 %v9065, %v9061
    %v9474 = vpack.c.b16 %v9066, %v9062
    %v9475 = vpack.c.b16 %v9067, %v9063
    %v9476 = vpack.c.b16 %v9072, %v9068
    %v9477 = vpack.c.b16 %v9073, %v9069
    %v9478 = vpack.c.b16 %v9074, %v9070
    %v9479 = vpack.c.b16 %v9075, %v9071
    %v9480 = vpack.c.b16 %v9080, %v9076
    %v9481 = vpack.c.b16 %v9081, %v9077
    %v9482 = vpack.c.b16 %v9082, %v9078
    %v9483 = vpack.c.b16 %v9083, %v9079
    %v9484 = vpack.c.b16 %v9088, %v9084
    %v9485 = vpack.c.b16 %v9089, %v9085
    %v9486 = vpack.c.b16 %v9090, %v9086
    %v9487 = vpack.c.b16 %v9091, %v9087
    %v9488 = vpack.c.b16 %v9096, %v9092
    %v9489 = vpack.c.b16 %v9097, %v9093
    %v9490 = vpack.c.b16 %v9098, %v9094
    %v9491 = vpack.c.b16 %v9099, %v9095
    %v9492 = vpack.c.b16 %v9104, %v9100
    %v9493 = vpack.c.b16 %v9105, %v9101
    %v9494 = vpack.c.b16 %v9106, %v9102
    %v9495 = vpack.c.b16 %v9107, %v9103
    %v9496 = vpack.c.b16 %v9112, %v9108
    %v9497 = vpack.c.b16 %v9113, %v9109
    %v9498 = vpack.c.b16 %v9114, %v9110
    %v9499 = vpack.c.b16 %v9115, %v9111
    %v9500 = vpack.c.b16 %v9120, %v9116
    %v9501 = vpack.c.b16 %v9121, %v9117
    %v9502 = vpack.c.b16 %v9122, %v9118
    %v9503 = vpack.c.b16 %v9123, %v9119
    %v9504 = vpack.c.b16 %v9128, %v9124
    %v9505 = vpack.c.b16 %v9129, %v9125
    %v9506 = vpack.c.b16 %v9130, %v9126
    %v9507 = vpack.c.b16 %v9131, %v9127
    %v9508 = vpack.c.b16 %v9136, %v9132
    %v9509 = vpack.c.b16 %v9137, %v9133
    %v9510 = vpack.c.b16 %v9138, %v9134
    %v9511 = vpack.c.b16 %v9139, %v9135
    %v9512 = vpack.c.b16 %v9144, %v9140
    %v9513 = vpack.c.b16 %v9145, %v9141
    %v9514 = vpack.c.b16 %v9146, %v9142
    %v9515 = vpack.c.b16 %v9147, %v9143
    %v9516 = vpack.c.b16 %v9152, %v9148
    %v9517 = vpack.c.b16 %v9153, %v9149
    %v9518 = vpack.c.b16 %v9154, %v9150
    %v9519 = vpack.c.b16 %v9155, %v9151
    %v9520 = vpack.c.b16 %v9160, %v9156
    %v9521 = vpack.c.b16 %v9161, %v9157
    %v9522 = vpack.c.b16 %v9162, %v9158
    %v9523 = vpack.c.b16 %v9163, %v9159
    %v9524 = vpack.c.b16 %v9168, %v9164
    %v9525 = vpack.c.b16 %v9169, %v9165
    %v9526 = vpack.c.b16 %v9170, %v9166
    %v9527 = vpack.c.b16 %v9171, %v9167
    %v9528 = vpack.c.b16 %v9176, %v9172
    %v9529 = vpack.c.b16 %v9177, %v9173
    %v9530 = vpack.c.b16 %v9178, %v9174
    %v9531 = vpack.c.b16 %v9179, %v9175
    %v9532 = vpack.c.b16 %v9184, %v9180
    %v9533 = vpack.c.b16 %v9185, %v9181
    %v9534 = vpack.c.b16 %v9186, %v9182
    %v9535 = vpack.c.b16 %v9187, %v9183
    %v9536 = vpack.c.b16 %v9192, %v9188
    %v9537 = vpack.c.b16 %v9193, %v9189
    %v9538 = vpack.c.b16 %v9194, %v9190
    %v9539 = vpack.c.b16 %v9195, %v9191
    %v9540 = vpack.c.b16 %v9200, %v9196
    %v9541 = vpack.c.b16 %v9201, %v9197
    %v9542 = vpack.c.b16 %v9202, %v9198
    %v9543 = vpack.c.b16 %v9203, %v9199
    %v9544 = vpack.c.b16 %v9208, %v9204
    %v9545 = vpack.c.b16 %v9209, %v9205
    %v9546 = vpack.c.b16 %v9210, %v9206
    %v9547 = vpack.c.b16 %v9211, %v9207
    %v9548 = vpack.c.b16 %v9216, %v9212
    %v9549 = vpack.c.b16 %v9217, %v9213
    %v9550 = vpack.c.b16 %v9218, %v9214
    %v9551 = vpack.c.b16 %v9219, %v9215
    %v9552 = vpack.c.b16 %v9224, %v9220
    %v9553 = vpack.c.b16 %v9225, %v9221
    %v9554 = vpack.c.b16 %v9226, %v9222
    %v9555 = vpack.c.b16 %v9227, %v9223
    %v9556 = vpack.c.b16 %v9232, %v9228
    %v9557 = vpack.c.b16 %v9233, %v9229
    %v9558 = vpack.c.b16 %v9234, %v9230
    %v9559 = vpack.c.b16 %v9235, %v9231
    %v9560 = vpack.c.b16 %v9240, %v9236
    %v9561 = vpack.c.b16 %v9241, %v9237
    %v9562 = vpack.c.b16 %v9242, %v9238
    %v9563 = vpack.c.b16 %v9243, %v9239
    %v9564 = vpack.c.b16 %v9248, %v9244
    %v9565 = vpack.c.b16 %v9249, %v9245
    %v9566 = vpack.c.b16 %v9250, %v9246
    %v9567 = vpack.c.b16 %v9251, %v9247
    %v9568 = vpack.c.b16 %v9256, %v9252
    %v9569 = vpack.c.b16 %v9257, %v9253
    %v9570 = vpack.c.b16 %v9258, %v9254
    %v9571 = vpack.c.b16 %v9259, %v9255
    %v9572 = vpack.c.b16 %v9264, %v9260
    %v9573 = vpack.c.b16 %v9265, %v9261
    %v9574 = vpack.c.b16 %v9266, %v9262
    %v9575 = vpack.c.b16 %v9267, %v9263
    %v9576 = vpack.c.b16 %v9272, %v9268
    %v9577 = vpack.c.b16 %v9273, %v9269
    %v9578 = vpack.c.b16 %v9274, %v9270
    %v9579 = vpack.c.b16 %v9275, %v9271
    %v9580 = vpack.c.b16 %v9280, %v9276
    %v9581 = vpack.c.b16 %v9281, %v9277
    %v9582 = vpack.c.b16 %v9282, %v9278
    %v9583 = vpack.c.b16 %v9283, %v9279
    %v9584 = vpack.c.b16 %v9288, %v9284
    %v9585 = vpack.c.b16 %v9289, %v9285
    %v9586 = vpack.c.b16 %v9290, %v9286
    %v9587 = vpack.c.b16 %v9291, %v9287
    %v9588 = vpack.c.b16 %v9296, %v9292
    %v9589 = vpack.c.b16 %v9297, %v9293
    %v9590 = vpack.c.b16 %v9298, %v9294
    %v9591 = vpack.c.b16 %v9299, %v9295
    %v9592 = vpack.c.b16 %v9304, %v9300
    %v9593 = vpack.c.b16 %v9305, %v9301
    %v9594 = vpack.c.b16 %v9306, %v9302
    %v9595 = vpack.c.b16 %v9307, %v9303
    %v9596 = vpack.c.b16 %v9312, %v9308
    %v9597 = vpack.c.b16 %v9313, %v9309
    %v9598 = vpack.c.b16 %v9314, %v9310
    %v9599 = vpack.c.b16 %v9315, %v9311
    %v9600 = vpack.c.b16 %v9320, %v9316
    %v9601 = vpack.c.b16 %v9321, %v9317
    %v9602 = vpack.c.b16 %v9322, %v9318
    %v9603 = vpack.c.b16 %v9323, %v9319
    %v9604 = vpack.c.b16 %v9328, %v9324
    %v9605 = vpack.c.b16 %v9329, %v9325
    %v9606 = vpack.c.b16 %v9330, %v9326
    %v9607 = vpack.c.b16 %v9331, %v9327
    %v9608 = vpack.c.b16 %v9336, %v9332
    %v9609 = vpack.c.b16 %v9337, %v9333
    %v9610 = vpack.c.b16 %v9338, %v9334
    %v9611 = vpack.c.b16 %v9339, %v9335
    %v9612 = vpack.c.b16 %v9344, %v9340
    %v9613 = vpack.c.b16 %v9345, %v9341
    %v9614 = vpack.c.b16 %v9346, %v9342
    %v9615 = vpack.c.b16 %v9347, %v9343
    %v9616 = vpack.c.b16 %v9352, %v9348
    %v9617 = vpack.c.b16 %v9353, %v9349
    %v9618 = vpack.c.b16 %v9354, %v9350
    %v9619 = vpack.c.b16 %v9355, %v9351
    %v9620 = vpack.c.b16 %v9360, %v9356
    %v9621 = vpack.c.b16 %v9361, %v9357
    %v9622 = vpack.c.b16 %v9362, %v9358
    %v9623 = vpack.c.b16 %v9363, %v9359
    %v9624 = vpack.c.b16 %v9368, %v9364
    %v9625 = vpack.c.b16 %v9369, %v9365
    %v9626 = vpack.c.b16 %v9370, %v9366
    %v9627 = vpack.c.b16 %v9371, %v9367
    %9884 = vmatprep.subr.bf16.mxu0 %v9401
    %9885 = vmatpush1.bf16.msra.mxu0 %v9400
    %9886 = vmatprep.subr.bf16.mxu0 %v9397
    %9887 = vmatpush1.bf16.msra.mxu0 %v9396
    %9888 = vmatprep.subr.bf16.mxu0 %v9393
    %9889 = vmatpush1.bf16.msra.mxu0 %v9392
    %9890 = vmatprep.subr.bf16.mxu0 %v9389
    %9891 = vmatpush1.bf16.msra.mxu0 %v9388
    %9892 = vmatprep.subr.bf16.mxu0 %v9385
    %9893 = vmatpush1.bf16.msra.mxu0 %v9384
    %9894 = vmatprep.subr.bf16.mxu0 %v9381
    %9895 = vmatpush1.bf16.msra.mxu0 %v9380
    %9896 = vmatprep.subr.bf16.mxu0 %v9377
    %9897 = vmatpush1.bf16.msra.mxu0 %v9376
    %9898 = vmatprep.subr.bf16.mxu0 %v9373
    %9899 = vmatpush1.bf16.msra.mxu0 %v9372
    %9900 = vmatprep.subr.bf16.mxu0 %v9433
    %9901 = vmatpush2.bf16.msra.mxu0 %v9432
    %9902 = vmatprep.subr.bf16.mxu0 %v9429
    %9903 = vmatpush2.bf16.msra.mxu0 %v9428
    %9904 = vmatprep.subr.bf16.mxu0 %v9425
    %9905 = vmatpush2.bf16.msra.mxu0 %v9424
    %9906 = vmatprep.subr.bf16.mxu0 %v9421
    %9907 = vmatpush2.bf16.msra.mxu0 %v9420
    %9908 = vmatprep.subr.bf16.mxu0 %v9417
    %9909 = vmatpush2.bf16.msra.mxu0 %v9416
    %9910 = vmatprep.subr.bf16.mxu0 %v9413
    %9911 = vmatpush2.bf16.msra.mxu0 %v9412
    %9912 = vmatprep.subr.bf16.mxu0 %v9409
    %9913 = vmatpush2.bf16.msra.mxu0 %v9408
    %9914 = vmatprep.subr.bf16.mxu0 %v9405
    %9915 = vmatpush2.bf16.msra.mxu0 %v9404
    %9916 = vmatprep.mubr.bf16.mxu0 %v8319
    %9917 = vmatmul.mubr.bf16.gmra.mxu0 %v8318
    %v9918 = vpop.f32.mrf.mxu0
    %v9919 = vadd.f32 %v8587, %v9918
    %v9920 = vpop.f32.mrf.mxu0
    %v9921 = vadd.f32 %v8591, %v9920
    %v9922 = vpop.f32.mrf.mxu0
    %v9923 = vpop.f32.mrf.mxu0
    %9924 = vdwg.mxu0
    %9925 = vmatprep.subr.bf16.mxu0 %v9465
    %9926 = vmatpush1.bf16.msra.mxu0 %v9464
    %9927 = vmatprep.subr.bf16.mxu0 %v9461
    %9928 = vmatpush1.bf16.msra.mxu0 %v9460
    %9929 = vmatprep.subr.bf16.mxu0 %v9457
    %9930 = vmatpush1.bf16.msra.mxu0 %v9456
    %9931 = vmatprep.subr.bf16.mxu0 %v9453
    %9932 = vmatpush1.bf16.msra.mxu0 %v9452
    %9933 = vmatprep.subr.bf16.mxu0 %v9449
    %9934 = vmatpush1.bf16.msra.mxu0 %v9448
    %9935 = vmatprep.subr.bf16.mxu0 %v9445
    %9936 = vmatpush1.bf16.msra.mxu0 %v9444
    %9937 = vmatprep.subr.bf16.mxu0 %v9441
    %9938 = vmatpush1.bf16.msra.mxu0 %v9440
    %9939 = vmatprep.subr.bf16.mxu0 %v9437
    %9940 = vmatpush1.bf16.msra.mxu0 %v9436
    %9941 = vmatprep.subr.bf16.mxu0 %v9497
    %9942 = vmatpush2.bf16.msra.mxu0 %v9496
    %9943 = vmatprep.subr.bf16.mxu0 %v9493
    %9944 = vmatpush2.bf16.msra.mxu0 %v9492
    %9945 = vmatprep.subr.bf16.mxu0 %v9489
    %9946 = vmatpush2.bf16.msra.mxu0 %v9488
    %9947 = vmatprep.subr.bf16.mxu0 %v9485
    %9948 = vmatpush2.bf16.msra.mxu0 %v9484
    %9949 = vmatprep.subr.bf16.mxu0 %v9481
    %9950 = vmatpush2.bf16.msra.mxu0 %v9480
    %9951 = vmatprep.subr.bf16.mxu0 %v9477
    %9952 = vmatpush2.bf16.msra.mxu0 %v9476
    %9953 = vmatprep.subr.bf16.mxu0 %v9473
    %9954 = vmatpush2.bf16.msra.mxu0 %v9472
    %9955 = vmatprep.subr.bf16.mxu0 %v9469
    %9956 = vmatpush2.bf16.msra.mxu0 %v9468
    %9957 = vmatprep.mubr.bf16.mxu0 %v8321
    %9958 = vmatmul.mubr.bf16.gmra.mxu0 %v8320
    %v9959 = vpop.f32.mrf.mxu0
    %v9960 = vadd.f32 %v9919, %v9959
    %v9961 = vpop.f32.mrf.mxu0
    %v9962 = vadd.f32 %v9921, %v9961
    %v9963 = vpop.f32.mrf.mxu0
    %v9964 = vpop.f32.mrf.mxu0
    %9965 = vdwg.mxu0
    %9966 = vmatprep.subr.bf16.mxu0 %v9529
    %9967 = vmatpush1.bf16.msra.mxu0 %v9528
    %9968 = vmatprep.subr.bf16.mxu0 %v9525
    %9969 = vmatpush1.bf16.msra.mxu0 %v9524
    %9970 = vmatprep.subr.bf16.mxu0 %v9521
    %9971 = vmatpush1.bf16.msra.mxu0 %v9520
    %9972 = vmatprep.subr.bf16.mxu0 %v9517
    %9973 = vmatpush1.bf16.msra.mxu0 %v9516
    %9974 = vmatprep.subr.bf16.mxu0 %v9513
    %9975 = vmatpush1.bf16.msra.mxu0 %v9512
    %9976 = vmatprep.subr.bf16.mxu0 %v9509
    %9977 = vmatpush1.bf16.msra.mxu0 %v9508
    %9978 = vmatprep.subr.bf16.mxu0 %v9505
    %9979 = vmatpush1.bf16.msra.mxu0 %v9504
    %9980 = vmatprep.subr.bf16.mxu0 %v9501
    %9981 = vmatpush1.bf16.msra.mxu0 %v9500
    %9982 = vmatprep.subr.bf16.mxu0 %v9561
    %9983 = vmatpush2.bf16.msra.mxu0 %v9560
    %9984 = vmatprep.subr.bf16.mxu0 %v9557
    %9985 = vmatpush2.bf16.msra.mxu0 %v9556
    %9986 = vmatprep.subr.bf16.mxu0 %v9553
    %9987 = vmatpush2.bf16.msra.mxu0 %v9552
    %9988 = vmatprep.subr.bf16.mxu0 %v9549
    %9989 = vmatpush2.bf16.msra.mxu0 %v9548
    %9990 = vmatprep.subr.bf16.mxu0 %v9545
    %9991 = vmatpush2.bf16.msra.mxu0 %v9544
    %9992 = vmatprep.subr.bf16.mxu0 %v9541
    %9993 = vmatpush2.bf16.msra.mxu0 %v9540
    %9994 = vmatprep.subr.bf16.mxu0 %v9537
    %9995 = vmatpush2.bf16.msra.mxu0 %v9536
    %9996 = vmatprep.subr.bf16.mxu0 %v9533
    %9997 = vmatpush2.bf16.msra.mxu0 %v9532
    %9998 = vmatprep.mubr.bf16.mxu0 %v8323
    %9999 = vmatmul.mubr.bf16.gmra.mxu0 %v8322
    %v10000 = vpop.f32.mrf.mxu0
    %v10001 = vadd.f32 %v9960, %v10000
    %v10002 = vpop.f32.mrf.mxu0
    %v10003 = vadd.f32 %v9962, %v10002
    %v10004 = vpop.f32.mrf.mxu0
    %v10005 = vpop.f32.mrf.mxu0
    %10006 = vdwg.mxu0
    %10007 = vmatprep.subr.bf16.mxu0 %v9593
    %10008 = vmatpush1.bf16.msra.mxu0 %v9592
    %10009 = vmatprep.subr.bf16.mxu0 %v9589
    %10010 = vmatpush1.bf16.msra.mxu0 %v9588
    %10011 = vmatprep.subr.bf16.mxu0 %v9585
    %10012 = vmatpush1.bf16.msra.mxu0 %v9584
    %10013 = vmatprep.subr.bf16.mxu0 %v9581
    %10014 = vmatpush1.bf16.msra.mxu0 %v9580
    %10015 = vmatprep.subr.bf16.mxu0 %v9577
    %10016 = vmatpush1.bf16.msra.mxu0 %v9576
    %10017 = vmatprep.subr.bf16.mxu0 %v9573
    %10018 = vmatpush1.bf16.msra.mxu0 %v9572
    %10019 = vmatprep.subr.bf16.mxu0 %v9569
    %10020 = vmatpush1.bf16.msra.mxu0 %v9568
    %10021 = vmatprep.subr.bf16.mxu0 %v9565
    %10022 = vmatpush1.bf16.msra.mxu0 %v9564
    %10023 = vmatprep.subr.bf16.mxu0 %v9625
    %10024 = vmatpush2.bf16.msra.mxu0 %v9624
    %10025 = vmatprep.subr.bf16.mxu0 %v9621
    %10026 = vmatpush2.bf16.msra.mxu0 %v9620
    %10027 = vmatprep.subr.bf16.mxu0 %v9617
    %10028 = vmatpush2.bf16.msra.mxu0 %v9616
    %10029 = vmatprep.subr.bf16.mxu0 %v9613
    %10030 = vmatpush2.bf16.msra.mxu0 %v9612
    %10031 = vmatprep.subr.bf16.mxu0 %v9609
    %10032 = vmatpush2.bf16.msra.mxu0 %v9608
    %10033 = vmatprep.subr.bf16.mxu0 %v9605
    %10034 = vmatpush2.bf16.msra.mxu0 %v9604
    %10035 = vmatprep.subr.bf16.mxu0 %v9601
    %10036 = vmatpush2.bf16.msra.mxu0 %v9600
    %10037 = vmatprep.subr.bf16.mxu0 %v9597
    %10038 = vmatpush2.bf16.msra.mxu0 %v9596
    %10039 = vmatprep.mubr.bf16.mxu0 %v8325
    %10040 = vmatmul.mubr.bf16.gmra.mxu0 %v8324
    %v10041 = vpop.f32.mrf.mxu0
    %v10042 = vadd.f32 %v10001, %v10041
    %v10043 = vpop.f32.mrf.mxu0
    %v10044 = vadd.f32 %v10003, %v10043
    %v10045 = vpop.f32.mrf.mxu0
    %v10046 = vpop.f32.mrf.mxu0
    %10047 = vdwg.mxu0
    %10048 = vmatprep.subr.bf16.mxu0 %v9403
    %10049 = vmatpush1.bf16.msra.mxu0 %v9402
    %10050 = vmatprep.subr.bf16.mxu0 %v9399
    %10051 = vmatpush1.bf16.msra.mxu0 %v9398
    %10052 = vmatprep.subr.bf16.mxu0 %v9395
    %10053 = vmatpush1.bf16.msra.mxu0 %v9394
    %10054 = vmatprep.subr.bf16.mxu0 %v9391
    %10055 = vmatpush1.bf16.msra.mxu0 %v9390
    %10056 = vmatprep.subr.bf16.mxu0 %v9387
    %10057 = vmatpush1.bf16.msra.mxu0 %v9386
    %10058 = vmatprep.subr.bf16.mxu0 %v9383
    %10059 = vmatpush1.bf16.msra.mxu0 %v9382
    %10060 = vmatprep.subr.bf16.mxu0 %v9379
    %10061 = vmatpush1.bf16.msra.mxu0 %v9378
    %10062 = vmatprep.subr.bf16.mxu0 %v9375
    %10063 = vmatpush1.bf16.msra.mxu0 %v9374
    %10064 = vmatprep.subr.bf16.mxu0 %v9435
    %10065 = vmatpush2.bf16.msra.mxu0 %v9434
    %10066 = vmatprep.subr.bf16.mxu0 %v9431
    %10067 = vmatpush2.bf16.msra.mxu0 %v9430
    %10068 = vmatprep.subr.bf16.mxu0 %v9427
    %10069 = vmatpush2.bf16.msra.mxu0 %v9426
    %10070 = vmatprep.subr.bf16.mxu0 %v9423
    %10071 = vmatpush2.bf16.msra.mxu0 %v9422
    %10072 = vmatprep.subr.bf16.mxu0 %v9419
    %10073 = vmatpush2.bf16.msra.mxu0 %v9418
    %10074 = vmatprep.subr.bf16.mxu0 %v9415
    %10075 = vmatpush2.bf16.msra.mxu0 %v9414
    %10076 = vmatprep.subr.bf16.mxu0 %v9411
    %10077 = vmatpush2.bf16.msra.mxu0 %v9410
    %10078 = vmatprep.subr.bf16.mxu0 %v9407
    %10079 = vmatpush2.bf16.msra.mxu0 %v9406
    %10080 = vmatprep.mubr.bf16.mxu0 %v8319
    %10081 = vmatmul.mubr.bf16.gmra.mxu0 %v8318
    %v10082 = vpop.f32.mrf.mxu0
    %v10083 = vadd.f32 %v8595, %v10082
    %v10084 = vpop.f32.mrf.mxu0
    %v10085 = vadd.f32 %v8599, %v10084
    %v10086 = vpop.f32.mrf.mxu0
    %v10087 = vpop.f32.mrf.mxu0
    %10088 = vdwg.mxu0
    %10089 = vmatprep.subr.bf16.mxu0 %v9467
    %10090 = vmatpush1.bf16.msra.mxu0 %v9466
    %10091 = vmatprep.subr.bf16.mxu0 %v9463
    %10092 = vmatpush1.bf16.msra.mxu0 %v9462
    %10093 = vmatprep.subr.bf16.mxu0 %v9459
    %10094 = vmatpush1.bf16.msra.mxu0 %v9458
    %10095 = vmatprep.subr.bf16.mxu0 %v9455
    %10096 = vmatpush1.bf16.msra.mxu0 %v9454
    %10097 = vmatprep.subr.bf16.mxu0 %v9451
    %10098 = vmatpush1.bf16.msra.mxu0 %v9450
    %10099 = vmatprep.subr.bf16.mxu0 %v9447
    %10100 = vmatpush1.bf16.msra.mxu0 %v9446
    %10101 = vmatprep.subr.bf16.mxu0 %v9443
    %10102 = vmatpush1.bf16.msra.mxu0 %v9442
    %10103 = vmatprep.subr.bf16.mxu0 %v9439
    %10104 = vmatpush1.bf16.msra.mxu0 %v9438
    %10105 = vmatprep.subr.bf16.mxu0 %v9499
    %10106 = vmatpush2.bf16.msra.mxu0 %v9498
    %10107 = vmatprep.subr.bf16.mxu0 %v9495
    %10108 = vmatpush2.bf16.msra.mxu0 %v9494
    %10109 = vmatprep.subr.bf16.mxu0 %v9491
    %10110 = vmatpush2.bf16.msra.mxu0 %v9490
    %10111 = vmatprep.subr.bf16.mxu0 %v9487
    %10112 = vmatpush2.bf16.msra.mxu0 %v9486
    %10113 = vmatprep.subr.bf16.mxu0 %v9483
    %10114 = vmatpush2.bf16.msra.mxu0 %v9482
    %10115 = vmatprep.subr.bf16.mxu0 %v9479
    %10116 = vmatpush2.bf16.msra.mxu0 %v9478
    %10117 = vmatprep.subr.bf16.mxu0 %v9475
    %10118 = vmatpush2.bf16.msra.mxu0 %v9474
    %10119 = vmatprep.subr.bf16.mxu0 %v9471
    %10120 = vmatpush2.bf16.msra.mxu0 %v9470
    %10121 = vmatprep.mubr.bf16.mxu0 %v8321
    %10122 = vmatmul.mubr.bf16.gmra.mxu0 %v8320
    %v10123 = vpop.f32.mrf.mxu0
    %v10124 = vadd.f32 %v10083, %v10123
    %v10125 = vpop.f32.mrf.mxu0
    %v10126 = vadd.f32 %v10085, %v10125
    %v10127 = vpop.f32.mrf.mxu0
    %v10128 = vpop.f32.mrf.mxu0
    %10129 = vdwg.mxu0
    %10130 = vmatprep.subr.bf16.mxu0 %v9531
    %10131 = vmatpush1.bf16.msra.mxu0 %v9530
    %10132 = vmatprep.subr.bf16.mxu0 %v9527
    %10133 = vmatpush1.bf16.msra.mxu0 %v9526
    %10134 = vmatprep.subr.bf16.mxu0 %v9523
    %10135 = vmatpush1.bf16.msra.mxu0 %v9522
    %10136 = vmatprep.subr.bf16.mxu0 %v9519
    %10137 = vmatpush1.bf16.msra.mxu0 %v9518
    %10138 = vmatprep.subr.bf16.mxu0 %v9515
    %10139 = vmatpush1.bf16.msra.mxu0 %v9514
    %10140 = vmatprep.subr.bf16.mxu0 %v9511
    %10141 = vmatpush1.bf16.msra.mxu0 %v9510
    %10142 = vmatprep.subr.bf16.mxu0 %v9507
    %10143 = vmatpush1.bf16.msra.mxu0 %v9506
    %10144 = vmatprep.subr.bf16.mxu0 %v9503
    %10145 = vmatpush1.bf16.msra.mxu0 %v9502
    %10146 = vmatprep.subr.bf16.mxu0 %v9563
    %10147 = vmatpush2.bf16.msra.mxu0 %v9562
    %10148 = vmatprep.subr.bf16.mxu0 %v9559
    %10149 = vmatpush2.bf16.msra.mxu0 %v9558
    %10150 = vmatprep.subr.bf16.mxu0 %v9555
    %10151 = vmatpush2.bf16.msra.mxu0 %v9554
    %10152 = vmatprep.subr.bf16.mxu0 %v9551
    %10153 = vmatpush2.bf16.msra.mxu0 %v9550
    %10154 = vmatprep.subr.bf16.mxu0 %v9547
    %10155 = vmatpush2.bf16.msra.mxu0 %v9546
    %10156 = vmatprep.subr.bf16.mxu0 %v9543
    %10157 = vmatpush2.bf16.msra.mxu0 %v9542
    %10158 = vmatprep.subr.bf16.mxu0 %v9539
    %10159 = vmatpush2.bf16.msra.mxu0 %v9538
    %10160 = vmatprep.subr.bf16.mxu0 %v9535
    %10161 = vmatpush2.bf16.msra.mxu0 %v9534
    %10162 = vmatprep.mubr.bf16.mxu0 %v8323
    %10163 = vmatmul.mubr.bf16.gmra.mxu0 %v8322
    %v10164 = vpop.f32.mrf.mxu0
    %v10165 = vadd.f32 %v10124, %v10164
    %v10166 = vpop.f32.mrf.mxu0
    %v10167 = vadd.f32 %v10126, %v10166
    %v10168 = vpop.f32.mrf.mxu0
    %v10169 = vpop.f32.mrf.mxu0
    %10170 = vdwg.mxu0
    %10171 = vmatprep.subr.bf16.mxu0 %v9595
    %10172 = vmatpush1.bf16.msra.mxu0 %v9594
    %10173 = vmatprep.subr.bf16.mxu0 %v9591
    %10174 = vmatpush1.bf16.msra.mxu0 %v9590
    %10175 = vmatprep.subr.bf16.mxu0 %v9587
    %10176 = vmatpush1.bf16.msra.mxu0 %v9586
    %10177 = vmatprep.subr.bf16.mxu0 %v9583
    %10178 = vmatpush1.bf16.msra.mxu0 %v9582
    %10179 = vmatprep.subr.bf16.mxu0 %v9579
    %10180 = vmatpush1.bf16.msra.mxu0 %v9578
    %10181 = vmatprep.subr.bf16.mxu0 %v9575
    %10182 = vmatpush1.bf16.msra.mxu0 %v9574
    %10183 = vmatprep.subr.bf16.mxu0 %v9571
    %10184 = vmatpush1.bf16.msra.mxu0 %v9570
    %10185 = vmatprep.subr.bf16.mxu0 %v9567
    %10186 = vmatpush1.bf16.msra.mxu0 %v9566
    %10187 = vmatprep.subr.bf16.mxu0 %v9627
    %10188 = vmatpush2.bf16.msra.mxu0 %v9626
    %10189 = vmatprep.subr.bf16.mxu0 %v9623
    %10190 = vmatpush2.bf16.msra.mxu0 %v9622
    %10191 = vmatprep.subr.bf16.mxu0 %v9619
    %10192 = vmatpush2.bf16.msra.mxu0 %v9618
    %10193 = vmatprep.subr.bf16.mxu0 %v9615
    %10194 = vmatpush2.bf16.msra.mxu0 %v9614
    %10195 = vmatprep.subr.bf16.mxu0 %v9611
    %10196 = vmatpush2.bf16.msra.mxu0 %v9610
    %10197 = vmatprep.subr.bf16.mxu0 %v9607
    %10198 = vmatpush2.bf16.msra.mxu0 %v9606
    %10199 = vmatprep.subr.bf16.mxu0 %v9603
    %10200 = vmatpush2.bf16.msra.mxu0 %v9602
    %10201 = vmatprep.subr.bf16.mxu0 %v9599
    %10202 = vmatpush2.bf16.msra.mxu0 %v9598
    %10203 = vmatprep.mubr.bf16.mxu0 %v8325
    %10204 = vmatmul.mubr.bf16.gmra.mxu0 %v8324
    %v10205 = vpop.f32.mrf.mxu0
    %v10206 = vadd.f32 %v10165, %v10205
    %v10207 = vpop.f32.mrf.mxu0
    %v10208 = vadd.f32 %v10167, %v10207
    %v10209 = vpop.f32.mrf.mxu0
    %v10210 = vpop.f32.mrf.mxu0
    %10211 = vdwg.mxu0
    %vm10212 = vcmp.gt.f32.partialorder %v10042, 0.0
    %vm10213 = vcmp.gt.f32.partialorder %v10044, 0.0
    %vm10214 = vcmp.gt.f32.partialorder %v10206, 0.0
    %vm10215 = vcmp.gt.f32.partialorder %v10208, 0.0
    %v10216 = vmul.f32 %v10042, 0.2
    %v10217 = vmul.f32 %v10044, 0.2
    %v10218 = vmul.f32 %v10206, 0.2
    %v10219 = vmul.f32 %v10208, 0.2
    %v10220 = vsel %vm10212, %v10042, %v10216
    %v10221 = vsel %vm10213, %v10044, %v10217
    %v10222 = vsel %vm10214, %v10206, %v10218
    %v10223 = vsel %vm10215, %v10208, %v10219
    %v10224 = vld [vmem:[#allocation14] sm:$0xf]
    %v10225 = vld [vmem:[#allocation2] sm:$0x1]
    %10227 = vset.pattern.permute.xlu0 0
    %10228 = vperm.xlu0 %10227, %v10225
    %v10229 = vpop.permute.xlu0 %10228
    %v10231 = vlaneseq
    %v10232 = vshrl.u32 %v10231, 7
    %v10233 = vsub.s32 0, %v10232
    %v10234 = vrot.slane %v10229, %v10233
    %v10236 = vlaneseq
    %v10237 = vshrl.u32 %v10236, 7
    %v10238 = vsub.s32 0, %v10237
    %v10239 = vrot.slane %v10224, %v10238
    %v10240 = vlaneseq
    %v10241 = vshrl.u32 %v10240, 7
    %v10242 = vsub.s32 1, %v10241
    %v10243 = vrot.slane %v10224, %v10242
    %v10244 = vlaneseq
    %v10245 = vshrl.u32 %v10244, 7
    %v10246 = vsub.s32 2, %v10245
    %v10247 = vrot.slane %v10224, %v10246
    %v10248 = vlaneseq
    %v10249 = vshrl.u32 %v10248, 7
    %v10250 = vsub.s32 3, %v10249
    %v10251 = vrot.slane %v10224, %v10250
    %10256 = vmatprep.subr.mxu0 0.0
    %10257 = vmatpush1.xpose.msra.mxu0 0.0
    %10258 = vmatprep.subr.mxu0 0.0
    %10259 = vmatpush1.xpose.msra.mxu0 0.0
    %10260 = vmatprep.subr.mxu0 0.0
    %10261 = vmatpush1.xpose.msra.mxu0 0.0
    %10262 = vmatprep.subr.mxu0 0.0
    %10263 = vmatpush1.xpose.msra.mxu0 0.0
    %10264 = vmatprep.subr.mxu0 0.0
    %10265 = vmatpush1.xpose.msra.mxu0 0.0
    %10266 = vmatprep.subr.mxu0 0.0
    %10267 = vmatpush1.xpose.msra.mxu0 0.0
    %10268 = vmatprep.subr.mxu0 0.0
    %10269 = vmatpush1.xpose.msra.mxu0 0.0
    %10270 = vmatprep.subr.mxu0 0.0
    %10271 = vmatpush1.xpose.msra.mxu0 0.0
    %10272 = vmatprep.subr.mxu0 0.0
    %10273 = vmatpush1.xpose.msra.mxu0 0.0
    %10274 = vmatprep.subr.mxu0 0.0
    %10275 = vmatpush1.xpose.msra.mxu0 0.0
    %10276 = vmatprep.subr.mxu0 0.0
    %10277 = vmatpush1.xpose.msra.mxu0 0.0
    %10278 = vmatprep.subr.mxu0 0.0
    %10279 = vmatpush1.xpose.msra.mxu0 0.0
    %10280 = vmatprep.subr.mxu0 0.0
    %10281 = vmatpush1.xpose.msra.mxu0 0.0
    %10282 = vmatprep.subr.mxu0 0.0
    %10283 = vmatpush1.xpose.msra.mxu0 0.0
    %10284 = vmatprep.subr.mxu0 0.0
    %10285 = vmatpush1.xpose.msra.mxu0 0.0
    %10286 = vmatprep.subr.mxu0 %v10221
    %10287 = vmatpush1.xpose.msra.mxu0 %v10220
    %10288 = vmatprep.subr.mxu0 0.0
    %10289 = vmatpush2.xpose.msra.mxu0 0.0
    %10290 = vmatprep.subr.mxu0 0.0
    %10291 = vmatpush2.xpose.msra.mxu0 0.0
    %10292 = vmatprep.subr.mxu0 0.0
    %10293 = vmatpush2.xpose.msra.mxu0 0.0
    %10294 = vmatprep.subr.mxu0 0.0
    %10295 = vmatpush2.xpose.msra.mxu0 0.0
    %10296 = vmatprep.subr.mxu0 0.0
    %10297 = vmatpush2.xpose.msra.mxu0 0.0
    %10298 = vmatprep.subr.mxu0 0.0
    %10299 = vmatpush2.xpose.msra.mxu0 0.0
    %10300 = vmatprep.subr.mxu0 0.0
    %10301 = vmatpush2.xpose.msra.mxu0 0.0
    %10302 = vmatprep.subr.mxu0 0.0
    %10303 = vmatpush2.xpose.msra.mxu0 0.0
    %10304 = vmatprep.subr.mxu0 0.0
    %10305 = vmatpush2.xpose.msra.mxu0 0.0
    %10306 = vmatprep.subr.mxu0 0.0
    %10307 = vmatpush2.xpose.msra.mxu0 0.0
    %10308 = vmatprep.subr.mxu0 0.0
    %10309 = vmatpush2.xpose.msra.mxu0 0.0
    %10310 = vmatprep.subr.mxu0 0.0
    %10311 = vmatpush2.xpose.msra.mxu0 0.0
    %10312 = vmatprep.subr.mxu0 0.0
    %10313 = vmatpush2.xpose.msra.mxu0 0.0
    %10314 = vmatprep.subr.mxu0 0.0
    %10315 = vmatpush2.xpose.msra.mxu0 0.0
    %10316 = vmatprep.subr.mxu0 0.0
    %10317 = vmatpush2.xpose.msra.mxu0 0.0
    %10318 = vmatprep.subr.mxu0 0.0
    %10319 = vmatpush2.xpose.msra.mxu0 0.0
    %10320 = vmatprep.mubr.f32.mxu0 %v10243
    %10321 = vmatmul.mubr.f32.gmra.mxu0 %v10239
    %v10322 = vpop.f32.mrf.mxu0
    %v10323 = vadd.f32 %v10234, %v10322
    %v10324 = vpop.f32.mrf.mxu0
    %10325 = vdwg.mxu0
    %10326 = vmatprep.subr.mxu0 0.0
    %10327 = vmatpush1.xpose.msra.mxu0 0.0
    %10328 = vmatprep.subr.mxu0 0.0
    %10329 = vmatpush1.xpose.msra.mxu0 0.0
    %10330 = vmatprep.subr.mxu0 0.0
    %10331 = vmatpush1.xpose.msra.mxu0 0.0
    %10332 = vmatprep.subr.mxu0 0.0
    %10333 = vmatpush1.xpose.msra.mxu0 0.0
    %10334 = vmatprep.subr.mxu0 0.0
    %10335 = vmatpush1.xpose.msra.mxu0 0.0
    %10336 = vmatprep.subr.mxu0 0.0
    %10337 = vmatpush1.xpose.msra.mxu0 0.0
    %10338 = vmatprep.subr.mxu0 0.0
    %10339 = vmatpush1.xpose.msra.mxu0 0.0
    %10340 = vmatprep.subr.mxu0 0.0
    %10341 = vmatpush1.xpose.msra.mxu0 0.0
    %10342 = vmatprep.subr.mxu0 0.0
    %10343 = vmatpush1.xpose.msra.mxu0 0.0
    %10344 = vmatprep.subr.mxu0 0.0
    %10345 = vmatpush1.xpose.msra.mxu0 0.0
    %10346 = vmatprep.subr.mxu0 0.0
    %10347 = vmatpush1.xpose.msra.mxu0 0.0
    %10348 = vmatprep.subr.mxu0 0.0
    %10349 = vmatpush1.xpose.msra.mxu0 0.0
    %10350 = vmatprep.subr.mxu0 0.0
    %10351 = vmatpush1.xpose.msra.mxu0 0.0
    %10352 = vmatprep.subr.mxu0 0.0
    %10353 = vmatpush1.xpose.msra.mxu0 0.0
    %10354 = vmatprep.subr.mxu0 0.0
    %10355 = vmatpush1.xpose.msra.mxu0 0.0
    %10356 = vmatprep.subr.mxu0 %v10223
    %10357 = vmatpush1.xpose.msra.mxu0 %v10222
    %10358 = vmatprep.subr.mxu0 0.0
    %10359 = vmatpush2.xpose.msra.mxu0 0.0
    %10360 = vmatprep.subr.mxu0 0.0
    %10361 = vmatpush2.xpose.msra.mxu0 0.0
    %10362 = vmatprep.subr.mxu0 0.0
    %10363 = vmatpush2.xpose.msra.mxu0 0.0
    %10364 = vmatprep.subr.mxu0 0.0
    %10365 = vmatpush2.xpose.msra.mxu0 0.0
    %10366 = vmatprep.subr.mxu0 0.0
    %10367 = vmatpush2.xpose.msra.mxu0 0.0
    %10368 = vmatprep.subr.mxu0 0.0
    %10369 = vmatpush2.xpose.msra.mxu0 0.0
    %10370 = vmatprep.subr.mxu0 0.0
    %10371 = vmatpush2.xpose.msra.mxu0 0.0
    %10372 = vmatprep.subr.mxu0 0.0
    %10373 = vmatpush2.xpose.msra.mxu0 0.0
    %10374 = vmatprep.subr.mxu0 0.0
    %10375 = vmatpush2.xpose.msra.mxu0 0.0
    %10376 = vmatprep.subr.mxu0 0.0
    %10377 = vmatpush2.xpose.msra.mxu0 0.0
    %10378 = vmatprep.subr.mxu0 0.0
    %10379 = vmatpush2.xpose.msra.mxu0 0.0
    %10380 = vmatprep.subr.mxu0 0.0
    %10381 = vmatpush2.xpose.msra.mxu0 0.0
    %10382 = vmatprep.subr.mxu0 0.0
    %10383 = vmatpush2.xpose.msra.mxu0 0.0
    %10384 = vmatprep.subr.mxu0 0.0
    %10385 = vmatpush2.xpose.msra.mxu0 0.0
    %10386 = vmatprep.subr.mxu0 0.0
    %10387 = vmatpush2.xpose.msra.mxu0 0.0
    %10388 = vmatprep.subr.mxu0 0.0
    %10389 = vmatpush2.xpose.msra.mxu0 0.0
    %10390 = vmatprep.mubr.f32.mxu0 %v10251
    %10391 = vmatmul.mubr.f32.gmra.mxu0 %v10247
    %v10392 = vpop.f32.mrf.mxu0
    %v10393 = vadd.f32 %v10323, %v10392
    %v10394 = vpop.f32.mrf.mxu0
    %10395 = vdwg.mxu0
    %vm10396 = vcmask 57344
    %10397 = vst.msk [vmem:[#allocation15] sm:$0x1] %vm10396, %v10393
    // Predicated region
    $region66: #{discriminator_forward.1} parent=1 // pred_check
      _
    $region67: #{discriminator_forward.1} parent=1 // pred_check_branch
      %10399 = sbr.rel (0) target = $region69
    $region68: #{discriminator_forward.1} parent=1 // pred_region
      %s10401 = ssub.s32 16, 16
      %10402 = vsyncadd [#allocation5], %s10401
      %s10404 = sshll.u32 [#allocation15], 4
      %s10405 = int_to_ptr.vmem [resolvable:$true] %s10404
      %10407 = dma.vmem_to_hbm [thread:$0]  %s10405, 16, %s9, [#allocation5]
    $region69: #{discriminator_forward.1} parent=1 // pred_fallthru
      _
    // Predicated region
    $region70: #{discriminator_forward.1} parent=1 // pred_check
      _
    $region71: #{discriminator_forward.1} parent=1 // pred_check_branch
      %10409 = sbr.rel (0) target = $region73
    $region72: #{discriminator_forward.1} parent=1 // pred_region
      %10410 = dma.done [#allocation5], 16
    $region73: #{discriminator_forward.1} parent=1 // pred_fallthru
      _
    %10411 = vsyncpa [#allocation4], 1
    %10412 = vsyncpa [#allocation7], 1
    %10413 = vsyncpa [#allocation10], 1
    %10414 = vsyncpa [#allocation13], 1
    %10415 = vsyncpa [#allocation5], 1

</llo_original>
